<compile_context>
chip_gen: v7x
topology: tpu7x:2x2x1
jax: 0.10.0
libtpu: 0.0.40
codegen_flags: <defaults>
</compile_context>

<pallas_src>
import jax
import jax.numpy as jnp
from jax.experimental import pallas as pl
from jax.experimental.pallas import tpu as pltpu

# ---- synthetic "args" (deterministic config, shapes implied by the module) ----
NZ = 16            # args.nz   (latent dim)
NDF = 32           # args.ndf  (energy-MLP hidden width)
NEZ = 1            # args.nez  (energy output dim)
BATCH = 8
E_L_STEPS = 20         # args.e_l_steps
E_L_STEP_SIZE = 0.4    # args.e_l_step_size
E_PRIOR_SIG = 1.0      # args.e_prior_sig
E_L_WITH_NOISE = False # args.e_l_with_noise
# TODO(synk): e_l_with_noise=True (torch.randn_like per step) is skipped for a
# deterministic run; it could be added with pltpu.prng_seed/stateful_normal.
E_ACTIVATION = "swish"  # args.e_activation -> Swish(): x * sigmoid(x), exact match


def _langevin_prior_kernel(z_ref, w1_ref, b1_ref, w2_ref, b2_ref,
                           w1t_ref, w2t_ref, w3row_ref, zout_ref):
    """Runs the full Langevin prior loop (forward + analytic backward of netE)."""
    B = z_ref.shape[0]
    w1 = w1_ref[...]
    w2 = w2_ref[...]
    w1t = w1t_ref[...]          # (NDF, NZ)  pre-transposed in the wrapper
    w2t = w2t_ref[...]          # (NDF, NDF) pre-transposed in the wrapper

    # Hoisted broadcasts — loop-invariant, and JAX does not CSE broadcast_in_dim.
    b1 = jnp.broadcast_to(b1_ref[...], (B, NDF))
    b2 = jnp.broadcast_to(b2_ref[...], (B, NDF))
    # d(en.sum())/d_h2 = ones(B,NEZ) @ w3.T — constant across all Langevin steps.
    d_h2 = jnp.broadcast_to(w3row_ref[...], (B, NDF))

    coef = 0.5 * E_L_STEP_SIZE * E_L_STEP_SIZE
    inv_sig2 = 1.0 / (E_PRIOR_SIG * E_PRIOR_SIG)
    decay = 1.0 - coef * inv_sig2        # fold the z/sigma^2 term into one scale

    def step(_, z):
        # ---- netE forward (last Linear + b3 not needed: only its grad path) ----
        h1p = jnp.dot(z, w1, preferred_element_type=jnp.float32) + b1
        s1 = jax.nn.sigmoid(h1p)
        h1 = h1p * s1
        h2p = jnp.dot(h1, w2, preferred_element_type=jnp.float32) + b2
        s2 = jax.nn.sigmoid(h2p)
        h2 = h2p * s2
        # ---- analytic backward of en.sum():  swish'(x) = s + x*s*(1-s) = s + h*(1-s) ----
        d_h2p = d_h2 * (s2 + h2 * (1.0 - s2))
        d_h1 = jnp.dot(d_h2p, w2t, preferred_element_type=jnp.float32)
        d_h1p = d_h1 * (s1 + h1 * (1.0 - s1))
        z_grad = jnp.dot(d_h1p, w1t, preferred_element_type=jnp.float32)
        # ---- Langevin update (no noise: E_L_WITH_NOISE = False) ----
        return decay * z - coef * z_grad

    # Fully unrolled: 20 fixed steps, ~6 small live vregs -> fits regalloc easily,
    # and lets the LLO scheduler interleave MXU/EUP/VPU work across iterations.
    zout_ref[...] = jax.lax.fori_loop(0, E_L_STEPS, step, z_ref[...], unroll=True)


def net_wrapper_forward(z_nchw, params):
    """Equivalent of _netWrapper.forward(z, prior=True)."""
    B, nz = z_nchw.shape[0], z_nchw.shape[1]
    z2d = z_nchw.reshape(B, nz).astype(jnp.float32)
    w1, b1, w2, b2, w3, b3 = params
    del b3  # dead: the last-layer bias does not affect d(en.sum())/dz
    w1t = w1.T                                  # (NDF, NZ)
    w2t = w2.T                                  # (NDF, NDF)
    w3row = jnp.sum(w3, axis=1).reshape(1, NDF)  # lane-dense (1, NDF); == w3[:,0] for NEZ=1
    out = pl.pallas_call(
        _langevin_prior_kernel,
        out_shape=jax.ShapeDtypeStruct((B, nz), jnp.float32),
        in_specs=[pl.BlockSpec(memory_space=pltpu.MemorySpace.VMEM)] * 8,
        out_specs=pl.BlockSpec(memory_space=pltpu.MemorySpace.VMEM),
        input_output_aliases={0: 0},   # z updated in place; saves a writeback buffer
    )(z2d, w1, b1, w2, b2, w1t, w2t, w3row)
    return out.reshape(B, nz, 1, 1)


# TODO(synk): the prior=False branch (sample_langevin_post_z) needs the full
# _netG ConvTranspose2d stack and its backward through an MSE loss; not
# implemented here.

# ---------------- pure-JAX reference for verification ----------------
def _netE_ref(z, params):
    w1, b1, w2, b2, w3, b3 = params
    h1p = z @ w1 + b1
    h1 = h1p * jax.nn.sigmoid(h1p)
    h2p = h1 @ w2 + b2
    h2 = h2p * jax.nn.sigmoid(h2p)
    return h2 @ w3 + b3


def _langevin_ref(z_nchw, params):
    B, nz = z_nchw.shape[0], z_nchw.shape[1]
    z = z_nchw.reshape(B, nz).astype(jnp.float32)
    coef = 0.5 * E_L_STEP_SIZE * E_L_STEP_SIZE
    inv_sig2 = 1.0 / (E_PRIOR_SIG * E_PRIOR_SIG)

    def step(z, _):
        g = jax.grad(lambda zz: _netE_ref(zz, params).sum())(z)
        return z - coef * (g + inv_sig2 * z), None

    z, _ = jax.lax.scan(step, z, None, length=E_L_STEPS)
    return z.reshape(B, nz, 1, 1)


def _init_params(key):
    ks = jax.random.split(key, 6)

    def xavier(k, shape):  # xavier-normal-style deterministic init
        fan_in, fan_out = shape
        std = (2.0 / (fan_in + fan_out)) ** 0.5
        return (std * jax.random.normal(k, shape)).astype(jnp.float32)

    w1 = xavier(ks[0], (NZ, NDF))
    b1 = (0.01 * jax.random.normal(ks[1], (1, NDF))).astype(jnp.float32)
    w2 = xavier(ks[2], (NDF, NDF))
    b2 = (0.01 * jax.random.normal(ks[3], (1, NDF))).astype(jnp.float32)
    w3 = xavier(ks[4], (NDF, NEZ))
    b3 = (0.01 * jax.random.normal(ks[5], (1, NEZ))).astype(jnp.float32)
    return (w1, b1, w2, b2, w3, b3)


if __name__ == "__main__":
    root = jax.random.PRNGKey(0)
    kp, kz = jax.random.split(root)
    params = _init_params(kp)
    # latent input, PyTorch-style (B, nz, 1, 1) as fed to netE / langevin sampler
    z = (E_PRIOR_SIG * jax.random.normal(kz, (BATCH, NZ, 1, 1))).astype(jnp.float32)

    z_out = jax.block_until_ready(net_wrapper_forward(z, params))
    z_ref = jax.block_until_ready(_langevin_ref(z, params))

    assert z_out.shape == (BATCH, NZ, 1, 1)
    assert jnp.allclose(z_out, z_ref, rtol=1e-4, atol=1e-5), (
        f"max abs err {jnp.max(jnp.abs(z_out - z_ref))}")
    print("KERNEL_OK")
</pallas_src>

<mosaic_0001>
module attributes {stable_mosaic.version = 11 : i64} {
  func.func @_langevin_prior_kernel(%arg0: memref<8x16xf32, #tpu.memory_space<vmem>>, %arg1: memref<16x32xf32, #tpu.memory_space<vmem>>, %arg2: memref<1x32xf32, #tpu.memory_space<vmem>>, %arg3: memref<32x32xf32, #tpu.memory_space<vmem>>, %arg4: memref<1x32xf32, #tpu.memory_space<vmem>>, %arg5: memref<32x16xf32, #tpu.memory_space<vmem>>, %arg6: memref<32x32xf32, #tpu.memory_space<vmem>>, %arg7: memref<1x32xf32, #tpu.memory_space<vmem>>, %arg8: memref<8x16xf32, #tpu.memory_space<vmem>>) attributes {dimension_semantics = [], scalar_prefetch = 0 : i64, scratch_operands = 0 : i64, tpu.core_type = #tpu.core_type<tc>} {
    %c0 = arith.constant 0 : index
    %c0_0 = arith.constant 0 : index
    %0 = vector.load %arg1[%c0, %c0_0] : memref<16x32xf32, #tpu.memory_space<vmem>>, vector<16x32xf32>
    %c0_1 = arith.constant 0 : index
    %c0_2 = arith.constant 0 : index
    %1 = vector.load %arg3[%c0_1, %c0_2] : memref<32x32xf32, #tpu.memory_space<vmem>>, vector<32x32xf32>
    %c0_3 = arith.constant 0 : index
    %c0_4 = arith.constant 0 : index
    %2 = vector.load %arg5[%c0_3, %c0_4] : memref<32x16xf32, #tpu.memory_space<vmem>>, vector<32x16xf32>
    %c0_5 = arith.constant 0 : index
    %c0_6 = arith.constant 0 : index
    %3 = vector.load %arg6[%c0_5, %c0_6] : memref<32x32xf32, #tpu.memory_space<vmem>>, vector<32x32xf32>
    %c0_7 = arith.constant 0 : index
    %c0_8 = arith.constant 0 : index
    %4 = vector.load %arg2[%c0_7, %c0_8] : memref<1x32xf32, #tpu.memory_space<vmem>>, vector<1x32xf32>
    %5 = vector.shape_cast %4 : vector<1x32xf32> to vector<1x32xf32>
    %6 = vector.broadcast %5 : vector<1x32xf32> to vector<8x32xf32>
    %c0_9 = arith.constant 0 : index
    %c0_10 = arith.constant 0 : index
    %7 = vector.load %arg4[%c0_9, %c0_10] : memref<1x32xf32, #tpu.memory_space<vmem>>, vector<1x32xf32>
    %8 = vector.shape_cast %7 : vector<1x32xf32> to vector<1x32xf32>
    %9 = vector.broadcast %8 : vector<1x32xf32> to vector<8x32xf32>
    %c0_11 = arith.constant 0 : index
    %c0_12 = arith.constant 0 : index
    %10 = vector.load %arg7[%c0_11, %c0_12] : memref<1x32xf32, #tpu.memory_space<vmem>>, vector<1x32xf32>
    %11 = vector.shape_cast %10 : vector<1x32xf32> to vector<1x32xf32>
    %12 = vector.broadcast %11 : vector<1x32xf32> to vector<8x32xf32>
    %c0_13 = arith.constant 0 : index
    %c0_14 = arith.constant 0 : index
    %13 = vector.load %arg0[%c0_13, %c0_14] : memref<8x16xf32, #tpu.memory_space<vmem>>, vector<8x16xf32>
    %c0_i32 = arith.constant 0 : i32
    %cst = arith.constant dense<0.000000e+00> : vector<8x32xf32>
    %14 = tpu.matmul %13, %0, %cst {dimension_numbers = #tpu.dot_dimension_numbers<[1], [0], [0], [1], [0, 0, 1, 1], [], []>} : vector<8x16xf32>, vector<16x32xf32>, vector<8x32xf32> -> vector<8x32xf32>
    %15 = arith.addf %14, %6 : vector<8x32xf32>
    %16 = arith.negf %15 : vector<8x32xf32>
    %17 = math.exp %16 : vector<8x32xf32>
    %cst_15 = arith.constant 1.000000e+00 : f32
    %18 = vector.broadcast %cst_15 : f32 to vector<8x32xf32>
    %19 = arith.addf %18, %17 : vector<8x32xf32>
    %20 = arith.divf %18, %19 : vector<8x32xf32>
    %21 = arith.mulf %15, %20 : vector<8x32xf32>
    %cst_16 = arith.constant dense<0.000000e+00> : vector<8x32xf32>
    %22 = tpu.matmul %21, %1, %cst_16 {dimension_numbers = #tpu.dot_dimension_numbers<[1], [0], [0], [1], [0, 0, 1, 1], [], []>} : vector<8x32xf32>, vector<32x32xf32>, vector<8x32xf32> -> vector<8x32xf32>
    %23 = arith.addf %22, %9 : vector<8x32xf32>
    %24 = arith.negf %23 : vector<8x32xf32>
    %25 = math.exp %24 : vector<8x32xf32>
    %cst_17 = arith.constant 1.000000e+00 : f32
    %26 = vector.broadcast %cst_17 : f32 to vector<8x32xf32>
    %27 = arith.addf %26, %25 : vector<8x32xf32>
    %28 = arith.divf %26, %27 : vector<8x32xf32>
    %29 = arith.mulf %23, %28 : vector<8x32xf32>
    %cst_18 = arith.constant 1.000000e+00 : f32
    %30 = vector.broadcast %cst_18 : f32 to vector<8x32xf32>
    %31 = arith.subf %30, %28 : vector<8x32xf32>
    %32 = arith.mulf %29, %31 : vector<8x32xf32>
    %33 = arith.addf %28, %32 : vector<8x32xf32>
    %34 = arith.mulf %12, %33 : vector<8x32xf32>
    %cst_19 = arith.constant dense<0.000000e+00> : vector<8x32xf32>
    %35 = tpu.matmul %34, %3, %cst_19 {dimension_numbers = #tpu.dot_dimension_numbers<[1], [0], [0], [1], [0, 0, 1, 1], [], []>} : vector<8x32xf32>, vector<32x32xf32>, vector<8x32xf32> -> vector<8x32xf32>
    %cst_20 = arith.constant 1.000000e+00 : f32
    %36 = vector.broadcast %cst_20 : f32 to vector<8x32xf32>
    %37 = arith.subf %36, %20 : vector<8x32xf32>
    %38 = arith.mulf %21, %37 : vector<8x32xf32>
    %39 = arith.addf %20, %38 : vector<8x32xf32>
    %40 = arith.mulf %35, %39 : vector<8x32xf32>
    %cst_21 = arith.constant dense<0.000000e+00> : vector<8x16xf32>
    %41 = tpu.matmul %40, %2, %cst_21 {dimension_numbers = #tpu.dot_dimension_numbers<[1], [0], [0], [1], [0, 0, 1, 1], [], []>} : vector<8x32xf32>, vector<32x16xf32>, vector<8x16xf32> -> vector<8x16xf32>
    %cst_22 = arith.constant 9.200000e-01 : f32
    %42 = vector.broadcast %cst_22 : f32 to vector<8x16xf32>
    %43 = arith.mulf %42, %13 : vector<8x16xf32>
    %cst_23 = arith.constant 8.000000e-02 : f32
    %44 = vector.broadcast %cst_23 : f32 to vector<8x16xf32>
    %45 = arith.mulf %44, %41 : vector<8x16xf32>
    %46 = arith.subf %43, %45 : vector<8x16xf32>
    %c1_i32 = arith.constant 1 : i32
    %cst_24 = arith.constant dense<0.000000e+00> : vector<8x32xf32>
    %47 = tpu.matmul %46, %0, %cst_24 {dimension_numbers = #tpu.dot_dimension_numbers<[1], [0], [0], [1], [0, 0, 1, 1], [], []>} : vector<8x16xf32>, vector<16x32xf32>, vector<8x32xf32> -> vector<8x32xf32>
    %48 = arith.addf %47, %6 : vector<8x32xf32>
    %49 = arith.negf %48 : vector<8x32xf32>
    %50 = math.exp %49 : vector<8x32xf32>
    %cst_25 = arith.constant 1.000000e+00 : f32
    %51 = vector.broadcast %cst_25 : f32 to vector<8x32xf32>
    %52 = arith.addf %51, %50 : vector<8x32xf32>
    %53 = arith.divf %51, %52 : vector<8x32xf32>
    %54 = arith.mulf %48, %53 : vector<8x32xf32>
    %cst_26 = arith.constant dense<0.000000e+00> : vector<8x32xf32>
    %55 = tpu.matmul %54, %1, %cst_26 {dimension_numbers = #tpu.dot_dimension_numbers<[1], [0], [0], [1], [0, 0, 1, 1], [], []>} : vector<8x32xf32>, vector<32x32xf32>, vector<8x32xf32> -> vector<8x32xf32>
    %56 = arith.addf %55, %9 : vector<8x32xf32>
    %57 = arith.negf %56 : vector<8x32xf32>
    %58 = math.exp %57 : vector<8x32xf32>
    %cst_27 = arith.constant 1.000000e+00 : f32
    %59 = vector.broadcast %cst_27 : f32 to vector<8x32xf32>
    %60 = arith.addf %59, %58 : vector<8x32xf32>
    %61 = arith.divf %59, %60 : vector<8x32xf32>
    %62 = arith.mulf %56, %61 : vector<8x32xf32>
    %cst_28 = arith.constant 1.000000e+00 : f32
    %63 = vector.broadcast %cst_28 : f32 to vector<8x32xf32>
    %64 = arith.subf %63, %61 : vector<8x32xf32>
    %65 = arith.mulf %62, %64 : vector<8x32xf32>
    %66 = arith.addf %61, %65 : vector<8x32xf32>
    %67 = arith.mulf %12, %66 : vector<8x32xf32>
    %cst_29 = arith.constant dense<0.000000e+00> : vector<8x32xf32>
    %68 = tpu.matmul %67, %3, %cst_29 {dimension_numbers = #tpu.dot_dimension_numbers<[1], [0], [0], [1], [0, 0, 1, 1], [], []>} : vector<8x32xf32>, vector<32x32xf32>, vector<8x32xf32> -> vector<8x32xf32>
    %cst_30 = arith.constant 1.000000e+00 : f32
    %69 = vector.broadcast %cst_30 : f32 to vector<8x32xf32>
    %70 = arith.subf %69, %53 : vector<8x32xf32>
    %71 = arith.mulf %54, %70 : vector<8x32xf32>
    %72 = arith.addf %53, %71 : vector<8x32xf32>
    %73 = arith.mulf %68, %72 : vector<8x32xf32>
    %cst_31 = arith.constant dense<0.000000e+00> : vector<8x16xf32>
    %74 = tpu.matmul %73, %2, %cst_31 {dimension_numbers = #tpu.dot_dimension_numbers<[1], [0], [0], [1], [0, 0, 1, 1], [], []>} : vector<8x32xf32>, vector<32x16xf32>, vector<8x16xf32> -> vector<8x16xf32>
    %cst_32 = arith.constant 9.200000e-01 : f32
    %75 = vector.broadcast %cst_32 : f32 to vector<8x16xf32>
    %76 = arith.mulf %75, %46 : vector<8x16xf32>
    %cst_33 = arith.constant 8.000000e-02 : f32
    %77 = vector.broadcast %cst_33 : f32 to vector<8x16xf32>
    %78 = arith.mulf %77, %74 : vector<8x16xf32>
    %79 = arith.subf %76, %78 : vector<8x16xf32>
    %c2_i32 = arith.constant 2 : i32
    %cst_34 = arith.constant dense<0.000000e+00> : vector<8x32xf32>
    %80 = tpu.matmul %79, %0, %cst_34 {dimension_numbers = #tpu.dot_dimension_numbers<[1], [0], [0], [1], [0, 0, 1, 1], [], []>} : vector<8x16xf32>, vector<16x32xf32>, vector<8x32xf32> -> vector<8x32xf32>
    %81 = arith.addf %80, %6 : vector<8x32xf32>
    %82 = arith.negf %81 : vector<8x32xf32>
    %83 = math.exp %82 : vector<8x32xf32>
    %cst_35 = arith.constant 1.000000e+00 : f32
    %84 = vector.broadcast %cst_35 : f32 to vector<8x32xf32>
    %85 = arith.addf %84, %83 : vector<8x32xf32>
    %86 = arith.divf %84, %85 : vector<8x32xf32>
    %87 = arith.mulf %81, %86 : vector<8x32xf32>
    %cst_36 = arith.constant dense<0.000000e+00> : vector<8x32xf32>
    %88 = tpu.matmul %87, %1, %cst_36 {dimension_numbers = #tpu.dot_dimension_numbers<[1], [0], [0], [1], [0, 0, 1, 1], [], []>} : vector<8x32xf32>, vector<32x32xf32>, vector<8x32xf32> -> vector<8x32xf32>
    %89 = arith.addf %88, %9 : vector<8x32xf32>
    %90 = arith.negf %89 : vector<8x32xf32>
    %91 = math.exp %90 : vector<8x32xf32>
    %cst_37 = arith.constant 1.000000e+00 : f32
    %92 = vector.broadcast %cst_37 : f32 to vector<8x32xf32>
    %93 = arith.addf %92, %91 : vector<8x32xf32>
    %94 = arith.divf %92, %93 : vector<8x32xf32>
    %95 = arith.mulf %89, %94 : vector<8x32xf32>
    %cst_38 = arith.constant 1.000000e+00 : f32
    %96 = vector.broadcast %cst_38 : f32 to vector<8x32xf32>
    %97 = arith.subf %96, %94 : vector<8x32xf32>
    %98 = arith.mulf %95, %97 : vector<8x32xf32>
    %99 = arith.addf %94, %98 : vector<8x32xf32>
    %100 = arith.mulf %12, %99 : vector<8x32xf32>
    %cst_39 = arith.constant dense<0.000000e+00> : vector<8x32xf32>
    %101 = tpu.matmul %100, %3, %cst_39 {dimension_numbers = #tpu.dot_dimension_numbers<[1], [0], [0], [1], [0, 0, 1, 1], [], []>} : vector<8x32xf32>, vector<32x32xf32>, vector<8x32xf32> -> vector<8x32xf32>
    %cst_40 = arith.constant 1.000000e+00 : f32
    %102 = vector.broadcast %cst_40 : f32 to vector<8x32xf32>
    %103 = arith.subf %102, %86 : vector<8x32xf32>
    %104 = arith.mulf %87, %103 : vector<8x32xf32>
    %105 = arith.addf %86, %104 : vector<8x32xf32>
    %106 = arith.mulf %101, %105 : vector<8x32xf32>
    %cst_41 = arith.constant dense<0.000000e+00> : vector<8x16xf32>
    %107 = tpu.matmul %106, %2, %cst_41 {dimension_numbers = #tpu.dot_dimension_numbers<[1], [0], [0], [1], [0, 0, 1, 1], [], []>} : vector<8x32xf32>, vector<32x16xf32>, vector<8x16xf32> -> vector<8x16xf32>
    %cst_42 = arith.constant 9.200000e-01 : f32
    %108 = vector.broadcast %cst_42 : f32 to vector<8x16xf32>
    %109 = arith.mulf %108, %79 : vector<8x16xf32>
    %cst_43 = arith.constant 8.000000e-02 : f32
    %110 = vector.broadcast %cst_43 : f32 to vector<8x16xf32>
    %111 = arith.mulf %110, %107 : vector<8x16xf32>
    %112 = arith.subf %109, %111 : vector<8x16xf32>
    %c3_i32 = arith.constant 3 : i32
    %cst_44 = arith.constant dense<0.000000e+00> : vector<8x32xf32>
    %113 = tpu.matmul %112, %0, %cst_44 {dimension_numbers = #tpu.dot_dimension_numbers<[1], [0], [0], [1], [0, 0, 1, 1], [], []>} : vector<8x16xf32>, vector<16x32xf32>, vector<8x32xf32> -> vector<8x32xf32>
    %114 = arith.addf %113, %6 : vector<8x32xf32>
    %115 = arith.negf %114 : vector<8x32xf32>
    %116 = math.exp %115 : vector<8x32xf32>
    %cst_45 = arith.constant 1.000000e+00 : f32
    %117 = vector.broadcast %cst_45 : f32 to vector<8x32xf32>
    %118 = arith.addf %117, %116 : vector<8x32xf32>
    %119 = arith.divf %117, %118 : vector<8x32xf32>
    %120 = arith.mulf %114, %119 : vector<8x32xf32>
    %cst_46 = arith.constant dense<0.000000e+00> : vector<8x32xf32>
    %121 = tpu.matmul %120, %1, %cst_46 {dimension_numbers = #tpu.dot_dimension_numbers<[1], [0], [0], [1], [0, 0, 1, 1], [], []>} : vector<8x32xf32>, vector<32x32xf32>, vector<8x32xf32> -> vector<8x32xf32>
    %122 = arith.addf %121, %9 : vector<8x32xf32>
    %123 = arith.negf %122 : vector<8x32xf32>
    %124 = math.exp %123 : vector<8x32xf32>
    %cst_47 = arith.constant 1.000000e+00 : f32
    %125 = vector.broadcast %cst_47 : f32 to vector<8x32xf32>
    %126 = arith.addf %125, %124 : vector<8x32xf32>
    %127 = arith.divf %125, %126 : vector<8x32xf32>
    %128 = arith.mulf %122, %127 : vector<8x32xf32>
    %cst_48 = arith.constant 1.000000e+00 : f32
    %129 = vector.broadcast %cst_48 : f32 to vector<8x32xf32>
    %130 = arith.subf %129, %127 : vector<8x32xf32>
    %131 = arith.mulf %128, %130 : vector<8x32xf32>
    %132 = arith.addf %127, %131 : vector<8x32xf32>
    %133 = arith.mulf %12, %132 : vector<8x32xf32>
    %cst_49 = arith.constant dense<0.000000e+00> : vector<8x32xf32>
    %134 = tpu.matmul %133, %3, %cst_49 {dimension_numbers = #tpu.dot_dimension_numbers<[1], [0], [0], [1], [0, 0, 1, 1], [], []>} : vector<8x32xf32>, vector<32x32xf32>, vector<8x32xf32> -> vector<8x32xf32>
    %cst_50 = arith.constant 1.000000e+00 : f32
    %135 = vector.broadcast %cst_50 : f32 to vector<8x32xf32>
    %136 = arith.subf %135, %119 : vector<8x32xf32>
    %137 = arith.mulf %120, %136 : vector<8x32xf32>
    %138 = arith.addf %119, %137 : vector<8x32xf32>
    %139 = arith.mulf %134, %138 : vector<8x32xf32>
    %cst_51 = arith.constant dense<0.000000e+00> : vector<8x16xf32>
    %140 = tpu.matmul %139, %2, %cst_51 {dimension_numbers = #tpu.dot_dimension_numbers<[1], [0], [0], [1], [0, 0, 1, 1], [], []>} : vector<8x32xf32>, vector<32x16xf32>, vector<8x16xf32> -> vector<8x16xf32>
    %cst_52 = arith.constant 9.200000e-01 : f32
    %141 = vector.broadcast %cst_52 : f32 to vector<8x16xf32>
    %142 = arith.mulf %141, %112 : vector<8x16xf32>
    %cst_53 = arith.constant 8.000000e-02 : f32
    %143 = vector.broadcast %cst_53 : f32 to vector<8x16xf32>
    %144 = arith.mulf %143, %140 : vector<8x16xf32>
    %145 = arith.subf %142, %144 : vector<8x16xf32>
    %c4_i32 = arith.constant 4 : i32
    %cst_54 = arith.constant dense<0.000000e+00> : vector<8x32xf32>
    %146 = tpu.matmul %145, %0, %cst_54 {dimension_numbers = #tpu.dot_dimension_numbers<[1], [0], [0], [1], [0, 0, 1, 1], [], []>} : vector<8x16xf32>, vector<16x32xf32>, vector<8x32xf32> -> vector<8x32xf32>
    %147 = arith.addf %146, %6 : vector<8x32xf32>
    %148 = arith.negf %147 : vector<8x32xf32>
    %149 = math.exp %148 : vector<8x32xf32>
    %cst_55 = arith.constant 1.000000e+00 : f32
    %150 = vector.broadcast %cst_55 : f32 to vector<8x32xf32>
    %151 = arith.addf %150, %149 : vector<8x32xf32>
    %152 = arith.divf %150, %151 : vector<8x32xf32>
    %153 = arith.mulf %147, %152 : vector<8x32xf32>
    %cst_56 = arith.constant dense<0.000000e+00> : vector<8x32xf32>
    %154 = tpu.matmul %153, %1, %cst_56 {dimension_numbers = #tpu.dot_dimension_numbers<[1], [0], [0], [1], [0, 0, 1, 1], [], []>} : vector<8x32xf32>, vector<32x32xf32>, vector<8x32xf32> -> vector<8x32xf32>
    %155 = arith.addf %154, %9 : vector<8x32xf32>
    %156 = arith.negf %155 : vector<8x32xf32>
    %157 = math.exp %156 : vector<8x32xf32>
    %cst_57 = arith.constant 1.000000e+00 : f32
    %158 = vector.broadcast %cst_57 : f32 to vector<8x32xf32>
    %159 = arith.addf %158, %157 : vector<8x32xf32>
    %160 = arith.divf %158, %159 : vector<8x32xf32>
    %161 = arith.mulf %155, %160 : vector<8x32xf32>
    %cst_58 = arith.constant 1.000000e+00 : f32
    %162 = vector.broadcast %cst_58 : f32 to vector<8x32xf32>
    %163 = arith.subf %162, %160 : vector<8x32xf32>
    %164 = arith.mulf %161, %163 : vector<8x32xf32>
    %165 = arith.addf %160, %164 : vector<8x32xf32>
    %166 = arith.mulf %12, %165 : vector<8x32xf32>
    %cst_59 = arith.constant dense<0.000000e+00> : vector<8x32xf32>
    %167 = tpu.matmul %166, %3, %cst_59 {dimension_numbers = #tpu.dot_dimension_numbers<[1], [0], [0], [1], [0, 0, 1, 1], [], []>} : vector<8x32xf32>, vector<32x32xf32>, vector<8x32xf32> -> vector<8x32xf32>
    %cst_60 = arith.constant 1.000000e+00 : f32
    %168 = vector.broadcast %cst_60 : f32 to vector<8x32xf32>
    %169 = arith.subf %168, %152 : vector<8x32xf32>
    %170 = arith.mulf %153, %169 : vector<8x32xf32>
    %171 = arith.addf %152, %170 : vector<8x32xf32>
    %172 = arith.mulf %167, %171 : vector<8x32xf32>
    %cst_61 = arith.constant dense<0.000000e+00> : vector<8x16xf32>
    %173 = tpu.matmul %172, %2, %cst_61 {dimension_numbers = #tpu.dot_dimension_numbers<[1], [0], [0], [1], [0, 0, 1, 1], [], []>} : vector<8x32xf32>, vector<32x16xf32>, vector<8x16xf32> -> vector<8x16xf32>
    %cst_62 = arith.constant 9.200000e-01 : f32
    %174 = vector.broadcast %cst_62 : f32 to vector<8x16xf32>
    %175 = arith.mulf %174, %145 : vector<8x16xf32>
    %cst_63 = arith.constant 8.000000e-02 : f32
    %176 = vector.broadcast %cst_63 : f32 to vector<8x16xf32>
    %177 = arith.mulf %176, %173 : vector<8x16xf32>
    %178 = arith.subf %175, %177 : vector<8x16xf32>
    %c5_i32 = arith.constant 5 : i32
    %cst_64 = arith.constant dense<0.000000e+00> : vector<8x32xf32>
    %179 = tpu.matmul %178, %0, %cst_64 {dimension_numbers = #tpu.dot_dimension_numbers<[1], [0], [0], [1], [0, 0, 1, 1], [], []>} : vector<8x16xf32>, vector<16x32xf32>, vector<8x32xf32> -> vector<8x32xf32>
    %180 = arith.addf %179, %6 : vector<8x32xf32>
    %181 = arith.negf %180 : vector<8x32xf32>
    %182 = math.exp %181 : vector<8x32xf32>
    %cst_65 = arith.constant 1.000000e+00 : f32
    %183 = vector.broadcast %cst_65 : f32 to vector<8x32xf32>
    %184 = arith.addf %183, %182 : vector<8x32xf32>
    %185 = arith.divf %183, %184 : vector<8x32xf32>
    %186 = arith.mulf %180, %185 : vector<8x32xf32>
    %cst_66 = arith.constant dense<0.000000e+00> : vector<8x32xf32>
    %187 = tpu.matmul %186, %1, %cst_66 {dimension_numbers = #tpu.dot_dimension_numbers<[1], [0], [0], [1], [0, 0, 1, 1], [], []>} : vector<8x32xf32>, vector<32x32xf32>, vector<8x32xf32> -> vector<8x32xf32>
    %188 = arith.addf %187, %9 : vector<8x32xf32>
    %189 = arith.negf %188 : vector<8x32xf32>
    %190 = math.exp %189 : vector<8x32xf32>
    %cst_67 = arith.constant 1.000000e+00 : f32
    %191 = vector.broadcast %cst_67 : f32 to vector<8x32xf32>
    %192 = arith.addf %191, %190 : vector<8x32xf32>
    %193 = arith.divf %191, %192 : vector<8x32xf32>
    %194 = arith.mulf %188, %193 : vector<8x32xf32>
    %cst_68 = arith.constant 1.000000e+00 : f32
    %195 = vector.broadcast %cst_68 : f32 to vector<8x32xf32>
    %196 = arith.subf %195, %193 : vector<8x32xf32>
    %197 = arith.mulf %194, %196 : vector<8x32xf32>
    %198 = arith.addf %193, %197 : vector<8x32xf32>
    %199 = arith.mulf %12, %198 : vector<8x32xf32>
    %cst_69 = arith.constant dense<0.000000e+00> : vector<8x32xf32>
    %200 = tpu.matmul %199, %3, %cst_69 {dimension_numbers = #tpu.dot_dimension_numbers<[1], [0], [0], [1], [0, 0, 1, 1], [], []>} : vector<8x32xf32>, vector<32x32xf32>, vector<8x32xf32> -> vector<8x32xf32>
    %cst_70 = arith.constant 1.000000e+00 : f32
    %201 = vector.broadcast %cst_70 : f32 to vector<8x32xf32>
    %202 = arith.subf %201, %185 : vector<8x32xf32>
    %203 = arith.mulf %186, %202 : vector<8x32xf32>
    %204 = arith.addf %185, %203 : vector<8x32xf32>
    %205 = arith.mulf %200, %204 : vector<8x32xf32>
    %cst_71 = arith.constant dense<0.000000e+00> : vector<8x16xf32>
    %206 = tpu.matmul %205, %2, %cst_71 {dimension_numbers = #tpu.dot_dimension_numbers<[1], [0], [0], [1], [0, 0, 1, 1], [], []>} : vector<8x32xf32>, vector<32x16xf32>, vector<8x16xf32> -> vector<8x16xf32>
    %cst_72 = arith.constant 9.200000e-01 : f32
    %207 = vector.broadcast %cst_72 : f32 to vector<8x16xf32>
    %208 = arith.mulf %207, %178 : vector<8x16xf32>
    %cst_73 = arith.constant 8.000000e-02 : f32
    %209 = vector.broadcast %cst_73 : f32 to vector<8x16xf32>
    %210 = arith.mulf %209, %206 : vector<8x16xf32>
    %211 = arith.subf %208, %210 : vector<8x16xf32>
    %c6_i32 = arith.constant 6 : i32
    %cst_74 = arith.constant dense<0.000000e+00> : vector<8x32xf32>
    %212 = tpu.matmul %211, %0, %cst_74 {dimension_numbers = #tpu.dot_dimension_numbers<[1], [0], [0], [1], [0, 0, 1, 1], [], []>} : vector<8x16xf32>, vector<16x32xf32>, vector<8x32xf32> -> vector<8x32xf32>
    %213 = arith.addf %212, %6 : vector<8x32xf32>
    %214 = arith.negf %213 : vector<8x32xf32>
    %215 = math.exp %214 : vector<8x32xf32>
    %cst_75 = arith.constant 1.000000e+00 : f32
    %216 = vector.broadcast %cst_75 : f32 to vector<8x32xf32>
    %217 = arith.addf %216, %215 : vector<8x32xf32>
    %218 = arith.divf %216, %217 : vector<8x32xf32>
    %219 = arith.mulf %213, %218 : vector<8x32xf32>
    %cst_76 = arith.constant dense<0.000000e+00> : vector<8x32xf32>
    %220 = tpu.matmul %219, %1, %cst_76 {dimension_numbers = #tpu.dot_dimension_numbers<[1], [0], [0], [1], [0, 0, 1, 1], [], []>} : vector<8x32xf32>, vector<32x32xf32>, vector<8x32xf32> -> vector<8x32xf32>
    %221 = arith.addf %220, %9 : vector<8x32xf32>
    %222 = arith.negf %221 : vector<8x32xf32>
    %223 = math.exp %222 : vector<8x32xf32>
    %cst_77 = arith.constant 1.000000e+00 : f32
    %224 = vector.broadcast %cst_77 : f32 to vector<8x32xf32>
    %225 = arith.addf %224, %223 : vector<8x32xf32>
    %226 = arith.divf %224, %225 : vector<8x32xf32>
    %227 = arith.mulf %221, %226 : vector<8x32xf32>
    %cst_78 = arith.constant 1.000000e+00 : f32
    %228 = vector.broadcast %cst_78 : f32 to vector<8x32xf32>
    %229 = arith.subf %228, %226 : vector<8x32xf32>
    %230 = arith.mulf %227, %229 : vector<8x32xf32>
    %231 = arith.addf %226, %230 : vector<8x32xf32>
    %232 = arith.mulf %12, %231 : vector<8x32xf32>
    %cst_79 = arith.constant dense<0.000000e+00> : vector<8x32xf32>
    %233 = tpu.matmul %232, %3, %cst_79 {dimension_numbers = #tpu.dot_dimension_numbers<[1], [0], [0], [1], [0, 0, 1, 1], [], []>} : vector<8x32xf32>, vector<32x32xf32>, vector<8x32xf32> -> vector<8x32xf32>
    %cst_80 = arith.constant 1.000000e+00 : f32
    %234 = vector.broadcast %cst_80 : f32 to vector<8x32xf32>
    %235 = arith.subf %234, %218 : vector<8x32xf32>
    %236 = arith.mulf %219, %235 : vector<8x32xf32>
    %237 = arith.addf %218, %236 : vector<8x32xf32>
    %238 = arith.mulf %233, %237 : vector<8x32xf32>
    %cst_81 = arith.constant dense<0.000000e+00> : vector<8x16xf32>
    %239 = tpu.matmul %238, %2, %cst_81 {dimension_numbers = #tpu.dot_dimension_numbers<[1], [0], [0], [1], [0, 0, 1, 1], [], []>} : vector<8x32xf32>, vector<32x16xf32>, vector<8x16xf32> -> vector<8x16xf32>
    %cst_82 = arith.constant 9.200000e-01 : f32
    %240 = vector.broadcast %cst_82 : f32 to vector<8x16xf32>
    %241 = arith.mulf %240, %211 : vector<8x16xf32>
    %cst_83 = arith.constant 8.000000e-02 : f32
    %242 = vector.broadcast %cst_83 : f32 to vector<8x16xf32>
    %243 = arith.mulf %242, %239 : vector<8x16xf32>
    %244 = arith.subf %241, %243 : vector<8x16xf32>
    %c7_i32 = arith.constant 7 : i32
    %cst_84 = arith.constant dense<0.000000e+00> : vector<8x32xf32>
    %245 = tpu.matmul %244, %0, %cst_84 {dimension_numbers = #tpu.dot_dimension_numbers<[1], [0], [0], [1], [0, 0, 1, 1], [], []>} : vector<8x16xf32>, vector<16x32xf32>, vector<8x32xf32> -> vector<8x32xf32>
    %246 = arith.addf %245, %6 : vector<8x32xf32>
    %247 = arith.negf %246 : vector<8x32xf32>
    %248 = math.exp %247 : vector<8x32xf32>
    %cst_85 = arith.constant 1.000000e+00 : f32
    %249 = vector.broadcast %cst_85 : f32 to vector<8x32xf32>
    %250 = arith.addf %249, %248 : vector<8x32xf32>
    %251 = arith.divf %249, %250 : vector<8x32xf32>
    %252 = arith.mulf %246, %251 : vector<8x32xf32>
    %cst_86 = arith.constant dense<0.000000e+00> : vector<8x32xf32>
    %253 = tpu.matmul %252, %1, %cst_86 {dimension_numbers = #tpu.dot_dimension_numbers<[1], [0], [0], [1], [0, 0, 1, 1], [], []>} : vector<8x32xf32>, vector<32x32xf32>, vector<8x32xf32> -> vector<8x32xf32>
    %254 = arith.addf %253, %9 : vector<8x32xf32>
    %255 = arith.negf %254 : vector<8x32xf32>
    %256 = math.exp %255 : vector<8x32xf32>
    %cst_87 = arith.constant 1.000000e+00 : f32
    %257 = vector.broadcast %cst_87 : f32 to vector<8x32xf32>
    %258 = arith.addf %257, %256 : vector<8x32xf32>
    %259 = arith.divf %257, %258 : vector<8x32xf32>
    %260 = arith.mulf %254, %259 : vector<8x32xf32>
    %cst_88 = arith.constant 1.000000e+00 : f32
    %261 = vector.broadcast %cst_88 : f32 to vector<8x32xf32>
    %262 = arith.subf %261, %259 : vector<8x32xf32>
    %263 = arith.mulf %260, %262 : vector<8x32xf32>
    %264 = arith.addf %259, %263 : vector<8x32xf32>
    %265 = arith.mulf %12, %264 : vector<8x32xf32>
    %cst_89 = arith.constant dense<0.000000e+00> : vector<8x32xf32>
    %266 = tpu.matmul %265, %3, %cst_89 {dimension_numbers = #tpu.dot_dimension_numbers<[1], [0], [0], [1], [0, 0, 1, 1], [], []>} : vector<8x32xf32>, vector<32x32xf32>, vector<8x32xf32> -> vector<8x32xf32>
    %cst_90 = arith.constant 1.000000e+00 : f32
    %267 = vector.broadcast %cst_90 : f32 to vector<8x32xf32>
    %268 = arith.subf %267, %251 : vector<8x32xf32>
    %269 = arith.mulf %252, %268 : vector<8x32xf32>
    %270 = arith.addf %251, %269 : vector<8x32xf32>
    %271 = arith.mulf %266, %270 : vector<8x32xf32>
    %cst_91 = arith.constant dense<0.000000e+00> : vector<8x16xf32>
    %272 = tpu.matmul %271, %2, %cst_91 {dimension_numbers = #tpu.dot_dimension_numbers<[1], [0], [0], [1], [0, 0, 1, 1], [], []>} : vector<8x32xf32>, vector<32x16xf32>, vector<8x16xf32> -> vector<8x16xf32>
    %cst_92 = arith.constant 9.200000e-01 : f32
    %273 = vector.broadcast %cst_92 : f32 to vector<8x16xf32>
    %274 = arith.mulf %273, %244 : vector<8x16xf32>
    %cst_93 = arith.constant 8.000000e-02 : f32
    %275 = vector.broadcast %cst_93 : f32 to vector<8x16xf32>
    %276 = arith.mulf %275, %272 : vector<8x16xf32>
    %277 = arith.subf %274, %276 : vector<8x16xf32>
    %c8_i32 = arith.constant 8 : i32
    %cst_94 = arith.constant dense<0.000000e+00> : vector<8x32xf32>
    %278 = tpu.matmul %277, %0, %cst_94 {dimension_numbers = #tpu.dot_dimension_numbers<[1], [0], [0], [1], [0, 0, 1, 1], [], []>} : vector<8x16xf32>, vector<16x32xf32>, vector<8x32xf32> -> vector<8x32xf32>
    %279 = arith.addf %278, %6 : vector<8x32xf32>
    %280 = arith.negf %279 : vector<8x32xf32>
    %281 = math.exp %280 : vector<8x32xf32>
    %cst_95 = arith.constant 1.000000e+00 : f32
    %282 = vector.broadcast %cst_95 : f32 to vector<8x32xf32>
    %283 = arith.addf %282, %281 : vector<8x32xf32>
    %284 = arith.divf %282, %283 : vector<8x32xf32>
    %285 = arith.mulf %279, %284 : vector<8x32xf32>
    %cst_96 = arith.constant dense<0.000000e+00> : vector<8x32xf32>
    %286 = tpu.matmul %285, %1, %cst_96 {dimension_numbers = #tpu.dot_dimension_numbers<[1], [0], [0], [1], [0, 0, 1, 1], [], []>} : vector<8x32xf32>, vector<32x32xf32>, vector<8x32xf32> -> vector<8x32xf32>
    %287 = arith.addf %286, %9 : vector<8x32xf32>
    %288 = arith.negf %287 : vector<8x32xf32>
    %289 = math.exp %288 : vector<8x32xf32>
    %cst_97 = arith.constant 1.000000e+00 : f32
    %290 = vector.broadcast %cst_97 : f32 to vector<8x32xf32>
    %291 = arith.addf %290, %289 : vector<8x32xf32>
    %292 = arith.divf %290, %291 : vector<8x32xf32>
    %293 = arith.mulf %287, %292 : vector<8x32xf32>
    %cst_98 = arith.constant 1.000000e+00 : f32
    %294 = vector.broadcast %cst_98 : f32 to vector<8x32xf32>
    %295 = arith.subf %294, %292 : vector<8x32xf32>
    %296 = arith.mulf %293, %295 : vector<8x32xf32>
    %297 = arith.addf %292, %296 : vector<8x32xf32>
    %298 = arith.mulf %12, %297 : vector<8x32xf32>
    %cst_99 = arith.constant dense<0.000000e+00> : vector<8x32xf32>
    %299 = tpu.matmul %298, %3, %cst_99 {dimension_numbers = #tpu.dot_dimension_numbers<[1], [0], [0], [1], [0, 0, 1, 1], [], []>} : vector<8x32xf32>, vector<32x32xf32>, vector<8x32xf32> -> vector<8x32xf32>
    %cst_100 = arith.constant 1.000000e+00 : f32
    %300 = vector.broadcast %cst_100 : f32 to vector<8x32xf32>
    %301 = arith.subf %300, %284 : vector<8x32xf32>
    %302 = arith.mulf %285, %301 : vector<8x32xf32>
    %303 = arith.addf %284, %302 : vector<8x32xf32>
    %304 = arith.mulf %299, %303 : vector<8x32xf32>
    %cst_101 = arith.constant dense<0.000000e+00> : vector<8x16xf32>
    %305 = tpu.matmul %304, %2, %cst_101 {dimension_numbers = #tpu.dot_dimension_numbers<[1], [0], [0], [1], [0, 0, 1, 1], [], []>} : vector<8x32xf32>, vector<32x16xf32>, vector<8x16xf32> -> vector<8x16xf32>
    %cst_102 = arith.constant 9.200000e-01 : f32
    %306 = vector.broadcast %cst_102 : f32 to vector<8x16xf32>
    %307 = arith.mulf %306, %277 : vector<8x16xf32>
    %cst_103 = arith.constant 8.000000e-02 : f32
    %308 = vector.broadcast %cst_103 : f32 to vector<8x16xf32>
    %309 = arith.mulf %308, %305 : vector<8x16xf32>
    %310 = arith.subf %307, %309 : vector<8x16xf32>
    %c9_i32 = arith.constant 9 : i32
    %cst_104 = arith.constant dense<0.000000e+00> : vector<8x32xf32>
    %311 = tpu.matmul %310, %0, %cst_104 {dimension_numbers = #tpu.dot_dimension_numbers<[1], [0], [0], [1], [0, 0, 1, 1], [], []>} : vector<8x16xf32>, vector<16x32xf32>, vector<8x32xf32> -> vector<8x32xf32>
    %312 = arith.addf %311, %6 : vector<8x32xf32>
    %313 = arith.negf %312 : vector<8x32xf32>
    %314 = math.exp %313 : vector<8x32xf32>
    %cst_105 = arith.constant 1.000000e+00 : f32
    %315 = vector.broadcast %cst_105 : f32 to vector<8x32xf32>
    %316 = arith.addf %315, %314 : vector<8x32xf32>
    %317 = arith.divf %315, %316 : vector<8x32xf32>
    %318 = arith.mulf %312, %317 : vector<8x32xf32>
    %cst_106 = arith.constant dense<0.000000e+00> : vector<8x32xf32>
    %319 = tpu.matmul %318, %1, %cst_106 {dimension_numbers = #tpu.dot_dimension_numbers<[1], [0], [0], [1], [0, 0, 1, 1], [], []>} : vector<8x32xf32>, vector<32x32xf32>, vector<8x32xf32> -> vector<8x32xf32>
    %320 = arith.addf %319, %9 : vector<8x32xf32>
    %321 = arith.negf %320 : vector<8x32xf32>
    %322 = math.exp %321 : vector<8x32xf32>
    %cst_107 = arith.constant 1.000000e+00 : f32
    %323 = vector.broadcast %cst_107 : f32 to vector<8x32xf32>
    %324 = arith.addf %323, %322 : vector<8x32xf32>
    %325 = arith.divf %323, %324 : vector<8x32xf32>
    %326 = arith.mulf %320, %325 : vector<8x32xf32>
    %cst_108 = arith.constant 1.000000e+00 : f32
    %327 = vector.broadcast %cst_108 : f32 to vector<8x32xf32>
    %328 = arith.subf %327, %325 : vector<8x32xf32>
    %329 = arith.mulf %326, %328 : vector<8x32xf32>
    %330 = arith.addf %325, %329 : vector<8x32xf32>
    %331 = arith.mulf %12, %330 : vector<8x32xf32>
    %cst_109 = arith.constant dense<0.000000e+00> : vector<8x32xf32>
    %332 = tpu.matmul %331, %3, %cst_109 {dimension_numbers = #tpu.dot_dimension_numbers<[1], [0], [0], [1], [0, 0, 1, 1], [], []>} : vector<8x32xf32>, vector<32x32xf32>, vector<8x32xf32> -> vector<8x32xf32>
    %cst_110 = arith.constant 1.000000e+00 : f32
    %333 = vector.broadcast %cst_110 : f32 to vector<8x32xf32>
    %334 = arith.subf %333, %317 : vector<8x32xf32>
    %335 = arith.mulf %318, %334 : vector<8x32xf32>
    %336 = arith.addf %317, %335 : vector<8x32xf32>
    %337 = arith.mulf %332, %336 : vector<8x32xf32>
    %cst_111 = arith.constant dense<0.000000e+00> : vector<8x16xf32>
    %338 = tpu.matmul %337, %2, %cst_111 {dimension_numbers = #tpu.dot_dimension_numbers<[1], [0], [0], [1], [0, 0, 1, 1], [], []>} : vector<8x32xf32>, vector<32x16xf32>, vector<8x16xf32> -> vector<8x16xf32>
    %cst_112 = arith.constant 9.200000e-01 : f32
    %339 = vector.broadcast %cst_112 : f32 to vector<8x16xf32>
    %340 = arith.mulf %339, %310 : vector<8x16xf32>
    %cst_113 = arith.constant 8.000000e-02 : f32
    %341 = vector.broadcast %cst_113 : f32 to vector<8x16xf32>
    %342 = arith.mulf %341, %338 : vector<8x16xf32>
    %343 = arith.subf %340, %342 : vector<8x16xf32>
    %c10_i32 = arith.constant 10 : i32
    %cst_114 = arith.constant dense<0.000000e+00> : vector<8x32xf32>
    %344 = tpu.matmul %343, %0, %cst_114 {dimension_numbers = #tpu.dot_dimension_numbers<[1], [0], [0], [1], [0, 0, 1, 1], [], []>} : vector<8x16xf32>, vector<16x32xf32>, vector<8x32xf32> -> vector<8x32xf32>
    %345 = arith.addf %344, %6 : vector<8x32xf32>
    %346 = arith.negf %345 : vector<8x32xf32>
    %347 = math.exp %346 : vector<8x32xf32>
    %cst_115 = arith.constant 1.000000e+00 : f32
    %348 = vector.broadcast %cst_115 : f32 to vector<8x32xf32>
    %349 = arith.addf %348, %347 : vector<8x32xf32>
    %350 = arith.divf %348, %349 : vector<8x32xf32>
    %351 = arith.mulf %345, %350 : vector<8x32xf32>
    %cst_116 = arith.constant dense<0.000000e+00> : vector<8x32xf32>
    %352 = tpu.matmul %351, %1, %cst_116 {dimension_numbers = #tpu.dot_dimension_numbers<[1], [0], [0], [1], [0, 0, 1, 1], [], []>} : vector<8x32xf32>, vector<32x32xf32>, vector<8x32xf32> -> vector<8x32xf32>
    %353 = arith.addf %352, %9 : vector<8x32xf32>
    %354 = arith.negf %353 : vector<8x32xf32>
    %355 = math.exp %354 : vector<8x32xf32>
    %cst_117 = arith.constant 1.000000e+00 : f32
    %356 = vector.broadcast %cst_117 : f32 to vector<8x32xf32>
    %357 = arith.addf %356, %355 : vector<8x32xf32>
    %358 = arith.divf %356, %357 : vector<8x32xf32>
    %359 = arith.mulf %353, %358 : vector<8x32xf32>
    %cst_118 = arith.constant 1.000000e+00 : f32
    %360 = vector.broadcast %cst_118 : f32 to vector<8x32xf32>
    %361 = arith.subf %360, %358 : vector<8x32xf32>
    %362 = arith.mulf %359, %361 : vector<8x32xf32>
    %363 = arith.addf %358, %362 : vector<8x32xf32>
    %364 = arith.mulf %12, %363 : vector<8x32xf32>
    %cst_119 = arith.constant dense<0.000000e+00> : vector<8x32xf32>
    %365 = tpu.matmul %364, %3, %cst_119 {dimension_numbers = #tpu.dot_dimension_numbers<[1], [0], [0], [1], [0, 0, 1, 1], [], []>} : vector<8x32xf32>, vector<32x32xf32>, vector<8x32xf32> -> vector<8x32xf32>
    %cst_120 = arith.constant 1.000000e+00 : f32
    %366 = vector.broadcast %cst_120 : f32 to vector<8x32xf32>
    %367 = arith.subf %366, %350 : vector<8x32xf32>
    %368 = arith.mulf %351, %367 : vector<8x32xf32>
    %369 = arith.addf %350, %368 : vector<8x32xf32>
    %370 = arith.mulf %365, %369 : vector<8x32xf32>
    %cst_121 = arith.constant dense<0.000000e+00> : vector<8x16xf32>
    %371 = tpu.matmul %370, %2, %cst_121 {dimension_numbers = #tpu.dot_dimension_numbers<[1], [0], [0], [1], [0, 0, 1, 1], [], []>} : vector<8x32xf32>, vector<32x16xf32>, vector<8x16xf32> -> vector<8x16xf32>
    %cst_122 = arith.constant 9.200000e-01 : f32
    %372 = vector.broadcast %cst_122 : f32 to vector<8x16xf32>
    %373 = arith.mulf %372, %343 : vector<8x16xf32>
    %cst_123 = arith.constant 8.000000e-02 : f32
    %374 = vector.broadcast %cst_123 : f32 to vector<8x16xf32>
    %375 = arith.mulf %374, %371 : vector<8x16xf32>
    %376 = arith.subf %373, %375 : vector<8x16xf32>
    %c11_i32 = arith.constant 11 : i32
    %cst_124 = arith.constant dense<0.000000e+00> : vector<8x32xf32>
    %377 = tpu.matmul %376, %0, %cst_124 {dimension_numbers = #tpu.dot_dimension_numbers<[1], [0], [0], [1], [0, 0, 1, 1], [], []>} : vector<8x16xf32>, vector<16x32xf32>, vector<8x32xf32> -> vector<8x32xf32>
    %378 = arith.addf %377, %6 : vector<8x32xf32>
    %379 = arith.negf %378 : vector<8x32xf32>
    %380 = math.exp %379 : vector<8x32xf32>
    %cst_125 = arith.constant 1.000000e+00 : f32
    %381 = vector.broadcast %cst_125 : f32 to vector<8x32xf32>
    %382 = arith.addf %381, %380 : vector<8x32xf32>
    %383 = arith.divf %381, %382 : vector<8x32xf32>
    %384 = arith.mulf %378, %383 : vector<8x32xf32>
    %cst_126 = arith.constant dense<0.000000e+00> : vector<8x32xf32>
    %385 = tpu.matmul %384, %1, %cst_126 {dimension_numbers = #tpu.dot_dimension_numbers<[1], [0], [0], [1], [0, 0, 1, 1], [], []>} : vector<8x32xf32>, vector<32x32xf32>, vector<8x32xf32> -> vector<8x32xf32>
    %386 = arith.addf %385, %9 : vector<8x32xf32>
    %387 = arith.negf %386 : vector<8x32xf32>
    %388 = math.exp %387 : vector<8x32xf32>
    %cst_127 = arith.constant 1.000000e+00 : f32
    %389 = vector.broadcast %cst_127 : f32 to vector<8x32xf32>
    %390 = arith.addf %389, %388 : vector<8x32xf32>
    %391 = arith.divf %389, %390 : vector<8x32xf32>
    %392 = arith.mulf %386, %391 : vector<8x32xf32>
    %cst_128 = arith.constant 1.000000e+00 : f32
    %393 = vector.broadcast %cst_128 : f32 to vector<8x32xf32>
    %394 = arith.subf %393, %391 : vector<8x32xf32>
    %395 = arith.mulf %392, %394 : vector<8x32xf32>
    %396 = arith.addf %391, %395 : vector<8x32xf32>
    %397 = arith.mulf %12, %396 : vector<8x32xf32>
    %cst_129 = arith.constant dense<0.000000e+00> : vector<8x32xf32>
    %398 = tpu.matmul %397, %3, %cst_129 {dimension_numbers = #tpu.dot_dimension_numbers<[1], [0], [0], [1], [0, 0, 1, 1], [], []>} : vector<8x32xf32>, vector<32x32xf32>, vector<8x32xf32> -> vector<8x32xf32>
    %cst_130 = arith.constant 1.000000e+00 : f32
    %399 = vector.broadcast %cst_130 : f32 to vector<8x32xf32>
    %400 = arith.subf %399, %383 : vector<8x32xf32>
    %401 = arith.mulf %384, %400 : vector<8x32xf32>
    %402 = arith.addf %383, %401 : vector<8x32xf32>
    %403 = arith.mulf %398, %402 : vector<8x32xf32>
    %cst_131 = arith.constant dense<0.000000e+00> : vector<8x16xf32>
    %404 = tpu.matmul %403, %2, %cst_131 {dimension_numbers = #tpu.dot_dimension_numbers<[1], [0], [0], [1], [0, 0, 1, 1], [], []>} : vector<8x32xf32>, vector<32x16xf32>, vector<8x16xf32> -> vector<8x16xf32>
    %cst_132 = arith.constant 9.200000e-01 : f32
    %405 = vector.broadcast %cst_132 : f32 to vector<8x16xf32>
    %406 = arith.mulf %405, %376 : vector<8x16xf32>
    %cst_133 = arith.constant 8.000000e-02 : f32
    %407 = vector.broadcast %cst_133 : f32 to vector<8x16xf32>
    %408 = arith.mulf %407, %404 : vector<8x16xf32>
    %409 = arith.subf %406, %408 : vector<8x16xf32>
    %c12_i32 = arith.constant 12 : i32
    %cst_134 = arith.constant dense<0.000000e+00> : vector<8x32xf32>
    %410 = tpu.matmul %409, %0, %cst_134 {dimension_numbers = #tpu.dot_dimension_numbers<[1], [0], [0], [1], [0, 0, 1, 1], [], []>} : vector<8x16xf32>, vector<16x32xf32>, vector<8x32xf32> -> vector<8x32xf32>
    %411 = arith.addf %410, %6 : vector<8x32xf32>
    %412 = arith.negf %411 : vector<8x32xf32>
    %413 = math.exp %412 : vector<8x32xf32>
    %cst_135 = arith.constant 1.000000e+00 : f32
    %414 = vector.broadcast %cst_135 : f32 to vector<8x32xf32>
    %415 = arith.addf %414, %413 : vector<8x32xf32>
    %416 = arith.divf %414, %415 : vector<8x32xf32>
    %417 = arith.mulf %411, %416 : vector<8x32xf32>
    %cst_136 = arith.constant dense<0.000000e+00> : vector<8x32xf32>
    %418 = tpu.matmul %417, %1, %cst_136 {dimension_numbers = #tpu.dot_dimension_numbers<[1], [0], [0], [1], [0, 0, 1, 1], [], []>} : vector<8x32xf32>, vector<32x32xf32>, vector<8x32xf32> -> vector<8x32xf32>
    %419 = arith.addf %418, %9 : vector<8x32xf32>
    %420 = arith.negf %419 : vector<8x32xf32>
    %421 = math.exp %420 : vector<8x32xf32>
    %cst_137 = arith.constant 1.000000e+00 : f32
    %422 = vector.broadcast %cst_137 : f32 to vector<8x32xf32>
    %423 = arith.addf %422, %421 : vector<8x32xf32>
    %424 = arith.divf %422, %423 : vector<8x32xf32>
    %425 = arith.mulf %419, %424 : vector<8x32xf32>
    %cst_138 = arith.constant 1.000000e+00 : f32
    %426 = vector.broadcast %cst_138 : f32 to vector<8x32xf32>
    %427 = arith.subf %426, %424 : vector<8x32xf32>
    %428 = arith.mulf %425, %427 : vector<8x32xf32>
    %429 = arith.addf %424, %428 : vector<8x32xf32>
    %430 = arith.mulf %12, %429 : vector<8x32xf32>
    %cst_139 = arith.constant dense<0.000000e+00> : vector<8x32xf32>
    %431 = tpu.matmul %430, %3, %cst_139 {dimension_numbers = #tpu.dot_dimension_numbers<[1], [0], [0], [1], [0, 0, 1, 1], [], []>} : vector<8x32xf32>, vector<32x32xf32>, vector<8x32xf32> -> vector<8x32xf32>
    %cst_140 = arith.constant 1.000000e+00 : f32
    %432 = vector.broadcast %cst_140 : f32 to vector<8x32xf32>
    %433 = arith.subf %432, %416 : vector<8x32xf32>
    %434 = arith.mulf %417, %433 : vector<8x32xf32>
    %435 = arith.addf %416, %434 : vector<8x32xf32>
    %436 = arith.mulf %431, %435 : vector<8x32xf32>
    %cst_141 = arith.constant dense<0.000000e+00> : vector<8x16xf32>
    %437 = tpu.matmul %436, %2, %cst_141 {dimension_numbers = #tpu.dot_dimension_numbers<[1], [0], [0], [1], [0, 0, 1, 1], [], []>} : vector<8x32xf32>, vector<32x16xf32>, vector<8x16xf32> -> vector<8x16xf32>
    %cst_142 = arith.constant 9.200000e-01 : f32
    %438 = vector.broadcast %cst_142 : f32 to vector<8x16xf32>
    %439 = arith.mulf %438, %409 : vector<8x16xf32>
    %cst_143 = arith.constant 8.000000e-02 : f32
    %440 = vector.broadcast %cst_143 : f32 to vector<8x16xf32>
    %441 = arith.mulf %440, %437 : vector<8x16xf32>
    %442 = arith.subf %439, %441 : vector<8x16xf32>
    %c13_i32 = arith.constant 13 : i32
    %cst_144 = arith.constant dense<0.000000e+00> : vector<8x32xf32>
    %443 = tpu.matmul %442, %0, %cst_144 {dimension_numbers = #tpu.dot_dimension_numbers<[1], [0], [0], [1], [0, 0, 1, 1], [], []>} : vector<8x16xf32>, vector<16x32xf32>, vector<8x32xf32> -> vector<8x32xf32>
    %444 = arith.addf %443, %6 : vector<8x32xf32>
    %445 = arith.negf %444 : vector<8x32xf32>
    %446 = math.exp %445 : vector<8x32xf32>
    %cst_145 = arith.constant 1.000000e+00 : f32
    %447 = vector.broadcast %cst_145 : f32 to vector<8x32xf32>
    %448 = arith.addf %447, %446 : vector<8x32xf32>
    %449 = arith.divf %447, %448 : vector<8x32xf32>
    %450 = arith.mulf %444, %449 : vector<8x32xf32>
    %cst_146 = arith.constant dense<0.000000e+00> : vector<8x32xf32>
    %451 = tpu.matmul %450, %1, %cst_146 {dimension_numbers = #tpu.dot_dimension_numbers<[1], [0], [0], [1], [0, 0, 1, 1], [], []>} : vector<8x32xf32>, vector<32x32xf32>, vector<8x32xf32> -> vector<8x32xf32>
    %452 = arith.addf %451, %9 : vector<8x32xf32>
    %453 = arith.negf %452 : vector<8x32xf32>
    %454 = math.exp %453 : vector<8x32xf32>
    %cst_147 = arith.constant 1.000000e+00 : f32
    %455 = vector.broadcast %cst_147 : f32 to vector<8x32xf32>
    %456 = arith.addf %455, %454 : vector<8x32xf32>
    %457 = arith.divf %455, %456 : vector<8x32xf32>
    %458 = arith.mulf %452, %457 : vector<8x32xf32>
    %cst_148 = arith.constant 1.000000e+00 : f32
    %459 = vector.broadcast %cst_148 : f32 to vector<8x32xf32>
    %460 = arith.subf %459, %457 : vector<8x32xf32>
    %461 = arith.mulf %458, %460 : vector<8x32xf32>
    %462 = arith.addf %457, %461 : vector<8x32xf32>
    %463 = arith.mulf %12, %462 : vector<8x32xf32>
    %cst_149 = arith.constant dense<0.000000e+00> : vector<8x32xf32>
    %464 = tpu.matmul %463, %3, %cst_149 {dimension_numbers = #tpu.dot_dimension_numbers<[1], [0], [0], [1], [0, 0, 1, 1], [], []>} : vector<8x32xf32>, vector<32x32xf32>, vector<8x32xf32> -> vector<8x32xf32>
    %cst_150 = arith.constant 1.000000e+00 : f32
    %465 = vector.broadcast %cst_150 : f32 to vector<8x32xf32>
    %466 = arith.subf %465, %449 : vector<8x32xf32>
    %467 = arith.mulf %450, %466 : vector<8x32xf32>
    %468 = arith.addf %449, %467 : vector<8x32xf32>
    %469 = arith.mulf %464, %468 : vector<8x32xf32>
    %cst_151 = arith.constant dense<0.000000e+00> : vector<8x16xf32>
    %470 = tpu.matmul %469, %2, %cst_151 {dimension_numbers = #tpu.dot_dimension_numbers<[1], [0], [0], [1], [0, 0, 1, 1], [], []>} : vector<8x32xf32>, vector<32x16xf32>, vector<8x16xf32> -> vector<8x16xf32>
    %cst_152 = arith.constant 9.200000e-01 : f32
    %471 = vector.broadcast %cst_152 : f32 to vector<8x16xf32>
    %472 = arith.mulf %471, %442 : vector<8x16xf32>
    %cst_153 = arith.constant 8.000000e-02 : f32
    %473 = vector.broadcast %cst_153 : f32 to vector<8x16xf32>
    %474 = arith.mulf %473, %470 : vector<8x16xf32>
    %475 = arith.subf %472, %474 : vector<8x16xf32>
    %c14_i32 = arith.constant 14 : i32
    %cst_154 = arith.constant dense<0.000000e+00> : vector<8x32xf32>
    %476 = tpu.matmul %475, %0, %cst_154 {dimension_numbers = #tpu.dot_dimension_numbers<[1], [0], [0], [1], [0, 0, 1, 1], [], []>} : vector<8x16xf32>, vector<16x32xf32>, vector<8x32xf32> -> vector<8x32xf32>
    %477 = arith.addf %476, %6 : vector<8x32xf32>
    %478 = arith.negf %477 : vector<8x32xf32>
    %479 = math.exp %478 : vector<8x32xf32>
    %cst_155 = arith.constant 1.000000e+00 : f32
    %480 = vector.broadcast %cst_155 : f32 to vector<8x32xf32>
    %481 = arith.addf %480, %479 : vector<8x32xf32>
    %482 = arith.divf %480, %481 : vector<8x32xf32>
    %483 = arith.mulf %477, %482 : vector<8x32xf32>
    %cst_156 = arith.constant dense<0.000000e+00> : vector<8x32xf32>
    %484 = tpu.matmul %483, %1, %cst_156 {dimension_numbers = #tpu.dot_dimension_numbers<[1], [0], [0], [1], [0, 0, 1, 1], [], []>} : vector<8x32xf32>, vector<32x32xf32>, vector<8x32xf32> -> vector<8x32xf32>
    %485 = arith.addf %484, %9 : vector<8x32xf32>
    %486 = arith.negf %485 : vector<8x32xf32>
    %487 = math.exp %486 : vector<8x32xf32>
    %cst_157 = arith.constant 1.000000e+00 : f32
    %488 = vector.broadcast %cst_157 : f32 to vector<8x32xf32>
    %489 = arith.addf %488, %487 : vector<8x32xf32>
    %490 = arith.divf %488, %489 : vector<8x32xf32>
    %491 = arith.mulf %485, %490 : vector<8x32xf32>
    %cst_158 = arith.constant 1.000000e+00 : f32
    %492 = vector.broadcast %cst_158 : f32 to vector<8x32xf32>
    %493 = arith.subf %492, %490 : vector<8x32xf32>
    %494 = arith.mulf %491, %493 : vector<8x32xf32>
    %495 = arith.addf %490, %494 : vector<8x32xf32>
    %496 = arith.mulf %12, %495 : vector<8x32xf32>
    %cst_159 = arith.constant dense<0.000000e+00> : vector<8x32xf32>
    %497 = tpu.matmul %496, %3, %cst_159 {dimension_numbers = #tpu.dot_dimension_numbers<[1], [0], [0], [1], [0, 0, 1, 1], [], []>} : vector<8x32xf32>, vector<32x32xf32>, vector<8x32xf32> -> vector<8x32xf32>
    %cst_160 = arith.constant 1.000000e+00 : f32
    %498 = vector.broadcast %cst_160 : f32 to vector<8x32xf32>
    %499 = arith.subf %498, %482 : vector<8x32xf32>
    %500 = arith.mulf %483, %499 : vector<8x32xf32>
    %501 = arith.addf %482, %500 : vector<8x32xf32>
    %502 = arith.mulf %497, %501 : vector<8x32xf32>
    %cst_161 = arith.constant dense<0.000000e+00> : vector<8x16xf32>
    %503 = tpu.matmul %502, %2, %cst_161 {dimension_numbers = #tpu.dot_dimension_numbers<[1], [0], [0], [1], [0, 0, 1, 1], [], []>} : vector<8x32xf32>, vector<32x16xf32>, vector<8x16xf32> -> vector<8x16xf32>
    %cst_162 = arith.constant 9.200000e-01 : f32
    %504 = vector.broadcast %cst_162 : f32 to vector<8x16xf32>
    %505 = arith.mulf %504, %475 : vector<8x16xf32>
    %cst_163 = arith.constant 8.000000e-02 : f32
    %506 = vector.broadcast %cst_163 : f32 to vector<8x16xf32>
    %507 = arith.mulf %506, %503 : vector<8x16xf32>
    %508 = arith.subf %505, %507 : vector<8x16xf32>
    %c15_i32 = arith.constant 15 : i32
    %cst_164 = arith.constant dense<0.000000e+00> : vector<8x32xf32>
    %509 = tpu.matmul %508, %0, %cst_164 {dimension_numbers = #tpu.dot_dimension_numbers<[1], [0], [0], [1], [0, 0, 1, 1], [], []>} : vector<8x16xf32>, vector<16x32xf32>, vector<8x32xf32> -> vector<8x32xf32>
    %510 = arith.addf %509, %6 : vector<8x32xf32>
    %511 = arith.negf %510 : vector<8x32xf32>
    %512 = math.exp %511 : vector<8x32xf32>
    %cst_165 = arith.constant 1.000000e+00 : f32
    %513 = vector.broadcast %cst_165 : f32 to vector<8x32xf32>
    %514 = arith.addf %513, %512 : vector<8x32xf32>
    %515 = arith.divf %513, %514 : vector<8x32xf32>
    %516 = arith.mulf %510, %515 : vector<8x32xf32>
    %cst_166 = arith.constant dense<0.000000e+00> : vector<8x32xf32>
    %517 = tpu.matmul %516, %1, %cst_166 {dimension_numbers = #tpu.dot_dimension_numbers<[1], [0], [0], [1], [0, 0, 1, 1], [], []>} : vector<8x32xf32>, vector<32x32xf32>, vector<8x32xf32> -> vector<8x32xf32>
    %518 = arith.addf %517, %9 : vector<8x32xf32>
    %519 = arith.negf %518 : vector<8x32xf32>
    %520 = math.exp %519 : vector<8x32xf32>
    %cst_167 = arith.constant 1.000000e+00 : f32
    %521 = vector.broadcast %cst_167 : f32 to vector<8x32xf32>
    %522 = arith.addf %521, %520 : vector<8x32xf32>
    %523 = arith.divf %521, %522 : vector<8x32xf32>
    %524 = arith.mulf %518, %523 : vector<8x32xf32>
    %cst_168 = arith.constant 1.000000e+00 : f32
    %525 = vector.broadcast %cst_168 : f32 to vector<8x32xf32>
    %526 = arith.subf %525, %523 : vector<8x32xf32>
    %527 = arith.mulf %524, %526 : vector<8x32xf32>
    %528 = arith.addf %523, %527 : vector<8x32xf32>
    %529 = arith.mulf %12, %528 : vector<8x32xf32>
    %cst_169 = arith.constant dense<0.000000e+00> : vector<8x32xf32>
    %530 = tpu.matmul %529, %3, %cst_169 {dimension_numbers = #tpu.dot_dimension_numbers<[1], [0], [0], [1], [0, 0, 1, 1], [], []>} : vector<8x32xf32>, vector<32x32xf32>, vector<8x32xf32> -> vector<8x32xf32>
    %cst_170 = arith.constant 1.000000e+00 : f32
    %531 = vector.broadcast %cst_170 : f32 to vector<8x32xf32>
    %532 = arith.subf %531, %515 : vector<8x32xf32>
    %533 = arith.mulf %516, %532 : vector<8x32xf32>
    %534 = arith.addf %515, %533 : vector<8x32xf32>
    %535 = arith.mulf %530, %534 : vector<8x32xf32>
    %cst_171 = arith.constant dense<0.000000e+00> : vector<8x16xf32>
    %536 = tpu.matmul %535, %2, %cst_171 {dimension_numbers = #tpu.dot_dimension_numbers<[1], [0], [0], [1], [0, 0, 1, 1], [], []>} : vector<8x32xf32>, vector<32x16xf32>, vector<8x16xf32> -> vector<8x16xf32>
    %cst_172 = arith.constant 9.200000e-01 : f32
    %537 = vector.broadcast %cst_172 : f32 to vector<8x16xf32>
    %538 = arith.mulf %537, %508 : vector<8x16xf32>
    %cst_173 = arith.constant 8.000000e-02 : f32
    %539 = vector.broadcast %cst_173 : f32 to vector<8x16xf32>
    %540 = arith.mulf %539, %536 : vector<8x16xf32>
    %541 = arith.subf %538, %540 : vector<8x16xf32>
    %c16_i32 = arith.constant 16 : i32
    %cst_174 = arith.constant dense<0.000000e+00> : vector<8x32xf32>
    %542 = tpu.matmul %541, %0, %cst_174 {dimension_numbers = #tpu.dot_dimension_numbers<[1], [0], [0], [1], [0, 0, 1, 1], [], []>} : vector<8x16xf32>, vector<16x32xf32>, vector<8x32xf32> -> vector<8x32xf32>
    %543 = arith.addf %542, %6 : vector<8x32xf32>
    %544 = arith.negf %543 : vector<8x32xf32>
    %545 = math.exp %544 : vector<8x32xf32>
    %cst_175 = arith.constant 1.000000e+00 : f32
    %546 = vector.broadcast %cst_175 : f32 to vector<8x32xf32>
    %547 = arith.addf %546, %545 : vector<8x32xf32>
    %548 = arith.divf %546, %547 : vector<8x32xf32>
    %549 = arith.mulf %543, %548 : vector<8x32xf32>
    %cst_176 = arith.constant dense<0.000000e+00> : vector<8x32xf32>
    %550 = tpu.matmul %549, %1, %cst_176 {dimension_numbers = #tpu.dot_dimension_numbers<[1], [0], [0], [1], [0, 0, 1, 1], [], []>} : vector<8x32xf32>, vector<32x32xf32>, vector<8x32xf32> -> vector<8x32xf32>
    %551 = arith.addf %550, %9 : vector<8x32xf32>
    %552 = arith.negf %551 : vector<8x32xf32>
    %553 = math.exp %552 : vector<8x32xf32>
    %cst_177 = arith.constant 1.000000e+00 : f32
    %554 = vector.broadcast %cst_177 : f32 to vector<8x32xf32>
    %555 = arith.addf %554, %553 : vector<8x32xf32>
    %556 = arith.divf %554, %555 : vector<8x32xf32>
    %557 = arith.mulf %551, %556 : vector<8x32xf32>
    %cst_178 = arith.constant 1.000000e+00 : f32
    %558 = vector.broadcast %cst_178 : f32 to vector<8x32xf32>
    %559 = arith.subf %558, %556 : vector<8x32xf32>
    %560 = arith.mulf %557, %559 : vector<8x32xf32>
    %561 = arith.addf %556, %560 : vector<8x32xf32>
    %562 = arith.mulf %12, %561 : vector<8x32xf32>
    %cst_179 = arith.constant dense<0.000000e+00> : vector<8x32xf32>
    %563 = tpu.matmul %562, %3, %cst_179 {dimension_numbers = #tpu.dot_dimension_numbers<[1], [0], [0], [1], [0, 0, 1, 1], [], []>} : vector<8x32xf32>, vector<32x32xf32>, vector<8x32xf32> -> vector<8x32xf32>
    %cst_180 = arith.constant 1.000000e+00 : f32
    %564 = vector.broadcast %cst_180 : f32 to vector<8x32xf32>
    %565 = arith.subf %564, %548 : vector<8x32xf32>
    %566 = arith.mulf %549, %565 : vector<8x32xf32>
    %567 = arith.addf %548, %566 : vector<8x32xf32>
    %568 = arith.mulf %563, %567 : vector<8x32xf32>
    %cst_181 = arith.constant dense<0.000000e+00> : vector<8x16xf32>
    %569 = tpu.matmul %568, %2, %cst_181 {dimension_numbers = #tpu.dot_dimension_numbers<[1], [0], [0], [1], [0, 0, 1, 1], [], []>} : vector<8x32xf32>, vector<32x16xf32>, vector<8x16xf32> -> vector<8x16xf32>
    %cst_182 = arith.constant 9.200000e-01 : f32
    %570 = vector.broadcast %cst_182 : f32 to vector<8x16xf32>
    %571 = arith.mulf %570, %541 : vector<8x16xf32>
    %cst_183 = arith.constant 8.000000e-02 : f32
    %572 = vector.broadcast %cst_183 : f32 to vector<8x16xf32>
    %573 = arith.mulf %572, %569 : vector<8x16xf32>
    %574 = arith.subf %571, %573 : vector<8x16xf32>
    %c17_i32 = arith.constant 17 : i32
    %cst_184 = arith.constant dense<0.000000e+00> : vector<8x32xf32>
    %575 = tpu.matmul %574, %0, %cst_184 {dimension_numbers = #tpu.dot_dimension_numbers<[1], [0], [0], [1], [0, 0, 1, 1], [], []>} : vector<8x16xf32>, vector<16x32xf32>, vector<8x32xf32> -> vector<8x32xf32>
    %576 = arith.addf %575, %6 : vector<8x32xf32>
    %577 = arith.negf %576 : vector<8x32xf32>
    %578 = math.exp %577 : vector<8x32xf32>
    %cst_185 = arith.constant 1.000000e+00 : f32
    %579 = vector.broadcast %cst_185 : f32 to vector<8x32xf32>
    %580 = arith.addf %579, %578 : vector<8x32xf32>
    %581 = arith.divf %579, %580 : vector<8x32xf32>
    %582 = arith.mulf %576, %581 : vector<8x32xf32>
    %cst_186 = arith.constant dense<0.000000e+00> : vector<8x32xf32>
    %583 = tpu.matmul %582, %1, %cst_186 {dimension_numbers = #tpu.dot_dimension_numbers<[1], [0], [0], [1], [0, 0, 1, 1], [], []>} : vector<8x32xf32>, vector<32x32xf32>, vector<8x32xf32> -> vector<8x32xf32>
    %584 = arith.addf %583, %9 : vector<8x32xf32>
    %585 = arith.negf %584 : vector<8x32xf32>
    %586 = math.exp %585 : vector<8x32xf32>
    %cst_187 = arith.constant 1.000000e+00 : f32
    %587 = vector.broadcast %cst_187 : f32 to vector<8x32xf32>
    %588 = arith.addf %587, %586 : vector<8x32xf32>
    %589 = arith.divf %587, %588 : vector<8x32xf32>
    %590 = arith.mulf %584, %589 : vector<8x32xf32>
    %cst_188 = arith.constant 1.000000e+00 : f32
    %591 = vector.broadcast %cst_188 : f32 to vector<8x32xf32>
    %592 = arith.subf %591, %589 : vector<8x32xf32>
    %593 = arith.mulf %590, %592 : vector<8x32xf32>
    %594 = arith.addf %589, %593 : vector<8x32xf32>
    %595 = arith.mulf %12, %594 : vector<8x32xf32>
    %cst_189 = arith.constant dense<0.000000e+00> : vector<8x32xf32>
    %596 = tpu.matmul %595, %3, %cst_189 {dimension_numbers = #tpu.dot_dimension_numbers<[1], [0], [0], [1], [0, 0, 1, 1], [], []>} : vector<8x32xf32>, vector<32x32xf32>, vector<8x32xf32> -> vector<8x32xf32>
    %cst_190 = arith.constant 1.000000e+00 : f32
    %597 = vector.broadcast %cst_190 : f32 to vector<8x32xf32>
    %598 = arith.subf %597, %581 : vector<8x32xf32>
    %599 = arith.mulf %582, %598 : vector<8x32xf32>
    %600 = arith.addf %581, %599 : vector<8x32xf32>
    %601 = arith.mulf %596, %600 : vector<8x32xf32>
    %cst_191 = arith.constant dense<0.000000e+00> : vector<8x16xf32>
    %602 = tpu.matmul %601, %2, %cst_191 {dimension_numbers = #tpu.dot_dimension_numbers<[1], [0], [0], [1], [0, 0, 1, 1], [], []>} : vector<8x32xf32>, vector<32x16xf32>, vector<8x16xf32> -> vector<8x16xf32>
    %cst_192 = arith.constant 9.200000e-01 : f32
    %603 = vector.broadcast %cst_192 : f32 to vector<8x16xf32>
    %604 = arith.mulf %603, %574 : vector<8x16xf32>
    %cst_193 = arith.constant 8.000000e-02 : f32
    %605 = vector.broadcast %cst_193 : f32 to vector<8x16xf32>
    %606 = arith.mulf %605, %602 : vector<8x16xf32>
    %607 = arith.subf %604, %606 : vector<8x16xf32>
    %c18_i32 = arith.constant 18 : i32
    %cst_194 = arith.constant dense<0.000000e+00> : vector<8x32xf32>
    %608 = tpu.matmul %607, %0, %cst_194 {dimension_numbers = #tpu.dot_dimension_numbers<[1], [0], [0], [1], [0, 0, 1, 1], [], []>} : vector<8x16xf32>, vector<16x32xf32>, vector<8x32xf32> -> vector<8x32xf32>
    %609 = arith.addf %608, %6 : vector<8x32xf32>
    %610 = arith.negf %609 : vector<8x32xf32>
    %611 = math.exp %610 : vector<8x32xf32>
    %cst_195 = arith.constant 1.000000e+00 : f32
    %612 = vector.broadcast %cst_195 : f32 to vector<8x32xf32>
    %613 = arith.addf %612, %611 : vector<8x32xf32>
    %614 = arith.divf %612, %613 : vector<8x32xf32>
    %615 = arith.mulf %609, %614 : vector<8x32xf32>
    %cst_196 = arith.constant dense<0.000000e+00> : vector<8x32xf32>
    %616 = tpu.matmul %615, %1, %cst_196 {dimension_numbers = #tpu.dot_dimension_numbers<[1], [0], [0], [1], [0, 0, 1, 1], [], []>} : vector<8x32xf32>, vector<32x32xf32>, vector<8x32xf32> -> vector<8x32xf32>
    %617 = arith.addf %616, %9 : vector<8x32xf32>
    %618 = arith.negf %617 : vector<8x32xf32>
    %619 = math.exp %618 : vector<8x32xf32>
    %cst_197 = arith.constant 1.000000e+00 : f32
    %620 = vector.broadcast %cst_197 : f32 to vector<8x32xf32>
    %621 = arith.addf %620, %619 : vector<8x32xf32>
    %622 = arith.divf %620, %621 : vector<8x32xf32>
    %623 = arith.mulf %617, %622 : vector<8x32xf32>
    %cst_198 = arith.constant 1.000000e+00 : f32
    %624 = vector.broadcast %cst_198 : f32 to vector<8x32xf32>
    %625 = arith.subf %624, %622 : vector<8x32xf32>
    %626 = arith.mulf %623, %625 : vector<8x32xf32>
    %627 = arith.addf %622, %626 : vector<8x32xf32>
    %628 = arith.mulf %12, %627 : vector<8x32xf32>
    %cst_199 = arith.constant dense<0.000000e+00> : vector<8x32xf32>
    %629 = tpu.matmul %628, %3, %cst_199 {dimension_numbers = #tpu.dot_dimension_numbers<[1], [0], [0], [1], [0, 0, 1, 1], [], []>} : vector<8x32xf32>, vector<32x32xf32>, vector<8x32xf32> -> vector<8x32xf32>
    %cst_200 = arith.constant 1.000000e+00 : f32
    %630 = vector.broadcast %cst_200 : f32 to vector<8x32xf32>
    %631 = arith.subf %630, %614 : vector<8x32xf32>
    %632 = arith.mulf %615, %631 : vector<8x32xf32>
    %633 = arith.addf %614, %632 : vector<8x32xf32>
    %634 = arith.mulf %629, %633 : vector<8x32xf32>
    %cst_201 = arith.constant dense<0.000000e+00> : vector<8x16xf32>
    %635 = tpu.matmul %634, %2, %cst_201 {dimension_numbers = #tpu.dot_dimension_numbers<[1], [0], [0], [1], [0, 0, 1, 1], [], []>} : vector<8x32xf32>, vector<32x16xf32>, vector<8x16xf32> -> vector<8x16xf32>
    %cst_202 = arith.constant 9.200000e-01 : f32
    %636 = vector.broadcast %cst_202 : f32 to vector<8x16xf32>
    %637 = arith.mulf %636, %607 : vector<8x16xf32>
    %cst_203 = arith.constant 8.000000e-02 : f32
    %638 = vector.broadcast %cst_203 : f32 to vector<8x16xf32>
    %639 = arith.mulf %638, %635 : vector<8x16xf32>
    %640 = arith.subf %637, %639 : vector<8x16xf32>
    %c19_i32 = arith.constant 19 : i32
    %cst_204 = arith.constant dense<0.000000e+00> : vector<8x32xf32>
    %641 = tpu.matmul %640, %0, %cst_204 {dimension_numbers = #tpu.dot_dimension_numbers<[1], [0], [0], [1], [0, 0, 1, 1], [], []>} : vector<8x16xf32>, vector<16x32xf32>, vector<8x32xf32> -> vector<8x32xf32>
    %642 = arith.addf %641, %6 : vector<8x32xf32>
    %643 = arith.negf %642 : vector<8x32xf32>
    %644 = math.exp %643 : vector<8x32xf32>
    %cst_205 = arith.constant 1.000000e+00 : f32
    %645 = vector.broadcast %cst_205 : f32 to vector<8x32xf32>
    %646 = arith.addf %645, %644 : vector<8x32xf32>
    %647 = arith.divf %645, %646 : vector<8x32xf32>
    %648 = arith.mulf %642, %647 : vector<8x32xf32>
    %cst_206 = arith.constant dense<0.000000e+00> : vector<8x32xf32>
    %649 = tpu.matmul %648, %1, %cst_206 {dimension_numbers = #tpu.dot_dimension_numbers<[1], [0], [0], [1], [0, 0, 1, 1], [], []>} : vector<8x32xf32>, vector<32x32xf32>, vector<8x32xf32> -> vector<8x32xf32>
    %650 = arith.addf %649, %9 : vector<8x32xf32>
    %651 = arith.negf %650 : vector<8x32xf32>
    %652 = math.exp %651 : vector<8x32xf32>
    %cst_207 = arith.constant 1.000000e+00 : f32
    %653 = vector.broadcast %cst_207 : f32 to vector<8x32xf32>
    %654 = arith.addf %653, %652 : vector<8x32xf32>
    %655 = arith.divf %653, %654 : vector<8x32xf32>
    %656 = arith.mulf %650, %655 : vector<8x32xf32>
    %cst_208 = arith.constant 1.000000e+00 : f32
    %657 = vector.broadcast %cst_208 : f32 to vector<8x32xf32>
    %658 = arith.subf %657, %655 : vector<8x32xf32>
    %659 = arith.mulf %656, %658 : vector<8x32xf32>
    %660 = arith.addf %655, %659 : vector<8x32xf32>
    %661 = arith.mulf %12, %660 : vector<8x32xf32>
    %cst_209 = arith.constant dense<0.000000e+00> : vector<8x32xf32>
    %662 = tpu.matmul %661, %3, %cst_209 {dimension_numbers = #tpu.dot_dimension_numbers<[1], [0], [0], [1], [0, 0, 1, 1], [], []>} : vector<8x32xf32>, vector<32x32xf32>, vector<8x32xf32> -> vector<8x32xf32>
    %cst_210 = arith.constant 1.000000e+00 : f32
    %663 = vector.broadcast %cst_210 : f32 to vector<8x32xf32>
    %664 = arith.subf %663, %647 : vector<8x32xf32>
    %665 = arith.mulf %648, %664 : vector<8x32xf32>
    %666 = arith.addf %647, %665 : vector<8x32xf32>
    %667 = arith.mulf %662, %666 : vector<8x32xf32>
    %cst_211 = arith.constant dense<0.000000e+00> : vector<8x16xf32>
    %668 = tpu.matmul %667, %2, %cst_211 {dimension_numbers = #tpu.dot_dimension_numbers<[1], [0], [0], [1], [0, 0, 1, 1], [], []>} : vector<8x32xf32>, vector<32x16xf32>, vector<8x16xf32> -> vector<8x16xf32>
    %cst_212 = arith.constant 9.200000e-01 : f32
    %669 = vector.broadcast %cst_212 : f32 to vector<8x16xf32>
    %670 = arith.mulf %669, %640 : vector<8x16xf32>
    %cst_213 = arith.constant 8.000000e-02 : f32
    %671 = vector.broadcast %cst_213 : f32 to vector<8x16xf32>
    %672 = arith.mulf %671, %668 : vector<8x16xf32>
    %673 = arith.subf %670, %672 : vector<8x16xf32>
    %c0_214 = arith.constant 0 : index
    %c0_215 = arith.constant 0 : index
    %674 = vector.load %arg8[%c0_214, %c0_215] : memref<8x16xf32, #tpu.memory_space<vmem>>, vector<8x16xf32>
    tpu.vector_store %arg8[%c0_214, %c0_215], %673 {strides = array<i32>} : memref<8x16xf32, #tpu.memory_space<vmem>>, vector<8x16xf32>,
    return
  }
}

</mosaic_0001>

<llo_original>
// kernel: tpu_custom_call.1
$region0: #{tpu_custom_call.1}
  #allocation0 [shape = 'u32[]', space=smem, size = 0x4, offset = 0x4, fixed_abs, tag = 'smem constant byte address 0x4 - core index']
  #allocation1 [shape = 'u32[144,128]{1,0:T(1,128)}', space=vmem, size = 0x12000, scoped, tag = 'internal scratch']
  %s0 = inlined_call_operand.hbm [shape: f32[8,16], index: 0, kind: input, shape index: {}, may-alias: {0,8}]
  %s1 = inlined_call_operand.hbm [shape: f32[16,32], index: 1, kind: input, shape index: {}]
  %s2 = inlined_call_operand.vmem [shape: f32[1,32], index: 2, kind: input, shape index: {}]
  %s3 = inlined_call_operand.vmem [shape: f32[32,32], index: 3, kind: input, shape index: {}]
  %s4 = inlined_call_operand.vmem [shape: f32[1,32], index: 4, kind: input, shape index: {}]
  %s5 = inlined_call_operand.vmem [shape: f32[32,16], index: 5, kind: input, shape index: {}]
  %s6 = inlined_call_operand.vmem [shape: f32[32,32], index: 6, kind: input, shape index: {}]
  %s7 = inlined_call_operand.vmem [shape: f32[1,32], index: 7, kind: input, shape index: {}]
  %s8 = inlined_call_operand.hbm [shape: f32[8,16], index: 8, kind: output, shape index: {}, may-alias: {0,8}]
  %s9 = sld [smem:[#allocation0]]
  $region50: #{tpu_custom_call.1} parent=0
    _
  %s11 = ssub.s32 1, %s9
  %s12 = scalar_select 0, %s11, %s9
  $region1: #{tpu_custom_call.1} parent=0
    #allocation2 [shape = 'u8[4096]{0}', space=vmem, size = 0x1000, scoped, tag = 'input window, operand 0, single buffered']
    #allocation3 [shape = 's32[1]{0}', space=sflag, size = 0x4, scoped, tag = 'scoped memory for tpu_custom_call.1']
    #allocation4 [shape = 's32[1]{0}', space=sflag, size = 0x4, scoped, tag = 'scoped memory for tpu_custom_call.1']
    #allocation5 [shape = 'u8[8192]{0}', space=vmem, size = 0x2000, scoped, tag = 'input window, operand 1, single buffered']
    #allocation6 [shape = 's32[1]{0}', space=sflag, size = 0x4, scoped, tag = 'scoped memory for tpu_custom_call.1']
    #allocation7 [shape = 'u8[4096]{0}', space=vmem, size = 0x1000, scoped, tag = 'output window, operand 0, single buffered']
    %13 = vsyncpa [#allocation3], 0
    %14 = vsyncpa [#allocation6], 0
    %15 = vsyncpa [#allocation4], 0
    // Predicated region
    $region2: #{tpu_custom_call.1} parent=1 // pred_check
      _
    $region3: #{tpu_custom_call.1} parent=1 // pred_check_branch
      %17 = sbr.rel (0) target = $region5
    $region4: #{tpu_custom_call.1} parent=1 // pred_region
      %s19 = ssub.s32 128, 128
      %20 = vsyncadd [#allocation3], %s19
      %s22 = sshll.u32 [#allocation2], 4
      %s23 = int_to_ptr.vmem [resolvable:$true] %s22
      %25 = dma.hbm_to_vmem [thread:$0]  %s0, 128, %s23, [#allocation3]
    $region5: #{tpu_custom_call.1} parent=1 // pred_fallthru
      _
    // Predicated region
    $region6: #{tpu_custom_call.1} parent=1 // pred_check
      _
    $region7: #{tpu_custom_call.1} parent=1 // pred_check_branch
      %27 = sbr.rel (0) target = $region9
    $region8: #{tpu_custom_call.1} parent=1 // pred_region
      %s29 = ssub.s32 256, 256
      %30 = vsyncadd [#allocation6], %s29
      %s31 = sshll.u32 [#allocation5], 4
      %s32 = int_to_ptr.vmem [resolvable:$true] %s31
      %37 = dma.hbm_to_vmem [thread:$0]  %s1, 256, %s32, [#allocation6], 128, 128, 8
    $region9: #{tpu_custom_call.1} parent=1 // pred_fallthru
      _
    // Predicated region
    $region10: #{tpu_custom_call.1} parent=1 // pred_check
      _
    $region11: #{tpu_custom_call.1} parent=1 // pred_check_branch
      %39 = sbr.rel (0) target = $region13
    $region12: #{tpu_custom_call.1} parent=1 // pred_region
      _
    $region13: #{tpu_custom_call.1} parent=1 // pred_fallthru
      _
    // Predicated region
    $region14: #{tpu_custom_call.1} parent=1 // pred_check
      _
    $region15: #{tpu_custom_call.1} parent=1 // pred_check_branch
      %41 = sbr.rel (0) target = $region17
    $region16: #{tpu_custom_call.1} parent=1 // pred_region
      _
    $region17: #{tpu_custom_call.1} parent=1 // pred_fallthru
      _
    // Predicated region
    $region18: #{tpu_custom_call.1} parent=1 // pred_check
      _
    $region19: #{tpu_custom_call.1} parent=1 // pred_check_branch
      %43 = sbr.rel (0) target = $region21
    $region20: #{tpu_custom_call.1} parent=1 // pred_region
      _
    $region21: #{tpu_custom_call.1} parent=1 // pred_fallthru
      _
    // Predicated region
    $region22: #{tpu_custom_call.1} parent=1 // pred_check
      _
    $region23: #{tpu_custom_call.1} parent=1 // pred_check_branch
      %45 = sbr.rel (0) target = $region25
    $region24: #{tpu_custom_call.1} parent=1 // pred_region
      _
    $region25: #{tpu_custom_call.1} parent=1 // pred_fallthru
      _
    // Predicated region
    $region26: #{tpu_custom_call.1} parent=1 // pred_check
      _
    $region27: #{tpu_custom_call.1} parent=1 // pred_check_branch
      %47 = sbr.rel (0) target = $region29
    $region28: #{tpu_custom_call.1} parent=1 // pred_region
      _
    $region29: #{tpu_custom_call.1} parent=1 // pred_fallthru
      _
    // Predicated region
    $region30: #{tpu_custom_call.1} parent=1 // pred_check
      _
    $region31: #{tpu_custom_call.1} parent=1 // pred_check_branch
      %49 = sbr.rel (0) target = $region33
    $region32: #{tpu_custom_call.1} parent=1 // pred_region
      _
    $region33: #{tpu_custom_call.1} parent=1 // pred_fallthru
      _
    // Predicated region
    $region34: #{tpu_custom_call.1} parent=1 // pred_check
      _
    $region35: #{tpu_custom_call.1} parent=1 // pred_check_branch
      %51 = sbr.rel (0) target = $region37
    $region36: #{tpu_custom_call.1} parent=1 // pred_region
      %52 = dma.done [#allocation3], 128
    $region37: #{tpu_custom_call.1} parent=1 // pred_fallthru
      _
    // Predicated region
    $region38: #{tpu_custom_call.1} parent=1 // pred_check
      _
    $region39: #{tpu_custom_call.1} parent=1 // pred_check_branch
      %54 = sbr.rel (0) target = $region41
    $region40: #{tpu_custom_call.1} parent=1 // pred_region
      %55 = dma.done [#allocation6], 256
    $region41: #{tpu_custom_call.1} parent=1 // pred_fallthru
      _
    %v56 = vld [vmem:[#allocation5] sm:$0xff]
    %v57 = vld [vmem:[#allocation5 + $0x8] sm:$0xff]
    %v58 = vld [vmem:[%s3] sm:$0xff]
    %v59 = vld [vmem:[%s3 + $0x8] sm:$0xff]
    %v60 = vld [vmem:[%s3 + $0x10] sm:$0xff]
    %v61 = vld [vmem:[%s3 + $0x18] sm:$0xff]
    %v62 = vld [vmem:[%s5] sm:$0xff]
    %v63 = vld [vmem:[%s5 + $0x8] sm:$0xff]
    %v64 = vld [vmem:[%s5 + $0x10] sm:$0xff]
    %v65 = vld [vmem:[%s5 + $0x18] sm:$0xff]
    %v66 = vld [vmem:[%s6] sm:$0xff]
    %v67 = vld [vmem:[%s6 + $0x8] sm:$0xff]
    %v68 = vld [vmem:[%s6 + $0x10] sm:$0xff]
    %v69 = vld [vmem:[%s6 + $0x18] sm:$0xff]
    %v70 = vld [vmem:[%s2] sm:$0x1]
    %v72 = vlaneseq
    %v73 = vshrl.u32 %v72, 7
    %v74 = vsub.s32 0, %v73
    %v75 = vrot.slane %v70, %v74
    %v77 = vld [vmem:[%s4] sm:$0x1]
    %v79 = vlaneseq
    %v80 = vshrl.u32 %v79, 7
    %v81 = vsub.s32 0, %v80
    %v82 = vrot.slane %v77, %v81
    %v84 = vld [vmem:[%s7] sm:$0x1]
    %v86 = vlaneseq
    %v87 = vshrl.u32 %v86, 7
    %v88 = vsub.s32 0, %v87
    %v89 = vrot.slane %v84, %v88
    %v91 = vld [vmem:[#allocation2] sm:$0xff]
    %vm92 = vcmask 130048
    %v94 = vsel %vm92, %v91, 0
    %96 = vmatprep.subr.mxu0 0.0
    %97 = vmatpush1.msra.mxu0 %v56
    %98 = vmatprep.subr.mxu0 0.0
    %99 = vmatpush1.msra.mxu0 %v57
    %100 = vmatprep.subr.mxu0 0.0
    %101 = vmatpush1.msra.mxu0 0.0
    %102 = vmatprep.subr.mxu0 0.0
    %103 = vmatpush1.msra.mxu0 0.0
    %104 = vmatprep.subr.mxu0 0.0
    %105 = vmatpush1.msra.mxu0 0.0
    %106 = vmatprep.subr.mxu0 0.0
    %107 = vmatpush1.msra.mxu0 0.0
    %108 = vmatprep.subr.mxu0 0.0
    %109 = vmatpush1.msra.mxu0 0.0
    %110 = vmatprep.subr.mxu0 0.0
    %111 = vmatpush1.msra.mxu0 0.0
    %112 = vmatprep.subr.mxu0 0.0
    %113 = vmatpush1.msra.mxu0 0.0
    %114 = vmatprep.subr.mxu0 0.0
    %115 = vmatpush1.msra.mxu0 0.0
    %116 = vmatprep.subr.mxu0 0.0
    %117 = vmatpush1.msra.mxu0 0.0
    %118 = vmatprep.subr.mxu0 0.0
    %119 = vmatpush1.msra.mxu0 0.0
    %120 = vmatprep.subr.mxu0 0.0
    %121 = vmatpush1.msra.mxu0 0.0
    %122 = vmatprep.subr.mxu0 0.0
    %123 = vmatpush1.msra.mxu0 0.0
    %124 = vmatprep.subr.mxu0 0.0
    %125 = vmatpush1.msra.mxu0 0.0
    %126 = vmatprep.subr.mxu0 0.0
    %127 = vmatpush1.msra.mxu0 0.0
    %128 = vmatprep.subr.mxu0 0.0
    %129 = vmatpush1.msra.mxu0 0.0
    %130 = vmatprep.subr.mxu0 0.0
    %131 = vmatpush1.msra.mxu0 0.0
    %132 = vmatprep.subr.mxu0 0.0
    %133 = vmatpush1.msra.mxu0 0.0
    %134 = vmatprep.subr.mxu0 0.0
    %135 = vmatpush1.msra.mxu0 0.0
    %136 = vmatprep.subr.mxu0 0.0
    %137 = vmatpush1.msra.mxu0 0.0
    %138 = vmatprep.subr.mxu0 0.0
    %139 = vmatpush1.msra.mxu0 0.0
    %140 = vmatprep.subr.mxu0 0.0
    %141 = vmatpush1.msra.mxu0 0.0
    %142 = vmatprep.subr.mxu0 0.0
    %143 = vmatpush1.msra.mxu0 0.0
    %144 = vmatprep.subr.mxu0 0.0
    %145 = vmatpush1.msra.mxu0 0.0
    %146 = vmatprep.subr.mxu0 0.0
    %147 = vmatpush1.msra.mxu0 0.0
    %148 = vmatprep.subr.mxu0 0.0
    %149 = vmatpush1.msra.mxu0 0.0
    %150 = vmatprep.subr.mxu0 0.0
    %151 = vmatpush1.msra.mxu0 0.0
    %152 = vmatprep.subr.mxu0 0.0
    %153 = vmatpush1.msra.mxu0 0.0
    %154 = vmatprep.subr.mxu0 0.0
    %155 = vmatpush1.msra.mxu0 0.0
    %156 = vmatprep.subr.mxu0 0.0
    %157 = vmatpush1.msra.mxu0 0.0
    %158 = vmatprep.subr.mxu0 0.0
    %159 = vmatpush1.msra.mxu0 0.0
    %160 = vmatprep.mubr.f32.mxu0 0.0
    %161 = vmatmul.mubr.f32.gmra.mrb[0].mxu0 %v94
    %v162 = vpop.f32.mrb[0].mxu0
    %v163 = vadd.f32 %v75, %v162
    %v164 = vpop.f32.mrb[0].mxu0
    %165 = vdwg.mxu0
    %v166 = vxor.u32 %v163, 2147483648
    %v167 = vmul.f32 %v166, 1.442695
    %v168 = vpow.pop %v167
    %v169 = vadd.f32 %v168, 1.0
    %v170 = vrcp.pop %v169
    %v171 = vmul.f32 1.0, %v170
    %v172 = vmul.f32 %v163, %v171
    %vm173 = vcmask 261120
    %v175 = vsel %vm173, %v172, 0
    %177 = vmatprep.subr.mxu0 0.0
    %178 = vmatpush1.msra.mxu0 %v58
    %179 = vmatprep.subr.mxu0 0.0
    %180 = vmatpush1.msra.mxu0 %v59
    %181 = vmatprep.subr.mxu0 0.0
    %182 = vmatpush1.msra.mxu0 %v60
    %183 = vmatprep.subr.mxu0 0.0
    %184 = vmatpush1.msra.mxu0 %v61
    %185 = vmatprep.subr.mxu0 0.0
    %186 = vmatpush1.msra.mxu0 0.0
    %187 = vmatprep.subr.mxu0 0.0
    %188 = vmatpush1.msra.mxu0 0.0
    %189 = vmatprep.subr.mxu0 0.0
    %190 = vmatpush1.msra.mxu0 0.0
    %191 = vmatprep.subr.mxu0 0.0
    %192 = vmatpush1.msra.mxu0 0.0
    %193 = vmatprep.subr.mxu0 0.0
    %194 = vmatpush1.msra.mxu0 0.0
    %195 = vmatprep.subr.mxu0 0.0
    %196 = vmatpush1.msra.mxu0 0.0
    %197 = vmatprep.subr.mxu0 0.0
    %198 = vmatpush1.msra.mxu0 0.0
    %199 = vmatprep.subr.mxu0 0.0
    %200 = vmatpush1.msra.mxu0 0.0
    %201 = vmatprep.subr.mxu0 0.0
    %202 = vmatpush1.msra.mxu0 0.0
    %203 = vmatprep.subr.mxu0 0.0
    %204 = vmatpush1.msra.mxu0 0.0
    %205 = vmatprep.subr.mxu0 0.0
    %206 = vmatpush1.msra.mxu0 0.0
    %207 = vmatprep.subr.mxu0 0.0
    %208 = vmatpush1.msra.mxu0 0.0
    %209 = vmatprep.subr.mxu0 0.0
    %210 = vmatpush1.msra.mxu0 0.0
    %211 = vmatprep.subr.mxu0 0.0
    %212 = vmatpush1.msra.mxu0 0.0
    %213 = vmatprep.subr.mxu0 0.0
    %214 = vmatpush1.msra.mxu0 0.0
    %215 = vmatprep.subr.mxu0 0.0
    %216 = vmatpush1.msra.mxu0 0.0
    %217 = vmatprep.subr.mxu0 0.0
    %218 = vmatpush1.msra.mxu0 0.0
    %219 = vmatprep.subr.mxu0 0.0
    %220 = vmatpush1.msra.mxu0 0.0
    %221 = vmatprep.subr.mxu0 0.0
    %222 = vmatpush1.msra.mxu0 0.0
    %223 = vmatprep.subr.mxu0 0.0
    %224 = vmatpush1.msra.mxu0 0.0
    %225 = vmatprep.subr.mxu0 0.0
    %226 = vmatpush1.msra.mxu0 0.0
    %227 = vmatprep.subr.mxu0 0.0
    %228 = vmatpush1.msra.mxu0 0.0
    %229 = vmatprep.subr.mxu0 0.0
    %230 = vmatpush1.msra.mxu0 0.0
    %231 = vmatprep.subr.mxu0 0.0
    %232 = vmatpush1.msra.mxu0 0.0
    %233 = vmatprep.subr.mxu0 0.0
    %234 = vmatpush1.msra.mxu0 0.0
    %235 = vmatprep.subr.mxu0 0.0
    %236 = vmatpush1.msra.mxu0 0.0
    %237 = vmatprep.subr.mxu0 0.0
    %238 = vmatpush1.msra.mxu0 0.0
    %239 = vmatprep.subr.mxu0 0.0
    %240 = vmatpush1.msra.mxu0 0.0
    %241 = vmatprep.mubr.f32.mxu0 0.0
    %242 = vmatmul.mubr.f32.gmra.mrb[0].mxu0 %v175
    %v243 = vpop.f32.mrb[0].mxu0
    %v244 = vadd.f32 %v82, %v243
    %v245 = vpop.f32.mrb[0].mxu0
    %246 = vdwg.mxu0
    %v247 = vxor.u32 %v244, 2147483648
    %v248 = vmul.f32 %v247, 1.442695
    %v249 = vpow.pop %v248
    %v250 = vadd.f32 %v249, 1.0
    %v251 = vrcp.pop %v250
    %v252 = vmul.f32 1.0, %v251
    %v253 = vmul.f32 %v244, %v252
    %v254 = vsub.f32 1.0, %v252
    %v255 = vmul.f32 %v253, %v254
    %v256 = vadd.f32 %v252, %v255
    %v257 = vmul.f32 %v89, %v256
    %v259 = vsel %vm173, %v257, 0
    %261 = vmatprep.subr.mxu0 0.0
    %262 = vmatpush1.msra.mxu0 %v66
    %263 = vmatprep.subr.mxu0 0.0
    %264 = vmatpush1.msra.mxu0 %v67
    %265 = vmatprep.subr.mxu0 0.0
    %266 = vmatpush1.msra.mxu0 %v68
    %267 = vmatprep.subr.mxu0 0.0
    %268 = vmatpush1.msra.mxu0 %v69
    %269 = vmatprep.subr.mxu0 0.0
    %270 = vmatpush1.msra.mxu0 0.0
    %271 = vmatprep.subr.mxu0 0.0
    %272 = vmatpush1.msra.mxu0 0.0
    %273 = vmatprep.subr.mxu0 0.0
    %274 = vmatpush1.msra.mxu0 0.0
    %275 = vmatprep.subr.mxu0 0.0
    %276 = vmatpush1.msra.mxu0 0.0
    %277 = vmatprep.subr.mxu0 0.0
    %278 = vmatpush1.msra.mxu0 0.0
    %279 = vmatprep.subr.mxu0 0.0
    %280 = vmatpush1.msra.mxu0 0.0
    %281 = vmatprep.subr.mxu0 0.0
    %282 = vmatpush1.msra.mxu0 0.0
    %283 = vmatprep.subr.mxu0 0.0
    %284 = vmatpush1.msra.mxu0 0.0
    %285 = vmatprep.subr.mxu0 0.0
    %286 = vmatpush1.msra.mxu0 0.0
    %287 = vmatprep.subr.mxu0 0.0
    %288 = vmatpush1.msra.mxu0 0.0
    %289 = vmatprep.subr.mxu0 0.0
    %290 = vmatpush1.msra.mxu0 0.0
    %291 = vmatprep.subr.mxu0 0.0
    %292 = vmatpush1.msra.mxu0 0.0
    %293 = vmatprep.subr.mxu0 0.0
    %294 = vmatpush1.msra.mxu0 0.0
    %295 = vmatprep.subr.mxu0 0.0
    %296 = vmatpush1.msra.mxu0 0.0
    %297 = vmatprep.subr.mxu0 0.0
    %298 = vmatpush1.msra.mxu0 0.0
    %299 = vmatprep.subr.mxu0 0.0
    %300 = vmatpush1.msra.mxu0 0.0
    %301 = vmatprep.subr.mxu0 0.0
    %302 = vmatpush1.msra.mxu0 0.0
    %303 = vmatprep.subr.mxu0 0.0
    %304 = vmatpush1.msra.mxu0 0.0
    %305 = vmatprep.subr.mxu0 0.0
    %306 = vmatpush1.msra.mxu0 0.0
    %307 = vmatprep.subr.mxu0 0.0
    %308 = vmatpush1.msra.mxu0 0.0
    %309 = vmatprep.subr.mxu0 0.0
    %310 = vmatpush1.msra.mxu0 0.0
    %311 = vmatprep.subr.mxu0 0.0
    %312 = vmatpush1.msra.mxu0 0.0
    %313 = vmatprep.subr.mxu0 0.0
    %314 = vmatpush1.msra.mxu0 0.0
    %315 = vmatprep.subr.mxu0 0.0
    %316 = vmatpush1.msra.mxu0 0.0
    %317 = vmatprep.subr.mxu0 0.0
    %318 = vmatpush1.msra.mxu0 0.0
    %319 = vmatprep.subr.mxu0 0.0
    %320 = vmatpush1.msra.mxu0 0.0
    %321 = vmatprep.subr.mxu0 0.0
    %322 = vmatpush1.msra.mxu0 0.0
    %323 = vmatprep.subr.mxu0 0.0
    %324 = vmatpush1.msra.mxu0 0.0
    %325 = vmatprep.mubr.f32.mxu0 0.0
    %326 = vmatmul.mubr.f32.gmra.mrb[0].mxu0 %v259
    %v327 = vpop.f32.mrb[0].mxu0
    %v328 = vadd.f32 0.0, %v327
    %v329 = vpop.f32.mrb[0].mxu0
    %330 = vdwg.mxu0
    %v331 = vsub.f32 1.0, %v171
    %v332 = vmul.f32 %v172, %v331
    %v333 = vadd.f32 %v171, %v332
    %v334 = vmul.f32 %v328, %v333
    %v336 = vsel %vm173, %v334, 0
    %338 = vmatprep.subr.mxu0 0.0
    %339 = vmatpush1.msra.mxu0 %v62
    %340 = vmatprep.subr.mxu0 0.0
    %341 = vmatpush1.msra.mxu0 %v63
    %342 = vmatprep.subr.mxu0 0.0
    %343 = vmatpush1.msra.mxu0 %v64
    %344 = vmatprep.subr.mxu0 0.0
    %345 = vmatpush1.msra.mxu0 %v65
    %346 = vmatprep.subr.mxu0 0.0
    %347 = vmatpush1.msra.mxu0 0.0
    %348 = vmatprep.subr.mxu0 0.0
    %349 = vmatpush1.msra.mxu0 0.0
    %350 = vmatprep.subr.mxu0 0.0
    %351 = vmatpush1.msra.mxu0 0.0
    %352 = vmatprep.subr.mxu0 0.0
    %353 = vmatpush1.msra.mxu0 0.0
    %354 = vmatprep.subr.mxu0 0.0
    %355 = vmatpush1.msra.mxu0 0.0
    %356 = vmatprep.subr.mxu0 0.0
    %357 = vmatpush1.msra.mxu0 0.0
    %358 = vmatprep.subr.mxu0 0.0
    %359 = vmatpush1.msra.mxu0 0.0
    %360 = vmatprep.subr.mxu0 0.0
    %361 = vmatpush1.msra.mxu0 0.0
    %362 = vmatprep.subr.mxu0 0.0
    %363 = vmatpush1.msra.mxu0 0.0
    %364 = vmatprep.subr.mxu0 0.0
    %365 = vmatpush1.msra.mxu0 0.0
    %366 = vmatprep.subr.mxu0 0.0
    %367 = vmatpush1.msra.mxu0 0.0
    %368 = vmatprep.subr.mxu0 0.0
    %369 = vmatpush1.msra.mxu0 0.0
    %370 = vmatprep.subr.mxu0 0.0
    %371 = vmatpush1.msra.mxu0 0.0
    %372 = vmatprep.subr.mxu0 0.0
    %373 = vmatpush1.msra.mxu0 0.0
    %374 = vmatprep.subr.mxu0 0.0
    %375 = vmatpush1.msra.mxu0 0.0
    %376 = vmatprep.subr.mxu0 0.0
    %377 = vmatpush1.msra.mxu0 0.0
    %378 = vmatprep.subr.mxu0 0.0
    %379 = vmatpush1.msra.mxu0 0.0
    %380 = vmatprep.subr.mxu0 0.0
    %381 = vmatpush1.msra.mxu0 0.0
    %382 = vmatprep.subr.mxu0 0.0
    %383 = vmatpush1.msra.mxu0 0.0
    %384 = vmatprep.subr.mxu0 0.0
    %385 = vmatpush1.msra.mxu0 0.0
    %386 = vmatprep.subr.mxu0 0.0
    %387 = vmatpush1.msra.mxu0 0.0
    %388 = vmatprep.subr.mxu0 0.0
    %389 = vmatpush1.msra.mxu0 0.0
    %390 = vmatprep.subr.mxu0 0.0
    %391 = vmatpush1.msra.mxu0 0.0
    %392 = vmatprep.subr.mxu0 0.0
    %393 = vmatpush1.msra.mxu0 0.0
    %394 = vmatprep.subr.mxu0 0.0
    %395 = vmatpush1.msra.mxu0 0.0
    %396 = vmatprep.subr.mxu0 0.0
    %397 = vmatpush1.msra.mxu0 0.0
    %398 = vmatprep.subr.mxu0 0.0
    %399 = vmatpush1.msra.mxu0 0.0
    %400 = vmatprep.subr.mxu0 0.0
    %401 = vmatpush1.msra.mxu0 0.0
    %402 = vmatprep.mubr.f32.mxu0 0.0
    %403 = vmatmul.mubr.f32.gmra.mrb[0].mxu0 %v336
    %v404 = vpop.f32.mrb[0].mxu0
    %v405 = vadd.f32 0.0, %v404
    %v406 = vpop.f32.mrb[0].mxu0
    %407 = vdwg.mxu0
    %v408 = vmul.f32 %v91, 0.92
    %v409 = vmul.f32 %v405, 0.08
    %v410 = vsub.f32 %v408, %v409
    %v412 = vsel %vm92, %v410, 0
    %414 = vmatprep.subr.mxu0 0.0
    %415 = vmatpush1.msra.mxu0 %v56
    %416 = vmatprep.subr.mxu0 0.0
    %417 = vmatpush1.msra.mxu0 %v57
    %418 = vmatprep.subr.mxu0 0.0
    %419 = vmatpush1.msra.mxu0 0.0
    %420 = vmatprep.subr.mxu0 0.0
    %421 = vmatpush1.msra.mxu0 0.0
    %422 = vmatprep.subr.mxu0 0.0
    %423 = vmatpush1.msra.mxu0 0.0
    %424 = vmatprep.subr.mxu0 0.0
    %425 = vmatpush1.msra.mxu0 0.0
    %426 = vmatprep.subr.mxu0 0.0
    %427 = vmatpush1.msra.mxu0 0.0
    %428 = vmatprep.subr.mxu0 0.0
    %429 = vmatpush1.msra.mxu0 0.0
    %430 = vmatprep.subr.mxu0 0.0
    %431 = vmatpush1.msra.mxu0 0.0
    %432 = vmatprep.subr.mxu0 0.0
    %433 = vmatpush1.msra.mxu0 0.0
    %434 = vmatprep.subr.mxu0 0.0
    %435 = vmatpush1.msra.mxu0 0.0
    %436 = vmatprep.subr.mxu0 0.0
    %437 = vmatpush1.msra.mxu0 0.0
    %438 = vmatprep.subr.mxu0 0.0
    %439 = vmatpush1.msra.mxu0 0.0
    %440 = vmatprep.subr.mxu0 0.0
    %441 = vmatpush1.msra.mxu0 0.0
    %442 = vmatprep.subr.mxu0 0.0
    %443 = vmatpush1.msra.mxu0 0.0
    %444 = vmatprep.subr.mxu0 0.0
    %445 = vmatpush1.msra.mxu0 0.0
    %446 = vmatprep.subr.mxu0 0.0
    %447 = vmatpush1.msra.mxu0 0.0
    %448 = vmatprep.subr.mxu0 0.0
    %449 = vmatpush1.msra.mxu0 0.0
    %450 = vmatprep.subr.mxu0 0.0
    %451 = vmatpush1.msra.mxu0 0.0
    %452 = vmatprep.subr.mxu0 0.0
    %453 = vmatpush1.msra.mxu0 0.0
    %454 = vmatprep.subr.mxu0 0.0
    %455 = vmatpush1.msra.mxu0 0.0
    %456 = vmatprep.subr.mxu0 0.0
    %457 = vmatpush1.msra.mxu0 0.0
    %458 = vmatprep.subr.mxu0 0.0
    %459 = vmatpush1.msra.mxu0 0.0
    %460 = vmatprep.subr.mxu0 0.0
    %461 = vmatpush1.msra.mxu0 0.0
    %462 = vmatprep.subr.mxu0 0.0
    %463 = vmatpush1.msra.mxu0 0.0
    %464 = vmatprep.subr.mxu0 0.0
    %465 = vmatpush1.msra.mxu0 0.0
    %466 = vmatprep.subr.mxu0 0.0
    %467 = vmatpush1.msra.mxu0 0.0
    %468 = vmatprep.subr.mxu0 0.0
    %469 = vmatpush1.msra.mxu0 0.0
    %470 = vmatprep.subr.mxu0 0.0
    %471 = vmatpush1.msra.mxu0 0.0
    %472 = vmatprep.subr.mxu0 0.0
    %473 = vmatpush1.msra.mxu0 0.0
    %474 = vmatprep.subr.mxu0 0.0
    %475 = vmatpush1.msra.mxu0 0.0
    %476 = vmatprep.subr.mxu0 0.0
    %477 = vmatpush1.msra.mxu0 0.0
    %478 = vmatprep.mubr.f32.mxu0 0.0
    %479 = vmatmul.mubr.f32.gmra.mrb[0].mxu0 %v412
    %v480 = vpop.f32.mrb[0].mxu0
    %v481 = vadd.f32 %v75, %v480
    %v482 = vpop.f32.mrb[0].mxu0
    %483 = vdwg.mxu0
    %v484 = vxor.u32 %v481, 2147483648
    %v485 = vmul.f32 %v484, 1.442695
    %v486 = vpow.pop %v485
    %v487 = vadd.f32 %v486, 1.0
    %v488 = vrcp.pop %v487
    %v489 = vmul.f32 1.0, %v488
    %v490 = vmul.f32 %v481, %v489
    %v492 = vsel %vm173, %v490, 0
    %494 = vmatprep.subr.mxu0 0.0
    %495 = vmatpush1.msra.mxu0 %v58
    %496 = vmatprep.subr.mxu0 0.0
    %497 = vmatpush1.msra.mxu0 %v59
    %498 = vmatprep.subr.mxu0 0.0
    %499 = vmatpush1.msra.mxu0 %v60
    %500 = vmatprep.subr.mxu0 0.0
    %501 = vmatpush1.msra.mxu0 %v61
    %502 = vmatprep.subr.mxu0 0.0
    %503 = vmatpush1.msra.mxu0 0.0
    %504 = vmatprep.subr.mxu0 0.0
    %505 = vmatpush1.msra.mxu0 0.0
    %506 = vmatprep.subr.mxu0 0.0
    %507 = vmatpush1.msra.mxu0 0.0
    %508 = vmatprep.subr.mxu0 0.0
    %509 = vmatpush1.msra.mxu0 0.0
    %510 = vmatprep.subr.mxu0 0.0
    %511 = vmatpush1.msra.mxu0 0.0
    %512 = vmatprep.subr.mxu0 0.0
    %513 = vmatpush1.msra.mxu0 0.0
    %514 = vmatprep.subr.mxu0 0.0
    %515 = vmatpush1.msra.mxu0 0.0
    %516 = vmatprep.subr.mxu0 0.0
    %517 = vmatpush1.msra.mxu0 0.0
    %518 = vmatprep.subr.mxu0 0.0
    %519 = vmatpush1.msra.mxu0 0.0
    %520 = vmatprep.subr.mxu0 0.0
    %521 = vmatpush1.msra.mxu0 0.0
    %522 = vmatprep.subr.mxu0 0.0
    %523 = vmatpush1.msra.mxu0 0.0
    %524 = vmatprep.subr.mxu0 0.0
    %525 = vmatpush1.msra.mxu0 0.0
    %526 = vmatprep.subr.mxu0 0.0
    %527 = vmatpush1.msra.mxu0 0.0
    %528 = vmatprep.subr.mxu0 0.0
    %529 = vmatpush1.msra.mxu0 0.0
    %530 = vmatprep.subr.mxu0 0.0
    %531 = vmatpush1.msra.mxu0 0.0
    %532 = vmatprep.subr.mxu0 0.0
    %533 = vmatpush1.msra.mxu0 0.0
    %534 = vmatprep.subr.mxu0 0.0
    %535 = vmatpush1.msra.mxu0 0.0
    %536 = vmatprep.subr.mxu0 0.0
    %537 = vmatpush1.msra.mxu0 0.0
    %538 = vmatprep.subr.mxu0 0.0
    %539 = vmatpush1.msra.mxu0 0.0
    %540 = vmatprep.subr.mxu0 0.0
    %541 = vmatpush1.msra.mxu0 0.0
    %542 = vmatprep.subr.mxu0 0.0
    %543 = vmatpush1.msra.mxu0 0.0
    %544 = vmatprep.subr.mxu0 0.0
    %545 = vmatpush1.msra.mxu0 0.0
    %546 = vmatprep.subr.mxu0 0.0
    %547 = vmatpush1.msra.mxu0 0.0
    %548 = vmatprep.subr.mxu0 0.0
    %549 = vmatpush1.msra.mxu0 0.0
    %550 = vmatprep.subr.mxu0 0.0
    %551 = vmatpush1.msra.mxu0 0.0
    %552 = vmatprep.subr.mxu0 0.0
    %553 = vmatpush1.msra.mxu0 0.0
    %554 = vmatprep.subr.mxu0 0.0
    %555 = vmatpush1.msra.mxu0 0.0
    %556 = vmatprep.subr.mxu0 0.0
    %557 = vmatpush1.msra.mxu0 0.0
    %558 = vmatprep.mubr.f32.mxu0 0.0
    %559 = vmatmul.mubr.f32.gmra.mrb[0].mxu0 %v492
    %v560 = vpop.f32.mrb[0].mxu0
    %v561 = vadd.f32 %v82, %v560
    %v562 = vpop.f32.mrb[0].mxu0
    %563 = vdwg.mxu0
    %v564 = vxor.u32 %v561, 2147483648
    %v565 = vmul.f32 %v564, 1.442695
    %v566 = vpow.pop %v565
    %v567 = vadd.f32 %v566, 1.0
    %v568 = vrcp.pop %v567
    %v569 = vmul.f32 1.0, %v568
    %v570 = vmul.f32 %v561, %v569
    %v571 = vsub.f32 1.0, %v569
    %v572 = vmul.f32 %v570, %v571
    %v573 = vadd.f32 %v569, %v572
    %v574 = vmul.f32 %v89, %v573
    %v576 = vsel %vm173, %v574, 0
    %578 = vmatprep.subr.mxu0 0.0
    %579 = vmatpush1.msra.mxu0 %v66
    %580 = vmatprep.subr.mxu0 0.0
    %581 = vmatpush1.msra.mxu0 %v67
    %582 = vmatprep.subr.mxu0 0.0
    %583 = vmatpush1.msra.mxu0 %v68
    %584 = vmatprep.subr.mxu0 0.0
    %585 = vmatpush1.msra.mxu0 %v69
    %586 = vmatprep.subr.mxu0 0.0
    %587 = vmatpush1.msra.mxu0 0.0
    %588 = vmatprep.subr.mxu0 0.0
    %589 = vmatpush1.msra.mxu0 0.0
    %590 = vmatprep.subr.mxu0 0.0
    %591 = vmatpush1.msra.mxu0 0.0
    %592 = vmatprep.subr.mxu0 0.0
    %593 = vmatpush1.msra.mxu0 0.0
    %594 = vmatprep.subr.mxu0 0.0
    %595 = vmatpush1.msra.mxu0 0.0
    %596 = vmatprep.subr.mxu0 0.0
    %597 = vmatpush1.msra.mxu0 0.0
    %598 = vmatprep.subr.mxu0 0.0
    %599 = vmatpush1.msra.mxu0 0.0
    %600 = vmatprep.subr.mxu0 0.0
    %601 = vmatpush1.msra.mxu0 0.0
    %602 = vmatprep.subr.mxu0 0.0
    %603 = vmatpush1.msra.mxu0 0.0
    %604 = vmatprep.subr.mxu0 0.0
    %605 = vmatpush1.msra.mxu0 0.0
    %606 = vmatprep.subr.mxu0 0.0
    %607 = vmatpush1.msra.mxu0 0.0
    %608 = vmatprep.subr.mxu0 0.0
    %609 = vmatpush1.msra.mxu0 0.0
    %610 = vmatprep.subr.mxu0 0.0
    %611 = vmatpush1.msra.mxu0 0.0
    %612 = vmatprep.subr.mxu0 0.0
    %613 = vmatpush1.msra.mxu0 0.0
    %614 = vmatprep.subr.mxu0 0.0
    %615 = vmatpush1.msra.mxu0 0.0
    %616 = vmatprep.subr.mxu0 0.0
    %617 = vmatpush1.msra.mxu0 0.0
    %618 = vmatprep.subr.mxu0 0.0
    %619 = vmatpush1.msra.mxu0 0.0
    %620 = vmatprep.subr.mxu0 0.0
    %621 = vmatpush1.msra.mxu0 0.0
    %622 = vmatprep.subr.mxu0 0.0
    %623 = vmatpush1.msra.mxu0 0.0
    %624 = vmatprep.subr.mxu0 0.0
    %625 = vmatpush1.msra.mxu0 0.0
    %626 = vmatprep.subr.mxu0 0.0
    %627 = vmatpush1.msra.mxu0 0.0
    %628 = vmatprep.subr.mxu0 0.0
    %629 = vmatpush1.msra.mxu0 0.0
    %630 = vmatprep.subr.mxu0 0.0
    %631 = vmatpush1.msra.mxu0 0.0
    %632 = vmatprep.subr.mxu0 0.0
    %633 = vmatpush1.msra.mxu0 0.0
    %634 = vmatprep.subr.mxu0 0.0
    %635 = vmatpush1.msra.mxu0 0.0
    %636 = vmatprep.subr.mxu0 0.0
    %637 = vmatpush1.msra.mxu0 0.0
    %638 = vmatprep.subr.mxu0 0.0
    %639 = vmatpush1.msra.mxu0 0.0
    %640 = vmatprep.subr.mxu0 0.0
    %641 = vmatpush1.msra.mxu0 0.0
    %642 = vmatprep.mubr.f32.mxu0 0.0
    %643 = vmatmul.mubr.f32.gmra.mrb[0].mxu0 %v576
    %v644 = vpop.f32.mrb[0].mxu0
    %v645 = vadd.f32 0.0, %v644
    %v646 = vpop.f32.mrb[0].mxu0
    %647 = vdwg.mxu0
    %v648 = vsub.f32 1.0, %v489
    %v649 = vmul.f32 %v490, %v648
    %v650 = vadd.f32 %v489, %v649
    %v651 = vmul.f32 %v645, %v650
    %v653 = vsel %vm173, %v651, 0
    %655 = vmatprep.subr.mxu0 0.0
    %656 = vmatpush1.msra.mxu0 %v62
    %657 = vmatprep.subr.mxu0 0.0
    %658 = vmatpush1.msra.mxu0 %v63
    %659 = vmatprep.subr.mxu0 0.0
    %660 = vmatpush1.msra.mxu0 %v64
    %661 = vmatprep.subr.mxu0 0.0
    %662 = vmatpush1.msra.mxu0 %v65
    %663 = vmatprep.subr.mxu0 0.0
    %664 = vmatpush1.msra.mxu0 0.0
    %665 = vmatprep.subr.mxu0 0.0
    %666 = vmatpush1.msra.mxu0 0.0
    %667 = vmatprep.subr.mxu0 0.0
    %668 = vmatpush1.msra.mxu0 0.0
    %669 = vmatprep.subr.mxu0 0.0
    %670 = vmatpush1.msra.mxu0 0.0
    %671 = vmatprep.subr.mxu0 0.0
    %672 = vmatpush1.msra.mxu0 0.0
    %673 = vmatprep.subr.mxu0 0.0
    %674 = vmatpush1.msra.mxu0 0.0
    %675 = vmatprep.subr.mxu0 0.0
    %676 = vmatpush1.msra.mxu0 0.0
    %677 = vmatprep.subr.mxu0 0.0
    %678 = vmatpush1.msra.mxu0 0.0
    %679 = vmatprep.subr.mxu0 0.0
    %680 = vmatpush1.msra.mxu0 0.0
    %681 = vmatprep.subr.mxu0 0.0
    %682 = vmatpush1.msra.mxu0 0.0
    %683 = vmatprep.subr.mxu0 0.0
    %684 = vmatpush1.msra.mxu0 0.0
    %685 = vmatprep.subr.mxu0 0.0
    %686 = vmatpush1.msra.mxu0 0.0
    %687 = vmatprep.subr.mxu0 0.0
    %688 = vmatpush1.msra.mxu0 0.0
    %689 = vmatprep.subr.mxu0 0.0
    %690 = vmatpush1.msra.mxu0 0.0
    %691 = vmatprep.subr.mxu0 0.0
    %692 = vmatpush1.msra.mxu0 0.0
    %693 = vmatprep.subr.mxu0 0.0
    %694 = vmatpush1.msra.mxu0 0.0
    %695 = vmatprep.subr.mxu0 0.0
    %696 = vmatpush1.msra.mxu0 0.0
    %697 = vmatprep.subr.mxu0 0.0
    %698 = vmatpush1.msra.mxu0 0.0
    %699 = vmatprep.subr.mxu0 0.0
    %700 = vmatpush1.msra.mxu0 0.0
    %701 = vmatprep.subr.mxu0 0.0
    %702 = vmatpush1.msra.mxu0 0.0
    %703 = vmatprep.subr.mxu0 0.0
    %704 = vmatpush1.msra.mxu0 0.0
    %705 = vmatprep.subr.mxu0 0.0
    %706 = vmatpush1.msra.mxu0 0.0
    %707 = vmatprep.subr.mxu0 0.0
    %708 = vmatpush1.msra.mxu0 0.0
    %709 = vmatprep.subr.mxu0 0.0
    %710 = vmatpush1.msra.mxu0 0.0
    %711 = vmatprep.subr.mxu0 0.0
    %712 = vmatpush1.msra.mxu0 0.0
    %713 = vmatprep.subr.mxu0 0.0
    %714 = vmatpush1.msra.mxu0 0.0
    %715 = vmatprep.subr.mxu0 0.0
    %716 = vmatpush1.msra.mxu0 0.0
    %717 = vmatprep.subr.mxu0 0.0
    %718 = vmatpush1.msra.mxu0 0.0
    %719 = vmatprep.mubr.f32.mxu0 0.0
    %720 = vmatmul.mubr.f32.gmra.mrb[0].mxu0 %v653
    %v721 = vpop.f32.mrb[0].mxu0
    %v722 = vadd.f32 0.0, %v721
    %v723 = vpop.f32.mrb[0].mxu0
    %724 = vdwg.mxu0
    %v725 = vmul.f32 %v410, 0.92
    %v726 = vmul.f32 %v722, 0.08
    %v727 = vsub.f32 %v725, %v726
    %v729 = vsel %vm92, %v727, 0
    %731 = vmatprep.subr.mxu0 0.0
    %732 = vmatpush1.msra.mxu0 %v56
    %733 = vmatprep.subr.mxu0 0.0
    %734 = vmatpush1.msra.mxu0 %v57
    %735 = vmatprep.subr.mxu0 0.0
    %736 = vmatpush1.msra.mxu0 0.0
    %737 = vmatprep.subr.mxu0 0.0
    %738 = vmatpush1.msra.mxu0 0.0
    %739 = vmatprep.subr.mxu0 0.0
    %740 = vmatpush1.msra.mxu0 0.0
    %741 = vmatprep.subr.mxu0 0.0
    %742 = vmatpush1.msra.mxu0 0.0
    %743 = vmatprep.subr.mxu0 0.0
    %744 = vmatpush1.msra.mxu0 0.0
    %745 = vmatprep.subr.mxu0 0.0
    %746 = vmatpush1.msra.mxu0 0.0
    %747 = vmatprep.subr.mxu0 0.0
    %748 = vmatpush1.msra.mxu0 0.0
    %749 = vmatprep.subr.mxu0 0.0
    %750 = vmatpush1.msra.mxu0 0.0
    %751 = vmatprep.subr.mxu0 0.0
    %752 = vmatpush1.msra.mxu0 0.0
    %753 = vmatprep.subr.mxu0 0.0
    %754 = vmatpush1.msra.mxu0 0.0
    %755 = vmatprep.subr.mxu0 0.0
    %756 = vmatpush1.msra.mxu0 0.0
    %757 = vmatprep.subr.mxu0 0.0
    %758 = vmatpush1.msra.mxu0 0.0
    %759 = vmatprep.subr.mxu0 0.0
    %760 = vmatpush1.msra.mxu0 0.0
    %761 = vmatprep.subr.mxu0 0.0
    %762 = vmatpush1.msra.mxu0 0.0
    %763 = vmatprep.subr.mxu0 0.0
    %764 = vmatpush1.msra.mxu0 0.0
    %765 = vmatprep.subr.mxu0 0.0
    %766 = vmatpush1.msra.mxu0 0.0
    %767 = vmatprep.subr.mxu0 0.0
    %768 = vmatpush1.msra.mxu0 0.0
    %769 = vmatprep.subr.mxu0 0.0
    %770 = vmatpush1.msra.mxu0 0.0
    %771 = vmatprep.subr.mxu0 0.0
    %772 = vmatpush1.msra.mxu0 0.0
    %773 = vmatprep.subr.mxu0 0.0
    %774 = vmatpush1.msra.mxu0 0.0
    %775 = vmatprep.subr.mxu0 0.0
    %776 = vmatpush1.msra.mxu0 0.0
    %777 = vmatprep.subr.mxu0 0.0
    %778 = vmatpush1.msra.mxu0 0.0
    %779 = vmatprep.subr.mxu0 0.0
    %780 = vmatpush1.msra.mxu0 0.0
    %781 = vmatprep.subr.mxu0 0.0
    %782 = vmatpush1.msra.mxu0 0.0
    %783 = vmatprep.subr.mxu0 0.0
    %784 = vmatpush1.msra.mxu0 0.0
    %785 = vmatprep.subr.mxu0 0.0
    %786 = vmatpush1.msra.mxu0 0.0
    %787 = vmatprep.subr.mxu0 0.0
    %788 = vmatpush1.msra.mxu0 0.0
    %789 = vmatprep.subr.mxu0 0.0
    %790 = vmatpush1.msra.mxu0 0.0
    %791 = vmatprep.subr.mxu0 0.0
    %792 = vmatpush1.msra.mxu0 0.0
    %793 = vmatprep.subr.mxu0 0.0
    %794 = vmatpush1.msra.mxu0 0.0
    %795 = vmatprep.mubr.f32.mxu0 0.0
    %796 = vmatmul.mubr.f32.gmra.mrb[0].mxu0 %v729
    %v797 = vpop.f32.mrb[0].mxu0
    %v798 = vadd.f32 %v75, %v797
    %v799 = vpop.f32.mrb[0].mxu0
    %800 = vdwg.mxu0
    %v801 = vxor.u32 %v798, 2147483648
    %v802 = vmul.f32 %v801, 1.442695
    %v803 = vpow.pop %v802
    %v804 = vadd.f32 %v803, 1.0
    %v805 = vrcp.pop %v804
    %v806 = vmul.f32 1.0, %v805
    %v807 = vmul.f32 %v798, %v806
    %v809 = vsel %vm173, %v807, 0
    %811 = vmatprep.subr.mxu0 0.0
    %812 = vmatpush1.msra.mxu0 %v58
    %813 = vmatprep.subr.mxu0 0.0
    %814 = vmatpush1.msra.mxu0 %v59
    %815 = vmatprep.subr.mxu0 0.0
    %816 = vmatpush1.msra.mxu0 %v60
    %817 = vmatprep.subr.mxu0 0.0
    %818 = vmatpush1.msra.mxu0 %v61
    %819 = vmatprep.subr.mxu0 0.0
    %820 = vmatpush1.msra.mxu0 0.0
    %821 = vmatprep.subr.mxu0 0.0
    %822 = vmatpush1.msra.mxu0 0.0
    %823 = vmatprep.subr.mxu0 0.0
    %824 = vmatpush1.msra.mxu0 0.0
    %825 = vmatprep.subr.mxu0 0.0
    %826 = vmatpush1.msra.mxu0 0.0
    %827 = vmatprep.subr.mxu0 0.0
    %828 = vmatpush1.msra.mxu0 0.0
    %829 = vmatprep.subr.mxu0 0.0
    %830 = vmatpush1.msra.mxu0 0.0
    %831 = vmatprep.subr.mxu0 0.0
    %832 = vmatpush1.msra.mxu0 0.0
    %833 = vmatprep.subr.mxu0 0.0
    %834 = vmatpush1.msra.mxu0 0.0
    %835 = vmatprep.subr.mxu0 0.0
    %836 = vmatpush1.msra.mxu0 0.0
    %837 = vmatprep.subr.mxu0 0.0
    %838 = vmatpush1.msra.mxu0 0.0
    %839 = vmatprep.subr.mxu0 0.0
    %840 = vmatpush1.msra.mxu0 0.0
    %841 = vmatprep.subr.mxu0 0.0
    %842 = vmatpush1.msra.mxu0 0.0
    %843 = vmatprep.subr.mxu0 0.0
    %844 = vmatpush1.msra.mxu0 0.0
    %845 = vmatprep.subr.mxu0 0.0
    %846 = vmatpush1.msra.mxu0 0.0
    %847 = vmatprep.subr.mxu0 0.0
    %848 = vmatpush1.msra.mxu0 0.0
    %849 = vmatprep.subr.mxu0 0.0
    %850 = vmatpush1.msra.mxu0 0.0
    %851 = vmatprep.subr.mxu0 0.0
    %852 = vmatpush1.msra.mxu0 0.0
    %853 = vmatprep.subr.mxu0 0.0
    %854 = vmatpush1.msra.mxu0 0.0
    %855 = vmatprep.subr.mxu0 0.0
    %856 = vmatpush1.msra.mxu0 0.0
    %857 = vmatprep.subr.mxu0 0.0
    %858 = vmatpush1.msra.mxu0 0.0
    %859 = vmatprep.subr.mxu0 0.0
    %860 = vmatpush1.msra.mxu0 0.0
    %861 = vmatprep.subr.mxu0 0.0
    %862 = vmatpush1.msra.mxu0 0.0
    %863 = vmatprep.subr.mxu0 0.0
    %864 = vmatpush1.msra.mxu0 0.0
    %865 = vmatprep.subr.mxu0 0.0
    %866 = vmatpush1.msra.mxu0 0.0
    %867 = vmatprep.subr.mxu0 0.0
    %868 = vmatpush1.msra.mxu0 0.0
    %869 = vmatprep.subr.mxu0 0.0
    %870 = vmatpush1.msra.mxu0 0.0
    %871 = vmatprep.subr.mxu0 0.0
    %872 = vmatpush1.msra.mxu0 0.0
    %873 = vmatprep.subr.mxu0 0.0
    %874 = vmatpush1.msra.mxu0 0.0
    %875 = vmatprep.mubr.f32.mxu0 0.0
    %876 = vmatmul.mubr.f32.gmra.mrb[0].mxu0 %v809
    %v877 = vpop.f32.mrb[0].mxu0
    %v878 = vadd.f32 %v82, %v877
    %v879 = vpop.f32.mrb[0].mxu0
    %880 = vdwg.mxu0
    %v881 = vxor.u32 %v878, 2147483648
    %v882 = vmul.f32 %v881, 1.442695
    %v883 = vpow.pop %v882
    %v884 = vadd.f32 %v883, 1.0
    %v885 = vrcp.pop %v884
    %v886 = vmul.f32 1.0, %v885
    %v887 = vmul.f32 %v878, %v886
    %v888 = vsub.f32 1.0, %v886
    %v889 = vmul.f32 %v887, %v888
    %v890 = vadd.f32 %v886, %v889
    %v891 = vmul.f32 %v89, %v890
    %v893 = vsel %vm173, %v891, 0
    %895 = vmatprep.subr.mxu0 0.0
    %896 = vmatpush1.msra.mxu0 %v66
    %897 = vmatprep.subr.mxu0 0.0
    %898 = vmatpush1.msra.mxu0 %v67
    %899 = vmatprep.subr.mxu0 0.0
    %900 = vmatpush1.msra.mxu0 %v68
    %901 = vmatprep.subr.mxu0 0.0
    %902 = vmatpush1.msra.mxu0 %v69
    %903 = vmatprep.subr.mxu0 0.0
    %904 = vmatpush1.msra.mxu0 0.0
    %905 = vmatprep.subr.mxu0 0.0
    %906 = vmatpush1.msra.mxu0 0.0
    %907 = vmatprep.subr.mxu0 0.0
    %908 = vmatpush1.msra.mxu0 0.0
    %909 = vmatprep.subr.mxu0 0.0
    %910 = vmatpush1.msra.mxu0 0.0
    %911 = vmatprep.subr.mxu0 0.0
    %912 = vmatpush1.msra.mxu0 0.0
    %913 = vmatprep.subr.mxu0 0.0
    %914 = vmatpush1.msra.mxu0 0.0
    %915 = vmatprep.subr.mxu0 0.0
    %916 = vmatpush1.msra.mxu0 0.0
    %917 = vmatprep.subr.mxu0 0.0
    %918 = vmatpush1.msra.mxu0 0.0
    %919 = vmatprep.subr.mxu0 0.0
    %920 = vmatpush1.msra.mxu0 0.0
    %921 = vmatprep.subr.mxu0 0.0
    %922 = vmatpush1.msra.mxu0 0.0
    %923 = vmatprep.subr.mxu0 0.0
    %924 = vmatpush1.msra.mxu0 0.0
    %925 = vmatprep.subr.mxu0 0.0
    %926 = vmatpush1.msra.mxu0 0.0
    %927 = vmatprep.subr.mxu0 0.0
    %928 = vmatpush1.msra.mxu0 0.0
    %929 = vmatprep.subr.mxu0 0.0
    %930 = vmatpush1.msra.mxu0 0.0
    %931 = vmatprep.subr.mxu0 0.0
    %932 = vmatpush1.msra.mxu0 0.0
    %933 = vmatprep.subr.mxu0 0.0
    %934 = vmatpush1.msra.mxu0 0.0
    %935 = vmatprep.subr.mxu0 0.0
    %936 = vmatpush1.msra.mxu0 0.0
    %937 = vmatprep.subr.mxu0 0.0
    %938 = vmatpush1.msra.mxu0 0.0
    %939 = vmatprep.subr.mxu0 0.0
    %940 = vmatpush1.msra.mxu0 0.0
    %941 = vmatprep.subr.mxu0 0.0
    %942 = vmatpush1.msra.mxu0 0.0
    %943 = vmatprep.subr.mxu0 0.0
    %944 = vmatpush1.msra.mxu0 0.0
    %945 = vmatprep.subr.mxu0 0.0
    %946 = vmatpush1.msra.mxu0 0.0
    %947 = vmatprep.subr.mxu0 0.0
    %948 = vmatpush1.msra.mxu0 0.0
    %949 = vmatprep.subr.mxu0 0.0
    %950 = vmatpush1.msra.mxu0 0.0
    %951 = vmatprep.subr.mxu0 0.0
    %952 = vmatpush1.msra.mxu0 0.0
    %953 = vmatprep.subr.mxu0 0.0
    %954 = vmatpush1.msra.mxu0 0.0
    %955 = vmatprep.subr.mxu0 0.0
    %956 = vmatpush1.msra.mxu0 0.0
    %957 = vmatprep.subr.mxu0 0.0
    %958 = vmatpush1.msra.mxu0 0.0
    %959 = vmatprep.mubr.f32.mxu0 0.0
    %960 = vmatmul.mubr.f32.gmra.mrb[0].mxu0 %v893
    %v961 = vpop.f32.mrb[0].mxu0
    %v962 = vadd.f32 0.0, %v961
    %v963 = vpop.f32.mrb[0].mxu0
    %964 = vdwg.mxu0
    %v965 = vsub.f32 1.0, %v806
    %v966 = vmul.f32 %v807, %v965
    %v967 = vadd.f32 %v806, %v966
    %v968 = vmul.f32 %v962, %v967
    %v970 = vsel %vm173, %v968, 0
    %972 = vmatprep.subr.mxu0 0.0
    %973 = vmatpush1.msra.mxu0 %v62
    %974 = vmatprep.subr.mxu0 0.0
    %975 = vmatpush1.msra.mxu0 %v63
    %976 = vmatprep.subr.mxu0 0.0
    %977 = vmatpush1.msra.mxu0 %v64
    %978 = vmatprep.subr.mxu0 0.0
    %979 = vmatpush1.msra.mxu0 %v65
    %980 = vmatprep.subr.mxu0 0.0
    %981 = vmatpush1.msra.mxu0 0.0
    %982 = vmatprep.subr.mxu0 0.0
    %983 = vmatpush1.msra.mxu0 0.0
    %984 = vmatprep.subr.mxu0 0.0
    %985 = vmatpush1.msra.mxu0 0.0
    %986 = vmatprep.subr.mxu0 0.0
    %987 = vmatpush1.msra.mxu0 0.0
    %988 = vmatprep.subr.mxu0 0.0
    %989 = vmatpush1.msra.mxu0 0.0
    %990 = vmatprep.subr.mxu0 0.0
    %991 = vmatpush1.msra.mxu0 0.0
    %992 = vmatprep.subr.mxu0 0.0
    %993 = vmatpush1.msra.mxu0 0.0
    %994 = vmatprep.subr.mxu0 0.0
    %995 = vmatpush1.msra.mxu0 0.0
    %996 = vmatprep.subr.mxu0 0.0
    %997 = vmatpush1.msra.mxu0 0.0
    %998 = vmatprep.subr.mxu0 0.0
    %999 = vmatpush1.msra.mxu0 0.0
    %1000 = vmatprep.subr.mxu0 0.0
    %1001 = vmatpush1.msra.mxu0 0.0
    %1002 = vmatprep.subr.mxu0 0.0
    %1003 = vmatpush1.msra.mxu0 0.0
    %1004 = vmatprep.subr.mxu0 0.0
    %1005 = vmatpush1.msra.mxu0 0.0
    %1006 = vmatprep.subr.mxu0 0.0
    %1007 = vmatpush1.msra.mxu0 0.0
    %1008 = vmatprep.subr.mxu0 0.0
    %1009 = vmatpush1.msra.mxu0 0.0
    %1010 = vmatprep.subr.mxu0 0.0
    %1011 = vmatpush1.msra.mxu0 0.0
    %1012 = vmatprep.subr.mxu0 0.0
    %1013 = vmatpush1.msra.mxu0 0.0
    %1014 = vmatprep.subr.mxu0 0.0
    %1015 = vmatpush1.msra.mxu0 0.0
    %1016 = vmatprep.subr.mxu0 0.0
    %1017 = vmatpush1.msra.mxu0 0.0
    %1018 = vmatprep.subr.mxu0 0.0
    %1019 = vmatpush1.msra.mxu0 0.0
    %1020 = vmatprep.subr.mxu0 0.0
    %1021 = vmatpush1.msra.mxu0 0.0
    %1022 = vmatprep.subr.mxu0 0.0
    %1023 = vmatpush1.msra.mxu0 0.0
    %1024 = vmatprep.subr.mxu0 0.0
    %1025 = vmatpush1.msra.mxu0 0.0
    %1026 = vmatprep.subr.mxu0 0.0
    %1027 = vmatpush1.msra.mxu0 0.0
    %1028 = vmatprep.subr.mxu0 0.0
    %1029 = vmatpush1.msra.mxu0 0.0
    %1030 = vmatprep.subr.mxu0 0.0
    %1031 = vmatpush1.msra.mxu0 0.0
    %1032 = vmatprep.subr.mxu0 0.0
    %1033 = vmatpush1.msra.mxu0 0.0
    %1034 = vmatprep.subr.mxu0 0.0
    %1035 = vmatpush1.msra.mxu0 0.0
    %1036 = vmatprep.mubr.f32.mxu0 0.0
    %1037 = vmatmul.mubr.f32.gmra.mrb[0].mxu0 %v970
    %v1038 = vpop.f32.mrb[0].mxu0
    %v1039 = vadd.f32 0.0, %v1038
    %v1040 = vpop.f32.mrb[0].mxu0
    %1041 = vdwg.mxu0
    %v1042 = vmul.f32 %v727, 0.92
    %v1043 = vmul.f32 %v1039, 0.08
    %v1044 = vsub.f32 %v1042, %v1043
    %v1046 = vsel %vm92, %v1044, 0
    %1048 = vmatprep.subr.mxu0 0.0
    %1049 = vmatpush1.msra.mxu0 %v56
    %1050 = vmatprep.subr.mxu0 0.0
    %1051 = vmatpush1.msra.mxu0 %v57
    %1052 = vmatprep.subr.mxu0 0.0
    %1053 = vmatpush1.msra.mxu0 0.0
    %1054 = vmatprep.subr.mxu0 0.0
    %1055 = vmatpush1.msra.mxu0 0.0
    %1056 = vmatprep.subr.mxu0 0.0
    %1057 = vmatpush1.msra.mxu0 0.0
    %1058 = vmatprep.subr.mxu0 0.0
    %1059 = vmatpush1.msra.mxu0 0.0
    %1060 = vmatprep.subr.mxu0 0.0
    %1061 = vmatpush1.msra.mxu0 0.0
    %1062 = vmatprep.subr.mxu0 0.0
    %1063 = vmatpush1.msra.mxu0 0.0
    %1064 = vmatprep.subr.mxu0 0.0
    %1065 = vmatpush1.msra.mxu0 0.0
    %1066 = vmatprep.subr.mxu0 0.0
    %1067 = vmatpush1.msra.mxu0 0.0
    %1068 = vmatprep.subr.mxu0 0.0
    %1069 = vmatpush1.msra.mxu0 0.0
    %1070 = vmatprep.subr.mxu0 0.0
    %1071 = vmatpush1.msra.mxu0 0.0
    %1072 = vmatprep.subr.mxu0 0.0
    %1073 = vmatpush1.msra.mxu0 0.0
    %1074 = vmatprep.subr.mxu0 0.0
    %1075 = vmatpush1.msra.mxu0 0.0
    %1076 = vmatprep.subr.mxu0 0.0
    %1077 = vmatpush1.msra.mxu0 0.0
    %1078 = vmatprep.subr.mxu0 0.0
    %1079 = vmatpush1.msra.mxu0 0.0
    %1080 = vmatprep.subr.mxu0 0.0
    %1081 = vmatpush1.msra.mxu0 0.0
    %1082 = vmatprep.subr.mxu0 0.0
    %1083 = vmatpush1.msra.mxu0 0.0
    %1084 = vmatprep.subr.mxu0 0.0
    %1085 = vmatpush1.msra.mxu0 0.0
    %1086 = vmatprep.subr.mxu0 0.0
    %1087 = vmatpush1.msra.mxu0 0.0
    %1088 = vmatprep.subr.mxu0 0.0
    %1089 = vmatpush1.msra.mxu0 0.0
    %1090 = vmatprep.subr.mxu0 0.0
    %1091 = vmatpush1.msra.mxu0 0.0
    %1092 = vmatprep.subr.mxu0 0.0
    %1093 = vmatpush1.msra.mxu0 0.0
    %1094 = vmatprep.subr.mxu0 0.0
    %1095 = vmatpush1.msra.mxu0 0.0
    %1096 = vmatprep.subr.mxu0 0.0
    %1097 = vmatpush1.msra.mxu0 0.0
    %1098 = vmatprep.subr.mxu0 0.0
    %1099 = vmatpush1.msra.mxu0 0.0
    %1100 = vmatprep.subr.mxu0 0.0
    %1101 = vmatpush1.msra.mxu0 0.0
    %1102 = vmatprep.subr.mxu0 0.0
    %1103 = vmatpush1.msra.mxu0 0.0
    %1104 = vmatprep.subr.mxu0 0.0
    %1105 = vmatpush1.msra.mxu0 0.0
    %1106 = vmatprep.subr.mxu0 0.0
    %1107 = vmatpush1.msra.mxu0 0.0
    %1108 = vmatprep.subr.mxu0 0.0
    %1109 = vmatpush1.msra.mxu0 0.0
    %1110 = vmatprep.subr.mxu0 0.0
    %1111 = vmatpush1.msra.mxu0 0.0
    %1112 = vmatprep.mubr.f32.mxu0 0.0
    %1113 = vmatmul.mubr.f32.gmra.mrb[0].mxu0 %v1046
    %v1114 = vpop.f32.mrb[0].mxu0
    %v1115 = vadd.f32 %v75, %v1114
    %v1116 = vpop.f32.mrb[0].mxu0
    %1117 = vdwg.mxu0
    %v1118 = vxor.u32 %v1115, 2147483648
    %v1119 = vmul.f32 %v1118, 1.442695
    %v1120 = vpow.pop %v1119
    %v1121 = vadd.f32 %v1120, 1.0
    %v1122 = vrcp.pop %v1121
    %v1123 = vmul.f32 1.0, %v1122
    %v1124 = vmul.f32 %v1115, %v1123
    %v1126 = vsel %vm173, %v1124, 0
    %1128 = vmatprep.subr.mxu0 0.0
    %1129 = vmatpush1.msra.mxu0 %v58
    %1130 = vmatprep.subr.mxu0 0.0
    %1131 = vmatpush1.msra.mxu0 %v59
    %1132 = vmatprep.subr.mxu0 0.0
    %1133 = vmatpush1.msra.mxu0 %v60
    %1134 = vmatprep.subr.mxu0 0.0
    %1135 = vmatpush1.msra.mxu0 %v61
    %1136 = vmatprep.subr.mxu0 0.0
    %1137 = vmatpush1.msra.mxu0 0.0
    %1138 = vmatprep.subr.mxu0 0.0
    %1139 = vmatpush1.msra.mxu0 0.0
    %1140 = vmatprep.subr.mxu0 0.0
    %1141 = vmatpush1.msra.mxu0 0.0
    %1142 = vmatprep.subr.mxu0 0.0
    %1143 = vmatpush1.msra.mxu0 0.0
    %1144 = vmatprep.subr.mxu0 0.0
    %1145 = vmatpush1.msra.mxu0 0.0
    %1146 = vmatprep.subr.mxu0 0.0
    %1147 = vmatpush1.msra.mxu0 0.0
    %1148 = vmatprep.subr.mxu0 0.0
    %1149 = vmatpush1.msra.mxu0 0.0
    %1150 = vmatprep.subr.mxu0 0.0
    %1151 = vmatpush1.msra.mxu0 0.0
    %1152 = vmatprep.subr.mxu0 0.0
    %1153 = vmatpush1.msra.mxu0 0.0
    %1154 = vmatprep.subr.mxu0 0.0
    %1155 = vmatpush1.msra.mxu0 0.0
    %1156 = vmatprep.subr.mxu0 0.0
    %1157 = vmatpush1.msra.mxu0 0.0
    %1158 = vmatprep.subr.mxu0 0.0
    %1159 = vmatpush1.msra.mxu0 0.0
    %1160 = vmatprep.subr.mxu0 0.0
    %1161 = vmatpush1.msra.mxu0 0.0
    %1162 = vmatprep.subr.mxu0 0.0
    %1163 = vmatpush1.msra.mxu0 0.0
    %1164 = vmatprep.subr.mxu0 0.0
    %1165 = vmatpush1.msra.mxu0 0.0
    %1166 = vmatprep.subr.mxu0 0.0
    %1167 = vmatpush1.msra.mxu0 0.0
    %1168 = vmatprep.subr.mxu0 0.0
    %1169 = vmatpush1.msra.mxu0 0.0
    %1170 = vmatprep.subr.mxu0 0.0
    %1171 = vmatpush1.msra.mxu0 0.0
    %1172 = vmatprep.subr.mxu0 0.0
    %1173 = vmatpush1.msra.mxu0 0.0
    %1174 = vmatprep.subr.mxu0 0.0
    %1175 = vmatpush1.msra.mxu0 0.0
    %1176 = vmatprep.subr.mxu0 0.0
    %1177 = vmatpush1.msra.mxu0 0.0
    %1178 = vmatprep.subr.mxu0 0.0
    %1179 = vmatpush1.msra.mxu0 0.0
    %1180 = vmatprep.subr.mxu0 0.0
    %1181 = vmatpush1.msra.mxu0 0.0
    %1182 = vmatprep.subr.mxu0 0.0
    %1183 = vmatpush1.msra.mxu0 0.0
    %1184 = vmatprep.subr.mxu0 0.0
    %1185 = vmatpush1.msra.mxu0 0.0
    %1186 = vmatprep.subr.mxu0 0.0
    %1187 = vmatpush1.msra.mxu0 0.0
    %1188 = vmatprep.subr.mxu0 0.0
    %1189 = vmatpush1.msra.mxu0 0.0
    %1190 = vmatprep.subr.mxu0 0.0
    %1191 = vmatpush1.msra.mxu0 0.0
    %1192 = vmatprep.mubr.f32.mxu0 0.0
    %1193 = vmatmul.mubr.f32.gmra.mrb[0].mxu0 %v1126
    %v1194 = vpop.f32.mrb[0].mxu0
    %v1195 = vadd.f32 %v82, %v1194
    %v1196 = vpop.f32.mrb[0].mxu0
    %1197 = vdwg.mxu0
    %v1198 = vxor.u32 %v1195, 2147483648
    %v1199 = vmul.f32 %v1198, 1.442695
    %v1200 = vpow.pop %v1199
    %v1201 = vadd.f32 %v1200, 1.0
    %v1202 = vrcp.pop %v1201
    %v1203 = vmul.f32 1.0, %v1202
    %v1204 = vmul.f32 %v1195, %v1203
    %v1205 = vsub.f32 1.0, %v1203
    %v1206 = vmul.f32 %v1204, %v1205
    %v1207 = vadd.f32 %v1203, %v1206
    %v1208 = vmul.f32 %v89, %v1207
    %v1210 = vsel %vm173, %v1208, 0
    %1212 = vmatprep.subr.mxu0 0.0
    %1213 = vmatpush1.msra.mxu0 %v66
    %1214 = vmatprep.subr.mxu0 0.0
    %1215 = vmatpush1.msra.mxu0 %v67
    %1216 = vmatprep.subr.mxu0 0.0
    %1217 = vmatpush1.msra.mxu0 %v68
    %1218 = vmatprep.subr.mxu0 0.0
    %1219 = vmatpush1.msra.mxu0 %v69
    %1220 = vmatprep.subr.mxu0 0.0
    %1221 = vmatpush1.msra.mxu0 0.0
    %1222 = vmatprep.subr.mxu0 0.0
    %1223 = vmatpush1.msra.mxu0 0.0
    %1224 = vmatprep.subr.mxu0 0.0
    %1225 = vmatpush1.msra.mxu0 0.0
    %1226 = vmatprep.subr.mxu0 0.0
    %1227 = vmatpush1.msra.mxu0 0.0
    %1228 = vmatprep.subr.mxu0 0.0
    %1229 = vmatpush1.msra.mxu0 0.0
    %1230 = vmatprep.subr.mxu0 0.0
    %1231 = vmatpush1.msra.mxu0 0.0
    %1232 = vmatprep.subr.mxu0 0.0
    %1233 = vmatpush1.msra.mxu0 0.0
    %1234 = vmatprep.subr.mxu0 0.0
    %1235 = vmatpush1.msra.mxu0 0.0
    %1236 = vmatprep.subr.mxu0 0.0
    %1237 = vmatpush1.msra.mxu0 0.0
    %1238 = vmatprep.subr.mxu0 0.0
    %1239 = vmatpush1.msra.mxu0 0.0
    %1240 = vmatprep.subr.mxu0 0.0
    %1241 = vmatpush1.msra.mxu0 0.0
    %1242 = vmatprep.subr.mxu0 0.0
    %1243 = vmatpush1.msra.mxu0 0.0
    %1244 = vmatprep.subr.mxu0 0.0
    %1245 = vmatpush1.msra.mxu0 0.0
    %1246 = vmatprep.subr.mxu0 0.0
    %1247 = vmatpush1.msra.mxu0 0.0
    %1248 = vmatprep.subr.mxu0 0.0
    %1249 = vmatpush1.msra.mxu0 0.0
    %1250 = vmatprep.subr.mxu0 0.0
    %1251 = vmatpush1.msra.mxu0 0.0
    %1252 = vmatprep.subr.mxu0 0.0
    %1253 = vmatpush1.msra.mxu0 0.0
    %1254 = vmatprep.subr.mxu0 0.0
    %1255 = vmatpush1.msra.mxu0 0.0
    %1256 = vmatprep.subr.mxu0 0.0
    %1257 = vmatpush1.msra.mxu0 0.0
    %1258 = vmatprep.subr.mxu0 0.0
    %1259 = vmatpush1.msra.mxu0 0.0
    %1260 = vmatprep.subr.mxu0 0.0
    %1261 = vmatpush1.msra.mxu0 0.0
    %1262 = vmatprep.subr.mxu0 0.0
    %1263 = vmatpush1.msra.mxu0 0.0
    %1264 = vmatprep.subr.mxu0 0.0
    %1265 = vmatpush1.msra.mxu0 0.0
    %1266 = vmatprep.subr.mxu0 0.0
    %1267 = vmatpush1.msra.mxu0 0.0
    %1268 = vmatprep.subr.mxu0 0.0
    %1269 = vmatpush1.msra.mxu0 0.0
    %1270 = vmatprep.subr.mxu0 0.0
    %1271 = vmatpush1.msra.mxu0 0.0
    %1272 = vmatprep.subr.mxu0 0.0
    %1273 = vmatpush1.msra.mxu0 0.0
    %1274 = vmatprep.subr.mxu0 0.0
    %1275 = vmatpush1.msra.mxu0 0.0
    %1276 = vmatprep.mubr.f32.mxu0 0.0
    %1277 = vmatmul.mubr.f32.gmra.mrb[0].mxu0 %v1210
    %v1278 = vpop.f32.mrb[0].mxu0
    %v1279 = vadd.f32 0.0, %v1278
    %v1280 = vpop.f32.mrb[0].mxu0
    %1281 = vdwg.mxu0
    %v1282 = vsub.f32 1.0, %v1123
    %v1283 = vmul.f32 %v1124, %v1282
    %v1284 = vadd.f32 %v1123, %v1283
    %v1285 = vmul.f32 %v1279, %v1284
    %v1287 = vsel %vm173, %v1285, 0
    %1289 = vmatprep.subr.mxu0 0.0
    %1290 = vmatpush1.msra.mxu0 %v62
    %1291 = vmatprep.subr.mxu0 0.0
    %1292 = vmatpush1.msra.mxu0 %v63
    %1293 = vmatprep.subr.mxu0 0.0
    %1294 = vmatpush1.msra.mxu0 %v64
    %1295 = vmatprep.subr.mxu0 0.0
    %1296 = vmatpush1.msra.mxu0 %v65
    %1297 = vmatprep.subr.mxu0 0.0
    %1298 = vmatpush1.msra.mxu0 0.0
    %1299 = vmatprep.subr.mxu0 0.0
    %1300 = vmatpush1.msra.mxu0 0.0
    %1301 = vmatprep.subr.mxu0 0.0
    %1302 = vmatpush1.msra.mxu0 0.0
    %1303 = vmatprep.subr.mxu0 0.0
    %1304 = vmatpush1.msra.mxu0 0.0
    %1305 = vmatprep.subr.mxu0 0.0
    %1306 = vmatpush1.msra.mxu0 0.0
    %1307 = vmatprep.subr.mxu0 0.0
    %1308 = vmatpush1.msra.mxu0 0.0
    %1309 = vmatprep.subr.mxu0 0.0
    %1310 = vmatpush1.msra.mxu0 0.0
    %1311 = vmatprep.subr.mxu0 0.0
    %1312 = vmatpush1.msra.mxu0 0.0
    %1313 = vmatprep.subr.mxu0 0.0
    %1314 = vmatpush1.msra.mxu0 0.0
    %1315 = vmatprep.subr.mxu0 0.0
    %1316 = vmatpush1.msra.mxu0 0.0
    %1317 = vmatprep.subr.mxu0 0.0
    %1318 = vmatpush1.msra.mxu0 0.0
    %1319 = vmatprep.subr.mxu0 0.0
    %1320 = vmatpush1.msra.mxu0 0.0
    %1321 = vmatprep.subr.mxu0 0.0
    %1322 = vmatpush1.msra.mxu0 0.0
    %1323 = vmatprep.subr.mxu0 0.0
    %1324 = vmatpush1.msra.mxu0 0.0
    %1325 = vmatprep.subr.mxu0 0.0
    %1326 = vmatpush1.msra.mxu0 0.0
    %1327 = vmatprep.subr.mxu0 0.0
    %1328 = vmatpush1.msra.mxu0 0.0
    %1329 = vmatprep.subr.mxu0 0.0
    %1330 = vmatpush1.msra.mxu0 0.0
    %1331 = vmatprep.subr.mxu0 0.0
    %1332 = vmatpush1.msra.mxu0 0.0
    %1333 = vmatprep.subr.mxu0 0.0
    %1334 = vmatpush1.msra.mxu0 0.0
    %1335 = vmatprep.subr.mxu0 0.0
    %1336 = vmatpush1.msra.mxu0 0.0
    %1337 = vmatprep.subr.mxu0 0.0
    %1338 = vmatpush1.msra.mxu0 0.0
    %1339 = vmatprep.subr.mxu0 0.0
    %1340 = vmatpush1.msra.mxu0 0.0
    %1341 = vmatprep.subr.mxu0 0.0
    %1342 = vmatpush1.msra.mxu0 0.0
    %1343 = vmatprep.subr.mxu0 0.0
    %1344 = vmatpush1.msra.mxu0 0.0
    %1345 = vmatprep.subr.mxu0 0.0
    %1346 = vmatpush1.msra.mxu0 0.0
    %1347 = vmatprep.subr.mxu0 0.0
    %1348 = vmatpush1.msra.mxu0 0.0
    %1349 = vmatprep.subr.mxu0 0.0
    %1350 = vmatpush1.msra.mxu0 0.0
    %1351 = vmatprep.subr.mxu0 0.0
    %1352 = vmatpush1.msra.mxu0 0.0
    %1353 = vmatprep.mubr.f32.mxu0 0.0
    %1354 = vmatmul.mubr.f32.gmra.mrb[0].mxu0 %v1287
    %v1355 = vpop.f32.mrb[0].mxu0
    %v1356 = vadd.f32 0.0, %v1355
    %v1357 = vpop.f32.mrb[0].mxu0
    %1358 = vdwg.mxu0
    %v1359 = vmul.f32 %v1044, 0.92
    %v1360 = vmul.f32 %v1356, 0.08
    %v1361 = vsub.f32 %v1359, %v1360
    %v1363 = vsel %vm92, %v1361, 0
    %1365 = vmatprep.subr.mxu0 0.0
    %1366 = vmatpush1.msra.mxu0 %v56
    %1367 = vmatprep.subr.mxu0 0.0
    %1368 = vmatpush1.msra.mxu0 %v57
    %1369 = vmatprep.subr.mxu0 0.0
    %1370 = vmatpush1.msra.mxu0 0.0
    %1371 = vmatprep.subr.mxu0 0.0
    %1372 = vmatpush1.msra.mxu0 0.0
    %1373 = vmatprep.subr.mxu0 0.0
    %1374 = vmatpush1.msra.mxu0 0.0
    %1375 = vmatprep.subr.mxu0 0.0
    %1376 = vmatpush1.msra.mxu0 0.0
    %1377 = vmatprep.subr.mxu0 0.0
    %1378 = vmatpush1.msra.mxu0 0.0
    %1379 = vmatprep.subr.mxu0 0.0
    %1380 = vmatpush1.msra.mxu0 0.0
    %1381 = vmatprep.subr.mxu0 0.0
    %1382 = vmatpush1.msra.mxu0 0.0
    %1383 = vmatprep.subr.mxu0 0.0
    %1384 = vmatpush1.msra.mxu0 0.0
    %1385 = vmatprep.subr.mxu0 0.0
    %1386 = vmatpush1.msra.mxu0 0.0
    %1387 = vmatprep.subr.mxu0 0.0
    %1388 = vmatpush1.msra.mxu0 0.0
    %1389 = vmatprep.subr.mxu0 0.0
    %1390 = vmatpush1.msra.mxu0 0.0
    %1391 = vmatprep.subr.mxu0 0.0
    %1392 = vmatpush1.msra.mxu0 0.0
    %1393 = vmatprep.subr.mxu0 0.0
    %1394 = vmatpush1.msra.mxu0 0.0
    %1395 = vmatprep.subr.mxu0 0.0
    %1396 = vmatpush1.msra.mxu0 0.0
    %1397 = vmatprep.subr.mxu0 0.0
    %1398 = vmatpush1.msra.mxu0 0.0
    %1399 = vmatprep.subr.mxu0 0.0
    %1400 = vmatpush1.msra.mxu0 0.0
    %1401 = vmatprep.subr.mxu0 0.0
    %1402 = vmatpush1.msra.mxu0 0.0
    %1403 = vmatprep.subr.mxu0 0.0
    %1404 = vmatpush1.msra.mxu0 0.0
    %1405 = vmatprep.subr.mxu0 0.0
    %1406 = vmatpush1.msra.mxu0 0.0
    %1407 = vmatprep.subr.mxu0 0.0
    %1408 = vmatpush1.msra.mxu0 0.0
    %1409 = vmatprep.subr.mxu0 0.0
    %1410 = vmatpush1.msra.mxu0 0.0
    %1411 = vmatprep.subr.mxu0 0.0
    %1412 = vmatpush1.msra.mxu0 0.0
    %1413 = vmatprep.subr.mxu0 0.0
    %1414 = vmatpush1.msra.mxu0 0.0
    %1415 = vmatprep.subr.mxu0 0.0
    %1416 = vmatpush1.msra.mxu0 0.0
    %1417 = vmatprep.subr.mxu0 0.0
    %1418 = vmatpush1.msra.mxu0 0.0
    %1419 = vmatprep.subr.mxu0 0.0
    %1420 = vmatpush1.msra.mxu0 0.0
    %1421 = vmatprep.subr.mxu0 0.0
    %1422 = vmatpush1.msra.mxu0 0.0
    %1423 = vmatprep.subr.mxu0 0.0
    %1424 = vmatpush1.msra.mxu0 0.0
    %1425 = vmatprep.subr.mxu0 0.0
    %1426 = vmatpush1.msra.mxu0 0.0
    %1427 = vmatprep.subr.mxu0 0.0
    %1428 = vmatpush1.msra.mxu0 0.0
    %1429 = vmatprep.mubr.f32.mxu0 0.0
    %1430 = vmatmul.mubr.f32.gmra.mrb[0].mxu0 %v1363
    %v1431 = vpop.f32.mrb[0].mxu0
    %v1432 = vadd.f32 %v75, %v1431
    %v1433 = vpop.f32.mrb[0].mxu0
    %1434 = vdwg.mxu0
    %v1435 = vxor.u32 %v1432, 2147483648
    %v1436 = vmul.f32 %v1435, 1.442695
    %v1437 = vpow.pop %v1436
    %v1438 = vadd.f32 %v1437, 1.0
    %v1439 = vrcp.pop %v1438
    %v1440 = vmul.f32 1.0, %v1439
    %v1441 = vmul.f32 %v1432, %v1440
    %v1443 = vsel %vm173, %v1441, 0
    %1445 = vmatprep.subr.mxu0 0.0
    %1446 = vmatpush1.msra.mxu0 %v58
    %1447 = vmatprep.subr.mxu0 0.0
    %1448 = vmatpush1.msra.mxu0 %v59
    %1449 = vmatprep.subr.mxu0 0.0
    %1450 = vmatpush1.msra.mxu0 %v60
    %1451 = vmatprep.subr.mxu0 0.0
    %1452 = vmatpush1.msra.mxu0 %v61
    %1453 = vmatprep.subr.mxu0 0.0
    %1454 = vmatpush1.msra.mxu0 0.0
    %1455 = vmatprep.subr.mxu0 0.0
    %1456 = vmatpush1.msra.mxu0 0.0
    %1457 = vmatprep.subr.mxu0 0.0
    %1458 = vmatpush1.msra.mxu0 0.0
    %1459 = vmatprep.subr.mxu0 0.0
    %1460 = vmatpush1.msra.mxu0 0.0
    %1461 = vmatprep.subr.mxu0 0.0
    %1462 = vmatpush1.msra.mxu0 0.0
    %1463 = vmatprep.subr.mxu0 0.0
    %1464 = vmatpush1.msra.mxu0 0.0
    %1465 = vmatprep.subr.mxu0 0.0
    %1466 = vmatpush1.msra.mxu0 0.0
    %1467 = vmatprep.subr.mxu0 0.0
    %1468 = vmatpush1.msra.mxu0 0.0
    %1469 = vmatprep.subr.mxu0 0.0
    %1470 = vmatpush1.msra.mxu0 0.0
    %1471 = vmatprep.subr.mxu0 0.0
    %1472 = vmatpush1.msra.mxu0 0.0
    %1473 = vmatprep.subr.mxu0 0.0
    %1474 = vmatpush1.msra.mxu0 0.0
    %1475 = vmatprep.subr.mxu0 0.0
    %1476 = vmatpush1.msra.mxu0 0.0
    %1477 = vmatprep.subr.mxu0 0.0
    %1478 = vmatpush1.msra.mxu0 0.0
    %1479 = vmatprep.subr.mxu0 0.0
    %1480 = vmatpush1.msra.mxu0 0.0
    %1481 = vmatprep.subr.mxu0 0.0
    %1482 = vmatpush1.msra.mxu0 0.0
    %1483 = vmatprep.subr.mxu0 0.0
    %1484 = vmatpush1.msra.mxu0 0.0
    %1485 = vmatprep.subr.mxu0 0.0
    %1486 = vmatpush1.msra.mxu0 0.0
    %1487 = vmatprep.subr.mxu0 0.0
    %1488 = vmatpush1.msra.mxu0 0.0
    %1489 = vmatprep.subr.mxu0 0.0
    %1490 = vmatpush1.msra.mxu0 0.0
    %1491 = vmatprep.subr.mxu0 0.0
    %1492 = vmatpush1.msra.mxu0 0.0
    %1493 = vmatprep.subr.mxu0 0.0
    %1494 = vmatpush1.msra.mxu0 0.0
    %1495 = vmatprep.subr.mxu0 0.0
    %1496 = vmatpush1.msra.mxu0 0.0
    %1497 = vmatprep.subr.mxu0 0.0
    %1498 = vmatpush1.msra.mxu0 0.0
    %1499 = vmatprep.subr.mxu0 0.0
    %1500 = vmatpush1.msra.mxu0 0.0
    %1501 = vmatprep.subr.mxu0 0.0
    %1502 = vmatpush1.msra.mxu0 0.0
    %1503 = vmatprep.subr.mxu0 0.0
    %1504 = vmatpush1.msra.mxu0 0.0
    %1505 = vmatprep.subr.mxu0 0.0
    %1506 = vmatpush1.msra.mxu0 0.0
    %1507 = vmatprep.subr.mxu0 0.0
    %1508 = vmatpush1.msra.mxu0 0.0
    %1509 = vmatprep.mubr.f32.mxu0 0.0
    %1510 = vmatmul.mubr.f32.gmra.mrb[0].mxu0 %v1443
    %v1511 = vpop.f32.mrb[0].mxu0
    %v1512 = vadd.f32 %v82, %v1511
    %v1513 = vpop.f32.mrb[0].mxu0
    %1514 = vdwg.mxu0
    %v1515 = vxor.u32 %v1512, 2147483648
    %v1516 = vmul.f32 %v1515, 1.442695
    %v1517 = vpow.pop %v1516
    %v1518 = vadd.f32 %v1517, 1.0
    %v1519 = vrcp.pop %v1518
    %v1520 = vmul.f32 1.0, %v1519
    %v1521 = vmul.f32 %v1512, %v1520
    %v1522 = vsub.f32 1.0, %v1520
    %v1523 = vmul.f32 %v1521, %v1522
    %v1524 = vadd.f32 %v1520, %v1523
    %v1525 = vmul.f32 %v89, %v1524
    %v1527 = vsel %vm173, %v1525, 0
    %1529 = vmatprep.subr.mxu0 0.0
    %1530 = vmatpush1.msra.mxu0 %v66
    %1531 = vmatprep.subr.mxu0 0.0
    %1532 = vmatpush1.msra.mxu0 %v67
    %1533 = vmatprep.subr.mxu0 0.0
    %1534 = vmatpush1.msra.mxu0 %v68
    %1535 = vmatprep.subr.mxu0 0.0
    %1536 = vmatpush1.msra.mxu0 %v69
    %1537 = vmatprep.subr.mxu0 0.0
    %1538 = vmatpush1.msra.mxu0 0.0
    %1539 = vmatprep.subr.mxu0 0.0
    %1540 = vmatpush1.msra.mxu0 0.0
    %1541 = vmatprep.subr.mxu0 0.0
    %1542 = vmatpush1.msra.mxu0 0.0
    %1543 = vmatprep.subr.mxu0 0.0
    %1544 = vmatpush1.msra.mxu0 0.0
    %1545 = vmatprep.subr.mxu0 0.0
    %1546 = vmatpush1.msra.mxu0 0.0
    %1547 = vmatprep.subr.mxu0 0.0
    %1548 = vmatpush1.msra.mxu0 0.0
    %1549 = vmatprep.subr.mxu0 0.0
    %1550 = vmatpush1.msra.mxu0 0.0
    %1551 = vmatprep.subr.mxu0 0.0
    %1552 = vmatpush1.msra.mxu0 0.0
    %1553 = vmatprep.subr.mxu0 0.0
    %1554 = vmatpush1.msra.mxu0 0.0
    %1555 = vmatprep.subr.mxu0 0.0
    %1556 = vmatpush1.msra.mxu0 0.0
    %1557 = vmatprep.subr.mxu0 0.0
    %1558 = vmatpush1.msra.mxu0 0.0
    %1559 = vmatprep.subr.mxu0 0.0
    %1560 = vmatpush1.msra.mxu0 0.0
    %1561 = vmatprep.subr.mxu0 0.0
    %1562 = vmatpush1.msra.mxu0 0.0
    %1563 = vmatprep.subr.mxu0 0.0
    %1564 = vmatpush1.msra.mxu0 0.0
    %1565 = vmatprep.subr.mxu0 0.0
    %1566 = vmatpush1.msra.mxu0 0.0
    %1567 = vmatprep.subr.mxu0 0.0
    %1568 = vmatpush1.msra.mxu0 0.0
    %1569 = vmatprep.subr.mxu0 0.0
    %1570 = vmatpush1.msra.mxu0 0.0
    %1571 = vmatprep.subr.mxu0 0.0
    %1572 = vmatpush1.msra.mxu0 0.0
    %1573 = vmatprep.subr.mxu0 0.0
    %1574 = vmatpush1.msra.mxu0 0.0
    %1575 = vmatprep.subr.mxu0 0.0
    %1576 = vmatpush1.msra.mxu0 0.0
    %1577 = vmatprep.subr.mxu0 0.0
    %1578 = vmatpush1.msra.mxu0 0.0
    %1579 = vmatprep.subr.mxu0 0.0
    %1580 = vmatpush1.msra.mxu0 0.0
    %1581 = vmatprep.subr.mxu0 0.0
    %1582 = vmatpush1.msra.mxu0 0.0
    %1583 = vmatprep.subr.mxu0 0.0
    %1584 = vmatpush1.msra.mxu0 0.0
    %1585 = vmatprep.subr.mxu0 0.0
    %1586 = vmatpush1.msra.mxu0 0.0
    %1587 = vmatprep.subr.mxu0 0.0
    %1588 = vmatpush1.msra.mxu0 0.0
    %1589 = vmatprep.subr.mxu0 0.0
    %1590 = vmatpush1.msra.mxu0 0.0
    %1591 = vmatprep.subr.mxu0 0.0
    %1592 = vmatpush1.msra.mxu0 0.0
    %1593 = vmatprep.mubr.f32.mxu0 0.0
    %1594 = vmatmul.mubr.f32.gmra.mrb[0].mxu0 %v1527
    %v1595 = vpop.f32.mrb[0].mxu0
    %v1596 = vadd.f32 0.0, %v1595
    %v1597 = vpop.f32.mrb[0].mxu0
    %1598 = vdwg.mxu0
    %v1599 = vsub.f32 1.0, %v1440
    %v1600 = vmul.f32 %v1441, %v1599
    %v1601 = vadd.f32 %v1440, %v1600
    %v1602 = vmul.f32 %v1596, %v1601
    %v1604 = vsel %vm173, %v1602, 0
    %1606 = vmatprep.subr.mxu0 0.0
    %1607 = vmatpush1.msra.mxu0 %v62
    %1608 = vmatprep.subr.mxu0 0.0
    %1609 = vmatpush1.msra.mxu0 %v63
    %1610 = vmatprep.subr.mxu0 0.0
    %1611 = vmatpush1.msra.mxu0 %v64
    %1612 = vmatprep.subr.mxu0 0.0
    %1613 = vmatpush1.msra.mxu0 %v65
    %1614 = vmatprep.subr.mxu0 0.0
    %1615 = vmatpush1.msra.mxu0 0.0
    %1616 = vmatprep.subr.mxu0 0.0
    %1617 = vmatpush1.msra.mxu0 0.0
    %1618 = vmatprep.subr.mxu0 0.0
    %1619 = vmatpush1.msra.mxu0 0.0
    %1620 = vmatprep.subr.mxu0 0.0
    %1621 = vmatpush1.msra.mxu0 0.0
    %1622 = vmatprep.subr.mxu0 0.0
    %1623 = vmatpush1.msra.mxu0 0.0
    %1624 = vmatprep.subr.mxu0 0.0
    %1625 = vmatpush1.msra.mxu0 0.0
    %1626 = vmatprep.subr.mxu0 0.0
    %1627 = vmatpush1.msra.mxu0 0.0
    %1628 = vmatprep.subr.mxu0 0.0
    %1629 = vmatpush1.msra.mxu0 0.0
    %1630 = vmatprep.subr.mxu0 0.0
    %1631 = vmatpush1.msra.mxu0 0.0
    %1632 = vmatprep.subr.mxu0 0.0
    %1633 = vmatpush1.msra.mxu0 0.0
    %1634 = vmatprep.subr.mxu0 0.0
    %1635 = vmatpush1.msra.mxu0 0.0
    %1636 = vmatprep.subr.mxu0 0.0
    %1637 = vmatpush1.msra.mxu0 0.0
    %1638 = vmatprep.subr.mxu0 0.0
    %1639 = vmatpush1.msra.mxu0 0.0
    %1640 = vmatprep.subr.mxu0 0.0
    %1641 = vmatpush1.msra.mxu0 0.0
    %1642 = vmatprep.subr.mxu0 0.0
    %1643 = vmatpush1.msra.mxu0 0.0
    %1644 = vmatprep.subr.mxu0 0.0
    %1645 = vmatpush1.msra.mxu0 0.0
    %1646 = vmatprep.subr.mxu0 0.0
    %1647 = vmatpush1.msra.mxu0 0.0
    %1648 = vmatprep.subr.mxu0 0.0
    %1649 = vmatpush1.msra.mxu0 0.0
    %1650 = vmatprep.subr.mxu0 0.0
    %1651 = vmatpush1.msra.mxu0 0.0
    %1652 = vmatprep.subr.mxu0 0.0
    %1653 = vmatpush1.msra.mxu0 0.0
    %1654 = vmatprep.subr.mxu0 0.0
    %1655 = vmatpush1.msra.mxu0 0.0
    %1656 = vmatprep.subr.mxu0 0.0
    %1657 = vmatpush1.msra.mxu0 0.0
    %1658 = vmatprep.subr.mxu0 0.0
    %1659 = vmatpush1.msra.mxu0 0.0
    %1660 = vmatprep.subr.mxu0 0.0
    %1661 = vmatpush1.msra.mxu0 0.0
    %1662 = vmatprep.subr.mxu0 0.0
    %1663 = vmatpush1.msra.mxu0 0.0
    %1664 = vmatprep.subr.mxu0 0.0
    %1665 = vmatpush1.msra.mxu0 0.0
    %1666 = vmatprep.subr.mxu0 0.0
    %1667 = vmatpush1.msra.mxu0 0.0
    %1668 = vmatprep.subr.mxu0 0.0
    %1669 = vmatpush1.msra.mxu0 0.0
    %1670 = vmatprep.mubr.f32.mxu0 0.0
    %1671 = vmatmul.mubr.f32.gmra.mrb[0].mxu0 %v1604
    %v1672 = vpop.f32.mrb[0].mxu0
    %v1673 = vadd.f32 0.0, %v1672
    %v1674 = vpop.f32.mrb[0].mxu0
    %1675 = vdwg.mxu0
    %v1676 = vmul.f32 %v1361, 0.92
    %v1677 = vmul.f32 %v1673, 0.08
    %v1678 = vsub.f32 %v1676, %v1677
    %v1680 = vsel %vm92, %v1678, 0
    %1682 = vmatprep.subr.mxu0 0.0
    %1683 = vmatpush1.msra.mxu0 %v56
    %1684 = vmatprep.subr.mxu0 0.0
    %1685 = vmatpush1.msra.mxu0 %v57
    %1686 = vmatprep.subr.mxu0 0.0
    %1687 = vmatpush1.msra.mxu0 0.0
    %1688 = vmatprep.subr.mxu0 0.0
    %1689 = vmatpush1.msra.mxu0 0.0
    %1690 = vmatprep.subr.mxu0 0.0
    %1691 = vmatpush1.msra.mxu0 0.0
    %1692 = vmatprep.subr.mxu0 0.0
    %1693 = vmatpush1.msra.mxu0 0.0
    %1694 = vmatprep.subr.mxu0 0.0
    %1695 = vmatpush1.msra.mxu0 0.0
    %1696 = vmatprep.subr.mxu0 0.0
    %1697 = vmatpush1.msra.mxu0 0.0
    %1698 = vmatprep.subr.mxu0 0.0
    %1699 = vmatpush1.msra.mxu0 0.0
    %1700 = vmatprep.subr.mxu0 0.0
    %1701 = vmatpush1.msra.mxu0 0.0
    %1702 = vmatprep.subr.mxu0 0.0
    %1703 = vmatpush1.msra.mxu0 0.0
    %1704 = vmatprep.subr.mxu0 0.0
    %1705 = vmatpush1.msra.mxu0 0.0
    %1706 = vmatprep.subr.mxu0 0.0
    %1707 = vmatpush1.msra.mxu0 0.0
    %1708 = vmatprep.subr.mxu0 0.0
    %1709 = vmatpush1.msra.mxu0 0.0
    %1710 = vmatprep.subr.mxu0 0.0
    %1711 = vmatpush1.msra.mxu0 0.0
    %1712 = vmatprep.subr.mxu0 0.0
    %1713 = vmatpush1.msra.mxu0 0.0
    %1714 = vmatprep.subr.mxu0 0.0
    %1715 = vmatpush1.msra.mxu0 0.0
    %1716 = vmatprep.subr.mxu0 0.0
    %1717 = vmatpush1.msra.mxu0 0.0
    %1718 = vmatprep.subr.mxu0 0.0
    %1719 = vmatpush1.msra.mxu0 0.0
    %1720 = vmatprep.subr.mxu0 0.0
    %1721 = vmatpush1.msra.mxu0 0.0
    %1722 = vmatprep.subr.mxu0 0.0
    %1723 = vmatpush1.msra.mxu0 0.0
    %1724 = vmatprep.subr.mxu0 0.0
    %1725 = vmatpush1.msra.mxu0 0.0
    %1726 = vmatprep.subr.mxu0 0.0
    %1727 = vmatpush1.msra.mxu0 0.0
    %1728 = vmatprep.subr.mxu0 0.0
    %1729 = vmatpush1.msra.mxu0 0.0
    %1730 = vmatprep.subr.mxu0 0.0
    %1731 = vmatpush1.msra.mxu0 0.0
    %1732 = vmatprep.subr.mxu0 0.0
    %1733 = vmatpush1.msra.mxu0 0.0
    %1734 = vmatprep.subr.mxu0 0.0
    %1735 = vmatpush1.msra.mxu0 0.0
    %1736 = vmatprep.subr.mxu0 0.0
    %1737 = vmatpush1.msra.mxu0 0.0
    %1738 = vmatprep.subr.mxu0 0.0
    %1739 = vmatpush1.msra.mxu0 0.0
    %1740 = vmatprep.subr.mxu0 0.0
    %1741 = vmatpush1.msra.mxu0 0.0
    %1742 = vmatprep.subr.mxu0 0.0
    %1743 = vmatpush1.msra.mxu0 0.0
    %1744 = vmatprep.subr.mxu0 0.0
    %1745 = vmatpush1.msra.mxu0 0.0
    %1746 = vmatprep.mubr.f32.mxu0 0.0
    %1747 = vmatmul.mubr.f32.gmra.mrb[0].mxu0 %v1680
    %v1748 = vpop.f32.mrb[0].mxu0
    %v1749 = vadd.f32 %v75, %v1748
    %v1750 = vpop.f32.mrb[0].mxu0
    %1751 = vdwg.mxu0
    %v1752 = vxor.u32 %v1749, 2147483648
    %v1753 = vmul.f32 %v1752, 1.442695
    %v1754 = vpow.pop %v1753
    %v1755 = vadd.f32 %v1754, 1.0
    %v1756 = vrcp.pop %v1755
    %v1757 = vmul.f32 1.0, %v1756
    %v1758 = vmul.f32 %v1749, %v1757
    %v1760 = vsel %vm173, %v1758, 0
    %1762 = vmatprep.subr.mxu0 0.0
    %1763 = vmatpush1.msra.mxu0 %v58
    %1764 = vmatprep.subr.mxu0 0.0
    %1765 = vmatpush1.msra.mxu0 %v59
    %1766 = vmatprep.subr.mxu0 0.0
    %1767 = vmatpush1.msra.mxu0 %v60
    %1768 = vmatprep.subr.mxu0 0.0
    %1769 = vmatpush1.msra.mxu0 %v61
    %1770 = vmatprep.subr.mxu0 0.0
    %1771 = vmatpush1.msra.mxu0 0.0
    %1772 = vmatprep.subr.mxu0 0.0
    %1773 = vmatpush1.msra.mxu0 0.0
    %1774 = vmatprep.subr.mxu0 0.0
    %1775 = vmatpush1.msra.mxu0 0.0
    %1776 = vmatprep.subr.mxu0 0.0
    %1777 = vmatpush1.msra.mxu0 0.0
    %1778 = vmatprep.subr.mxu0 0.0
    %1779 = vmatpush1.msra.mxu0 0.0
    %1780 = vmatprep.subr.mxu0 0.0
    %1781 = vmatpush1.msra.mxu0 0.0
    %1782 = vmatprep.subr.mxu0 0.0
    %1783 = vmatpush1.msra.mxu0 0.0
    %1784 = vmatprep.subr.mxu0 0.0
    %1785 = vmatpush1.msra.mxu0 0.0
    %1786 = vmatprep.subr.mxu0 0.0
    %1787 = vmatpush1.msra.mxu0 0.0
    %1788 = vmatprep.subr.mxu0 0.0
    %1789 = vmatpush1.msra.mxu0 0.0
    %1790 = vmatprep.subr.mxu0 0.0
    %1791 = vmatpush1.msra.mxu0 0.0
    %1792 = vmatprep.subr.mxu0 0.0
    %1793 = vmatpush1.msra.mxu0 0.0
    %1794 = vmatprep.subr.mxu0 0.0
    %1795 = vmatpush1.msra.mxu0 0.0
    %1796 = vmatprep.subr.mxu0 0.0
    %1797 = vmatpush1.msra.mxu0 0.0
    %1798 = vmatprep.subr.mxu0 0.0
    %1799 = vmatpush1.msra.mxu0 0.0
    %1800 = vmatprep.subr.mxu0 0.0
    %1801 = vmatpush1.msra.mxu0 0.0
    %1802 = vmatprep.subr.mxu0 0.0
    %1803 = vmatpush1.msra.mxu0 0.0
    %1804 = vmatprep.subr.mxu0 0.0
    %1805 = vmatpush1.msra.mxu0 0.0
    %1806 = vmatprep.subr.mxu0 0.0
    %1807 = vmatpush1.msra.mxu0 0.0
    %1808 = vmatprep.subr.mxu0 0.0
    %1809 = vmatpush1.msra.mxu0 0.0
    %1810 = vmatprep.subr.mxu0 0.0
    %1811 = vmatpush1.msra.mxu0 0.0
    %1812 = vmatprep.subr.mxu0 0.0
    %1813 = vmatpush1.msra.mxu0 0.0
    %1814 = vmatprep.subr.mxu0 0.0
    %1815 = vmatpush1.msra.mxu0 0.0
    %1816 = vmatprep.subr.mxu0 0.0
    %1817 = vmatpush1.msra.mxu0 0.0
    %1818 = vmatprep.subr.mxu0 0.0
    %1819 = vmatpush1.msra.mxu0 0.0
    %1820 = vmatprep.subr.mxu0 0.0
    %1821 = vmatpush1.msra.mxu0 0.0
    %1822 = vmatprep.subr.mxu0 0.0
    %1823 = vmatpush1.msra.mxu0 0.0
    %1824 = vmatprep.subr.mxu0 0.0
    %1825 = vmatpush1.msra.mxu0 0.0
    %1826 = vmatprep.mubr.f32.mxu0 0.0
    %1827 = vmatmul.mubr.f32.gmra.mrb[0].mxu0 %v1760
    %v1828 = vpop.f32.mrb[0].mxu0
    %v1829 = vadd.f32 %v82, %v1828
    %v1830 = vpop.f32.mrb[0].mxu0
    %1831 = vdwg.mxu0
    %v1832 = vxor.u32 %v1829, 2147483648
    %v1833 = vmul.f32 %v1832, 1.442695
    %v1834 = vpow.pop %v1833
    %v1835 = vadd.f32 %v1834, 1.0
    %v1836 = vrcp.pop %v1835
    %v1837 = vmul.f32 1.0, %v1836
    %v1838 = vmul.f32 %v1829, %v1837
    %v1839 = vsub.f32 1.0, %v1837
    %v1840 = vmul.f32 %v1838, %v1839
    %v1841 = vadd.f32 %v1837, %v1840
    %v1842 = vmul.f32 %v89, %v1841
    %v1844 = vsel %vm173, %v1842, 0
    %1846 = vmatprep.subr.mxu0 0.0
    %1847 = vmatpush1.msra.mxu0 %v66
    %1848 = vmatprep.subr.mxu0 0.0
    %1849 = vmatpush1.msra.mxu0 %v67
    %1850 = vmatprep.subr.mxu0 0.0
    %1851 = vmatpush1.msra.mxu0 %v68
    %1852 = vmatprep.subr.mxu0 0.0
    %1853 = vmatpush1.msra.mxu0 %v69
    %1854 = vmatprep.subr.mxu0 0.0
    %1855 = vmatpush1.msra.mxu0 0.0
    %1856 = vmatprep.subr.mxu0 0.0
    %1857 = vmatpush1.msra.mxu0 0.0
    %1858 = vmatprep.subr.mxu0 0.0
    %1859 = vmatpush1.msra.mxu0 0.0
    %1860 = vmatprep.subr.mxu0 0.0
    %1861 = vmatpush1.msra.mxu0 0.0
    %1862 = vmatprep.subr.mxu0 0.0
    %1863 = vmatpush1.msra.mxu0 0.0
    %1864 = vmatprep.subr.mxu0 0.0
    %1865 = vmatpush1.msra.mxu0 0.0
    %1866 = vmatprep.subr.mxu0 0.0
    %1867 = vmatpush1.msra.mxu0 0.0
    %1868 = vmatprep.subr.mxu0 0.0
    %1869 = vmatpush1.msra.mxu0 0.0
    %1870 = vmatprep.subr.mxu0 0.0
    %1871 = vmatpush1.msra.mxu0 0.0
    %1872 = vmatprep.subr.mxu0 0.0
    %1873 = vmatpush1.msra.mxu0 0.0
    %1874 = vmatprep.subr.mxu0 0.0
    %1875 = vmatpush1.msra.mxu0 0.0
    %1876 = vmatprep.subr.mxu0 0.0
    %1877 = vmatpush1.msra.mxu0 0.0
    %1878 = vmatprep.subr.mxu0 0.0
    %1879 = vmatpush1.msra.mxu0 0.0
    %1880 = vmatprep.subr.mxu0 0.0
    %1881 = vmatpush1.msra.mxu0 0.0
    %1882 = vmatprep.subr.mxu0 0.0
    %1883 = vmatpush1.msra.mxu0 0.0
    %1884 = vmatprep.subr.mxu0 0.0
    %1885 = vmatpush1.msra.mxu0 0.0
    %1886 = vmatprep.subr.mxu0 0.0
    %1887 = vmatpush1.msra.mxu0 0.0
    %1888 = vmatprep.subr.mxu0 0.0
    %1889 = vmatpush1.msra.mxu0 0.0
    %1890 = vmatprep.subr.mxu0 0.0
    %1891 = vmatpush1.msra.mxu0 0.0
    %1892 = vmatprep.subr.mxu0 0.0
    %1893 = vmatpush1.msra.mxu0 0.0
    %1894 = vmatprep.subr.mxu0 0.0
    %1895 = vmatpush1.msra.mxu0 0.0
    %1896 = vmatprep.subr.mxu0 0.0
    %1897 = vmatpush1.msra.mxu0 0.0
    %1898 = vmatprep.subr.mxu0 0.0
    %1899 = vmatpush1.msra.mxu0 0.0
    %1900 = vmatprep.subr.mxu0 0.0
    %1901 = vmatpush1.msra.mxu0 0.0
    %1902 = vmatprep.subr.mxu0 0.0
    %1903 = vmatpush1.msra.mxu0 0.0
    %1904 = vmatprep.subr.mxu0 0.0
    %1905 = vmatpush1.msra.mxu0 0.0
    %1906 = vmatprep.subr.mxu0 0.0
    %1907 = vmatpush1.msra.mxu0 0.0
    %1908 = vmatprep.subr.mxu0 0.0
    %1909 = vmatpush1.msra.mxu0 0.0
    %1910 = vmatprep.mubr.f32.mxu0 0.0
    %1911 = vmatmul.mubr.f32.gmra.mrb[0].mxu0 %v1844
    %v1912 = vpop.f32.mrb[0].mxu0
    %v1913 = vadd.f32 0.0, %v1912
    %v1914 = vpop.f32.mrb[0].mxu0
    %1915 = vdwg.mxu0
    %v1916 = vsub.f32 1.0, %v1757
    %v1917 = vmul.f32 %v1758, %v1916
    %v1918 = vadd.f32 %v1757, %v1917
    %v1919 = vmul.f32 %v1913, %v1918
    %v1921 = vsel %vm173, %v1919, 0
    %1923 = vmatprep.subr.mxu0 0.0
    %1924 = vmatpush1.msra.mxu0 %v62
    %1925 = vmatprep.subr.mxu0 0.0
    %1926 = vmatpush1.msra.mxu0 %v63
    %1927 = vmatprep.subr.mxu0 0.0
    %1928 = vmatpush1.msra.mxu0 %v64
    %1929 = vmatprep.subr.mxu0 0.0
    %1930 = vmatpush1.msra.mxu0 %v65
    %1931 = vmatprep.subr.mxu0 0.0
    %1932 = vmatpush1.msra.mxu0 0.0
    %1933 = vmatprep.subr.mxu0 0.0
    %1934 = vmatpush1.msra.mxu0 0.0
    %1935 = vmatprep.subr.mxu0 0.0
    %1936 = vmatpush1.msra.mxu0 0.0
    %1937 = vmatprep.subr.mxu0 0.0
    %1938 = vmatpush1.msra.mxu0 0.0
    %1939 = vmatprep.subr.mxu0 0.0
    %1940 = vmatpush1.msra.mxu0 0.0
    %1941 = vmatprep.subr.mxu0 0.0
    %1942 = vmatpush1.msra.mxu0 0.0
    %1943 = vmatprep.subr.mxu0 0.0
    %1944 = vmatpush1.msra.mxu0 0.0
    %1945 = vmatprep.subr.mxu0 0.0
    %1946 = vmatpush1.msra.mxu0 0.0
    %1947 = vmatprep.subr.mxu0 0.0
    %1948 = vmatpush1.msra.mxu0 0.0
    %1949 = vmatprep.subr.mxu0 0.0
    %1950 = vmatpush1.msra.mxu0 0.0
    %1951 = vmatprep.subr.mxu0 0.0
    %1952 = vmatpush1.msra.mxu0 0.0
    %1953 = vmatprep.subr.mxu0 0.0
    %1954 = vmatpush1.msra.mxu0 0.0
    %1955 = vmatprep.subr.mxu0 0.0
    %1956 = vmatpush1.msra.mxu0 0.0
    %1957 = vmatprep.subr.mxu0 0.0
    %1958 = vmatpush1.msra.mxu0 0.0
    %1959 = vmatprep.subr.mxu0 0.0
    %1960 = vmatpush1.msra.mxu0 0.0
    %1961 = vmatprep.subr.mxu0 0.0
    %1962 = vmatpush1.msra.mxu0 0.0
    %1963 = vmatprep.subr.mxu0 0.0
    %1964 = vmatpush1.msra.mxu0 0.0
    %1965 = vmatprep.subr.mxu0 0.0
    %1966 = vmatpush1.msra.mxu0 0.0
    %1967 = vmatprep.subr.mxu0 0.0
    %1968 = vmatpush1.msra.mxu0 0.0
    %1969 = vmatprep.subr.mxu0 0.0
    %1970 = vmatpush1.msra.mxu0 0.0
    %1971 = vmatprep.subr.mxu0 0.0
    %1972 = vmatpush1.msra.mxu0 0.0
    %1973 = vmatprep.subr.mxu0 0.0
    %1974 = vmatpush1.msra.mxu0 0.0
    %1975 = vmatprep.subr.mxu0 0.0
    %1976 = vmatpush1.msra.mxu0 0.0
    %1977 = vmatprep.subr.mxu0 0.0
    %1978 = vmatpush1.msra.mxu0 0.0
    %1979 = vmatprep.subr.mxu0 0.0
    %1980 = vmatpush1.msra.mxu0 0.0
    %1981 = vmatprep.subr.mxu0 0.0
    %1982 = vmatpush1.msra.mxu0 0.0
    %1983 = vmatprep.subr.mxu0 0.0
    %1984 = vmatpush1.msra.mxu0 0.0
    %1985 = vmatprep.subr.mxu0 0.0
    %1986 = vmatpush1.msra.mxu0 0.0
    %1987 = vmatprep.mubr.f32.mxu0 0.0
    %1988 = vmatmul.mubr.f32.gmra.mrb[0].mxu0 %v1921
    %v1989 = vpop.f32.mrb[0].mxu0
    %v1990 = vadd.f32 0.0, %v1989
    %v1991 = vpop.f32.mrb[0].mxu0
    %1992 = vdwg.mxu0
    %v1993 = vmul.f32 %v1678, 0.92
    %v1994 = vmul.f32 %v1990, 0.08
    %v1995 = vsub.f32 %v1993, %v1994
    %v1997 = vsel %vm92, %v1995, 0
    %1999 = vmatprep.subr.mxu0 0.0
    %2000 = vmatpush1.msra.mxu0 %v56
    %2001 = vmatprep.subr.mxu0 0.0
    %2002 = vmatpush1.msra.mxu0 %v57
    %2003 = vmatprep.subr.mxu0 0.0
    %2004 = vmatpush1.msra.mxu0 0.0
    %2005 = vmatprep.subr.mxu0 0.0
    %2006 = vmatpush1.msra.mxu0 0.0
    %2007 = vmatprep.subr.mxu0 0.0
    %2008 = vmatpush1.msra.mxu0 0.0
    %2009 = vmatprep.subr.mxu0 0.0
    %2010 = vmatpush1.msra.mxu0 0.0
    %2011 = vmatprep.subr.mxu0 0.0
    %2012 = vmatpush1.msra.mxu0 0.0
    %2013 = vmatprep.subr.mxu0 0.0
    %2014 = vmatpush1.msra.mxu0 0.0
    %2015 = vmatprep.subr.mxu0 0.0
    %2016 = vmatpush1.msra.mxu0 0.0
    %2017 = vmatprep.subr.mxu0 0.0
    %2018 = vmatpush1.msra.mxu0 0.0
    %2019 = vmatprep.subr.mxu0 0.0
    %2020 = vmatpush1.msra.mxu0 0.0
    %2021 = vmatprep.subr.mxu0 0.0
    %2022 = vmatpush1.msra.mxu0 0.0
    %2023 = vmatprep.subr.mxu0 0.0
    %2024 = vmatpush1.msra.mxu0 0.0
    %2025 = vmatprep.subr.mxu0 0.0
    %2026 = vmatpush1.msra.mxu0 0.0
    %2027 = vmatprep.subr.mxu0 0.0
    %2028 = vmatpush1.msra.mxu0 0.0
    %2029 = vmatprep.subr.mxu0 0.0
    %2030 = vmatpush1.msra.mxu0 0.0
    %2031 = vmatprep.subr.mxu0 0.0
    %2032 = vmatpush1.msra.mxu0 0.0
    %2033 = vmatprep.subr.mxu0 0.0
    %2034 = vmatpush1.msra.mxu0 0.0
    %2035 = vmatprep.subr.mxu0 0.0
    %2036 = vmatpush1.msra.mxu0 0.0
    %2037 = vmatprep.subr.mxu0 0.0
    %2038 = vmatpush1.msra.mxu0 0.0
    %2039 = vmatprep.subr.mxu0 0.0
    %2040 = vmatpush1.msra.mxu0 0.0
    %2041 = vmatprep.subr.mxu0 0.0
    %2042 = vmatpush1.msra.mxu0 0.0
    %2043 = vmatprep.subr.mxu0 0.0
    %2044 = vmatpush1.msra.mxu0 0.0
    %2045 = vmatprep.subr.mxu0 0.0
    %2046 = vmatpush1.msra.mxu0 0.0
    %2047 = vmatprep.subr.mxu0 0.0
    %2048 = vmatpush1.msra.mxu0 0.0
    %2049 = vmatprep.subr.mxu0 0.0
    %2050 = vmatpush1.msra.mxu0 0.0
    %2051 = vmatprep.subr.mxu0 0.0
    %2052 = vmatpush1.msra.mxu0 0.0
    %2053 = vmatprep.subr.mxu0 0.0
    %2054 = vmatpush1.msra.mxu0 0.0
    %2055 = vmatprep.subr.mxu0 0.0
    %2056 = vmatpush1.msra.mxu0 0.0
    %2057 = vmatprep.subr.mxu0 0.0
    %2058 = vmatpush1.msra.mxu0 0.0
    %2059 = vmatprep.subr.mxu0 0.0
    %2060 = vmatpush1.msra.mxu0 0.0
    %2061 = vmatprep.subr.mxu0 0.0
    %2062 = vmatpush1.msra.mxu0 0.0
    %2063 = vmatprep.mubr.f32.mxu0 0.0
    %2064 = vmatmul.mubr.f32.gmra.mrb[0].mxu0 %v1997
    %v2065 = vpop.f32.mrb[0].mxu0
    %v2066 = vadd.f32 %v75, %v2065
    %v2067 = vpop.f32.mrb[0].mxu0
    %2068 = vdwg.mxu0
    %v2069 = vxor.u32 %v2066, 2147483648
    %v2070 = vmul.f32 %v2069, 1.442695
    %v2071 = vpow.pop %v2070
    %v2072 = vadd.f32 %v2071, 1.0
    %v2073 = vrcp.pop %v2072
    %v2074 = vmul.f32 1.0, %v2073
    %v2075 = vmul.f32 %v2066, %v2074
    %v2077 = vsel %vm173, %v2075, 0
    %2079 = vmatprep.subr.mxu0 0.0
    %2080 = vmatpush1.msra.mxu0 %v58
    %2081 = vmatprep.subr.mxu0 0.0
    %2082 = vmatpush1.msra.mxu0 %v59
    %2083 = vmatprep.subr.mxu0 0.0
    %2084 = vmatpush1.msra.mxu0 %v60
    %2085 = vmatprep.subr.mxu0 0.0
    %2086 = vmatpush1.msra.mxu0 %v61
    %2087 = vmatprep.subr.mxu0 0.0
    %2088 = vmatpush1.msra.mxu0 0.0
    %2089 = vmatprep.subr.mxu0 0.0
    %2090 = vmatpush1.msra.mxu0 0.0
    %2091 = vmatprep.subr.mxu0 0.0
    %2092 = vmatpush1.msra.mxu0 0.0
    %2093 = vmatprep.subr.mxu0 0.0
    %2094 = vmatpush1.msra.mxu0 0.0
    %2095 = vmatprep.subr.mxu0 0.0
    %2096 = vmatpush1.msra.mxu0 0.0
    %2097 = vmatprep.subr.mxu0 0.0
    %2098 = vmatpush1.msra.mxu0 0.0
    %2099 = vmatprep.subr.mxu0 0.0
    %2100 = vmatpush1.msra.mxu0 0.0
    %2101 = vmatprep.subr.mxu0 0.0
    %2102 = vmatpush1.msra.mxu0 0.0
    %2103 = vmatprep.subr.mxu0 0.0
    %2104 = vmatpush1.msra.mxu0 0.0
    %2105 = vmatprep.subr.mxu0 0.0
    %2106 = vmatpush1.msra.mxu0 0.0
    %2107 = vmatprep.subr.mxu0 0.0
    %2108 = vmatpush1.msra.mxu0 0.0
    %2109 = vmatprep.subr.mxu0 0.0
    %2110 = vmatpush1.msra.mxu0 0.0
    %2111 = vmatprep.subr.mxu0 0.0
    %2112 = vmatpush1.msra.mxu0 0.0
    %2113 = vmatprep.subr.mxu0 0.0
    %2114 = vmatpush1.msra.mxu0 0.0
    %2115 = vmatprep.subr.mxu0 0.0
    %2116 = vmatpush1.msra.mxu0 0.0
    %2117 = vmatprep.subr.mxu0 0.0
    %2118 = vmatpush1.msra.mxu0 0.0
    %2119 = vmatprep.subr.mxu0 0.0
    %2120 = vmatpush1.msra.mxu0 0.0
    %2121 = vmatprep.subr.mxu0 0.0
    %2122 = vmatpush1.msra.mxu0 0.0
    %2123 = vmatprep.subr.mxu0 0.0
    %2124 = vmatpush1.msra.mxu0 0.0
    %2125 = vmatprep.subr.mxu0 0.0
    %2126 = vmatpush1.msra.mxu0 0.0
    %2127 = vmatprep.subr.mxu0 0.0
    %2128 = vmatpush1.msra.mxu0 0.0
    %2129 = vmatprep.subr.mxu0 0.0
    %2130 = vmatpush1.msra.mxu0 0.0
    %2131 = vmatprep.subr.mxu0 0.0
    %2132 = vmatpush1.msra.mxu0 0.0
    %2133 = vmatprep.subr.mxu0 0.0
    %2134 = vmatpush1.msra.mxu0 0.0
    %2135 = vmatprep.subr.mxu0 0.0
    %2136 = vmatpush1.msra.mxu0 0.0
    %2137 = vmatprep.subr.mxu0 0.0
    %2138 = vmatpush1.msra.mxu0 0.0
    %2139 = vmatprep.subr.mxu0 0.0
    %2140 = vmatpush1.msra.mxu0 0.0
    %2141 = vmatprep.subr.mxu0 0.0
    %2142 = vmatpush1.msra.mxu0 0.0
    %2143 = vmatprep.mubr.f32.mxu0 0.0
    %2144 = vmatmul.mubr.f32.gmra.mrb[0].mxu0 %v2077
    %v2145 = vpop.f32.mrb[0].mxu0
    %v2146 = vadd.f32 %v82, %v2145
    %v2147 = vpop.f32.mrb[0].mxu0
    %2148 = vdwg.mxu0
    %v2149 = vxor.u32 %v2146, 2147483648
    %v2150 = vmul.f32 %v2149, 1.442695
    %v2151 = vpow.pop %v2150
    %v2152 = vadd.f32 %v2151, 1.0
    %v2153 = vrcp.pop %v2152
    %v2154 = vmul.f32 1.0, %v2153
    %v2155 = vmul.f32 %v2146, %v2154
    %v2156 = vsub.f32 1.0, %v2154
    %v2157 = vmul.f32 %v2155, %v2156
    %v2158 = vadd.f32 %v2154, %v2157
    %v2159 = vmul.f32 %v89, %v2158
    %v2161 = vsel %vm173, %v2159, 0
    %2163 = vmatprep.subr.mxu0 0.0
    %2164 = vmatpush1.msra.mxu0 %v66
    %2165 = vmatprep.subr.mxu0 0.0
    %2166 = vmatpush1.msra.mxu0 %v67
    %2167 = vmatprep.subr.mxu0 0.0
    %2168 = vmatpush1.msra.mxu0 %v68
    %2169 = vmatprep.subr.mxu0 0.0
    %2170 = vmatpush1.msra.mxu0 %v69
    %2171 = vmatprep.subr.mxu0 0.0
    %2172 = vmatpush1.msra.mxu0 0.0
    %2173 = vmatprep.subr.mxu0 0.0
    %2174 = vmatpush1.msra.mxu0 0.0
    %2175 = vmatprep.subr.mxu0 0.0
    %2176 = vmatpush1.msra.mxu0 0.0
    %2177 = vmatprep.subr.mxu0 0.0
    %2178 = vmatpush1.msra.mxu0 0.0
    %2179 = vmatprep.subr.mxu0 0.0
    %2180 = vmatpush1.msra.mxu0 0.0
    %2181 = vmatprep.subr.mxu0 0.0
    %2182 = vmatpush1.msra.mxu0 0.0
    %2183 = vmatprep.subr.mxu0 0.0
    %2184 = vmatpush1.msra.mxu0 0.0
    %2185 = vmatprep.subr.mxu0 0.0
    %2186 = vmatpush1.msra.mxu0 0.0
    %2187 = vmatprep.subr.mxu0 0.0
    %2188 = vmatpush1.msra.mxu0 0.0
    %2189 = vmatprep.subr.mxu0 0.0
    %2190 = vmatpush1.msra.mxu0 0.0
    %2191 = vmatprep.subr.mxu0 0.0
    %2192 = vmatpush1.msra.mxu0 0.0
    %2193 = vmatprep.subr.mxu0 0.0
    %2194 = vmatpush1.msra.mxu0 0.0
    %2195 = vmatprep.subr.mxu0 0.0
    %2196 = vmatpush1.msra.mxu0 0.0
    %2197 = vmatprep.subr.mxu0 0.0
    %2198 = vmatpush1.msra.mxu0 0.0
    %2199 = vmatprep.subr.mxu0 0.0
    %2200 = vmatpush1.msra.mxu0 0.0
    %2201 = vmatprep.subr.mxu0 0.0
    %2202 = vmatpush1.msra.mxu0 0.0
    %2203 = vmatprep.subr.mxu0 0.0
    %2204 = vmatpush1.msra.mxu0 0.0
    %2205 = vmatprep.subr.mxu0 0.0
    %2206 = vmatpush1.msra.mxu0 0.0
    %2207 = vmatprep.subr.mxu0 0.0
    %2208 = vmatpush1.msra.mxu0 0.0
    %2209 = vmatprep.subr.mxu0 0.0
    %2210 = vmatpush1.msra.mxu0 0.0
    %2211 = vmatprep.subr.mxu0 0.0
    %2212 = vmatpush1.msra.mxu0 0.0
    %2213 = vmatprep.subr.mxu0 0.0
    %2214 = vmatpush1.msra.mxu0 0.0
    %2215 = vmatprep.subr.mxu0 0.0
    %2216 = vmatpush1.msra.mxu0 0.0
    %2217 = vmatprep.subr.mxu0 0.0
    %2218 = vmatpush1.msra.mxu0 0.0
    %2219 = vmatprep.subr.mxu0 0.0
    %2220 = vmatpush1.msra.mxu0 0.0
    %2221 = vmatprep.subr.mxu0 0.0
    %2222 = vmatpush1.msra.mxu0 0.0
    %2223 = vmatprep.subr.mxu0 0.0
    %2224 = vmatpush1.msra.mxu0 0.0
    %2225 = vmatprep.subr.mxu0 0.0
    %2226 = vmatpush1.msra.mxu0 0.0
    %2227 = vmatprep.mubr.f32.mxu0 0.0
    %2228 = vmatmul.mubr.f32.gmra.mrb[0].mxu0 %v2161
    %v2229 = vpop.f32.mrb[0].mxu0
    %v2230 = vadd.f32 0.0, %v2229
    %v2231 = vpop.f32.mrb[0].mxu0
    %2232 = vdwg.mxu0
    %v2233 = vsub.f32 1.0, %v2074
    %v2234 = vmul.f32 %v2075, %v2233
    %v2235 = vadd.f32 %v2074, %v2234
    %v2236 = vmul.f32 %v2230, %v2235
    %v2238 = vsel %vm173, %v2236, 0
    %2240 = vmatprep.subr.mxu0 0.0
    %2241 = vmatpush1.msra.mxu0 %v62
    %2242 = vmatprep.subr.mxu0 0.0
    %2243 = vmatpush1.msra.mxu0 %v63
    %2244 = vmatprep.subr.mxu0 0.0
    %2245 = vmatpush1.msra.mxu0 %v64
    %2246 = vmatprep.subr.mxu0 0.0
    %2247 = vmatpush1.msra.mxu0 %v65
    %2248 = vmatprep.subr.mxu0 0.0
    %2249 = vmatpush1.msra.mxu0 0.0
    %2250 = vmatprep.subr.mxu0 0.0
    %2251 = vmatpush1.msra.mxu0 0.0
    %2252 = vmatprep.subr.mxu0 0.0
    %2253 = vmatpush1.msra.mxu0 0.0
    %2254 = vmatprep.subr.mxu0 0.0
    %2255 = vmatpush1.msra.mxu0 0.0
    %2256 = vmatprep.subr.mxu0 0.0
    %2257 = vmatpush1.msra.mxu0 0.0
    %2258 = vmatprep.subr.mxu0 0.0
    %2259 = vmatpush1.msra.mxu0 0.0
    %2260 = vmatprep.subr.mxu0 0.0
    %2261 = vmatpush1.msra.mxu0 0.0
    %2262 = vmatprep.subr.mxu0 0.0
    %2263 = vmatpush1.msra.mxu0 0.0
    %2264 = vmatprep.subr.mxu0 0.0
    %2265 = vmatpush1.msra.mxu0 0.0
    %2266 = vmatprep.subr.mxu0 0.0
    %2267 = vmatpush1.msra.mxu0 0.0
    %2268 = vmatprep.subr.mxu0 0.0
    %2269 = vmatpush1.msra.mxu0 0.0
    %2270 = vmatprep.subr.mxu0 0.0
    %2271 = vmatpush1.msra.mxu0 0.0
    %2272 = vmatprep.subr.mxu0 0.0
    %2273 = vmatpush1.msra.mxu0 0.0
    %2274 = vmatprep.subr.mxu0 0.0
    %2275 = vmatpush1.msra.mxu0 0.0
    %2276 = vmatprep.subr.mxu0 0.0
    %2277 = vmatpush1.msra.mxu0 0.0
    %2278 = vmatprep.subr.mxu0 0.0
    %2279 = vmatpush1.msra.mxu0 0.0
    %2280 = vmatprep.subr.mxu0 0.0
    %2281 = vmatpush1.msra.mxu0 0.0
    %2282 = vmatprep.subr.mxu0 0.0
    %2283 = vmatpush1.msra.mxu0 0.0
    %2284 = vmatprep.subr.mxu0 0.0
    %2285 = vmatpush1.msra.mxu0 0.0
    %2286 = vmatprep.subr.mxu0 0.0
    %2287 = vmatpush1.msra.mxu0 0.0
    %2288 = vmatprep.subr.mxu0 0.0
    %2289 = vmatpush1.msra.mxu0 0.0
    %2290 = vmatprep.subr.mxu0 0.0
    %2291 = vmatpush1.msra.mxu0 0.0
    %2292 = vmatprep.subr.mxu0 0.0
    %2293 = vmatpush1.msra.mxu0 0.0
    %2294 = vmatprep.subr.mxu0 0.0
    %2295 = vmatpush1.msra.mxu0 0.0
    %2296 = vmatprep.subr.mxu0 0.0
    %2297 = vmatpush1.msra.mxu0 0.0
    %2298 = vmatprep.subr.mxu0 0.0
    %2299 = vmatpush1.msra.mxu0 0.0
    %2300 = vmatprep.subr.mxu0 0.0
    %2301 = vmatpush1.msra.mxu0 0.0
    %2302 = vmatprep.subr.mxu0 0.0
    %2303 = vmatpush1.msra.mxu0 0.0
    %2304 = vmatprep.mubr.f32.mxu0 0.0
    %2305 = vmatmul.mubr.f32.gmra.mrb[0].mxu0 %v2238
    %v2306 = vpop.f32.mrb[0].mxu0
    %v2307 = vadd.f32 0.0, %v2306
    %v2308 = vpop.f32.mrb[0].mxu0
    %2309 = vdwg.mxu0
    %v2310 = vmul.f32 %v1995, 0.92
    %v2311 = vmul.f32 %v2307, 0.08
    %v2312 = vsub.f32 %v2310, %v2311
    %v2314 = vsel %vm92, %v2312, 0
    %2316 = vmatprep.subr.mxu0 0.0
    %2317 = vmatpush1.msra.mxu0 %v56
    %2318 = vmatprep.subr.mxu0 0.0
    %2319 = vmatpush1.msra.mxu0 %v57
    %2320 = vmatprep.subr.mxu0 0.0
    %2321 = vmatpush1.msra.mxu0 0.0
    %2322 = vmatprep.subr.mxu0 0.0
    %2323 = vmatpush1.msra.mxu0 0.0
    %2324 = vmatprep.subr.mxu0 0.0
    %2325 = vmatpush1.msra.mxu0 0.0
    %2326 = vmatprep.subr.mxu0 0.0
    %2327 = vmatpush1.msra.mxu0 0.0
    %2328 = vmatprep.subr.mxu0 0.0
    %2329 = vmatpush1.msra.mxu0 0.0
    %2330 = vmatprep.subr.mxu0 0.0
    %2331 = vmatpush1.msra.mxu0 0.0
    %2332 = vmatprep.subr.mxu0 0.0
    %2333 = vmatpush1.msra.mxu0 0.0
    %2334 = vmatprep.subr.mxu0 0.0
    %2335 = vmatpush1.msra.mxu0 0.0
    %2336 = vmatprep.subr.mxu0 0.0
    %2337 = vmatpush1.msra.mxu0 0.0
    %2338 = vmatprep.subr.mxu0 0.0
    %2339 = vmatpush1.msra.mxu0 0.0
    %2340 = vmatprep.subr.mxu0 0.0
    %2341 = vmatpush1.msra.mxu0 0.0
    %2342 = vmatprep.subr.mxu0 0.0
    %2343 = vmatpush1.msra.mxu0 0.0
    %2344 = vmatprep.subr.mxu0 0.0
    %2345 = vmatpush1.msra.mxu0 0.0
    %2346 = vmatprep.subr.mxu0 0.0
    %2347 = vmatpush1.msra.mxu0 0.0
    %2348 = vmatprep.subr.mxu0 0.0
    %2349 = vmatpush1.msra.mxu0 0.0
    %2350 = vmatprep.subr.mxu0 0.0
    %2351 = vmatpush1.msra.mxu0 0.0
    %2352 = vmatprep.subr.mxu0 0.0
    %2353 = vmatpush1.msra.mxu0 0.0
    %2354 = vmatprep.subr.mxu0 0.0
    %2355 = vmatpush1.msra.mxu0 0.0
    %2356 = vmatprep.subr.mxu0 0.0
    %2357 = vmatpush1.msra.mxu0 0.0
    %2358 = vmatprep.subr.mxu0 0.0
    %2359 = vmatpush1.msra.mxu0 0.0
    %2360 = vmatprep.subr.mxu0 0.0
    %2361 = vmatpush1.msra.mxu0 0.0
    %2362 = vmatprep.subr.mxu0 0.0
    %2363 = vmatpush1.msra.mxu0 0.0
    %2364 = vmatprep.subr.mxu0 0.0
    %2365 = vmatpush1.msra.mxu0 0.0
    %2366 = vmatprep.subr.mxu0 0.0
    %2367 = vmatpush1.msra.mxu0 0.0
    %2368 = vmatprep.subr.mxu0 0.0
    %2369 = vmatpush1.msra.mxu0 0.0
    %2370 = vmatprep.subr.mxu0 0.0
    %2371 = vmatpush1.msra.mxu0 0.0
    %2372 = vmatprep.subr.mxu0 0.0
    %2373 = vmatpush1.msra.mxu0 0.0
    %2374 = vmatprep.subr.mxu0 0.0
    %2375 = vmatpush1.msra.mxu0 0.0
    %2376 = vmatprep.subr.mxu0 0.0
    %2377 = vmatpush1.msra.mxu0 0.0
    %2378 = vmatprep.subr.mxu0 0.0
    %2379 = vmatpush1.msra.mxu0 0.0
    %2380 = vmatprep.mubr.f32.mxu0 0.0
    %2381 = vmatmul.mubr.f32.gmra.mrb[0].mxu0 %v2314
    %v2382 = vpop.f32.mrb[0].mxu0
    %v2383 = vadd.f32 %v75, %v2382
    %v2384 = vpop.f32.mrb[0].mxu0
    %2385 = vdwg.mxu0
    %v2386 = vxor.u32 %v2383, 2147483648
    %v2387 = vmul.f32 %v2386, 1.442695
    %v2388 = vpow.pop %v2387
    %v2389 = vadd.f32 %v2388, 1.0
    %v2390 = vrcp.pop %v2389
    %v2391 = vmul.f32 1.0, %v2390
    %v2392 = vmul.f32 %v2383, %v2391
    %v2394 = vsel %vm173, %v2392, 0
    %2396 = vmatprep.subr.mxu0 0.0
    %2397 = vmatpush1.msra.mxu0 %v58
    %2398 = vmatprep.subr.mxu0 0.0
    %2399 = vmatpush1.msra.mxu0 %v59
    %2400 = vmatprep.subr.mxu0 0.0
    %2401 = vmatpush1.msra.mxu0 %v60
    %2402 = vmatprep.subr.mxu0 0.0
    %2403 = vmatpush1.msra.mxu0 %v61
    %2404 = vmatprep.subr.mxu0 0.0
    %2405 = vmatpush1.msra.mxu0 0.0
    %2406 = vmatprep.subr.mxu0 0.0
    %2407 = vmatpush1.msra.mxu0 0.0
    %2408 = vmatprep.subr.mxu0 0.0
    %2409 = vmatpush1.msra.mxu0 0.0
    %2410 = vmatprep.subr.mxu0 0.0
    %2411 = vmatpush1.msra.mxu0 0.0
    %2412 = vmatprep.subr.mxu0 0.0
    %2413 = vmatpush1.msra.mxu0 0.0
    %2414 = vmatprep.subr.mxu0 0.0
    %2415 = vmatpush1.msra.mxu0 0.0
    %2416 = vmatprep.subr.mxu0 0.0
    %2417 = vmatpush1.msra.mxu0 0.0
    %2418 = vmatprep.subr.mxu0 0.0
    %2419 = vmatpush1.msra.mxu0 0.0
    %2420 = vmatprep.subr.mxu0 0.0
    %2421 = vmatpush1.msra.mxu0 0.0
    %2422 = vmatprep.subr.mxu0 0.0
    %2423 = vmatpush1.msra.mxu0 0.0
    %2424 = vmatprep.subr.mxu0 0.0
    %2425 = vmatpush1.msra.mxu0 0.0
    %2426 = vmatprep.subr.mxu0 0.0
    %2427 = vmatpush1.msra.mxu0 0.0
    %2428 = vmatprep.subr.mxu0 0.0
    %2429 = vmatpush1.msra.mxu0 0.0
    %2430 = vmatprep.subr.mxu0 0.0
    %2431 = vmatpush1.msra.mxu0 0.0
    %2432 = vmatprep.subr.mxu0 0.0
    %2433 = vmatpush1.msra.mxu0 0.0
    %2434 = vmatprep.subr.mxu0 0.0
    %2435 = vmatpush1.msra.mxu0 0.0
    %2436 = vmatprep.subr.mxu0 0.0
    %2437 = vmatpush1.msra.mxu0 0.0
    %2438 = vmatprep.subr.mxu0 0.0
    %2439 = vmatpush1.msra.mxu0 0.0
    %2440 = vmatprep.subr.mxu0 0.0
    %2441 = vmatpush1.msra.mxu0 0.0
    %2442 = vmatprep.subr.mxu0 0.0
    %2443 = vmatpush1.msra.mxu0 0.0
    %2444 = vmatprep.subr.mxu0 0.0
    %2445 = vmatpush1.msra.mxu0 0.0
    %2446 = vmatprep.subr.mxu0 0.0
    %2447 = vmatpush1.msra.mxu0 0.0
    %2448 = vmatprep.subr.mxu0 0.0
    %2449 = vmatpush1.msra.mxu0 0.0
    %2450 = vmatprep.subr.mxu0 0.0
    %2451 = vmatpush1.msra.mxu0 0.0
    %2452 = vmatprep.subr.mxu0 0.0
    %2453 = vmatpush1.msra.mxu0 0.0
    %2454 = vmatprep.subr.mxu0 0.0
    %2455 = vmatpush1.msra.mxu0 0.0
    %2456 = vmatprep.subr.mxu0 0.0
    %2457 = vmatpush1.msra.mxu0 0.0
    %2458 = vmatprep.subr.mxu0 0.0
    %2459 = vmatpush1.msra.mxu0 0.0
    %2460 = vmatprep.mubr.f32.mxu0 0.0
    %2461 = vmatmul.mubr.f32.gmra.mrb[0].mxu0 %v2394
    %v2462 = vpop.f32.mrb[0].mxu0
    %v2463 = vadd.f32 %v82, %v2462
    %v2464 = vpop.f32.mrb[0].mxu0
    %2465 = vdwg.mxu0
    %v2466 = vxor.u32 %v2463, 2147483648
    %v2467 = vmul.f32 %v2466, 1.442695
    %v2468 = vpow.pop %v2467
    %v2469 = vadd.f32 %v2468, 1.0
    %v2470 = vrcp.pop %v2469
    %v2471 = vmul.f32 1.0, %v2470
    %v2472 = vmul.f32 %v2463, %v2471
    %v2473 = vsub.f32 1.0, %v2471
    %v2474 = vmul.f32 %v2472, %v2473
    %v2475 = vadd.f32 %v2471, %v2474
    %v2476 = vmul.f32 %v89, %v2475
    %v2478 = vsel %vm173, %v2476, 0
    %2480 = vmatprep.subr.mxu0 0.0
    %2481 = vmatpush1.msra.mxu0 %v66
    %2482 = vmatprep.subr.mxu0 0.0
    %2483 = vmatpush1.msra.mxu0 %v67
    %2484 = vmatprep.subr.mxu0 0.0
    %2485 = vmatpush1.msra.mxu0 %v68
    %2486 = vmatprep.subr.mxu0 0.0
    %2487 = vmatpush1.msra.mxu0 %v69
    %2488 = vmatprep.subr.mxu0 0.0
    %2489 = vmatpush1.msra.mxu0 0.0
    %2490 = vmatprep.subr.mxu0 0.0
    %2491 = vmatpush1.msra.mxu0 0.0
    %2492 = vmatprep.subr.mxu0 0.0
    %2493 = vmatpush1.msra.mxu0 0.0
    %2494 = vmatprep.subr.mxu0 0.0
    %2495 = vmatpush1.msra.mxu0 0.0
    %2496 = vmatprep.subr.mxu0 0.0
    %2497 = vmatpush1.msra.mxu0 0.0
    %2498 = vmatprep.subr.mxu0 0.0
    %2499 = vmatpush1.msra.mxu0 0.0
    %2500 = vmatprep.subr.mxu0 0.0
    %2501 = vmatpush1.msra.mxu0 0.0
    %2502 = vmatprep.subr.mxu0 0.0
    %2503 = vmatpush1.msra.mxu0 0.0
    %2504 = vmatprep.subr.mxu0 0.0
    %2505 = vmatpush1.msra.mxu0 0.0
    %2506 = vmatprep.subr.mxu0 0.0
    %2507 = vmatpush1.msra.mxu0 0.0
    %2508 = vmatprep.subr.mxu0 0.0
    %2509 = vmatpush1.msra.mxu0 0.0
    %2510 = vmatprep.subr.mxu0 0.0
    %2511 = vmatpush1.msra.mxu0 0.0
    %2512 = vmatprep.subr.mxu0 0.0
    %2513 = vmatpush1.msra.mxu0 0.0
    %2514 = vmatprep.subr.mxu0 0.0
    %2515 = vmatpush1.msra.mxu0 0.0
    %2516 = vmatprep.subr.mxu0 0.0
    %2517 = vmatpush1.msra.mxu0 0.0
    %2518 = vmatprep.subr.mxu0 0.0
    %2519 = vmatpush1.msra.mxu0 0.0
    %2520 = vmatprep.subr.mxu0 0.0
    %2521 = vmatpush1.msra.mxu0 0.0
    %2522 = vmatprep.subr.mxu0 0.0
    %2523 = vmatpush1.msra.mxu0 0.0
    %2524 = vmatprep.subr.mxu0 0.0
    %2525 = vmatpush1.msra.mxu0 0.0
    %2526 = vmatprep.subr.mxu0 0.0
    %2527 = vmatpush1.msra.mxu0 0.0
    %2528 = vmatprep.subr.mxu0 0.0
    %2529 = vmatpush1.msra.mxu0 0.0
    %2530 = vmatprep.subr.mxu0 0.0
    %2531 = vmatpush1.msra.mxu0 0.0
    %2532 = vmatprep.subr.mxu0 0.0
    %2533 = vmatpush1.msra.mxu0 0.0
    %2534 = vmatprep.subr.mxu0 0.0
    %2535 = vmatpush1.msra.mxu0 0.0
    %2536 = vmatprep.subr.mxu0 0.0
    %2537 = vmatpush1.msra.mxu0 0.0
    %2538 = vmatprep.subr.mxu0 0.0
    %2539 = vmatpush1.msra.mxu0 0.0
    %2540 = vmatprep.subr.mxu0 0.0
    %2541 = vmatpush1.msra.mxu0 0.0
    %2542 = vmatprep.subr.mxu0 0.0
    %2543 = vmatpush1.msra.mxu0 0.0
    %2544 = vmatprep.mubr.f32.mxu0 0.0
    %2545 = vmatmul.mubr.f32.gmra.mrb[0].mxu0 %v2478
    %v2546 = vpop.f32.mrb[0].mxu0
    %v2547 = vadd.f32 0.0, %v2546
    %v2548 = vpop.f32.mrb[0].mxu0
    %2549 = vdwg.mxu0
    %v2550 = vsub.f32 1.0, %v2391
    %v2551 = vmul.f32 %v2392, %v2550
    %v2552 = vadd.f32 %v2391, %v2551
    %v2553 = vmul.f32 %v2547, %v2552
    %v2555 = vsel %vm173, %v2553, 0
    %2557 = vmatprep.subr.mxu0 0.0
    %2558 = vmatpush1.msra.mxu0 %v62
    %2559 = vmatprep.subr.mxu0 0.0
    %2560 = vmatpush1.msra.mxu0 %v63
    %2561 = vmatprep.subr.mxu0 0.0
    %2562 = vmatpush1.msra.mxu0 %v64
    %2563 = vmatprep.subr.mxu0 0.0
    %2564 = vmatpush1.msra.mxu0 %v65
    %2565 = vmatprep.subr.mxu0 0.0
    %2566 = vmatpush1.msra.mxu0 0.0
    %2567 = vmatprep.subr.mxu0 0.0
    %2568 = vmatpush1.msra.mxu0 0.0
    %2569 = vmatprep.subr.mxu0 0.0
    %2570 = vmatpush1.msra.mxu0 0.0
    %2571 = vmatprep.subr.mxu0 0.0
    %2572 = vmatpush1.msra.mxu0 0.0
    %2573 = vmatprep.subr.mxu0 0.0
    %2574 = vmatpush1.msra.mxu0 0.0
    %2575 = vmatprep.subr.mxu0 0.0
    %2576 = vmatpush1.msra.mxu0 0.0
    %2577 = vmatprep.subr.mxu0 0.0
    %2578 = vmatpush1.msra.mxu0 0.0
    %2579 = vmatprep.subr.mxu0 0.0
    %2580 = vmatpush1.msra.mxu0 0.0
    %2581 = vmatprep.subr.mxu0 0.0
    %2582 = vmatpush1.msra.mxu0 0.0
    %2583 = vmatprep.subr.mxu0 0.0
    %2584 = vmatpush1.msra.mxu0 0.0
    %2585 = vmatprep.subr.mxu0 0.0
    %2586 = vmatpush1.msra.mxu0 0.0
    %2587 = vmatprep.subr.mxu0 0.0
    %2588 = vmatpush1.msra.mxu0 0.0
    %2589 = vmatprep.subr.mxu0 0.0
    %2590 = vmatpush1.msra.mxu0 0.0
    %2591 = vmatprep.subr.mxu0 0.0
    %2592 = vmatpush1.msra.mxu0 0.0
    %2593 = vmatprep.subr.mxu0 0.0
    %2594 = vmatpush1.msra.mxu0 0.0
    %2595 = vmatprep.subr.mxu0 0.0
    %2596 = vmatpush1.msra.mxu0 0.0
    %2597 = vmatprep.subr.mxu0 0.0
    %2598 = vmatpush1.msra.mxu0 0.0
    %2599 = vmatprep.subr.mxu0 0.0
    %2600 = vmatpush1.msra.mxu0 0.0
    %2601 = vmatprep.subr.mxu0 0.0
    %2602 = vmatpush1.msra.mxu0 0.0
    %2603 = vmatprep.subr.mxu0 0.0
    %2604 = vmatpush1.msra.mxu0 0.0
    %2605 = vmatprep.subr.mxu0 0.0
    %2606 = vmatpush1.msra.mxu0 0.0
    %2607 = vmatprep.subr.mxu0 0.0
    %2608 = vmatpush1.msra.mxu0 0.0
    %2609 = vmatprep.subr.mxu0 0.0
    %2610 = vmatpush1.msra.mxu0 0.0
    %2611 = vmatprep.subr.mxu0 0.0
    %2612 = vmatpush1.msra.mxu0 0.0
    %2613 = vmatprep.subr.mxu0 0.0
    %2614 = vmatpush1.msra.mxu0 0.0
    %2615 = vmatprep.subr.mxu0 0.0
    %2616 = vmatpush1.msra.mxu0 0.0
    %2617 = vmatprep.subr.mxu0 0.0
    %2618 = vmatpush1.msra.mxu0 0.0
    %2619 = vmatprep.subr.mxu0 0.0
    %2620 = vmatpush1.msra.mxu0 0.0
    %2621 = vmatprep.mubr.f32.mxu0 0.0
    %2622 = vmatmul.mubr.f32.gmra.mrb[0].mxu0 %v2555
    %v2623 = vpop.f32.mrb[0].mxu0
    %v2624 = vadd.f32 0.0, %v2623
    %v2625 = vpop.f32.mrb[0].mxu0
    %2626 = vdwg.mxu0
    %v2627 = vmul.f32 %v2312, 0.92
    %v2628 = vmul.f32 %v2624, 0.08
    %v2629 = vsub.f32 %v2627, %v2628
    %v2631 = vsel %vm92, %v2629, 0
    %2633 = vmatprep.subr.mxu0 0.0
    %2634 = vmatpush1.msra.mxu0 %v56
    %2635 = vmatprep.subr.mxu0 0.0
    %2636 = vmatpush1.msra.mxu0 %v57
    %2637 = vmatprep.subr.mxu0 0.0
    %2638 = vmatpush1.msra.mxu0 0.0
    %2639 = vmatprep.subr.mxu0 0.0
    %2640 = vmatpush1.msra.mxu0 0.0
    %2641 = vmatprep.subr.mxu0 0.0
    %2642 = vmatpush1.msra.mxu0 0.0
    %2643 = vmatprep.subr.mxu0 0.0
    %2644 = vmatpush1.msra.mxu0 0.0
    %2645 = vmatprep.subr.mxu0 0.0
    %2646 = vmatpush1.msra.mxu0 0.0
    %2647 = vmatprep.subr.mxu0 0.0
    %2648 = vmatpush1.msra.mxu0 0.0
    %2649 = vmatprep.subr.mxu0 0.0
    %2650 = vmatpush1.msra.mxu0 0.0
    %2651 = vmatprep.subr.mxu0 0.0
    %2652 = vmatpush1.msra.mxu0 0.0
    %2653 = vmatprep.subr.mxu0 0.0
    %2654 = vmatpush1.msra.mxu0 0.0
    %2655 = vmatprep.subr.mxu0 0.0
    %2656 = vmatpush1.msra.mxu0 0.0
    %2657 = vmatprep.subr.mxu0 0.0
    %2658 = vmatpush1.msra.mxu0 0.0
    %2659 = vmatprep.subr.mxu0 0.0
    %2660 = vmatpush1.msra.mxu0 0.0
    %2661 = vmatprep.subr.mxu0 0.0
    %2662 = vmatpush1.msra.mxu0 0.0
    %2663 = vmatprep.subr.mxu0 0.0
    %2664 = vmatpush1.msra.mxu0 0.0
    %2665 = vmatprep.subr.mxu0 0.0
    %2666 = vmatpush1.msra.mxu0 0.0
    %2667 = vmatprep.subr.mxu0 0.0
    %2668 = vmatpush1.msra.mxu0 0.0
    %2669 = vmatprep.subr.mxu0 0.0
    %2670 = vmatpush1.msra.mxu0 0.0
    %2671 = vmatprep.subr.mxu0 0.0
    %2672 = vmatpush1.msra.mxu0 0.0
    %2673 = vmatprep.subr.mxu0 0.0
    %2674 = vmatpush1.msra.mxu0 0.0
    %2675 = vmatprep.subr.mxu0 0.0
    %2676 = vmatpush1.msra.mxu0 0.0
    %2677 = vmatprep.subr.mxu0 0.0
    %2678 = vmatpush1.msra.mxu0 0.0
    %2679 = vmatprep.subr.mxu0 0.0
    %2680 = vmatpush1.msra.mxu0 0.0
    %2681 = vmatprep.subr.mxu0 0.0
    %2682 = vmatpush1.msra.mxu0 0.0
    %2683 = vmatprep.subr.mxu0 0.0
    %2684 = vmatpush1.msra.mxu0 0.0
    %2685 = vmatprep.subr.mxu0 0.0
    %2686 = vmatpush1.msra.mxu0 0.0
    %2687 = vmatprep.subr.mxu0 0.0
    %2688 = vmatpush1.msra.mxu0 0.0
    %2689 = vmatprep.subr.mxu0 0.0
    %2690 = vmatpush1.msra.mxu0 0.0
    %2691 = vmatprep.subr.mxu0 0.0
    %2692 = vmatpush1.msra.mxu0 0.0
    %2693 = vmatprep.subr.mxu0 0.0
    %2694 = vmatpush1.msra.mxu0 0.0
    %2695 = vmatprep.subr.mxu0 0.0
    %2696 = vmatpush1.msra.mxu0 0.0
    %2697 = vmatprep.mubr.f32.mxu0 0.0
    %2698 = vmatmul.mubr.f32.gmra.mrb[0].mxu0 %v2631
    %v2699 = vpop.f32.mrb[0].mxu0
    %v2700 = vadd.f32 %v75, %v2699
    %v2701 = vpop.f32.mrb[0].mxu0
    %2702 = vdwg.mxu0
    %v2703 = vxor.u32 %v2700, 2147483648
    %v2704 = vmul.f32 %v2703, 1.442695
    %v2705 = vpow.pop %v2704
    %v2706 = vadd.f32 %v2705, 1.0
    %v2707 = vrcp.pop %v2706
    %v2708 = vmul.f32 1.0, %v2707
    %v2709 = vmul.f32 %v2700, %v2708
    %v2711 = vsel %vm173, %v2709, 0
    %2713 = vmatprep.subr.mxu0 0.0
    %2714 = vmatpush1.msra.mxu0 %v58
    %2715 = vmatprep.subr.mxu0 0.0
    %2716 = vmatpush1.msra.mxu0 %v59
    %2717 = vmatprep.subr.mxu0 0.0
    %2718 = vmatpush1.msra.mxu0 %v60
    %2719 = vmatprep.subr.mxu0 0.0
    %2720 = vmatpush1.msra.mxu0 %v61
    %2721 = vmatprep.subr.mxu0 0.0
    %2722 = vmatpush1.msra.mxu0 0.0
    %2723 = vmatprep.subr.mxu0 0.0
    %2724 = vmatpush1.msra.mxu0 0.0
    %2725 = vmatprep.subr.mxu0 0.0
    %2726 = vmatpush1.msra.mxu0 0.0
    %2727 = vmatprep.subr.mxu0 0.0
    %2728 = vmatpush1.msra.mxu0 0.0
    %2729 = vmatprep.subr.mxu0 0.0
    %2730 = vmatpush1.msra.mxu0 0.0
    %2731 = vmatprep.subr.mxu0 0.0
    %2732 = vmatpush1.msra.mxu0 0.0
    %2733 = vmatprep.subr.mxu0 0.0
    %2734 = vmatpush1.msra.mxu0 0.0
    %2735 = vmatprep.subr.mxu0 0.0
    %2736 = vmatpush1.msra.mxu0 0.0
    %2737 = vmatprep.subr.mxu0 0.0
    %2738 = vmatpush1.msra.mxu0 0.0
    %2739 = vmatprep.subr.mxu0 0.0
    %2740 = vmatpush1.msra.mxu0 0.0
    %2741 = vmatprep.subr.mxu0 0.0
    %2742 = vmatpush1.msra.mxu0 0.0
    %2743 = vmatprep.subr.mxu0 0.0
    %2744 = vmatpush1.msra.mxu0 0.0
    %2745 = vmatprep.subr.mxu0 0.0
    %2746 = vmatpush1.msra.mxu0 0.0
    %2747 = vmatprep.subr.mxu0 0.0
    %2748 = vmatpush1.msra.mxu0 0.0
    %2749 = vmatprep.subr.mxu0 0.0
    %2750 = vmatpush1.msra.mxu0 0.0
    %2751 = vmatprep.subr.mxu0 0.0
    %2752 = vmatpush1.msra.mxu0 0.0
    %2753 = vmatprep.subr.mxu0 0.0
    %2754 = vmatpush1.msra.mxu0 0.0
    %2755 = vmatprep.subr.mxu0 0.0
    %2756 = vmatpush1.msra.mxu0 0.0
    %2757 = vmatprep.subr.mxu0 0.0
    %2758 = vmatpush1.msra.mxu0 0.0
    %2759 = vmatprep.subr.mxu0 0.0
    %2760 = vmatpush1.msra.mxu0 0.0
    %2761 = vmatprep.subr.mxu0 0.0
    %2762 = vmatpush1.msra.mxu0 0.0
    %2763 = vmatprep.subr.mxu0 0.0
    %2764 = vmatpush1.msra.mxu0 0.0
    %2765 = vmatprep.subr.mxu0 0.0
    %2766 = vmatpush1.msra.mxu0 0.0
    %2767 = vmatprep.subr.mxu0 0.0
    %2768 = vmatpush1.msra.mxu0 0.0
    %2769 = vmatprep.subr.mxu0 0.0
    %2770 = vmatpush1.msra.mxu0 0.0
    %2771 = vmatprep.subr.mxu0 0.0
    %2772 = vmatpush1.msra.mxu0 0.0
    %2773 = vmatprep.subr.mxu0 0.0
    %2774 = vmatpush1.msra.mxu0 0.0
    %2775 = vmatprep.subr.mxu0 0.0
    %2776 = vmatpush1.msra.mxu0 0.0
    %2777 = vmatprep.mubr.f32.mxu0 0.0
    %2778 = vmatmul.mubr.f32.gmra.mrb[0].mxu0 %v2711
    %v2779 = vpop.f32.mrb[0].mxu0
    %v2780 = vadd.f32 %v82, %v2779
    %v2781 = vpop.f32.mrb[0].mxu0
    %2782 = vdwg.mxu0
    %v2783 = vxor.u32 %v2780, 2147483648
    %v2784 = vmul.f32 %v2783, 1.442695
    %v2785 = vpow.pop %v2784
    %v2786 = vadd.f32 %v2785, 1.0
    %v2787 = vrcp.pop %v2786
    %v2788 = vmul.f32 1.0, %v2787
    %v2789 = vmul.f32 %v2780, %v2788
    %v2790 = vsub.f32 1.0, %v2788
    %v2791 = vmul.f32 %v2789, %v2790
    %v2792 = vadd.f32 %v2788, %v2791
    %v2793 = vmul.f32 %v89, %v2792
    %v2795 = vsel %vm173, %v2793, 0
    %2797 = vmatprep.subr.mxu0 0.0
    %2798 = vmatpush1.msra.mxu0 %v66
    %2799 = vmatprep.subr.mxu0 0.0
    %2800 = vmatpush1.msra.mxu0 %v67
    %2801 = vmatprep.subr.mxu0 0.0
    %2802 = vmatpush1.msra.mxu0 %v68
    %2803 = vmatprep.subr.mxu0 0.0
    %2804 = vmatpush1.msra.mxu0 %v69
    %2805 = vmatprep.subr.mxu0 0.0
    %2806 = vmatpush1.msra.mxu0 0.0
    %2807 = vmatprep.subr.mxu0 0.0
    %2808 = vmatpush1.msra.mxu0 0.0
    %2809 = vmatprep.subr.mxu0 0.0
    %2810 = vmatpush1.msra.mxu0 0.0
    %2811 = vmatprep.subr.mxu0 0.0
    %2812 = vmatpush1.msra.mxu0 0.0
    %2813 = vmatprep.subr.mxu0 0.0
    %2814 = vmatpush1.msra.mxu0 0.0
    %2815 = vmatprep.subr.mxu0 0.0
    %2816 = vmatpush1.msra.mxu0 0.0
    %2817 = vmatprep.subr.mxu0 0.0
    %2818 = vmatpush1.msra.mxu0 0.0
    %2819 = vmatprep.subr.mxu0 0.0
    %2820 = vmatpush1.msra.mxu0 0.0
    %2821 = vmatprep.subr.mxu0 0.0
    %2822 = vmatpush1.msra.mxu0 0.0
    %2823 = vmatprep.subr.mxu0 0.0
    %2824 = vmatpush1.msra.mxu0 0.0
    %2825 = vmatprep.subr.mxu0 0.0
    %2826 = vmatpush1.msra.mxu0 0.0
    %2827 = vmatprep.subr.mxu0 0.0
    %2828 = vmatpush1.msra.mxu0 0.0
    %2829 = vmatprep.subr.mxu0 0.0
    %2830 = vmatpush1.msra.mxu0 0.0
    %2831 = vmatprep.subr.mxu0 0.0
    %2832 = vmatpush1.msra.mxu0 0.0
    %2833 = vmatprep.subr.mxu0 0.0
    %2834 = vmatpush1.msra.mxu0 0.0
    %2835 = vmatprep.subr.mxu0 0.0
    %2836 = vmatpush1.msra.mxu0 0.0
    %2837 = vmatprep.subr.mxu0 0.0
    %2838 = vmatpush1.msra.mxu0 0.0
    %2839 = vmatprep.subr.mxu0 0.0
    %2840 = vmatpush1.msra.mxu0 0.0
    %2841 = vmatprep.subr.mxu0 0.0
    %2842 = vmatpush1.msra.mxu0 0.0
    %2843 = vmatprep.subr.mxu0 0.0
    %2844 = vmatpush1.msra.mxu0 0.0
    %2845 = vmatprep.subr.mxu0 0.0
    %2846 = vmatpush1.msra.mxu0 0.0
    %2847 = vmatprep.subr.mxu0 0.0
    %2848 = vmatpush1.msra.mxu0 0.0
    %2849 = vmatprep.subr.mxu0 0.0
    %2850 = vmatpush1.msra.mxu0 0.0
    %2851 = vmatprep.subr.mxu0 0.0
    %2852 = vmatpush1.msra.mxu0 0.0
    %2853 = vmatprep.subr.mxu0 0.0
    %2854 = vmatpush1.msra.mxu0 0.0
    %2855 = vmatprep.subr.mxu0 0.0
    %2856 = vmatpush1.msra.mxu0 0.0
    %2857 = vmatprep.subr.mxu0 0.0
    %2858 = vmatpush1.msra.mxu0 0.0
    %2859 = vmatprep.subr.mxu0 0.0
    %2860 = vmatpush1.msra.mxu0 0.0
    %2861 = vmatprep.mubr.f32.mxu0 0.0
    %2862 = vmatmul.mubr.f32.gmra.mrb[0].mxu0 %v2795
    %v2863 = vpop.f32.mrb[0].mxu0
    %v2864 = vadd.f32 0.0, %v2863
    %v2865 = vpop.f32.mrb[0].mxu0
    %2866 = vdwg.mxu0
    %v2867 = vsub.f32 1.0, %v2708
    %v2868 = vmul.f32 %v2709, %v2867
    %v2869 = vadd.f32 %v2708, %v2868
    %v2870 = vmul.f32 %v2864, %v2869
    %v2872 = vsel %vm173, %v2870, 0
    %2874 = vmatprep.subr.mxu0 0.0
    %2875 = vmatpush1.msra.mxu0 %v62
    %2876 = vmatprep.subr.mxu0 0.0
    %2877 = vmatpush1.msra.mxu0 %v63
    %2878 = vmatprep.subr.mxu0 0.0
    %2879 = vmatpush1.msra.mxu0 %v64
    %2880 = vmatprep.subr.mxu0 0.0
    %2881 = vmatpush1.msra.mxu0 %v65
    %2882 = vmatprep.subr.mxu0 0.0
    %2883 = vmatpush1.msra.mxu0 0.0
    %2884 = vmatprep.subr.mxu0 0.0
    %2885 = vmatpush1.msra.mxu0 0.0
    %2886 = vmatprep.subr.mxu0 0.0
    %2887 = vmatpush1.msra.mxu0 0.0
    %2888 = vmatprep.subr.mxu0 0.0
    %2889 = vmatpush1.msra.mxu0 0.0
    %2890 = vmatprep.subr.mxu0 0.0
    %2891 = vmatpush1.msra.mxu0 0.0
    %2892 = vmatprep.subr.mxu0 0.0
    %2893 = vmatpush1.msra.mxu0 0.0
    %2894 = vmatprep.subr.mxu0 0.0
    %2895 = vmatpush1.msra.mxu0 0.0
    %2896 = vmatprep.subr.mxu0 0.0
    %2897 = vmatpush1.msra.mxu0 0.0
    %2898 = vmatprep.subr.mxu0 0.0
    %2899 = vmatpush1.msra.mxu0 0.0
    %2900 = vmatprep.subr.mxu0 0.0
    %2901 = vmatpush1.msra.mxu0 0.0
    %2902 = vmatprep.subr.mxu0 0.0
    %2903 = vmatpush1.msra.mxu0 0.0
    %2904 = vmatprep.subr.mxu0 0.0
    %2905 = vmatpush1.msra.mxu0 0.0
    %2906 = vmatprep.subr.mxu0 0.0
    %2907 = vmatpush1.msra.mxu0 0.0
    %2908 = vmatprep.subr.mxu0 0.0
    %2909 = vmatpush1.msra.mxu0 0.0
    %2910 = vmatprep.subr.mxu0 0.0
    %2911 = vmatpush1.msra.mxu0 0.0
    %2912 = vmatprep.subr.mxu0 0.0
    %2913 = vmatpush1.msra.mxu0 0.0
    %2914 = vmatprep.subr.mxu0 0.0
    %2915 = vmatpush1.msra.mxu0 0.0
    %2916 = vmatprep.subr.mxu0 0.0
    %2917 = vmatpush1.msra.mxu0 0.0
    %2918 = vmatprep.subr.mxu0 0.0
    %2919 = vmatpush1.msra.mxu0 0.0
    %2920 = vmatprep.subr.mxu0 0.0
    %2921 = vmatpush1.msra.mxu0 0.0
    %2922 = vmatprep.subr.mxu0 0.0
    %2923 = vmatpush1.msra.mxu0 0.0
    %2924 = vmatprep.subr.mxu0 0.0
    %2925 = vmatpush1.msra.mxu0 0.0
    %2926 = vmatprep.subr.mxu0 0.0
    %2927 = vmatpush1.msra.mxu0 0.0
    %2928 = vmatprep.subr.mxu0 0.0
    %2929 = vmatpush1.msra.mxu0 0.0
    %2930 = vmatprep.subr.mxu0 0.0
    %2931 = vmatpush1.msra.mxu0 0.0
    %2932 = vmatprep.subr.mxu0 0.0
    %2933 = vmatpush1.msra.mxu0 0.0
    %2934 = vmatprep.subr.mxu0 0.0
    %2935 = vmatpush1.msra.mxu0 0.0
    %2936 = vmatprep.subr.mxu0 0.0
    %2937 = vmatpush1.msra.mxu0 0.0
    %2938 = vmatprep.mubr.f32.mxu0 0.0
    %2939 = vmatmul.mubr.f32.gmra.mrb[0].mxu0 %v2872
    %v2940 = vpop.f32.mrb[0].mxu0
    %v2941 = vadd.f32 0.0, %v2940
    %v2942 = vpop.f32.mrb[0].mxu0
    %2943 = vdwg.mxu0
    %v2944 = vmul.f32 %v2629, 0.92
    %v2945 = vmul.f32 %v2941, 0.08
    %v2946 = vsub.f32 %v2944, %v2945
    %v2948 = vsel %vm92, %v2946, 0
    %2950 = vmatprep.subr.mxu0 0.0
    %2951 = vmatpush1.msra.mxu0 %v56
    %2952 = vmatprep.subr.mxu0 0.0
    %2953 = vmatpush1.msra.mxu0 %v57
    %2954 = vmatprep.subr.mxu0 0.0
    %2955 = vmatpush1.msra.mxu0 0.0
    %2956 = vmatprep.subr.mxu0 0.0
    %2957 = vmatpush1.msra.mxu0 0.0
    %2958 = vmatprep.subr.mxu0 0.0
    %2959 = vmatpush1.msra.mxu0 0.0
    %2960 = vmatprep.subr.mxu0 0.0
    %2961 = vmatpush1.msra.mxu0 0.0
    %2962 = vmatprep.subr.mxu0 0.0
    %2963 = vmatpush1.msra.mxu0 0.0
    %2964 = vmatprep.subr.mxu0 0.0
    %2965 = vmatpush1.msra.mxu0 0.0
    %2966 = vmatprep.subr.mxu0 0.0
    %2967 = vmatpush1.msra.mxu0 0.0
    %2968 = vmatprep.subr.mxu0 0.0
    %2969 = vmatpush1.msra.mxu0 0.0
    %2970 = vmatprep.subr.mxu0 0.0
    %2971 = vmatpush1.msra.mxu0 0.0
    %2972 = vmatprep.subr.mxu0 0.0
    %2973 = vmatpush1.msra.mxu0 0.0
    %2974 = vmatprep.subr.mxu0 0.0
    %2975 = vmatpush1.msra.mxu0 0.0
    %2976 = vmatprep.subr.mxu0 0.0
    %2977 = vmatpush1.msra.mxu0 0.0
    %2978 = vmatprep.subr.mxu0 0.0
    %2979 = vmatpush1.msra.mxu0 0.0
    %2980 = vmatprep.subr.mxu0 0.0
    %2981 = vmatpush1.msra.mxu0 0.0
    %2982 = vmatprep.subr.mxu0 0.0
    %2983 = vmatpush1.msra.mxu0 0.0
    %2984 = vmatprep.subr.mxu0 0.0
    %2985 = vmatpush1.msra.mxu0 0.0
    %2986 = vmatprep.subr.mxu0 0.0
    %2987 = vmatpush1.msra.mxu0 0.0
    %2988 = vmatprep.subr.mxu0 0.0
    %2989 = vmatpush1.msra.mxu0 0.0
    %2990 = vmatprep.subr.mxu0 0.0
    %2991 = vmatpush1.msra.mxu0 0.0
    %2992 = vmatprep.subr.mxu0 0.0
    %2993 = vmatpush1.msra.mxu0 0.0
    %2994 = vmatprep.subr.mxu0 0.0
    %2995 = vmatpush1.msra.mxu0 0.0
    %2996 = vmatprep.subr.mxu0 0.0
    %2997 = vmatpush1.msra.mxu0 0.0
    %2998 = vmatprep.subr.mxu0 0.0
    %2999 = vmatpush1.msra.mxu0 0.0
    %3000 = vmatprep.subr.mxu0 0.0
    %3001 = vmatpush1.msra.mxu0 0.0
    %3002 = vmatprep.subr.mxu0 0.0
    %3003 = vmatpush1.msra.mxu0 0.0
    %3004 = vmatprep.subr.mxu0 0.0
    %3005 = vmatpush1.msra.mxu0 0.0
    %3006 = vmatprep.subr.mxu0 0.0
    %3007 = vmatpush1.msra.mxu0 0.0
    %3008 = vmatprep.subr.mxu0 0.0
    %3009 = vmatpush1.msra.mxu0 0.0
    %3010 = vmatprep.subr.mxu0 0.0
    %3011 = vmatpush1.msra.mxu0 0.0
    %3012 = vmatprep.subr.mxu0 0.0
    %3013 = vmatpush1.msra.mxu0 0.0
    %3014 = vmatprep.mubr.f32.mxu0 0.0
    %3015 = vmatmul.mubr.f32.gmra.mrb[0].mxu0 %v2948
    %v3016 = vpop.f32.mrb[0].mxu0
    %v3017 = vadd.f32 %v75, %v3016
    %v3018 = vpop.f32.mrb[0].mxu0
    %3019 = vdwg.mxu0
    %v3020 = vxor.u32 %v3017, 2147483648
    %v3021 = vmul.f32 %v3020, 1.442695
    %v3022 = vpow.pop %v3021
    %v3023 = vadd.f32 %v3022, 1.0
    %v3024 = vrcp.pop %v3023
    %v3025 = vmul.f32 1.0, %v3024
    %v3026 = vmul.f32 %v3017, %v3025
    %v3028 = vsel %vm173, %v3026, 0
    %3030 = vmatprep.subr.mxu0 0.0
    %3031 = vmatpush1.msra.mxu0 %v58
    %3032 = vmatprep.subr.mxu0 0.0
    %3033 = vmatpush1.msra.mxu0 %v59
    %3034 = vmatprep.subr.mxu0 0.0
    %3035 = vmatpush1.msra.mxu0 %v60
    %3036 = vmatprep.subr.mxu0 0.0
    %3037 = vmatpush1.msra.mxu0 %v61
    %3038 = vmatprep.subr.mxu0 0.0
    %3039 = vmatpush1.msra.mxu0 0.0
    %3040 = vmatprep.subr.mxu0 0.0
    %3041 = vmatpush1.msra.mxu0 0.0
    %3042 = vmatprep.subr.mxu0 0.0
    %3043 = vmatpush1.msra.mxu0 0.0
    %3044 = vmatprep.subr.mxu0 0.0
    %3045 = vmatpush1.msra.mxu0 0.0
    %3046 = vmatprep.subr.mxu0 0.0
    %3047 = vmatpush1.msra.mxu0 0.0
    %3048 = vmatprep.subr.mxu0 0.0
    %3049 = vmatpush1.msra.mxu0 0.0
    %3050 = vmatprep.subr.mxu0 0.0
    %3051 = vmatpush1.msra.mxu0 0.0
    %3052 = vmatprep.subr.mxu0 0.0
    %3053 = vmatpush1.msra.mxu0 0.0
    %3054 = vmatprep.subr.mxu0 0.0
    %3055 = vmatpush1.msra.mxu0 0.0
    %3056 = vmatprep.subr.mxu0 0.0
    %3057 = vmatpush1.msra.mxu0 0.0
    %3058 = vmatprep.subr.mxu0 0.0
    %3059 = vmatpush1.msra.mxu0 0.0
    %3060 = vmatprep.subr.mxu0 0.0
    %3061 = vmatpush1.msra.mxu0 0.0
    %3062 = vmatprep.subr.mxu0 0.0
    %3063 = vmatpush1.msra.mxu0 0.0
    %3064 = vmatprep.subr.mxu0 0.0
    %3065 = vmatpush1.msra.mxu0 0.0
    %3066 = vmatprep.subr.mxu0 0.0
    %3067 = vmatpush1.msra.mxu0 0.0
    %3068 = vmatprep.subr.mxu0 0.0
    %3069 = vmatpush1.msra.mxu0 0.0
    %3070 = vmatprep.subr.mxu0 0.0
    %3071 = vmatpush1.msra.mxu0 0.0
    %3072 = vmatprep.subr.mxu0 0.0
    %3073 = vmatpush1.msra.mxu0 0.0
    %3074 = vmatprep.subr.mxu0 0.0
    %3075 = vmatpush1.msra.mxu0 0.0
    %3076 = vmatprep.subr.mxu0 0.0
    %3077 = vmatpush1.msra.mxu0 0.0
    %3078 = vmatprep.subr.mxu0 0.0
    %3079 = vmatpush1.msra.mxu0 0.0
    %3080 = vmatprep.subr.mxu0 0.0
    %3081 = vmatpush1.msra.mxu0 0.0
    %3082 = vmatprep.subr.mxu0 0.0
    %3083 = vmatpush1.msra.mxu0 0.0
    %3084 = vmatprep.subr.mxu0 0.0
    %3085 = vmatpush1.msra.mxu0 0.0
    %3086 = vmatprep.subr.mxu0 0.0
    %3087 = vmatpush1.msra.mxu0 0.0
    %3088 = vmatprep.subr.mxu0 0.0
    %3089 = vmatpush1.msra.mxu0 0.0
    %3090 = vmatprep.subr.mxu0 0.0
    %3091 = vmatpush1.msra.mxu0 0.0
    %3092 = vmatprep.subr.mxu0 0.0
    %3093 = vmatpush1.msra.mxu0 0.0
    %3094 = vmatprep.mubr.f32.mxu0 0.0
    %3095 = vmatmul.mubr.f32.gmra.mrb[0].mxu0 %v3028
    %v3096 = vpop.f32.mrb[0].mxu0
    %v3097 = vadd.f32 %v82, %v3096
    %v3098 = vpop.f32.mrb[0].mxu0
    %3099 = vdwg.mxu0
    %v3100 = vxor.u32 %v3097, 2147483648
    %v3101 = vmul.f32 %v3100, 1.442695
    %v3102 = vpow.pop %v3101
    %v3103 = vadd.f32 %v3102, 1.0
    %v3104 = vrcp.pop %v3103
    %v3105 = vmul.f32 1.0, %v3104
    %v3106 = vmul.f32 %v3097, %v3105
    %v3107 = vsub.f32 1.0, %v3105
    %v3108 = vmul.f32 %v3106, %v3107
    %v3109 = vadd.f32 %v3105, %v3108
    %v3110 = vmul.f32 %v89, %v3109
    %v3112 = vsel %vm173, %v3110, 0
    %3114 = vmatprep.subr.mxu0 0.0
    %3115 = vmatpush1.msra.mxu0 %v66
    %3116 = vmatprep.subr.mxu0 0.0
    %3117 = vmatpush1.msra.mxu0 %v67
    %3118 = vmatprep.subr.mxu0 0.0
    %3119 = vmatpush1.msra.mxu0 %v68
    %3120 = vmatprep.subr.mxu0 0.0
    %3121 = vmatpush1.msra.mxu0 %v69
    %3122 = vmatprep.subr.mxu0 0.0
    %3123 = vmatpush1.msra.mxu0 0.0
    %3124 = vmatprep.subr.mxu0 0.0
    %3125 = vmatpush1.msra.mxu0 0.0
    %3126 = vmatprep.subr.mxu0 0.0
    %3127 = vmatpush1.msra.mxu0 0.0
    %3128 = vmatprep.subr.mxu0 0.0
    %3129 = vmatpush1.msra.mxu0 0.0
    %3130 = vmatprep.subr.mxu0 0.0
    %3131 = vmatpush1.msra.mxu0 0.0
    %3132 = vmatprep.subr.mxu0 0.0
    %3133 = vmatpush1.msra.mxu0 0.0
    %3134 = vmatprep.subr.mxu0 0.0
    %3135 = vmatpush1.msra.mxu0 0.0
    %3136 = vmatprep.subr.mxu0 0.0
    %3137 = vmatpush1.msra.mxu0 0.0
    %3138 = vmatprep.subr.mxu0 0.0
    %3139 = vmatpush1.msra.mxu0 0.0
    %3140 = vmatprep.subr.mxu0 0.0
    %3141 = vmatpush1.msra.mxu0 0.0
    %3142 = vmatprep.subr.mxu0 0.0
    %3143 = vmatpush1.msra.mxu0 0.0
    %3144 = vmatprep.subr.mxu0 0.0
    %3145 = vmatpush1.msra.mxu0 0.0
    %3146 = vmatprep.subr.mxu0 0.0
    %3147 = vmatpush1.msra.mxu0 0.0
    %3148 = vmatprep.subr.mxu0 0.0
    %3149 = vmatpush1.msra.mxu0 0.0
    %3150 = vmatprep.subr.mxu0 0.0
    %3151 = vmatpush1.msra.mxu0 0.0
    %3152 = vmatprep.subr.mxu0 0.0
    %3153 = vmatpush1.msra.mxu0 0.0
    %3154 = vmatprep.subr.mxu0 0.0
    %3155 = vmatpush1.msra.mxu0 0.0
    %3156 = vmatprep.subr.mxu0 0.0
    %3157 = vmatpush1.msra.mxu0 0.0
    %3158 = vmatprep.subr.mxu0 0.0
    %3159 = vmatpush1.msra.mxu0 0.0
    %3160 = vmatprep.subr.mxu0 0.0
    %3161 = vmatpush1.msra.mxu0 0.0
    %3162 = vmatprep.subr.mxu0 0.0
    %3163 = vmatpush1.msra.mxu0 0.0
    %3164 = vmatprep.subr.mxu0 0.0
    %3165 = vmatpush1.msra.mxu0 0.0
    %3166 = vmatprep.subr.mxu0 0.0
    %3167 = vmatpush1.msra.mxu0 0.0
    %3168 = vmatprep.subr.mxu0 0.0
    %3169 = vmatpush1.msra.mxu0 0.0
    %3170 = vmatprep.subr.mxu0 0.0
    %3171 = vmatpush1.msra.mxu0 0.0
    %3172 = vmatprep.subr.mxu0 0.0
    %3173 = vmatpush1.msra.mxu0 0.0
    %3174 = vmatprep.subr.mxu0 0.0
    %3175 = vmatpush1.msra.mxu0 0.0
    %3176 = vmatprep.subr.mxu0 0.0
    %3177 = vmatpush1.msra.mxu0 0.0
    %3178 = vmatprep.mubr.f32.mxu0 0.0
    %3179 = vmatmul.mubr.f32.gmra.mrb[0].mxu0 %v3112
    %v3180 = vpop.f32.mrb[0].mxu0
    %v3181 = vadd.f32 0.0, %v3180
    %v3182 = vpop.f32.mrb[0].mxu0
    %3183 = vdwg.mxu0
    %v3184 = vsub.f32 1.0, %v3025
    %v3185 = vmul.f32 %v3026, %v3184
    %v3186 = vadd.f32 %v3025, %v3185
    %v3187 = vmul.f32 %v3181, %v3186
    %v3189 = vsel %vm173, %v3187, 0
    %3191 = vmatprep.subr.mxu0 0.0
    %3192 = vmatpush1.msra.mxu0 %v62
    %3193 = vmatprep.subr.mxu0 0.0
    %3194 = vmatpush1.msra.mxu0 %v63
    %3195 = vmatprep.subr.mxu0 0.0
    %3196 = vmatpush1.msra.mxu0 %v64
    %3197 = vmatprep.subr.mxu0 0.0
    %3198 = vmatpush1.msra.mxu0 %v65
    %3199 = vmatprep.subr.mxu0 0.0
    %3200 = vmatpush1.msra.mxu0 0.0
    %3201 = vmatprep.subr.mxu0 0.0
    %3202 = vmatpush1.msra.mxu0 0.0
    %3203 = vmatprep.subr.mxu0 0.0
    %3204 = vmatpush1.msra.mxu0 0.0
    %3205 = vmatprep.subr.mxu0 0.0
    %3206 = vmatpush1.msra.mxu0 0.0
    %3207 = vmatprep.subr.mxu0 0.0
    %3208 = vmatpush1.msra.mxu0 0.0
    %3209 = vmatprep.subr.mxu0 0.0
    %3210 = vmatpush1.msra.mxu0 0.0
    %3211 = vmatprep.subr.mxu0 0.0
    %3212 = vmatpush1.msra.mxu0 0.0
    %3213 = vmatprep.subr.mxu0 0.0
    %3214 = vmatpush1.msra.mxu0 0.0
    %3215 = vmatprep.subr.mxu0 0.0
    %3216 = vmatpush1.msra.mxu0 0.0
    %3217 = vmatprep.subr.mxu0 0.0
    %3218 = vmatpush1.msra.mxu0 0.0
    %3219 = vmatprep.subr.mxu0 0.0
    %3220 = vmatpush1.msra.mxu0 0.0
    %3221 = vmatprep.subr.mxu0 0.0
    %3222 = vmatpush1.msra.mxu0 0.0
    %3223 = vmatprep.subr.mxu0 0.0
    %3224 = vmatpush1.msra.mxu0 0.0
    %3225 = vmatprep.subr.mxu0 0.0
    %3226 = vmatpush1.msra.mxu0 0.0
    %3227 = vmatprep.subr.mxu0 0.0
    %3228 = vmatpush1.msra.mxu0 0.0
    %3229 = vmatprep.subr.mxu0 0.0
    %3230 = vmatpush1.msra.mxu0 0.0
    %3231 = vmatprep.subr.mxu0 0.0
    %3232 = vmatpush1.msra.mxu0 0.0
    %3233 = vmatprep.subr.mxu0 0.0
    %3234 = vmatpush1.msra.mxu0 0.0
    %3235 = vmatprep.subr.mxu0 0.0
    %3236 = vmatpush1.msra.mxu0 0.0
    %3237 = vmatprep.subr.mxu0 0.0
    %3238 = vmatpush1.msra.mxu0 0.0
    %3239 = vmatprep.subr.mxu0 0.0
    %3240 = vmatpush1.msra.mxu0 0.0
    %3241 = vmatprep.subr.mxu0 0.0
    %3242 = vmatpush1.msra.mxu0 0.0
    %3243 = vmatprep.subr.mxu0 0.0
    %3244 = vmatpush1.msra.mxu0 0.0
    %3245 = vmatprep.subr.mxu0 0.0
    %3246 = vmatpush1.msra.mxu0 0.0
    %3247 = vmatprep.subr.mxu0 0.0
    %3248 = vmatpush1.msra.mxu0 0.0
    %3249 = vmatprep.subr.mxu0 0.0
    %3250 = vmatpush1.msra.mxu0 0.0
    %3251 = vmatprep.subr.mxu0 0.0
    %3252 = vmatpush1.msra.mxu0 0.0
    %3253 = vmatprep.subr.mxu0 0.0
    %3254 = vmatpush1.msra.mxu0 0.0
    %3255 = vmatprep.mubr.f32.mxu0 0.0
    %3256 = vmatmul.mubr.f32.gmra.mrb[0].mxu0 %v3189
    %v3257 = vpop.f32.mrb[0].mxu0
    %v3258 = vadd.f32 0.0, %v3257
    %v3259 = vpop.f32.mrb[0].mxu0
    %3260 = vdwg.mxu0
    %v3261 = vmul.f32 %v2946, 0.92
    %v3262 = vmul.f32 %v3258, 0.08
    %v3263 = vsub.f32 %v3261, %v3262
    %v3265 = vsel %vm92, %v3263, 0
    %3267 = vmatprep.subr.mxu0 0.0
    %3268 = vmatpush1.msra.mxu0 %v56
    %3269 = vmatprep.subr.mxu0 0.0
    %3270 = vmatpush1.msra.mxu0 %v57
    %3271 = vmatprep.subr.mxu0 0.0
    %3272 = vmatpush1.msra.mxu0 0.0
    %3273 = vmatprep.subr.mxu0 0.0
    %3274 = vmatpush1.msra.mxu0 0.0
    %3275 = vmatprep.subr.mxu0 0.0
    %3276 = vmatpush1.msra.mxu0 0.0
    %3277 = vmatprep.subr.mxu0 0.0
    %3278 = vmatpush1.msra.mxu0 0.0
    %3279 = vmatprep.subr.mxu0 0.0
    %3280 = vmatpush1.msra.mxu0 0.0
    %3281 = vmatprep.subr.mxu0 0.0
    %3282 = vmatpush1.msra.mxu0 0.0
    %3283 = vmatprep.subr.mxu0 0.0
    %3284 = vmatpush1.msra.mxu0 0.0
    %3285 = vmatprep.subr.mxu0 0.0
    %3286 = vmatpush1.msra.mxu0 0.0
    %3287 = vmatprep.subr.mxu0 0.0
    %3288 = vmatpush1.msra.mxu0 0.0
    %3289 = vmatprep.subr.mxu0 0.0
    %3290 = vmatpush1.msra.mxu0 0.0
    %3291 = vmatprep.subr.mxu0 0.0
    %3292 = vmatpush1.msra.mxu0 0.0
    %3293 = vmatprep.subr.mxu0 0.0
    %3294 = vmatpush1.msra.mxu0 0.0
    %3295 = vmatprep.subr.mxu0 0.0
    %3296 = vmatpush1.msra.mxu0 0.0
    %3297 = vmatprep.subr.mxu0 0.0
    %3298 = vmatpush1.msra.mxu0 0.0
    %3299 = vmatprep.subr.mxu0 0.0
    %3300 = vmatpush1.msra.mxu0 0.0
    %3301 = vmatprep.subr.mxu0 0.0
    %3302 = vmatpush1.msra.mxu0 0.0
    %3303 = vmatprep.subr.mxu0 0.0
    %3304 = vmatpush1.msra.mxu0 0.0
    %3305 = vmatprep.subr.mxu0 0.0
    %3306 = vmatpush1.msra.mxu0 0.0
    %3307 = vmatprep.subr.mxu0 0.0
    %3308 = vmatpush1.msra.mxu0 0.0
    %3309 = vmatprep.subr.mxu0 0.0
    %3310 = vmatpush1.msra.mxu0 0.0
    %3311 = vmatprep.subr.mxu0 0.0
    %3312 = vmatpush1.msra.mxu0 0.0
    %3313 = vmatprep.subr.mxu0 0.0
    %3314 = vmatpush1.msra.mxu0 0.0
    %3315 = vmatprep.subr.mxu0 0.0
    %3316 = vmatpush1.msra.mxu0 0.0
    %3317 = vmatprep.subr.mxu0 0.0
    %3318 = vmatpush1.msra.mxu0 0.0
    %3319 = vmatprep.subr.mxu0 0.0
    %3320 = vmatpush1.msra.mxu0 0.0
    %3321 = vmatprep.subr.mxu0 0.0
    %3322 = vmatpush1.msra.mxu0 0.0
    %3323 = vmatprep.subr.mxu0 0.0
    %3324 = vmatpush1.msra.mxu0 0.0
    %3325 = vmatprep.subr.mxu0 0.0
    %3326 = vmatpush1.msra.mxu0 0.0
    %3327 = vmatprep.subr.mxu0 0.0
    %3328 = vmatpush1.msra.mxu0 0.0
    %3329 = vmatprep.subr.mxu0 0.0
    %3330 = vmatpush1.msra.mxu0 0.0
    %3331 = vmatprep.mubr.f32.mxu0 0.0
    %3332 = vmatmul.mubr.f32.gmra.mrb[0].mxu0 %v3265
    %v3333 = vpop.f32.mrb[0].mxu0
    %v3334 = vadd.f32 %v75, %v3333
    %v3335 = vpop.f32.mrb[0].mxu0
    %3336 = vdwg.mxu0
    %v3337 = vxor.u32 %v3334, 2147483648
    %v3338 = vmul.f32 %v3337, 1.442695
    %v3339 = vpow.pop %v3338
    %v3340 = vadd.f32 %v3339, 1.0
    %v3341 = vrcp.pop %v3340
    %v3342 = vmul.f32 1.0, %v3341
    %v3343 = vmul.f32 %v3334, %v3342
    %v3345 = vsel %vm173, %v3343, 0
    %3347 = vmatprep.subr.mxu0 0.0
    %3348 = vmatpush1.msra.mxu0 %v58
    %3349 = vmatprep.subr.mxu0 0.0
    %3350 = vmatpush1.msra.mxu0 %v59
    %3351 = vmatprep.subr.mxu0 0.0
    %3352 = vmatpush1.msra.mxu0 %v60
    %3353 = vmatprep.subr.mxu0 0.0
    %3354 = vmatpush1.msra.mxu0 %v61
    %3355 = vmatprep.subr.mxu0 0.0
    %3356 = vmatpush1.msra.mxu0 0.0
    %3357 = vmatprep.subr.mxu0 0.0
    %3358 = vmatpush1.msra.mxu0 0.0
    %3359 = vmatprep.subr.mxu0 0.0
    %3360 = vmatpush1.msra.mxu0 0.0
    %3361 = vmatprep.subr.mxu0 0.0
    %3362 = vmatpush1.msra.mxu0 0.0
    %3363 = vmatprep.subr.mxu0 0.0
    %3364 = vmatpush1.msra.mxu0 0.0
    %3365 = vmatprep.subr.mxu0 0.0
    %3366 = vmatpush1.msra.mxu0 0.0
    %3367 = vmatprep.subr.mxu0 0.0
    %3368 = vmatpush1.msra.mxu0 0.0
    %3369 = vmatprep.subr.mxu0 0.0
    %3370 = vmatpush1.msra.mxu0 0.0
    %3371 = vmatprep.subr.mxu0 0.0
    %3372 = vmatpush1.msra.mxu0 0.0
    %3373 = vmatprep.subr.mxu0 0.0
    %3374 = vmatpush1.msra.mxu0 0.0
    %3375 = vmatprep.subr.mxu0 0.0
    %3376 = vmatpush1.msra.mxu0 0.0
    %3377 = vmatprep.subr.mxu0 0.0
    %3378 = vmatpush1.msra.mxu0 0.0
    %3379 = vmatprep.subr.mxu0 0.0
    %3380 = vmatpush1.msra.mxu0 0.0
    %3381 = vmatprep.subr.mxu0 0.0
    %3382 = vmatpush1.msra.mxu0 0.0
    %3383 = vmatprep.subr.mxu0 0.0
    %3384 = vmatpush1.msra.mxu0 0.0
    %3385 = vmatprep.subr.mxu0 0.0
    %3386 = vmatpush1.msra.mxu0 0.0
    %3387 = vmatprep.subr.mxu0 0.0
    %3388 = vmatpush1.msra.mxu0 0.0
    %3389 = vmatprep.subr.mxu0 0.0
    %3390 = vmatpush1.msra.mxu0 0.0
    %3391 = vmatprep.subr.mxu0 0.0
    %3392 = vmatpush1.msra.mxu0 0.0
    %3393 = vmatprep.subr.mxu0 0.0
    %3394 = vmatpush1.msra.mxu0 0.0
    %3395 = vmatprep.subr.mxu0 0.0
    %3396 = vmatpush1.msra.mxu0 0.0
    %3397 = vmatprep.subr.mxu0 0.0
    %3398 = vmatpush1.msra.mxu0 0.0
    %3399 = vmatprep.subr.mxu0 0.0
    %3400 = vmatpush1.msra.mxu0 0.0
    %3401 = vmatprep.subr.mxu0 0.0
    %3402 = vmatpush1.msra.mxu0 0.0
    %3403 = vmatprep.subr.mxu0 0.0
    %3404 = vmatpush1.msra.mxu0 0.0
    %3405 = vmatprep.subr.mxu0 0.0
    %3406 = vmatpush1.msra.mxu0 0.0
    %3407 = vmatprep.subr.mxu0 0.0
    %3408 = vmatpush1.msra.mxu0 0.0
    %3409 = vmatprep.subr.mxu0 0.0
    %3410 = vmatpush1.msra.mxu0 0.0
    %3411 = vmatprep.mubr.f32.mxu0 0.0
    %3412 = vmatmul.mubr.f32.gmra.mrb[0].mxu0 %v3345
    %v3413 = vpop.f32.mrb[0].mxu0
    %v3414 = vadd.f32 %v82, %v3413
    %v3415 = vpop.f32.mrb[0].mxu0
    %3416 = vdwg.mxu0
    %v3417 = vxor.u32 %v3414, 2147483648
    %v3418 = vmul.f32 %v3417, 1.442695
    %v3419 = vpow.pop %v3418
    %v3420 = vadd.f32 %v3419, 1.0
    %v3421 = vrcp.pop %v3420
    %v3422 = vmul.f32 1.0, %v3421
    %v3423 = vmul.f32 %v3414, %v3422
    %v3424 = vsub.f32 1.0, %v3422
    %v3425 = vmul.f32 %v3423, %v3424
    %v3426 = vadd.f32 %v3422, %v3425
    %v3427 = vmul.f32 %v89, %v3426
    %v3429 = vsel %vm173, %v3427, 0
    %3431 = vmatprep.subr.mxu0 0.0
    %3432 = vmatpush1.msra.mxu0 %v66
    %3433 = vmatprep.subr.mxu0 0.0
    %3434 = vmatpush1.msra.mxu0 %v67
    %3435 = vmatprep.subr.mxu0 0.0
    %3436 = vmatpush1.msra.mxu0 %v68
    %3437 = vmatprep.subr.mxu0 0.0
    %3438 = vmatpush1.msra.mxu0 %v69
    %3439 = vmatprep.subr.mxu0 0.0
    %3440 = vmatpush1.msra.mxu0 0.0
    %3441 = vmatprep.subr.mxu0 0.0
    %3442 = vmatpush1.msra.mxu0 0.0
    %3443 = vmatprep.subr.mxu0 0.0
    %3444 = vmatpush1.msra.mxu0 0.0
    %3445 = vmatprep.subr.mxu0 0.0
    %3446 = vmatpush1.msra.mxu0 0.0
    %3447 = vmatprep.subr.mxu0 0.0
    %3448 = vmatpush1.msra.mxu0 0.0
    %3449 = vmatprep.subr.mxu0 0.0
    %3450 = vmatpush1.msra.mxu0 0.0
    %3451 = vmatprep.subr.mxu0 0.0
    %3452 = vmatpush1.msra.mxu0 0.0
    %3453 = vmatprep.subr.mxu0 0.0
    %3454 = vmatpush1.msra.mxu0 0.0
    %3455 = vmatprep.subr.mxu0 0.0
    %3456 = vmatpush1.msra.mxu0 0.0
    %3457 = vmatprep.subr.mxu0 0.0
    %3458 = vmatpush1.msra.mxu0 0.0
    %3459 = vmatprep.subr.mxu0 0.0
    %3460 = vmatpush1.msra.mxu0 0.0
    %3461 = vmatprep.subr.mxu0 0.0
    %3462 = vmatpush1.msra.mxu0 0.0
    %3463 = vmatprep.subr.mxu0 0.0
    %3464 = vmatpush1.msra.mxu0 0.0
    %3465 = vmatprep.subr.mxu0 0.0
    %3466 = vmatpush1.msra.mxu0 0.0
    %3467 = vmatprep.subr.mxu0 0.0
    %3468 = vmatpush1.msra.mxu0 0.0
    %3469 = vmatprep.subr.mxu0 0.0
    %3470 = vmatpush1.msra.mxu0 0.0
    %3471 = vmatprep.subr.mxu0 0.0
    %3472 = vmatpush1.msra.mxu0 0.0
    %3473 = vmatprep.subr.mxu0 0.0
    %3474 = vmatpush1.msra.mxu0 0.0
    %3475 = vmatprep.subr.mxu0 0.0
    %3476 = vmatpush1.msra.mxu0 0.0
    %3477 = vmatprep.subr.mxu0 0.0
    %3478 = vmatpush1.msra.mxu0 0.0
    %3479 = vmatprep.subr.mxu0 0.0
    %3480 = vmatpush1.msra.mxu0 0.0
    %3481 = vmatprep.subr.mxu0 0.0
    %3482 = vmatpush1.msra.mxu0 0.0
    %3483 = vmatprep.subr.mxu0 0.0
    %3484 = vmatpush1.msra.mxu0 0.0
    %3485 = vmatprep.subr.mxu0 0.0
    %3486 = vmatpush1.msra.mxu0 0.0
    %3487 = vmatprep.subr.mxu0 0.0
    %3488 = vmatpush1.msra.mxu0 0.0
    %3489 = vmatprep.subr.mxu0 0.0
    %3490 = vmatpush1.msra.mxu0 0.0
    %3491 = vmatprep.subr.mxu0 0.0
    %3492 = vmatpush1.msra.mxu0 0.0
    %3493 = vmatprep.subr.mxu0 0.0
    %3494 = vmatpush1.msra.mxu0 0.0
    %3495 = vmatprep.mubr.f32.mxu0 0.0
    %3496 = vmatmul.mubr.f32.gmra.mrb[0].mxu0 %v3429
    %v3497 = vpop.f32.mrb[0].mxu0
    %v3498 = vadd.f32 0.0, %v3497
    %v3499 = vpop.f32.mrb[0].mxu0
    %3500 = vdwg.mxu0
    %v3501 = vsub.f32 1.0, %v3342
    %v3502 = vmul.f32 %v3343, %v3501
    %v3503 = vadd.f32 %v3342, %v3502
    %v3504 = vmul.f32 %v3498, %v3503
    %v3506 = vsel %vm173, %v3504, 0
    %3508 = vmatprep.subr.mxu0 0.0
    %3509 = vmatpush1.msra.mxu0 %v62
    %3510 = vmatprep.subr.mxu0 0.0
    %3511 = vmatpush1.msra.mxu0 %v63
    %3512 = vmatprep.subr.mxu0 0.0
    %3513 = vmatpush1.msra.mxu0 %v64
    %3514 = vmatprep.subr.mxu0 0.0
    %3515 = vmatpush1.msra.mxu0 %v65
    %3516 = vmatprep.subr.mxu0 0.0
    %3517 = vmatpush1.msra.mxu0 0.0
    %3518 = vmatprep.subr.mxu0 0.0
    %3519 = vmatpush1.msra.mxu0 0.0
    %3520 = vmatprep.subr.mxu0 0.0
    %3521 = vmatpush1.msra.mxu0 0.0
    %3522 = vmatprep.subr.mxu0 0.0
    %3523 = vmatpush1.msra.mxu0 0.0
    %3524 = vmatprep.subr.mxu0 0.0
    %3525 = vmatpush1.msra.mxu0 0.0
    %3526 = vmatprep.subr.mxu0 0.0
    %3527 = vmatpush1.msra.mxu0 0.0
    %3528 = vmatprep.subr.mxu0 0.0
    %3529 = vmatpush1.msra.mxu0 0.0
    %3530 = vmatprep.subr.mxu0 0.0
    %3531 = vmatpush1.msra.mxu0 0.0
    %3532 = vmatprep.subr.mxu0 0.0
    %3533 = vmatpush1.msra.mxu0 0.0
    %3534 = vmatprep.subr.mxu0 0.0
    %3535 = vmatpush1.msra.mxu0 0.0
    %3536 = vmatprep.subr.mxu0 0.0
    %3537 = vmatpush1.msra.mxu0 0.0
    %3538 = vmatprep.subr.mxu0 0.0
    %3539 = vmatpush1.msra.mxu0 0.0
    %3540 = vmatprep.subr.mxu0 0.0
    %3541 = vmatpush1.msra.mxu0 0.0
    %3542 = vmatprep.subr.mxu0 0.0
    %3543 = vmatpush1.msra.mxu0 0.0
    %3544 = vmatprep.subr.mxu0 0.0
    %3545 = vmatpush1.msra.mxu0 0.0
    %3546 = vmatprep.subr.mxu0 0.0
    %3547 = vmatpush1.msra.mxu0 0.0
    %3548 = vmatprep.subr.mxu0 0.0
    %3549 = vmatpush1.msra.mxu0 0.0
    %3550 = vmatprep.subr.mxu0 0.0
    %3551 = vmatpush1.msra.mxu0 0.0
    %3552 = vmatprep.subr.mxu0 0.0
    %3553 = vmatpush1.msra.mxu0 0.0
    %3554 = vmatprep.subr.mxu0 0.0
    %3555 = vmatpush1.msra.mxu0 0.0
    %3556 = vmatprep.subr.mxu0 0.0
    %3557 = vmatpush1.msra.mxu0 0.0
    %3558 = vmatprep.subr.mxu0 0.0
    %3559 = vmatpush1.msra.mxu0 0.0
    %3560 = vmatprep.subr.mxu0 0.0
    %3561 = vmatpush1.msra.mxu0 0.0
    %3562 = vmatprep.subr.mxu0 0.0
    %3563 = vmatpush1.msra.mxu0 0.0
    %3564 = vmatprep.subr.mxu0 0.0
    %3565 = vmatpush1.msra.mxu0 0.0
    %3566 = vmatprep.subr.mxu0 0.0
    %3567 = vmatpush1.msra.mxu0 0.0
    %3568 = vmatprep.subr.mxu0 0.0
    %3569 = vmatpush1.msra.mxu0 0.0
    %3570 = vmatprep.subr.mxu0 0.0
    %3571 = vmatpush1.msra.mxu0 0.0
    %3572 = vmatprep.mubr.f32.mxu0 0.0
    %3573 = vmatmul.mubr.f32.gmra.mrb[0].mxu0 %v3506
    %v3574 = vpop.f32.mrb[0].mxu0
    %v3575 = vadd.f32 0.0, %v3574
    %v3576 = vpop.f32.mrb[0].mxu0
    %3577 = vdwg.mxu0
    %v3578 = vmul.f32 %v3263, 0.92
    %v3579 = vmul.f32 %v3575, 0.08
    %v3580 = vsub.f32 %v3578, %v3579
    %v3582 = vsel %vm92, %v3580, 0
    %3584 = vmatprep.subr.mxu0 0.0
    %3585 = vmatpush1.msra.mxu0 %v56
    %3586 = vmatprep.subr.mxu0 0.0
    %3587 = vmatpush1.msra.mxu0 %v57
    %3588 = vmatprep.subr.mxu0 0.0
    %3589 = vmatpush1.msra.mxu0 0.0
    %3590 = vmatprep.subr.mxu0 0.0
    %3591 = vmatpush1.msra.mxu0 0.0
    %3592 = vmatprep.subr.mxu0 0.0
    %3593 = vmatpush1.msra.mxu0 0.0
    %3594 = vmatprep.subr.mxu0 0.0
    %3595 = vmatpush1.msra.mxu0 0.0
    %3596 = vmatprep.subr.mxu0 0.0
    %3597 = vmatpush1.msra.mxu0 0.0
    %3598 = vmatprep.subr.mxu0 0.0
    %3599 = vmatpush1.msra.mxu0 0.0
    %3600 = vmatprep.subr.mxu0 0.0
    %3601 = vmatpush1.msra.mxu0 0.0
    %3602 = vmatprep.subr.mxu0 0.0
    %3603 = vmatpush1.msra.mxu0 0.0
    %3604 = vmatprep.subr.mxu0 0.0
    %3605 = vmatpush1.msra.mxu0 0.0
    %3606 = vmatprep.subr.mxu0 0.0
    %3607 = vmatpush1.msra.mxu0 0.0
    %3608 = vmatprep.subr.mxu0 0.0
    %3609 = vmatpush1.msra.mxu0 0.0
    %3610 = vmatprep.subr.mxu0 0.0
    %3611 = vmatpush1.msra.mxu0 0.0
    %3612 = vmatprep.subr.mxu0 0.0
    %3613 = vmatpush1.msra.mxu0 0.0
    %3614 = vmatprep.subr.mxu0 0.0
    %3615 = vmatpush1.msra.mxu0 0.0
    %3616 = vmatprep.subr.mxu0 0.0
    %3617 = vmatpush1.msra.mxu0 0.0
    %3618 = vmatprep.subr.mxu0 0.0
    %3619 = vmatpush1.msra.mxu0 0.0
    %3620 = vmatprep.subr.mxu0 0.0
    %3621 = vmatpush1.msra.mxu0 0.0
    %3622 = vmatprep.subr.mxu0 0.0
    %3623 = vmatpush1.msra.mxu0 0.0
    %3624 = vmatprep.subr.mxu0 0.0
    %3625 = vmatpush1.msra.mxu0 0.0
    %3626 = vmatprep.subr.mxu0 0.0
    %3627 = vmatpush1.msra.mxu0 0.0
    %3628 = vmatprep.subr.mxu0 0.0
    %3629 = vmatpush1.msra.mxu0 0.0
    %3630 = vmatprep.subr.mxu0 0.0
    %3631 = vmatpush1.msra.mxu0 0.0
    %3632 = vmatprep.subr.mxu0 0.0
    %3633 = vmatpush1.msra.mxu0 0.0
    %3634 = vmatprep.subr.mxu0 0.0
    %3635 = vmatpush1.msra.mxu0 0.0
    %3636 = vmatprep.subr.mxu0 0.0
    %3637 = vmatpush1.msra.mxu0 0.0
    %3638 = vmatprep.subr.mxu0 0.0
    %3639 = vmatpush1.msra.mxu0 0.0
    %3640 = vmatprep.subr.mxu0 0.0
    %3641 = vmatpush1.msra.mxu0 0.0
    %3642 = vmatprep.subr.mxu0 0.0
    %3643 = vmatpush1.msra.mxu0 0.0
    %3644 = vmatprep.subr.mxu0 0.0
    %3645 = vmatpush1.msra.mxu0 0.0
    %3646 = vmatprep.subr.mxu0 0.0
    %3647 = vmatpush1.msra.mxu0 0.0
    %3648 = vmatprep.mubr.f32.mxu0 0.0
    %3649 = vmatmul.mubr.f32.gmra.mrb[0].mxu0 %v3582
    %v3650 = vpop.f32.mrb[0].mxu0
    %v3651 = vadd.f32 %v75, %v3650
    %v3652 = vpop.f32.mrb[0].mxu0
    %3653 = vdwg.mxu0
    %v3654 = vxor.u32 %v3651, 2147483648
    %v3655 = vmul.f32 %v3654, 1.442695
    %v3656 = vpow.pop %v3655
    %v3657 = vadd.f32 %v3656, 1.0
    %v3658 = vrcp.pop %v3657
    %v3659 = vmul.f32 1.0, %v3658
    %v3660 = vmul.f32 %v3651, %v3659
    %v3662 = vsel %vm173, %v3660, 0
    %3664 = vmatprep.subr.mxu0 0.0
    %3665 = vmatpush1.msra.mxu0 %v58
    %3666 = vmatprep.subr.mxu0 0.0
    %3667 = vmatpush1.msra.mxu0 %v59
    %3668 = vmatprep.subr.mxu0 0.0
    %3669 = vmatpush1.msra.mxu0 %v60
    %3670 = vmatprep.subr.mxu0 0.0
    %3671 = vmatpush1.msra.mxu0 %v61
    %3672 = vmatprep.subr.mxu0 0.0
    %3673 = vmatpush1.msra.mxu0 0.0
    %3674 = vmatprep.subr.mxu0 0.0
    %3675 = vmatpush1.msra.mxu0 0.0
    %3676 = vmatprep.subr.mxu0 0.0
    %3677 = vmatpush1.msra.mxu0 0.0
    %3678 = vmatprep.subr.mxu0 0.0
    %3679 = vmatpush1.msra.mxu0 0.0
    %3680 = vmatprep.subr.mxu0 0.0
    %3681 = vmatpush1.msra.mxu0 0.0
    %3682 = vmatprep.subr.mxu0 0.0
    %3683 = vmatpush1.msra.mxu0 0.0
    %3684 = vmatprep.subr.mxu0 0.0
    %3685 = vmatpush1.msra.mxu0 0.0
    %3686 = vmatprep.subr.mxu0 0.0
    %3687 = vmatpush1.msra.mxu0 0.0
    %3688 = vmatprep.subr.mxu0 0.0
    %3689 = vmatpush1.msra.mxu0 0.0
    %3690 = vmatprep.subr.mxu0 0.0
    %3691 = vmatpush1.msra.mxu0 0.0
    %3692 = vmatprep.subr.mxu0 0.0
    %3693 = vmatpush1.msra.mxu0 0.0
    %3694 = vmatprep.subr.mxu0 0.0
    %3695 = vmatpush1.msra.mxu0 0.0
    %3696 = vmatprep.subr.mxu0 0.0
    %3697 = vmatpush1.msra.mxu0 0.0
    %3698 = vmatprep.subr.mxu0 0.0
    %3699 = vmatpush1.msra.mxu0 0.0
    %3700 = vmatprep.subr.mxu0 0.0
    %3701 = vmatpush1.msra.mxu0 0.0
    %3702 = vmatprep.subr.mxu0 0.0
    %3703 = vmatpush1.msra.mxu0 0.0
    %3704 = vmatprep.subr.mxu0 0.0
    %3705 = vmatpush1.msra.mxu0 0.0
    %3706 = vmatprep.subr.mxu0 0.0
    %3707 = vmatpush1.msra.mxu0 0.0
    %3708 = vmatprep.subr.mxu0 0.0
    %3709 = vmatpush1.msra.mxu0 0.0
    %3710 = vmatprep.subr.mxu0 0.0
    %3711 = vmatpush1.msra.mxu0 0.0
    %3712 = vmatprep.subr.mxu0 0.0
    %3713 = vmatpush1.msra.mxu0 0.0
    %3714 = vmatprep.subr.mxu0 0.0
    %3715 = vmatpush1.msra.mxu0 0.0
    %3716 = vmatprep.subr.mxu0 0.0
    %3717 = vmatpush1.msra.mxu0 0.0
    %3718 = vmatprep.subr.mxu0 0.0
    %3719 = vmatpush1.msra.mxu0 0.0
    %3720 = vmatprep.subr.mxu0 0.0
    %3721 = vmatpush1.msra.mxu0 0.0
    %3722 = vmatprep.subr.mxu0 0.0
    %3723 = vmatpush1.msra.mxu0 0.0
    %3724 = vmatprep.subr.mxu0 0.0
    %3725 = vmatpush1.msra.mxu0 0.0
    %3726 = vmatprep.subr.mxu0 0.0
    %3727 = vmatpush1.msra.mxu0 0.0
    %3728 = vmatprep.mubr.f32.mxu0 0.0
    %3729 = vmatmul.mubr.f32.gmra.mrb[0].mxu0 %v3662
    %v3730 = vpop.f32.mrb[0].mxu0
    %v3731 = vadd.f32 %v82, %v3730
    %v3732 = vpop.f32.mrb[0].mxu0
    %3733 = vdwg.mxu0
    %v3734 = vxor.u32 %v3731, 2147483648
    %v3735 = vmul.f32 %v3734, 1.442695
    %v3736 = vpow.pop %v3735
    %v3737 = vadd.f32 %v3736, 1.0
    %v3738 = vrcp.pop %v3737
    %v3739 = vmul.f32 1.0, %v3738
    %v3740 = vmul.f32 %v3731, %v3739
    %v3741 = vsub.f32 1.0, %v3739
    %v3742 = vmul.f32 %v3740, %v3741
    %v3743 = vadd.f32 %v3739, %v3742
    %v3744 = vmul.f32 %v89, %v3743
    %v3746 = vsel %vm173, %v3744, 0
    %3748 = vmatprep.subr.mxu0 0.0
    %3749 = vmatpush1.msra.mxu0 %v66
    %3750 = vmatprep.subr.mxu0 0.0
    %3751 = vmatpush1.msra.mxu0 %v67
    %3752 = vmatprep.subr.mxu0 0.0
    %3753 = vmatpush1.msra.mxu0 %v68
    %3754 = vmatprep.subr.mxu0 0.0
    %3755 = vmatpush1.msra.mxu0 %v69
    %3756 = vmatprep.subr.mxu0 0.0
    %3757 = vmatpush1.msra.mxu0 0.0
    %3758 = vmatprep.subr.mxu0 0.0
    %3759 = vmatpush1.msra.mxu0 0.0
    %3760 = vmatprep.subr.mxu0 0.0
    %3761 = vmatpush1.msra.mxu0 0.0
    %3762 = vmatprep.subr.mxu0 0.0
    %3763 = vmatpush1.msra.mxu0 0.0
    %3764 = vmatprep.subr.mxu0 0.0
    %3765 = vmatpush1.msra.mxu0 0.0
    %3766 = vmatprep.subr.mxu0 0.0
    %3767 = vmatpush1.msra.mxu0 0.0
    %3768 = vmatprep.subr.mxu0 0.0
    %3769 = vmatpush1.msra.mxu0 0.0
    %3770 = vmatprep.subr.mxu0 0.0
    %3771 = vmatpush1.msra.mxu0 0.0
    %3772 = vmatprep.subr.mxu0 0.0
    %3773 = vmatpush1.msra.mxu0 0.0
    %3774 = vmatprep.subr.mxu0 0.0
    %3775 = vmatpush1.msra.mxu0 0.0
    %3776 = vmatprep.subr.mxu0 0.0
    %3777 = vmatpush1.msra.mxu0 0.0
    %3778 = vmatprep.subr.mxu0 0.0
    %3779 = vmatpush1.msra.mxu0 0.0
    %3780 = vmatprep.subr.mxu0 0.0
    %3781 = vmatpush1.msra.mxu0 0.0
    %3782 = vmatprep.subr.mxu0 0.0
    %3783 = vmatpush1.msra.mxu0 0.0
    %3784 = vmatprep.subr.mxu0 0.0
    %3785 = vmatpush1.msra.mxu0 0.0
    %3786 = vmatprep.subr.mxu0 0.0
    %3787 = vmatpush1.msra.mxu0 0.0
    %3788 = vmatprep.subr.mxu0 0.0
    %3789 = vmatpush1.msra.mxu0 0.0
    %3790 = vmatprep.subr.mxu0 0.0
    %3791 = vmatpush1.msra.mxu0 0.0
    %3792 = vmatprep.subr.mxu0 0.0
    %3793 = vmatpush1.msra.mxu0 0.0
    %3794 = vmatprep.subr.mxu0 0.0
    %3795 = vmatpush1.msra.mxu0 0.0
    %3796 = vmatprep.subr.mxu0 0.0
    %3797 = vmatpush1.msra.mxu0 0.0
    %3798 = vmatprep.subr.mxu0 0.0
    %3799 = vmatpush1.msra.mxu0 0.0
    %3800 = vmatprep.subr.mxu0 0.0
    %3801 = vmatpush1.msra.mxu0 0.0
    %3802 = vmatprep.subr.mxu0 0.0
    %3803 = vmatpush1.msra.mxu0 0.0
    %3804 = vmatprep.subr.mxu0 0.0
    %3805 = vmatpush1.msra.mxu0 0.0
    %3806 = vmatprep.subr.mxu0 0.0
    %3807 = vmatpush1.msra.mxu0 0.0
    %3808 = vmatprep.subr.mxu0 0.0
    %3809 = vmatpush1.msra.mxu0 0.0
    %3810 = vmatprep.subr.mxu0 0.0
    %3811 = vmatpush1.msra.mxu0 0.0
    %3812 = vmatprep.mubr.f32.mxu0 0.0
    %3813 = vmatmul.mubr.f32.gmra.mrb[0].mxu0 %v3746
    %v3814 = vpop.f32.mrb[0].mxu0
    %v3815 = vadd.f32 0.0, %v3814
    %v3816 = vpop.f32.mrb[0].mxu0
    %3817 = vdwg.mxu0
    %v3818 = vsub.f32 1.0, %v3659
    %v3819 = vmul.f32 %v3660, %v3818
    %v3820 = vadd.f32 %v3659, %v3819
    %v3821 = vmul.f32 %v3815, %v3820
    %v3823 = vsel %vm173, %v3821, 0
    %3825 = vmatprep.subr.mxu0 0.0
    %3826 = vmatpush1.msra.mxu0 %v62
    %3827 = vmatprep.subr.mxu0 0.0
    %3828 = vmatpush1.msra.mxu0 %v63
    %3829 = vmatprep.subr.mxu0 0.0
    %3830 = vmatpush1.msra.mxu0 %v64
    %3831 = vmatprep.subr.mxu0 0.0
    %3832 = vmatpush1.msra.mxu0 %v65
    %3833 = vmatprep.subr.mxu0 0.0
    %3834 = vmatpush1.msra.mxu0 0.0
    %3835 = vmatprep.subr.mxu0 0.0
    %3836 = vmatpush1.msra.mxu0 0.0
    %3837 = vmatprep.subr.mxu0 0.0
    %3838 = vmatpush1.msra.mxu0 0.0
    %3839 = vmatprep.subr.mxu0 0.0
    %3840 = vmatpush1.msra.mxu0 0.0
    %3841 = vmatprep.subr.mxu0 0.0
    %3842 = vmatpush1.msra.mxu0 0.0
    %3843 = vmatprep.subr.mxu0 0.0
    %3844 = vmatpush1.msra.mxu0 0.0
    %3845 = vmatprep.subr.mxu0 0.0
    %3846 = vmatpush1.msra.mxu0 0.0
    %3847 = vmatprep.subr.mxu0 0.0
    %3848 = vmatpush1.msra.mxu0 0.0
    %3849 = vmatprep.subr.mxu0 0.0
    %3850 = vmatpush1.msra.mxu0 0.0
    %3851 = vmatprep.subr.mxu0 0.0
    %3852 = vmatpush1.msra.mxu0 0.0
    %3853 = vmatprep.subr.mxu0 0.0
    %3854 = vmatpush1.msra.mxu0 0.0
    %3855 = vmatprep.subr.mxu0 0.0
    %3856 = vmatpush1.msra.mxu0 0.0
    %3857 = vmatprep.subr.mxu0 0.0
    %3858 = vmatpush1.msra.mxu0 0.0
    %3859 = vmatprep.subr.mxu0 0.0
    %3860 = vmatpush1.msra.mxu0 0.0
    %3861 = vmatprep.subr.mxu0 0.0
    %3862 = vmatpush1.msra.mxu0 0.0
    %3863 = vmatprep.subr.mxu0 0.0
    %3864 = vmatpush1.msra.mxu0 0.0
    %3865 = vmatprep.subr.mxu0 0.0
    %3866 = vmatpush1.msra.mxu0 0.0
    %3867 = vmatprep.subr.mxu0 0.0
    %3868 = vmatpush1.msra.mxu0 0.0
    %3869 = vmatprep.subr.mxu0 0.0
    %3870 = vmatpush1.msra.mxu0 0.0
    %3871 = vmatprep.subr.mxu0 0.0
    %3872 = vmatpush1.msra.mxu0 0.0
    %3873 = vmatprep.subr.mxu0 0.0
    %3874 = vmatpush1.msra.mxu0 0.0
    %3875 = vmatprep.subr.mxu0 0.0
    %3876 = vmatpush1.msra.mxu0 0.0
    %3877 = vmatprep.subr.mxu0 0.0
    %3878 = vmatpush1.msra.mxu0 0.0
    %3879 = vmatprep.subr.mxu0 0.0
    %3880 = vmatpush1.msra.mxu0 0.0
    %3881 = vmatprep.subr.mxu0 0.0
    %3882 = vmatpush1.msra.mxu0 0.0
    %3883 = vmatprep.subr.mxu0 0.0
    %3884 = vmatpush1.msra.mxu0 0.0
    %3885 = vmatprep.subr.mxu0 0.0
    %3886 = vmatpush1.msra.mxu0 0.0
    %3887 = vmatprep.subr.mxu0 0.0
    %3888 = vmatpush1.msra.mxu0 0.0
    %3889 = vmatprep.mubr.f32.mxu0 0.0
    %3890 = vmatmul.mubr.f32.gmra.mrb[0].mxu0 %v3823
    %v3891 = vpop.f32.mrb[0].mxu0
    %v3892 = vadd.f32 0.0, %v3891
    %v3893 = vpop.f32.mrb[0].mxu0
    %3894 = vdwg.mxu0
    %v3895 = vmul.f32 %v3580, 0.92
    %v3896 = vmul.f32 %v3892, 0.08
    %v3897 = vsub.f32 %v3895, %v3896
    %v3899 = vsel %vm92, %v3897, 0
    %3901 = vmatprep.subr.mxu0 0.0
    %3902 = vmatpush1.msra.mxu0 %v56
    %3903 = vmatprep.subr.mxu0 0.0
    %3904 = vmatpush1.msra.mxu0 %v57
    %3905 = vmatprep.subr.mxu0 0.0
    %3906 = vmatpush1.msra.mxu0 0.0
    %3907 = vmatprep.subr.mxu0 0.0
    %3908 = vmatpush1.msra.mxu0 0.0
    %3909 = vmatprep.subr.mxu0 0.0
    %3910 = vmatpush1.msra.mxu0 0.0
    %3911 = vmatprep.subr.mxu0 0.0
    %3912 = vmatpush1.msra.mxu0 0.0
    %3913 = vmatprep.subr.mxu0 0.0
    %3914 = vmatpush1.msra.mxu0 0.0
    %3915 = vmatprep.subr.mxu0 0.0
    %3916 = vmatpush1.msra.mxu0 0.0
    %3917 = vmatprep.subr.mxu0 0.0
    %3918 = vmatpush1.msra.mxu0 0.0
    %3919 = vmatprep.subr.mxu0 0.0
    %3920 = vmatpush1.msra.mxu0 0.0
    %3921 = vmatprep.subr.mxu0 0.0
    %3922 = vmatpush1.msra.mxu0 0.0
    %3923 = vmatprep.subr.mxu0 0.0
    %3924 = vmatpush1.msra.mxu0 0.0
    %3925 = vmatprep.subr.mxu0 0.0
    %3926 = vmatpush1.msra.mxu0 0.0
    %3927 = vmatprep.subr.mxu0 0.0
    %3928 = vmatpush1.msra.mxu0 0.0
    %3929 = vmatprep.subr.mxu0 0.0
    %3930 = vmatpush1.msra.mxu0 0.0
    %3931 = vmatprep.subr.mxu0 0.0
    %3932 = vmatpush1.msra.mxu0 0.0
    %3933 = vmatprep.subr.mxu0 0.0
    %3934 = vmatpush1.msra.mxu0 0.0
    %3935 = vmatprep.subr.mxu0 0.0
    %3936 = vmatpush1.msra.mxu0 0.0
    %3937 = vmatprep.subr.mxu0 0.0
    %3938 = vmatpush1.msra.mxu0 0.0
    %3939 = vmatprep.subr.mxu0 0.0
    %3940 = vmatpush1.msra.mxu0 0.0
    %3941 = vmatprep.subr.mxu0 0.0
    %3942 = vmatpush1.msra.mxu0 0.0
    %3943 = vmatprep.subr.mxu0 0.0
    %3944 = vmatpush1.msra.mxu0 0.0
    %3945 = vmatprep.subr.mxu0 0.0
    %3946 = vmatpush1.msra.mxu0 0.0
    %3947 = vmatprep.subr.mxu0 0.0
    %3948 = vmatpush1.msra.mxu0 0.0
    %3949 = vmatprep.subr.mxu0 0.0
    %3950 = vmatpush1.msra.mxu0 0.0
    %3951 = vmatprep.subr.mxu0 0.0
    %3952 = vmatpush1.msra.mxu0 0.0
    %3953 = vmatprep.subr.mxu0 0.0
    %3954 = vmatpush1.msra.mxu0 0.0
    %3955 = vmatprep.subr.mxu0 0.0
    %3956 = vmatpush1.msra.mxu0 0.0
    %3957 = vmatprep.subr.mxu0 0.0
    %3958 = vmatpush1.msra.mxu0 0.0
    %3959 = vmatprep.subr.mxu0 0.0
    %3960 = vmatpush1.msra.mxu0 0.0
    %3961 = vmatprep.subr.mxu0 0.0
    %3962 = vmatpush1.msra.mxu0 0.0
    %3963 = vmatprep.subr.mxu0 0.0
    %3964 = vmatpush1.msra.mxu0 0.0
    %3965 = vmatprep.mubr.f32.mxu0 0.0
    %3966 = vmatmul.mubr.f32.gmra.mrb[0].mxu0 %v3899
    %v3967 = vpop.f32.mrb[0].mxu0
    %v3968 = vadd.f32 %v75, %v3967
    %v3969 = vpop.f32.mrb[0].mxu0
    %3970 = vdwg.mxu0
    %v3971 = vxor.u32 %v3968, 2147483648
    %v3972 = vmul.f32 %v3971, 1.442695
    %v3973 = vpow.pop %v3972
    %v3974 = vadd.f32 %v3973, 1.0
    %v3975 = vrcp.pop %v3974
    %v3976 = vmul.f32 1.0, %v3975
    %v3977 = vmul.f32 %v3968, %v3976
    %v3979 = vsel %vm173, %v3977, 0
    %3981 = vmatprep.subr.mxu0 0.0
    %3982 = vmatpush1.msra.mxu0 %v58
    %3983 = vmatprep.subr.mxu0 0.0
    %3984 = vmatpush1.msra.mxu0 %v59
    %3985 = vmatprep.subr.mxu0 0.0
    %3986 = vmatpush1.msra.mxu0 %v60
    %3987 = vmatprep.subr.mxu0 0.0
    %3988 = vmatpush1.msra.mxu0 %v61
    %3989 = vmatprep.subr.mxu0 0.0
    %3990 = vmatpush1.msra.mxu0 0.0
    %3991 = vmatprep.subr.mxu0 0.0
    %3992 = vmatpush1.msra.mxu0 0.0
    %3993 = vmatprep.subr.mxu0 0.0
    %3994 = vmatpush1.msra.mxu0 0.0
    %3995 = vmatprep.subr.mxu0 0.0
    %3996 = vmatpush1.msra.mxu0 0.0
    %3997 = vmatprep.subr.mxu0 0.0
    %3998 = vmatpush1.msra.mxu0 0.0
    %3999 = vmatprep.subr.mxu0 0.0
    %4000 = vmatpush1.msra.mxu0 0.0
    %4001 = vmatprep.subr.mxu0 0.0
    %4002 = vmatpush1.msra.mxu0 0.0
    %4003 = vmatprep.subr.mxu0 0.0
    %4004 = vmatpush1.msra.mxu0 0.0
    %4005 = vmatprep.subr.mxu0 0.0
    %4006 = vmatpush1.msra.mxu0 0.0
    %4007 = vmatprep.subr.mxu0 0.0
    %4008 = vmatpush1.msra.mxu0 0.0
    %4009 = vmatprep.subr.mxu0 0.0
    %4010 = vmatpush1.msra.mxu0 0.0
    %4011 = vmatprep.subr.mxu0 0.0
    %4012 = vmatpush1.msra.mxu0 0.0
    %4013 = vmatprep.subr.mxu0 0.0
    %4014 = vmatpush1.msra.mxu0 0.0
    %4015 = vmatprep.subr.mxu0 0.0
    %4016 = vmatpush1.msra.mxu0 0.0
    %4017 = vmatprep.subr.mxu0 0.0
    %4018 = vmatpush1.msra.mxu0 0.0
    %4019 = vmatprep.subr.mxu0 0.0
    %4020 = vmatpush1.msra.mxu0 0.0
    %4021 = vmatprep.subr.mxu0 0.0
    %4022 = vmatpush1.msra.mxu0 0.0
    %4023 = vmatprep.subr.mxu0 0.0
    %4024 = vmatpush1.msra.mxu0 0.0
    %4025 = vmatprep.subr.mxu0 0.0
    %4026 = vmatpush1.msra.mxu0 0.0
    %4027 = vmatprep.subr.mxu0 0.0
    %4028 = vmatpush1.msra.mxu0 0.0
    %4029 = vmatprep.subr.mxu0 0.0
    %4030 = vmatpush1.msra.mxu0 0.0
    %4031 = vmatprep.subr.mxu0 0.0
    %4032 = vmatpush1.msra.mxu0 0.0
    %4033 = vmatprep.subr.mxu0 0.0
    %4034 = vmatpush1.msra.mxu0 0.0
    %4035 = vmatprep.subr.mxu0 0.0
    %4036 = vmatpush1.msra.mxu0 0.0
    %4037 = vmatprep.subr.mxu0 0.0
    %4038 = vmatpush1.msra.mxu0 0.0
    %4039 = vmatprep.subr.mxu0 0.0
    %4040 = vmatpush1.msra.mxu0 0.0
    %4041 = vmatprep.subr.mxu0 0.0
    %4042 = vmatpush1.msra.mxu0 0.0
    %4043 = vmatprep.subr.mxu0 0.0
    %4044 = vmatpush1.msra.mxu0 0.0
    %4045 = vmatprep.mubr.f32.mxu0 0.0
    %4046 = vmatmul.mubr.f32.gmra.mrb[0].mxu0 %v3979
    %v4047 = vpop.f32.mrb[0].mxu0
    %v4048 = vadd.f32 %v82, %v4047
    %v4049 = vpop.f32.mrb[0].mxu0
    %4050 = vdwg.mxu0
    %v4051 = vxor.u32 %v4048, 2147483648
    %v4052 = vmul.f32 %v4051, 1.442695
    %v4053 = vpow.pop %v4052
    %v4054 = vadd.f32 %v4053, 1.0
    %v4055 = vrcp.pop %v4054
    %v4056 = vmul.f32 1.0, %v4055
    %v4057 = vmul.f32 %v4048, %v4056
    %v4058 = vsub.f32 1.0, %v4056
    %v4059 = vmul.f32 %v4057, %v4058
    %v4060 = vadd.f32 %v4056, %v4059
    %v4061 = vmul.f32 %v89, %v4060
    %v4063 = vsel %vm173, %v4061, 0
    %4065 = vmatprep.subr.mxu0 0.0
    %4066 = vmatpush1.msra.mxu0 %v66
    %4067 = vmatprep.subr.mxu0 0.0
    %4068 = vmatpush1.msra.mxu0 %v67
    %4069 = vmatprep.subr.mxu0 0.0
    %4070 = vmatpush1.msra.mxu0 %v68
    %4071 = vmatprep.subr.mxu0 0.0
    %4072 = vmatpush1.msra.mxu0 %v69
    %4073 = vmatprep.subr.mxu0 0.0
    %4074 = vmatpush1.msra.mxu0 0.0
    %4075 = vmatprep.subr.mxu0 0.0
    %4076 = vmatpush1.msra.mxu0 0.0
    %4077 = vmatprep.subr.mxu0 0.0
    %4078 = vmatpush1.msra.mxu0 0.0
    %4079 = vmatprep.subr.mxu0 0.0
    %4080 = vmatpush1.msra.mxu0 0.0
    %4081 = vmatprep.subr.mxu0 0.0
    %4082 = vmatpush1.msra.mxu0 0.0
    %4083 = vmatprep.subr.mxu0 0.0
    %4084 = vmatpush1.msra.mxu0 0.0
    %4085 = vmatprep.subr.mxu0 0.0
    %4086 = vmatpush1.msra.mxu0 0.0
    %4087 = vmatprep.subr.mxu0 0.0
    %4088 = vmatpush1.msra.mxu0 0.0
    %4089 = vmatprep.subr.mxu0 0.0
    %4090 = vmatpush1.msra.mxu0 0.0
    %4091 = vmatprep.subr.mxu0 0.0
    %4092 = vmatpush1.msra.mxu0 0.0
    %4093 = vmatprep.subr.mxu0 0.0
    %4094 = vmatpush1.msra.mxu0 0.0
    %4095 = vmatprep.subr.mxu0 0.0
    %4096 = vmatpush1.msra.mxu0 0.0
    %4097 = vmatprep.subr.mxu0 0.0
    %4098 = vmatpush1.msra.mxu0 0.0
    %4099 = vmatprep.subr.mxu0 0.0
    %4100 = vmatpush1.msra.mxu0 0.0
    %4101 = vmatprep.subr.mxu0 0.0
    %4102 = vmatpush1.msra.mxu0 0.0
    %4103 = vmatprep.subr.mxu0 0.0
    %4104 = vmatpush1.msra.mxu0 0.0
    %4105 = vmatprep.subr.mxu0 0.0
    %4106 = vmatpush1.msra.mxu0 0.0
    %4107 = vmatprep.subr.mxu0 0.0
    %4108 = vmatpush1.msra.mxu0 0.0
    %4109 = vmatprep.subr.mxu0 0.0
    %4110 = vmatpush1.msra.mxu0 0.0
    %4111 = vmatprep.subr.mxu0 0.0
    %4112 = vmatpush1.msra.mxu0 0.0
    %4113 = vmatprep.subr.mxu0 0.0
    %4114 = vmatpush1.msra.mxu0 0.0
    %4115 = vmatprep.subr.mxu0 0.0
    %4116 = vmatpush1.msra.mxu0 0.0
    %4117 = vmatprep.subr.mxu0 0.0
    %4118 = vmatpush1.msra.mxu0 0.0
    %4119 = vmatprep.subr.mxu0 0.0
    %4120 = vmatpush1.msra.mxu0 0.0
    %4121 = vmatprep.subr.mxu0 0.0
    %4122 = vmatpush1.msra.mxu0 0.0
    %4123 = vmatprep.subr.mxu0 0.0
    %4124 = vmatpush1.msra.mxu0 0.0
    %4125 = vmatprep.subr.mxu0 0.0
    %4126 = vmatpush1.msra.mxu0 0.0
    %4127 = vmatprep.subr.mxu0 0.0
    %4128 = vmatpush1.msra.mxu0 0.0
    %4129 = vmatprep.mubr.f32.mxu0 0.0
    %4130 = vmatmul.mubr.f32.gmra.mrb[0].mxu0 %v4063
    %v4131 = vpop.f32.mrb[0].mxu0
    %v4132 = vadd.f32 0.0, %v4131
    %v4133 = vpop.f32.mrb[0].mxu0
    %4134 = vdwg.mxu0
    %v4135 = vsub.f32 1.0, %v3976
    %v4136 = vmul.f32 %v3977, %v4135
    %v4137 = vadd.f32 %v3976, %v4136
    %v4138 = vmul.f32 %v4132, %v4137
    %v4140 = vsel %vm173, %v4138, 0
    %4142 = vmatprep.subr.mxu0 0.0
    %4143 = vmatpush1.msra.mxu0 %v62
    %4144 = vmatprep.subr.mxu0 0.0
    %4145 = vmatpush1.msra.mxu0 %v63
    %4146 = vmatprep.subr.mxu0 0.0
    %4147 = vmatpush1.msra.mxu0 %v64
    %4148 = vmatprep.subr.mxu0 0.0
    %4149 = vmatpush1.msra.mxu0 %v65
    %4150 = vmatprep.subr.mxu0 0.0
    %4151 = vmatpush1.msra.mxu0 0.0
    %4152 = vmatprep.subr.mxu0 0.0
    %4153 = vmatpush1.msra.mxu0 0.0
    %4154 = vmatprep.subr.mxu0 0.0
    %4155 = vmatpush1.msra.mxu0 0.0
    %4156 = vmatprep.subr.mxu0 0.0
    %4157 = vmatpush1.msra.mxu0 0.0
    %4158 = vmatprep.subr.mxu0 0.0
    %4159 = vmatpush1.msra.mxu0 0.0
    %4160 = vmatprep.subr.mxu0 0.0
    %4161 = vmatpush1.msra.mxu0 0.0
    %4162 = vmatprep.subr.mxu0 0.0
    %4163 = vmatpush1.msra.mxu0 0.0
    %4164 = vmatprep.subr.mxu0 0.0
    %4165 = vmatpush1.msra.mxu0 0.0
    %4166 = vmatprep.subr.mxu0 0.0
    %4167 = vmatpush1.msra.mxu0 0.0
    %4168 = vmatprep.subr.mxu0 0.0
    %4169 = vmatpush1.msra.mxu0 0.0
    %4170 = vmatprep.subr.mxu0 0.0
    %4171 = vmatpush1.msra.mxu0 0.0
    %4172 = vmatprep.subr.mxu0 0.0
    %4173 = vmatpush1.msra.mxu0 0.0
    %4174 = vmatprep.subr.mxu0 0.0
    %4175 = vmatpush1.msra.mxu0 0.0
    %4176 = vmatprep.subr.mxu0 0.0
    %4177 = vmatpush1.msra.mxu0 0.0
    %4178 = vmatprep.subr.mxu0 0.0
    %4179 = vmatpush1.msra.mxu0 0.0
    %4180 = vmatprep.subr.mxu0 0.0
    %4181 = vmatpush1.msra.mxu0 0.0
    %4182 = vmatprep.subr.mxu0 0.0
    %4183 = vmatpush1.msra.mxu0 0.0
    %4184 = vmatprep.subr.mxu0 0.0
    %4185 = vmatpush1.msra.mxu0 0.0
    %4186 = vmatprep.subr.mxu0 0.0
    %4187 = vmatpush1.msra.mxu0 0.0
    %4188 = vmatprep.subr.mxu0 0.0
    %4189 = vmatpush1.msra.mxu0 0.0
    %4190 = vmatprep.subr.mxu0 0.0
    %4191 = vmatpush1.msra.mxu0 0.0
    %4192 = vmatprep.subr.mxu0 0.0
    %4193 = vmatpush1.msra.mxu0 0.0
    %4194 = vmatprep.subr.mxu0 0.0
    %4195 = vmatpush1.msra.mxu0 0.0
    %4196 = vmatprep.subr.mxu0 0.0
    %4197 = vmatpush1.msra.mxu0 0.0
    %4198 = vmatprep.subr.mxu0 0.0
    %4199 = vmatpush1.msra.mxu0 0.0
    %4200 = vmatprep.subr.mxu0 0.0
    %4201 = vmatpush1.msra.mxu0 0.0
    %4202 = vmatprep.subr.mxu0 0.0
    %4203 = vmatpush1.msra.mxu0 0.0
    %4204 = vmatprep.subr.mxu0 0.0
    %4205 = vmatpush1.msra.mxu0 0.0
    %4206 = vmatprep.mubr.f32.mxu0 0.0
    %4207 = vmatmul.mubr.f32.gmra.mrb[0].mxu0 %v4140
    %v4208 = vpop.f32.mrb[0].mxu0
    %v4209 = vadd.f32 0.0, %v4208
    %v4210 = vpop.f32.mrb[0].mxu0
    %4211 = vdwg.mxu0
    %v4212 = vmul.f32 %v3897, 0.92
    %v4213 = vmul.f32 %v4209, 0.08
    %v4214 = vsub.f32 %v4212, %v4213
    %v4216 = vsel %vm92, %v4214, 0
    %4218 = vmatprep.subr.mxu0 0.0
    %4219 = vmatpush1.msra.mxu0 %v56
    %4220 = vmatprep.subr.mxu0 0.0
    %4221 = vmatpush1.msra.mxu0 %v57
    %4222 = vmatprep.subr.mxu0 0.0
    %4223 = vmatpush1.msra.mxu0 0.0
    %4224 = vmatprep.subr.mxu0 0.0
    %4225 = vmatpush1.msra.mxu0 0.0
    %4226 = vmatprep.subr.mxu0 0.0
    %4227 = vmatpush1.msra.mxu0 0.0
    %4228 = vmatprep.subr.mxu0 0.0
    %4229 = vmatpush1.msra.mxu0 0.0
    %4230 = vmatprep.subr.mxu0 0.0
    %4231 = vmatpush1.msra.mxu0 0.0
    %4232 = vmatprep.subr.mxu0 0.0
    %4233 = vmatpush1.msra.mxu0 0.0
    %4234 = vmatprep.subr.mxu0 0.0
    %4235 = vmatpush1.msra.mxu0 0.0
    %4236 = vmatprep.subr.mxu0 0.0
    %4237 = vmatpush1.msra.mxu0 0.0
    %4238 = vmatprep.subr.mxu0 0.0
    %4239 = vmatpush1.msra.mxu0 0.0
    %4240 = vmatprep.subr.mxu0 0.0
    %4241 = vmatpush1.msra.mxu0 0.0
    %4242 = vmatprep.subr.mxu0 0.0
    %4243 = vmatpush1.msra.mxu0 0.0
    %4244 = vmatprep.subr.mxu0 0.0
    %4245 = vmatpush1.msra.mxu0 0.0
    %4246 = vmatprep.subr.mxu0 0.0
    %4247 = vmatpush1.msra.mxu0 0.0
    %4248 = vmatprep.subr.mxu0 0.0
    %4249 = vmatpush1.msra.mxu0 0.0
    %4250 = vmatprep.subr.mxu0 0.0
    %4251 = vmatpush1.msra.mxu0 0.0
    %4252 = vmatprep.subr.mxu0 0.0
    %4253 = vmatpush1.msra.mxu0 0.0
    %4254 = vmatprep.subr.mxu0 0.0
    %4255 = vmatpush1.msra.mxu0 0.0
    %4256 = vmatprep.subr.mxu0 0.0
    %4257 = vmatpush1.msra.mxu0 0.0
    %4258 = vmatprep.subr.mxu0 0.0
    %4259 = vmatpush1.msra.mxu0 0.0
    %4260 = vmatprep.subr.mxu0 0.0
    %4261 = vmatpush1.msra.mxu0 0.0
    %4262 = vmatprep.subr.mxu0 0.0
    %4263 = vmatpush1.msra.mxu0 0.0
    %4264 = vmatprep.subr.mxu0 0.0
    %4265 = vmatpush1.msra.mxu0 0.0
    %4266 = vmatprep.subr.mxu0 0.0
    %4267 = vmatpush1.msra.mxu0 0.0
    %4268 = vmatprep.subr.mxu0 0.0
    %4269 = vmatpush1.msra.mxu0 0.0
    %4270 = vmatprep.subr.mxu0 0.0
    %4271 = vmatpush1.msra.mxu0 0.0
    %4272 = vmatprep.subr.mxu0 0.0
    %4273 = vmatpush1.msra.mxu0 0.0
    %4274 = vmatprep.subr.mxu0 0.0
    %4275 = vmatpush1.msra.mxu0 0.0
    %4276 = vmatprep.subr.mxu0 0.0
    %4277 = vmatpush1.msra.mxu0 0.0
    %4278 = vmatprep.subr.mxu0 0.0
    %4279 = vmatpush1.msra.mxu0 0.0
    %4280 = vmatprep.subr.mxu0 0.0
    %4281 = vmatpush1.msra.mxu0 0.0
    %4282 = vmatprep.mubr.f32.mxu0 0.0
    %4283 = vmatmul.mubr.f32.gmra.mrb[0].mxu0 %v4216
    %v4284 = vpop.f32.mrb[0].mxu0
    %v4285 = vadd.f32 %v75, %v4284
    %v4286 = vpop.f32.mrb[0].mxu0
    %4287 = vdwg.mxu0
    %v4288 = vxor.u32 %v4285, 2147483648
    %v4289 = vmul.f32 %v4288, 1.442695
    %v4290 = vpow.pop %v4289
    %v4291 = vadd.f32 %v4290, 1.0
    %v4292 = vrcp.pop %v4291
    %v4293 = vmul.f32 1.0, %v4292
    %v4294 = vmul.f32 %v4285, %v4293
    %v4296 = vsel %vm173, %v4294, 0
    %4298 = vmatprep.subr.mxu0 0.0
    %4299 = vmatpush1.msra.mxu0 %v58
    %4300 = vmatprep.subr.mxu0 0.0
    %4301 = vmatpush1.msra.mxu0 %v59
    %4302 = vmatprep.subr.mxu0 0.0
    %4303 = vmatpush1.msra.mxu0 %v60
    %4304 = vmatprep.subr.mxu0 0.0
    %4305 = vmatpush1.msra.mxu0 %v61
    %4306 = vmatprep.subr.mxu0 0.0
    %4307 = vmatpush1.msra.mxu0 0.0
    %4308 = vmatprep.subr.mxu0 0.0
    %4309 = vmatpush1.msra.mxu0 0.0
    %4310 = vmatprep.subr.mxu0 0.0
    %4311 = vmatpush1.msra.mxu0 0.0
    %4312 = vmatprep.subr.mxu0 0.0
    %4313 = vmatpush1.msra.mxu0 0.0
    %4314 = vmatprep.subr.mxu0 0.0
    %4315 = vmatpush1.msra.mxu0 0.0
    %4316 = vmatprep.subr.mxu0 0.0
    %4317 = vmatpush1.msra.mxu0 0.0
    %4318 = vmatprep.subr.mxu0 0.0
    %4319 = vmatpush1.msra.mxu0 0.0
    %4320 = vmatprep.subr.mxu0 0.0
    %4321 = vmatpush1.msra.mxu0 0.0
    %4322 = vmatprep.subr.mxu0 0.0
    %4323 = vmatpush1.msra.mxu0 0.0
    %4324 = vmatprep.subr.mxu0 0.0
    %4325 = vmatpush1.msra.mxu0 0.0
    %4326 = vmatprep.subr.mxu0 0.0
    %4327 = vmatpush1.msra.mxu0 0.0
    %4328 = vmatprep.subr.mxu0 0.0
    %4329 = vmatpush1.msra.mxu0 0.0
    %4330 = vmatprep.subr.mxu0 0.0
    %4331 = vmatpush1.msra.mxu0 0.0
    %4332 = vmatprep.subr.mxu0 0.0
    %4333 = vmatpush1.msra.mxu0 0.0
    %4334 = vmatprep.subr.mxu0 0.0
    %4335 = vmatpush1.msra.mxu0 0.0
    %4336 = vmatprep.subr.mxu0 0.0
    %4337 = vmatpush1.msra.mxu0 0.0
    %4338 = vmatprep.subr.mxu0 0.0
    %4339 = vmatpush1.msra.mxu0 0.0
    %4340 = vmatprep.subr.mxu0 0.0
    %4341 = vmatpush1.msra.mxu0 0.0
    %4342 = vmatprep.subr.mxu0 0.0
    %4343 = vmatpush1.msra.mxu0 0.0
    %4344 = vmatprep.subr.mxu0 0.0
    %4345 = vmatpush1.msra.mxu0 0.0
    %4346 = vmatprep.subr.mxu0 0.0
    %4347 = vmatpush1.msra.mxu0 0.0
    %4348 = vmatprep.subr.mxu0 0.0
    %4349 = vmatpush1.msra.mxu0 0.0
    %4350 = vmatprep.subr.mxu0 0.0
    %4351 = vmatpush1.msra.mxu0 0.0
    %4352 = vmatprep.subr.mxu0 0.0
    %4353 = vmatpush1.msra.mxu0 0.0
    %4354 = vmatprep.subr.mxu0 0.0
    %4355 = vmatpush1.msra.mxu0 0.0
    %4356 = vmatprep.subr.mxu0 0.0
    %4357 = vmatpush1.msra.mxu0 0.0
    %4358 = vmatprep.subr.mxu0 0.0
    %4359 = vmatpush1.msra.mxu0 0.0
    %4360 = vmatprep.subr.mxu0 0.0
    %4361 = vmatpush1.msra.mxu0 0.0
    %4362 = vmatprep.mubr.f32.mxu0 0.0
    %4363 = vmatmul.mubr.f32.gmra.mrb[0].mxu0 %v4296
    %v4364 = vpop.f32.mrb[0].mxu0
    %v4365 = vadd.f32 %v82, %v4364
    %v4366 = vpop.f32.mrb[0].mxu0
    %4367 = vdwg.mxu0
    %v4368 = vxor.u32 %v4365, 2147483648
    %v4369 = vmul.f32 %v4368, 1.442695
    %v4370 = vpow.pop %v4369
    %v4371 = vadd.f32 %v4370, 1.0
    %v4372 = vrcp.pop %v4371
    %v4373 = vmul.f32 1.0, %v4372
    %v4374 = vmul.f32 %v4365, %v4373
    %v4375 = vsub.f32 1.0, %v4373
    %v4376 = vmul.f32 %v4374, %v4375
    %v4377 = vadd.f32 %v4373, %v4376
    %v4378 = vmul.f32 %v89, %v4377
    %v4380 = vsel %vm173, %v4378, 0
    %4382 = vmatprep.subr.mxu0 0.0
    %4383 = vmatpush1.msra.mxu0 %v66
    %4384 = vmatprep.subr.mxu0 0.0
    %4385 = vmatpush1.msra.mxu0 %v67
    %4386 = vmatprep.subr.mxu0 0.0
    %4387 = vmatpush1.msra.mxu0 %v68
    %4388 = vmatprep.subr.mxu0 0.0
    %4389 = vmatpush1.msra.mxu0 %v69
    %4390 = vmatprep.subr.mxu0 0.0
    %4391 = vmatpush1.msra.mxu0 0.0
    %4392 = vmatprep.subr.mxu0 0.0
    %4393 = vmatpush1.msra.mxu0 0.0
    %4394 = vmatprep.subr.mxu0 0.0
    %4395 = vmatpush1.msra.mxu0 0.0
    %4396 = vmatprep.subr.mxu0 0.0
    %4397 = vmatpush1.msra.mxu0 0.0
    %4398 = vmatprep.subr.mxu0 0.0
    %4399 = vmatpush1.msra.mxu0 0.0
    %4400 = vmatprep.subr.mxu0 0.0
    %4401 = vmatpush1.msra.mxu0 0.0
    %4402 = vmatprep.subr.mxu0 0.0
    %4403 = vmatpush1.msra.mxu0 0.0
    %4404 = vmatprep.subr.mxu0 0.0
    %4405 = vmatpush1.msra.mxu0 0.0
    %4406 = vmatprep.subr.mxu0 0.0
    %4407 = vmatpush1.msra.mxu0 0.0
    %4408 = vmatprep.subr.mxu0 0.0
    %4409 = vmatpush1.msra.mxu0 0.0
    %4410 = vmatprep.subr.mxu0 0.0
    %4411 = vmatpush1.msra.mxu0 0.0
    %4412 = vmatprep.subr.mxu0 0.0
    %4413 = vmatpush1.msra.mxu0 0.0
    %4414 = vmatprep.subr.mxu0 0.0
    %4415 = vmatpush1.msra.mxu0 0.0
    %4416 = vmatprep.subr.mxu0 0.0
    %4417 = vmatpush1.msra.mxu0 0.0
    %4418 = vmatprep.subr.mxu0 0.0
    %4419 = vmatpush1.msra.mxu0 0.0
    %4420 = vmatprep.subr.mxu0 0.0
    %4421 = vmatpush1.msra.mxu0 0.0
    %4422 = vmatprep.subr.mxu0 0.0
    %4423 = vmatpush1.msra.mxu0 0.0
    %4424 = vmatprep.subr.mxu0 0.0
    %4425 = vmatpush1.msra.mxu0 0.0
    %4426 = vmatprep.subr.mxu0 0.0
    %4427 = vmatpush1.msra.mxu0 0.0
    %4428 = vmatprep.subr.mxu0 0.0
    %4429 = vmatpush1.msra.mxu0 0.0
    %4430 = vmatprep.subr.mxu0 0.0
    %4431 = vmatpush1.msra.mxu0 0.0
    %4432 = vmatprep.subr.mxu0 0.0
    %4433 = vmatpush1.msra.mxu0 0.0
    %4434 = vmatprep.subr.mxu0 0.0
    %4435 = vmatpush1.msra.mxu0 0.0
    %4436 = vmatprep.subr.mxu0 0.0
    %4437 = vmatpush1.msra.mxu0 0.0
    %4438 = vmatprep.subr.mxu0 0.0
    %4439 = vmatpush1.msra.mxu0 0.0
    %4440 = vmatprep.subr.mxu0 0.0
    %4441 = vmatpush1.msra.mxu0 0.0
    %4442 = vmatprep.subr.mxu0 0.0
    %4443 = vmatpush1.msra.mxu0 0.0
    %4444 = vmatprep.subr.mxu0 0.0
    %4445 = vmatpush1.msra.mxu0 0.0
    %4446 = vmatprep.mubr.f32.mxu0 0.0
    %4447 = vmatmul.mubr.f32.gmra.mrb[0].mxu0 %v4380
    %v4448 = vpop.f32.mrb[0].mxu0
    %v4449 = vadd.f32 0.0, %v4448
    %v4450 = vpop.f32.mrb[0].mxu0
    %4451 = vdwg.mxu0
    %v4452 = vsub.f32 1.0, %v4293
    %v4453 = vmul.f32 %v4294, %v4452
    %v4454 = vadd.f32 %v4293, %v4453
    %v4455 = vmul.f32 %v4449, %v4454
    %v4457 = vsel %vm173, %v4455, 0
    %4459 = vmatprep.subr.mxu0 0.0
    %4460 = vmatpush1.msra.mxu0 %v62
    %4461 = vmatprep.subr.mxu0 0.0
    %4462 = vmatpush1.msra.mxu0 %v63
    %4463 = vmatprep.subr.mxu0 0.0
    %4464 = vmatpush1.msra.mxu0 %v64
    %4465 = vmatprep.subr.mxu0 0.0
    %4466 = vmatpush1.msra.mxu0 %v65
    %4467 = vmatprep.subr.mxu0 0.0
    %4468 = vmatpush1.msra.mxu0 0.0
    %4469 = vmatprep.subr.mxu0 0.0
    %4470 = vmatpush1.msra.mxu0 0.0
    %4471 = vmatprep.subr.mxu0 0.0
    %4472 = vmatpush1.msra.mxu0 0.0
    %4473 = vmatprep.subr.mxu0 0.0
    %4474 = vmatpush1.msra.mxu0 0.0
    %4475 = vmatprep.subr.mxu0 0.0
    %4476 = vmatpush1.msra.mxu0 0.0
    %4477 = vmatprep.subr.mxu0 0.0
    %4478 = vmatpush1.msra.mxu0 0.0
    %4479 = vmatprep.subr.mxu0 0.0
    %4480 = vmatpush1.msra.mxu0 0.0
    %4481 = vmatprep.subr.mxu0 0.0
    %4482 = vmatpush1.msra.mxu0 0.0
    %4483 = vmatprep.subr.mxu0 0.0
    %4484 = vmatpush1.msra.mxu0 0.0
    %4485 = vmatprep.subr.mxu0 0.0
    %4486 = vmatpush1.msra.mxu0 0.0
    %4487 = vmatprep.subr.mxu0 0.0
    %4488 = vmatpush1.msra.mxu0 0.0
    %4489 = vmatprep.subr.mxu0 0.0
    %4490 = vmatpush1.msra.mxu0 0.0
    %4491 = vmatprep.subr.mxu0 0.0
    %4492 = vmatpush1.msra.mxu0 0.0
    %4493 = vmatprep.subr.mxu0 0.0
    %4494 = vmatpush1.msra.mxu0 0.0
    %4495 = vmatprep.subr.mxu0 0.0
    %4496 = vmatpush1.msra.mxu0 0.0
    %4497 = vmatprep.subr.mxu0 0.0
    %4498 = vmatpush1.msra.mxu0 0.0
    %4499 = vmatprep.subr.mxu0 0.0
    %4500 = vmatpush1.msra.mxu0 0.0
    %4501 = vmatprep.subr.mxu0 0.0
    %4502 = vmatpush1.msra.mxu0 0.0
    %4503 = vmatprep.subr.mxu0 0.0
    %4504 = vmatpush1.msra.mxu0 0.0
    %4505 = vmatprep.subr.mxu0 0.0
    %4506 = vmatpush1.msra.mxu0 0.0
    %4507 = vmatprep.subr.mxu0 0.0
    %4508 = vmatpush1.msra.mxu0 0.0
    %4509 = vmatprep.subr.mxu0 0.0
    %4510 = vmatpush1.msra.mxu0 0.0
    %4511 = vmatprep.subr.mxu0 0.0
    %4512 = vmatpush1.msra.mxu0 0.0
    %4513 = vmatprep.subr.mxu0 0.0
    %4514 = vmatpush1.msra.mxu0 0.0
    %4515 = vmatprep.subr.mxu0 0.0
    %4516 = vmatpush1.msra.mxu0 0.0
    %4517 = vmatprep.subr.mxu0 0.0
    %4518 = vmatpush1.msra.mxu0 0.0
    %4519 = vmatprep.subr.mxu0 0.0
    %4520 = vmatpush1.msra.mxu0 0.0
    %4521 = vmatprep.subr.mxu0 0.0
    %4522 = vmatpush1.msra.mxu0 0.0
    %4523 = vmatprep.mubr.f32.mxu0 0.0
    %4524 = vmatmul.mubr.f32.gmra.mrb[0].mxu0 %v4457
    %v4525 = vpop.f32.mrb[0].mxu0
    %v4526 = vadd.f32 0.0, %v4525
    %v4527 = vpop.f32.mrb[0].mxu0
    %4528 = vdwg.mxu0
    %v4529 = vmul.f32 %v4214, 0.92
    %v4530 = vmul.f32 %v4526, 0.08
    %v4531 = vsub.f32 %v4529, %v4530
    %v4533 = vsel %vm92, %v4531, 0
    %4535 = vmatprep.subr.mxu0 0.0
    %4536 = vmatpush1.msra.mxu0 %v56
    %4537 = vmatprep.subr.mxu0 0.0
    %4538 = vmatpush1.msra.mxu0 %v57
    %4539 = vmatprep.subr.mxu0 0.0
    %4540 = vmatpush1.msra.mxu0 0.0
    %4541 = vmatprep.subr.mxu0 0.0
    %4542 = vmatpush1.msra.mxu0 0.0
    %4543 = vmatprep.subr.mxu0 0.0
    %4544 = vmatpush1.msra.mxu0 0.0
    %4545 = vmatprep.subr.mxu0 0.0
    %4546 = vmatpush1.msra.mxu0 0.0
    %4547 = vmatprep.subr.mxu0 0.0
    %4548 = vmatpush1.msra.mxu0 0.0
    %4549 = vmatprep.subr.mxu0 0.0
    %4550 = vmatpush1.msra.mxu0 0.0
    %4551 = vmatprep.subr.mxu0 0.0
    %4552 = vmatpush1.msra.mxu0 0.0
    %4553 = vmatprep.subr.mxu0 0.0
    %4554 = vmatpush1.msra.mxu0 0.0
    %4555 = vmatprep.subr.mxu0 0.0
    %4556 = vmatpush1.msra.mxu0 0.0
    %4557 = vmatprep.subr.mxu0 0.0
    %4558 = vmatpush1.msra.mxu0 0.0
    %4559 = vmatprep.subr.mxu0 0.0
    %4560 = vmatpush1.msra.mxu0 0.0
    %4561 = vmatprep.subr.mxu0 0.0
    %4562 = vmatpush1.msra.mxu0 0.0
    %4563 = vmatprep.subr.mxu0 0.0
    %4564 = vmatpush1.msra.mxu0 0.0
    %4565 = vmatprep.subr.mxu0 0.0
    %4566 = vmatpush1.msra.mxu0 0.0
    %4567 = vmatprep.subr.mxu0 0.0
    %4568 = vmatpush1.msra.mxu0 0.0
    %4569 = vmatprep.subr.mxu0 0.0
    %4570 = vmatpush1.msra.mxu0 0.0
    %4571 = vmatprep.subr.mxu0 0.0
    %4572 = vmatpush1.msra.mxu0 0.0
    %4573 = vmatprep.subr.mxu0 0.0
    %4574 = vmatpush1.msra.mxu0 0.0
    %4575 = vmatprep.subr.mxu0 0.0
    %4576 = vmatpush1.msra.mxu0 0.0
    %4577 = vmatprep.subr.mxu0 0.0
    %4578 = vmatpush1.msra.mxu0 0.0
    %4579 = vmatprep.subr.mxu0 0.0
    %4580 = vmatpush1.msra.mxu0 0.0
    %4581 = vmatprep.subr.mxu0 0.0
    %4582 = vmatpush1.msra.mxu0 0.0
    %4583 = vmatprep.subr.mxu0 0.0
    %4584 = vmatpush1.msra.mxu0 0.0
    %4585 = vmatprep.subr.mxu0 0.0
    %4586 = vmatpush1.msra.mxu0 0.0
    %4587 = vmatprep.subr.mxu0 0.0
    %4588 = vmatpush1.msra.mxu0 0.0
    %4589 = vmatprep.subr.mxu0 0.0
    %4590 = vmatpush1.msra.mxu0 0.0
    %4591 = vmatprep.subr.mxu0 0.0
    %4592 = vmatpush1.msra.mxu0 0.0
    %4593 = vmatprep.subr.mxu0 0.0
    %4594 = vmatpush1.msra.mxu0 0.0
    %4595 = vmatprep.subr.mxu0 0.0
    %4596 = vmatpush1.msra.mxu0 0.0
    %4597 = vmatprep.subr.mxu0 0.0
    %4598 = vmatpush1.msra.mxu0 0.0
    %4599 = vmatprep.mubr.f32.mxu0 0.0
    %4600 = vmatmul.mubr.f32.gmra.mrb[0].mxu0 %v4533
    %v4601 = vpop.f32.mrb[0].mxu0
    %v4602 = vadd.f32 %v75, %v4601
    %v4603 = vpop.f32.mrb[0].mxu0
    %4604 = vdwg.mxu0
    %v4605 = vxor.u32 %v4602, 2147483648
    %v4606 = vmul.f32 %v4605, 1.442695
    %v4607 = vpow.pop %v4606
    %v4608 = vadd.f32 %v4607, 1.0
    %v4609 = vrcp.pop %v4608
    %v4610 = vmul.f32 1.0, %v4609
    %v4611 = vmul.f32 %v4602, %v4610
    %v4613 = vsel %vm173, %v4611, 0
    %4615 = vmatprep.subr.mxu0 0.0
    %4616 = vmatpush1.msra.mxu0 %v58
    %4617 = vmatprep.subr.mxu0 0.0
    %4618 = vmatpush1.msra.mxu0 %v59
    %4619 = vmatprep.subr.mxu0 0.0
    %4620 = vmatpush1.msra.mxu0 %v60
    %4621 = vmatprep.subr.mxu0 0.0
    %4622 = vmatpush1.msra.mxu0 %v61
    %4623 = vmatprep.subr.mxu0 0.0
    %4624 = vmatpush1.msra.mxu0 0.0
    %4625 = vmatprep.subr.mxu0 0.0
    %4626 = vmatpush1.msra.mxu0 0.0
    %4627 = vmatprep.subr.mxu0 0.0
    %4628 = vmatpush1.msra.mxu0 0.0
    %4629 = vmatprep.subr.mxu0 0.0
    %4630 = vmatpush1.msra.mxu0 0.0
    %4631 = vmatprep.subr.mxu0 0.0
    %4632 = vmatpush1.msra.mxu0 0.0
    %4633 = vmatprep.subr.mxu0 0.0
    %4634 = vmatpush1.msra.mxu0 0.0
    %4635 = vmatprep.subr.mxu0 0.0
    %4636 = vmatpush1.msra.mxu0 0.0
    %4637 = vmatprep.subr.mxu0 0.0
    %4638 = vmatpush1.msra.mxu0 0.0
    %4639 = vmatprep.subr.mxu0 0.0
    %4640 = vmatpush1.msra.mxu0 0.0
    %4641 = vmatprep.subr.mxu0 0.0
    %4642 = vmatpush1.msra.mxu0 0.0
    %4643 = vmatprep.subr.mxu0 0.0
    %4644 = vmatpush1.msra.mxu0 0.0
    %4645 = vmatprep.subr.mxu0 0.0
    %4646 = vmatpush1.msra.mxu0 0.0
    %4647 = vmatprep.subr.mxu0 0.0
    %4648 = vmatpush1.msra.mxu0 0.0
    %4649 = vmatprep.subr.mxu0 0.0
    %4650 = vmatpush1.msra.mxu0 0.0
    %4651 = vmatprep.subr.mxu0 0.0
    %4652 = vmatpush1.msra.mxu0 0.0
    %4653 = vmatprep.subr.mxu0 0.0
    %4654 = vmatpush1.msra.mxu0 0.0
    %4655 = vmatprep.subr.mxu0 0.0
    %4656 = vmatpush1.msra.mxu0 0.0
    %4657 = vmatprep.subr.mxu0 0.0
    %4658 = vmatpush1.msra.mxu0 0.0
    %4659 = vmatprep.subr.mxu0 0.0
    %4660 = vmatpush1.msra.mxu0 0.0
    %4661 = vmatprep.subr.mxu0 0.0
    %4662 = vmatpush1.msra.mxu0 0.0
    %4663 = vmatprep.subr.mxu0 0.0
    %4664 = vmatpush1.msra.mxu0 0.0
    %4665 = vmatprep.subr.mxu0 0.0
    %4666 = vmatpush1.msra.mxu0 0.0
    %4667 = vmatprep.subr.mxu0 0.0
    %4668 = vmatpush1.msra.mxu0 0.0
    %4669 = vmatprep.subr.mxu0 0.0
    %4670 = vmatpush1.msra.mxu0 0.0
    %4671 = vmatprep.subr.mxu0 0.0
    %4672 = vmatpush1.msra.mxu0 0.0
    %4673 = vmatprep.subr.mxu0 0.0
    %4674 = vmatpush1.msra.mxu0 0.0
    %4675 = vmatprep.subr.mxu0 0.0
    %4676 = vmatpush1.msra.mxu0 0.0
    %4677 = vmatprep.subr.mxu0 0.0
    %4678 = vmatpush1.msra.mxu0 0.0
    %4679 = vmatprep.mubr.f32.mxu0 0.0
    %4680 = vmatmul.mubr.f32.gmra.mrb[0].mxu0 %v4613
    %v4681 = vpop.f32.mrb[0].mxu0
    %v4682 = vadd.f32 %v82, %v4681
    %v4683 = vpop.f32.mrb[0].mxu0
    %4684 = vdwg.mxu0
    %v4685 = vxor.u32 %v4682, 2147483648
    %v4686 = vmul.f32 %v4685, 1.442695
    %v4687 = vpow.pop %v4686
    %v4688 = vadd.f32 %v4687, 1.0
    %v4689 = vrcp.pop %v4688
    %v4690 = vmul.f32 1.0, %v4689
    %v4691 = vmul.f32 %v4682, %v4690
    %v4692 = vsub.f32 1.0, %v4690
    %v4693 = vmul.f32 %v4691, %v4692
    %v4694 = vadd.f32 %v4690, %v4693
    %v4695 = vmul.f32 %v89, %v4694
    %v4697 = vsel %vm173, %v4695, 0
    %4699 = vmatprep.subr.mxu0 0.0
    %4700 = vmatpush1.msra.mxu0 %v66
    %4701 = vmatprep.subr.mxu0 0.0
    %4702 = vmatpush1.msra.mxu0 %v67
    %4703 = vmatprep.subr.mxu0 0.0
    %4704 = vmatpush1.msra.mxu0 %v68
    %4705 = vmatprep.subr.mxu0 0.0
    %4706 = vmatpush1.msra.mxu0 %v69
    %4707 = vmatprep.subr.mxu0 0.0
    %4708 = vmatpush1.msra.mxu0 0.0
    %4709 = vmatprep.subr.mxu0 0.0
    %4710 = vmatpush1.msra.mxu0 0.0
    %4711 = vmatprep.subr.mxu0 0.0
    %4712 = vmatpush1.msra.mxu0 0.0
    %4713 = vmatprep.subr.mxu0 0.0
    %4714 = vmatpush1.msra.mxu0 0.0
    %4715 = vmatprep.subr.mxu0 0.0
    %4716 = vmatpush1.msra.mxu0 0.0
    %4717 = vmatprep.subr.mxu0 0.0
    %4718 = vmatpush1.msra.mxu0 0.0
    %4719 = vmatprep.subr.mxu0 0.0
    %4720 = vmatpush1.msra.mxu0 0.0
    %4721 = vmatprep.subr.mxu0 0.0
    %4722 = vmatpush1.msra.mxu0 0.0
    %4723 = vmatprep.subr.mxu0 0.0
    %4724 = vmatpush1.msra.mxu0 0.0
    %4725 = vmatprep.subr.mxu0 0.0
    %4726 = vmatpush1.msra.mxu0 0.0
    %4727 = vmatprep.subr.mxu0 0.0
    %4728 = vmatpush1.msra.mxu0 0.0
    %4729 = vmatprep.subr.mxu0 0.0
    %4730 = vmatpush1.msra.mxu0 0.0
    %4731 = vmatprep.subr.mxu0 0.0
    %4732 = vmatpush1.msra.mxu0 0.0
    %4733 = vmatprep.subr.mxu0 0.0
    %4734 = vmatpush1.msra.mxu0 0.0
    %4735 = vmatprep.subr.mxu0 0.0
    %4736 = vmatpush1.msra.mxu0 0.0
    %4737 = vmatprep.subr.mxu0 0.0
    %4738 = vmatpush1.msra.mxu0 0.0
    %4739 = vmatprep.subr.mxu0 0.0
    %4740 = vmatpush1.msra.mxu0 0.0
    %4741 = vmatprep.subr.mxu0 0.0
    %4742 = vmatpush1.msra.mxu0 0.0
    %4743 = vmatprep.subr.mxu0 0.0
    %4744 = vmatpush1.msra.mxu0 0.0
    %4745 = vmatprep.subr.mxu0 0.0
    %4746 = vmatpush1.msra.mxu0 0.0
    %4747 = vmatprep.subr.mxu0 0.0
    %4748 = vmatpush1.msra.mxu0 0.0
    %4749 = vmatprep.subr.mxu0 0.0
    %4750 = vmatpush1.msra.mxu0 0.0
    %4751 = vmatprep.subr.mxu0 0.0
    %4752 = vmatpush1.msra.mxu0 0.0
    %4753 = vmatprep.subr.mxu0 0.0
    %4754 = vmatpush1.msra.mxu0 0.0
    %4755 = vmatprep.subr.mxu0 0.0
    %4756 = vmatpush1.msra.mxu0 0.0
    %4757 = vmatprep.subr.mxu0 0.0
    %4758 = vmatpush1.msra.mxu0 0.0
    %4759 = vmatprep.subr.mxu0 0.0
    %4760 = vmatpush1.msra.mxu0 0.0
    %4761 = vmatprep.subr.mxu0 0.0
    %4762 = vmatpush1.msra.mxu0 0.0
    %4763 = vmatprep.mubr.f32.mxu0 0.0
    %4764 = vmatmul.mubr.f32.gmra.mrb[0].mxu0 %v4697
    %v4765 = vpop.f32.mrb[0].mxu0
    %v4766 = vadd.f32 0.0, %v4765
    %v4767 = vpop.f32.mrb[0].mxu0
    %4768 = vdwg.mxu0
    %v4769 = vsub.f32 1.0, %v4610
    %v4770 = vmul.f32 %v4611, %v4769
    %v4771 = vadd.f32 %v4610, %v4770
    %v4772 = vmul.f32 %v4766, %v4771
    %v4774 = vsel %vm173, %v4772, 0
    %4776 = vmatprep.subr.mxu0 0.0
    %4777 = vmatpush1.msra.mxu0 %v62
    %4778 = vmatprep.subr.mxu0 0.0
    %4779 = vmatpush1.msra.mxu0 %v63
    %4780 = vmatprep.subr.mxu0 0.0
    %4781 = vmatpush1.msra.mxu0 %v64
    %4782 = vmatprep.subr.mxu0 0.0
    %4783 = vmatpush1.msra.mxu0 %v65
    %4784 = vmatprep.subr.mxu0 0.0
    %4785 = vmatpush1.msra.mxu0 0.0
    %4786 = vmatprep.subr.mxu0 0.0
    %4787 = vmatpush1.msra.mxu0 0.0
    %4788 = vmatprep.subr.mxu0 0.0
    %4789 = vmatpush1.msra.mxu0 0.0
    %4790 = vmatprep.subr.mxu0 0.0
    %4791 = vmatpush1.msra.mxu0 0.0
    %4792 = vmatprep.subr.mxu0 0.0
    %4793 = vmatpush1.msra.mxu0 0.0
    %4794 = vmatprep.subr.mxu0 0.0
    %4795 = vmatpush1.msra.mxu0 0.0
    %4796 = vmatprep.subr.mxu0 0.0
    %4797 = vmatpush1.msra.mxu0 0.0
    %4798 = vmatprep.subr.mxu0 0.0
    %4799 = vmatpush1.msra.mxu0 0.0
    %4800 = vmatprep.subr.mxu0 0.0
    %4801 = vmatpush1.msra.mxu0 0.0
    %4802 = vmatprep.subr.mxu0 0.0
    %4803 = vmatpush1.msra.mxu0 0.0
    %4804 = vmatprep.subr.mxu0 0.0
    %4805 = vmatpush1.msra.mxu0 0.0
    %4806 = vmatprep.subr.mxu0 0.0
    %4807 = vmatpush1.msra.mxu0 0.0
    %4808 = vmatprep.subr.mxu0 0.0
    %4809 = vmatpush1.msra.mxu0 0.0
    %4810 = vmatprep.subr.mxu0 0.0
    %4811 = vmatpush1.msra.mxu0 0.0
    %4812 = vmatprep.subr.mxu0 0.0
    %4813 = vmatpush1.msra.mxu0 0.0
    %4814 = vmatprep.subr.mxu0 0.0
    %4815 = vmatpush1.msra.mxu0 0.0
    %4816 = vmatprep.subr.mxu0 0.0
    %4817 = vmatpush1.msra.mxu0 0.0
    %4818 = vmatprep.subr.mxu0 0.0
    %4819 = vmatpush1.msra.mxu0 0.0
    %4820 = vmatprep.subr.mxu0 0.0
    %4821 = vmatpush1.msra.mxu0 0.0
    %4822 = vmatprep.subr.mxu0 0.0
    %4823 = vmatpush1.msra.mxu0 0.0
    %4824 = vmatprep.subr.mxu0 0.0
    %4825 = vmatpush1.msra.mxu0 0.0
    %4826 = vmatprep.subr.mxu0 0.0
    %4827 = vmatpush1.msra.mxu0 0.0
    %4828 = vmatprep.subr.mxu0 0.0
    %4829 = vmatpush1.msra.mxu0 0.0
    %4830 = vmatprep.subr.mxu0 0.0
    %4831 = vmatpush1.msra.mxu0 0.0
    %4832 = vmatprep.subr.mxu0 0.0
    %4833 = vmatpush1.msra.mxu0 0.0
    %4834 = vmatprep.subr.mxu0 0.0
    %4835 = vmatpush1.msra.mxu0 0.0
    %4836 = vmatprep.subr.mxu0 0.0
    %4837 = vmatpush1.msra.mxu0 0.0
    %4838 = vmatprep.subr.mxu0 0.0
    %4839 = vmatpush1.msra.mxu0 0.0
    %4840 = vmatprep.mubr.f32.mxu0 0.0
    %4841 = vmatmul.mubr.f32.gmra.mrb[0].mxu0 %v4774
    %v4842 = vpop.f32.mrb[0].mxu0
    %v4843 = vadd.f32 0.0, %v4842
    %v4844 = vpop.f32.mrb[0].mxu0
    %4845 = vdwg.mxu0
    %v4846 = vmul.f32 %v4531, 0.92
    %v4847 = vmul.f32 %v4843, 0.08
    %v4848 = vsub.f32 %v4846, %v4847
    %v4850 = vsel %vm92, %v4848, 0
    %4852 = vmatprep.subr.mxu0 0.0
    %4853 = vmatpush1.msra.mxu0 %v56
    %4854 = vmatprep.subr.mxu0 0.0
    %4855 = vmatpush1.msra.mxu0 %v57
    %4856 = vmatprep.subr.mxu0 0.0
    %4857 = vmatpush1.msra.mxu0 0.0
    %4858 = vmatprep.subr.mxu0 0.0
    %4859 = vmatpush1.msra.mxu0 0.0
    %4860 = vmatprep.subr.mxu0 0.0
    %4861 = vmatpush1.msra.mxu0 0.0
    %4862 = vmatprep.subr.mxu0 0.0
    %4863 = vmatpush1.msra.mxu0 0.0
    %4864 = vmatprep.subr.mxu0 0.0
    %4865 = vmatpush1.msra.mxu0 0.0
    %4866 = vmatprep.subr.mxu0 0.0
    %4867 = vmatpush1.msra.mxu0 0.0
    %4868 = vmatprep.subr.mxu0 0.0
    %4869 = vmatpush1.msra.mxu0 0.0
    %4870 = vmatprep.subr.mxu0 0.0
    %4871 = vmatpush1.msra.mxu0 0.0
    %4872 = vmatprep.subr.mxu0 0.0
    %4873 = vmatpush1.msra.mxu0 0.0
    %4874 = vmatprep.subr.mxu0 0.0
    %4875 = vmatpush1.msra.mxu0 0.0
    %4876 = vmatprep.subr.mxu0 0.0
    %4877 = vmatpush1.msra.mxu0 0.0
    %4878 = vmatprep.subr.mxu0 0.0
    %4879 = vmatpush1.msra.mxu0 0.0
    %4880 = vmatprep.subr.mxu0 0.0
    %4881 = vmatpush1.msra.mxu0 0.0
    %4882 = vmatprep.subr.mxu0 0.0
    %4883 = vmatpush1.msra.mxu0 0.0
    %4884 = vmatprep.subr.mxu0 0.0
    %4885 = vmatpush1.msra.mxu0 0.0
    %4886 = vmatprep.subr.mxu0 0.0
    %4887 = vmatpush1.msra.mxu0 0.0
    %4888 = vmatprep.subr.mxu0 0.0
    %4889 = vmatpush1.msra.mxu0 0.0
    %4890 = vmatprep.subr.mxu0 0.0
    %4891 = vmatpush1.msra.mxu0 0.0
    %4892 = vmatprep.subr.mxu0 0.0
    %4893 = vmatpush1.msra.mxu0 0.0
    %4894 = vmatprep.subr.mxu0 0.0
    %4895 = vmatpush1.msra.mxu0 0.0
    %4896 = vmatprep.subr.mxu0 0.0
    %4897 = vmatpush1.msra.mxu0 0.0
    %4898 = vmatprep.subr.mxu0 0.0
    %4899 = vmatpush1.msra.mxu0 0.0
    %4900 = vmatprep.subr.mxu0 0.0
    %4901 = vmatpush1.msra.mxu0 0.0
    %4902 = vmatprep.subr.mxu0 0.0
    %4903 = vmatpush1.msra.mxu0 0.0
    %4904 = vmatprep.subr.mxu0 0.0
    %4905 = vmatpush1.msra.mxu0 0.0
    %4906 = vmatprep.subr.mxu0 0.0
    %4907 = vmatpush1.msra.mxu0 0.0
    %4908 = vmatprep.subr.mxu0 0.0
    %4909 = vmatpush1.msra.mxu0 0.0
    %4910 = vmatprep.subr.mxu0 0.0
    %4911 = vmatpush1.msra.mxu0 0.0
    %4912 = vmatprep.subr.mxu0 0.0
    %4913 = vmatpush1.msra.mxu0 0.0
    %4914 = vmatprep.subr.mxu0 0.0
    %4915 = vmatpush1.msra.mxu0 0.0
    %4916 = vmatprep.mubr.f32.mxu0 0.0
    %4917 = vmatmul.mubr.f32.gmra.mrb[0].mxu0 %v4850
    %v4918 = vpop.f32.mrb[0].mxu0
    %v4919 = vadd.f32 %v75, %v4918
    %v4920 = vpop.f32.mrb[0].mxu0
    %4921 = vdwg.mxu0
    %v4922 = vxor.u32 %v4919, 2147483648
    %v4923 = vmul.f32 %v4922, 1.442695
    %v4924 = vpow.pop %v4923
    %v4925 = vadd.f32 %v4924, 1.0
    %v4926 = vrcp.pop %v4925
    %v4927 = vmul.f32 1.0, %v4926
    %v4928 = vmul.f32 %v4919, %v4927
    %v4930 = vsel %vm173, %v4928, 0
    %4932 = vmatprep.subr.mxu0 0.0
    %4933 = vmatpush1.msra.mxu0 %v58
    %4934 = vmatprep.subr.mxu0 0.0
    %4935 = vmatpush1.msra.mxu0 %v59
    %4936 = vmatprep.subr.mxu0 0.0
    %4937 = vmatpush1.msra.mxu0 %v60
    %4938 = vmatprep.subr.mxu0 0.0
    %4939 = vmatpush1.msra.mxu0 %v61
    %4940 = vmatprep.subr.mxu0 0.0
    %4941 = vmatpush1.msra.mxu0 0.0
    %4942 = vmatprep.subr.mxu0 0.0
    %4943 = vmatpush1.msra.mxu0 0.0
    %4944 = vmatprep.subr.mxu0 0.0
    %4945 = vmatpush1.msra.mxu0 0.0
    %4946 = vmatprep.subr.mxu0 0.0
    %4947 = vmatpush1.msra.mxu0 0.0
    %4948 = vmatprep.subr.mxu0 0.0
    %4949 = vmatpush1.msra.mxu0 0.0
    %4950 = vmatprep.subr.mxu0 0.0
    %4951 = vmatpush1.msra.mxu0 0.0
    %4952 = vmatprep.subr.mxu0 0.0
    %4953 = vmatpush1.msra.mxu0 0.0
    %4954 = vmatprep.subr.mxu0 0.0
    %4955 = vmatpush1.msra.mxu0 0.0
    %4956 = vmatprep.subr.mxu0 0.0
    %4957 = vmatpush1.msra.mxu0 0.0
    %4958 = vmatprep.subr.mxu0 0.0
    %4959 = vmatpush1.msra.mxu0 0.0
    %4960 = vmatprep.subr.mxu0 0.0
    %4961 = vmatpush1.msra.mxu0 0.0
    %4962 = vmatprep.subr.mxu0 0.0
    %4963 = vmatpush1.msra.mxu0 0.0
    %4964 = vmatprep.subr.mxu0 0.0
    %4965 = vmatpush1.msra.mxu0 0.0
    %4966 = vmatprep.subr.mxu0 0.0
    %4967 = vmatpush1.msra.mxu0 0.0
    %4968 = vmatprep.subr.mxu0 0.0
    %4969 = vmatpush1.msra.mxu0 0.0
    %4970 = vmatprep.subr.mxu0 0.0
    %4971 = vmatpush1.msra.mxu0 0.0
    %4972 = vmatprep.subr.mxu0 0.0
    %4973 = vmatpush1.msra.mxu0 0.0
    %4974 = vmatprep.subr.mxu0 0.0
    %4975 = vmatpush1.msra.mxu0 0.0
    %4976 = vmatprep.subr.mxu0 0.0
    %4977 = vmatpush1.msra.mxu0 0.0
    %4978 = vmatprep.subr.mxu0 0.0
    %4979 = vmatpush1.msra.mxu0 0.0
    %4980 = vmatprep.subr.mxu0 0.0
    %4981 = vmatpush1.msra.mxu0 0.0
    %4982 = vmatprep.subr.mxu0 0.0
    %4983 = vmatpush1.msra.mxu0 0.0
    %4984 = vmatprep.subr.mxu0 0.0
    %4985 = vmatpush1.msra.mxu0 0.0
    %4986 = vmatprep.subr.mxu0 0.0
    %4987 = vmatpush1.msra.mxu0 0.0
    %4988 = vmatprep.subr.mxu0 0.0
    %4989 = vmatpush1.msra.mxu0 0.0
    %4990 = vmatprep.subr.mxu0 0.0
    %4991 = vmatpush1.msra.mxu0 0.0
    %4992 = vmatprep.subr.mxu0 0.0
    %4993 = vmatpush1.msra.mxu0 0.0
    %4994 = vmatprep.subr.mxu0 0.0
    %4995 = vmatpush1.msra.mxu0 0.0
    %4996 = vmatprep.mubr.f32.mxu0 0.0
    %4997 = vmatmul.mubr.f32.gmra.mrb[0].mxu0 %v4930
    %v4998 = vpop.f32.mrb[0].mxu0
    %v4999 = vadd.f32 %v82, %v4998
    %v5000 = vpop.f32.mrb[0].mxu0
    %5001 = vdwg.mxu0
    %v5002 = vxor.u32 %v4999, 2147483648
    %v5003 = vmul.f32 %v5002, 1.442695
    %v5004 = vpow.pop %v5003
    %v5005 = vadd.f32 %v5004, 1.0
    %v5006 = vrcp.pop %v5005
    %v5007 = vmul.f32 1.0, %v5006
    %v5008 = vmul.f32 %v4999, %v5007
    %v5009 = vsub.f32 1.0, %v5007
    %v5010 = vmul.f32 %v5008, %v5009
    %v5011 = vadd.f32 %v5007, %v5010
    %v5012 = vmul.f32 %v89, %v5011
    %v5014 = vsel %vm173, %v5012, 0
    %5016 = vmatprep.subr.mxu0 0.0
    %5017 = vmatpush1.msra.mxu0 %v66
    %5018 = vmatprep.subr.mxu0 0.0
    %5019 = vmatpush1.msra.mxu0 %v67
    %5020 = vmatprep.subr.mxu0 0.0
    %5021 = vmatpush1.msra.mxu0 %v68
    %5022 = vmatprep.subr.mxu0 0.0
    %5023 = vmatpush1.msra.mxu0 %v69
    %5024 = vmatprep.subr.mxu0 0.0
    %5025 = vmatpush1.msra.mxu0 0.0
    %5026 = vmatprep.subr.mxu0 0.0
    %5027 = vmatpush1.msra.mxu0 0.0
    %5028 = vmatprep.subr.mxu0 0.0
    %5029 = vmatpush1.msra.mxu0 0.0
    %5030 = vmatprep.subr.mxu0 0.0
    %5031 = vmatpush1.msra.mxu0 0.0
    %5032 = vmatprep.subr.mxu0 0.0
    %5033 = vmatpush1.msra.mxu0 0.0
    %5034 = vmatprep.subr.mxu0 0.0
    %5035 = vmatpush1.msra.mxu0 0.0
    %5036 = vmatprep.subr.mxu0 0.0
    %5037 = vmatpush1.msra.mxu0 0.0
    %5038 = vmatprep.subr.mxu0 0.0
    %5039 = vmatpush1.msra.mxu0 0.0
    %5040 = vmatprep.subr.mxu0 0.0
    %5041 = vmatpush1.msra.mxu0 0.0
    %5042 = vmatprep.subr.mxu0 0.0
    %5043 = vmatpush1.msra.mxu0 0.0
    %5044 = vmatprep.subr.mxu0 0.0
    %5045 = vmatpush1.msra.mxu0 0.0
    %5046 = vmatprep.subr.mxu0 0.0
    %5047 = vmatpush1.msra.mxu0 0.0
    %5048 = vmatprep.subr.mxu0 0.0
    %5049 = vmatpush1.msra.mxu0 0.0
    %5050 = vmatprep.subr.mxu0 0.0
    %5051 = vmatpush1.msra.mxu0 0.0
    %5052 = vmatprep.subr.mxu0 0.0
    %5053 = vmatpush1.msra.mxu0 0.0
    %5054 = vmatprep.subr.mxu0 0.0
    %5055 = vmatpush1.msra.mxu0 0.0
    %5056 = vmatprep.subr.mxu0 0.0
    %5057 = vmatpush1.msra.mxu0 0.0
    %5058 = vmatprep.subr.mxu0 0.0
    %5059 = vmatpush1.msra.mxu0 0.0
    %5060 = vmatprep.subr.mxu0 0.0
    %5061 = vmatpush1.msra.mxu0 0.0
    %5062 = vmatprep.subr.mxu0 0.0
    %5063 = vmatpush1.msra.mxu0 0.0
    %5064 = vmatprep.subr.mxu0 0.0
    %5065 = vmatpush1.msra.mxu0 0.0
    %5066 = vmatprep.subr.mxu0 0.0
    %5067 = vmatpush1.msra.mxu0 0.0
    %5068 = vmatprep.subr.mxu0 0.0
    %5069 = vmatpush1.msra.mxu0 0.0
    %5070 = vmatprep.subr.mxu0 0.0
    %5071 = vmatpush1.msra.mxu0 0.0
    %5072 = vmatprep.subr.mxu0 0.0
    %5073 = vmatpush1.msra.mxu0 0.0
    %5074 = vmatprep.subr.mxu0 0.0
    %5075 = vmatpush1.msra.mxu0 0.0
    %5076 = vmatprep.subr.mxu0 0.0
    %5077 = vmatpush1.msra.mxu0 0.0
    %5078 = vmatprep.subr.mxu0 0.0
    %5079 = vmatpush1.msra.mxu0 0.0
    %5080 = vmatprep.mubr.f32.mxu0 0.0
    %5081 = vmatmul.mubr.f32.gmra.mrb[0].mxu0 %v5014
    %v5082 = vpop.f32.mrb[0].mxu0
    %v5083 = vadd.f32 0.0, %v5082
    %v5084 = vpop.f32.mrb[0].mxu0
    %5085 = vdwg.mxu0
    %v5086 = vsub.f32 1.0, %v4927
    %v5087 = vmul.f32 %v4928, %v5086
    %v5088 = vadd.f32 %v4927, %v5087
    %v5089 = vmul.f32 %v5083, %v5088
    %v5091 = vsel %vm173, %v5089, 0
    %5093 = vmatprep.subr.mxu0 0.0
    %5094 = vmatpush1.msra.mxu0 %v62
    %5095 = vmatprep.subr.mxu0 0.0
    %5096 = vmatpush1.msra.mxu0 %v63
    %5097 = vmatprep.subr.mxu0 0.0
    %5098 = vmatpush1.msra.mxu0 %v64
    %5099 = vmatprep.subr.mxu0 0.0
    %5100 = vmatpush1.msra.mxu0 %v65
    %5101 = vmatprep.subr.mxu0 0.0
    %5102 = vmatpush1.msra.mxu0 0.0
    %5103 = vmatprep.subr.mxu0 0.0
    %5104 = vmatpush1.msra.mxu0 0.0
    %5105 = vmatprep.subr.mxu0 0.0
    %5106 = vmatpush1.msra.mxu0 0.0
    %5107 = vmatprep.subr.mxu0 0.0
    %5108 = vmatpush1.msra.mxu0 0.0
    %5109 = vmatprep.subr.mxu0 0.0
    %5110 = vmatpush1.msra.mxu0 0.0
    %5111 = vmatprep.subr.mxu0 0.0
    %5112 = vmatpush1.msra.mxu0 0.0
    %5113 = vmatprep.subr.mxu0 0.0
    %5114 = vmatpush1.msra.mxu0 0.0
    %5115 = vmatprep.subr.mxu0 0.0
    %5116 = vmatpush1.msra.mxu0 0.0
    %5117 = vmatprep.subr.mxu0 0.0
    %5118 = vmatpush1.msra.mxu0 0.0
    %5119 = vmatprep.subr.mxu0 0.0
    %5120 = vmatpush1.msra.mxu0 0.0
    %5121 = vmatprep.subr.mxu0 0.0
    %5122 = vmatpush1.msra.mxu0 0.0
    %5123 = vmatprep.subr.mxu0 0.0
    %5124 = vmatpush1.msra.mxu0 0.0
    %5125 = vmatprep.subr.mxu0 0.0
    %5126 = vmatpush1.msra.mxu0 0.0
    %5127 = vmatprep.subr.mxu0 0.0
    %5128 = vmatpush1.msra.mxu0 0.0
    %5129 = vmatprep.subr.mxu0 0.0
    %5130 = vmatpush1.msra.mxu0 0.0
    %5131 = vmatprep.subr.mxu0 0.0
    %5132 = vmatpush1.msra.mxu0 0.0
    %5133 = vmatprep.subr.mxu0 0.0
    %5134 = vmatpush1.msra.mxu0 0.0
    %5135 = vmatprep.subr.mxu0 0.0
    %5136 = vmatpush1.msra.mxu0 0.0
    %5137 = vmatprep.subr.mxu0 0.0
    %5138 = vmatpush1.msra.mxu0 0.0
    %5139 = vmatprep.subr.mxu0 0.0
    %5140 = vmatpush1.msra.mxu0 0.0
    %5141 = vmatprep.subr.mxu0 0.0
    %5142 = vmatpush1.msra.mxu0 0.0
    %5143 = vmatprep.subr.mxu0 0.0
    %5144 = vmatpush1.msra.mxu0 0.0
    %5145 = vmatprep.subr.mxu0 0.0
    %5146 = vmatpush1.msra.mxu0 0.0
    %5147 = vmatprep.subr.mxu0 0.0
    %5148 = vmatpush1.msra.mxu0 0.0
    %5149 = vmatprep.subr.mxu0 0.0
    %5150 = vmatpush1.msra.mxu0 0.0
    %5151 = vmatprep.subr.mxu0 0.0
    %5152 = vmatpush1.msra.mxu0 0.0
    %5153 = vmatprep.subr.mxu0 0.0
    %5154 = vmatpush1.msra.mxu0 0.0
    %5155 = vmatprep.subr.mxu0 0.0
    %5156 = vmatpush1.msra.mxu0 0.0
    %5157 = vmatprep.mubr.f32.mxu0 0.0
    %5158 = vmatmul.mubr.f32.gmra.mrb[0].mxu0 %v5091
    %v5159 = vpop.f32.mrb[0].mxu0
    %v5160 = vadd.f32 0.0, %v5159
    %v5161 = vpop.f32.mrb[0].mxu0
    %5162 = vdwg.mxu0
    %v5163 = vmul.f32 %v4848, 0.92
    %v5164 = vmul.f32 %v5160, 0.08
    %v5165 = vsub.f32 %v5163, %v5164
    %v5167 = vsel %vm92, %v5165, 0
    %5169 = vmatprep.subr.mxu0 0.0
    %5170 = vmatpush1.msra.mxu0 %v56
    %5171 = vmatprep.subr.mxu0 0.0
    %5172 = vmatpush1.msra.mxu0 %v57
    %5173 = vmatprep.subr.mxu0 0.0
    %5174 = vmatpush1.msra.mxu0 0.0
    %5175 = vmatprep.subr.mxu0 0.0
    %5176 = vmatpush1.msra.mxu0 0.0
    %5177 = vmatprep.subr.mxu0 0.0
    %5178 = vmatpush1.msra.mxu0 0.0
    %5179 = vmatprep.subr.mxu0 0.0
    %5180 = vmatpush1.msra.mxu0 0.0
    %5181 = vmatprep.subr.mxu0 0.0
    %5182 = vmatpush1.msra.mxu0 0.0
    %5183 = vmatprep.subr.mxu0 0.0
    %5184 = vmatpush1.msra.mxu0 0.0
    %5185 = vmatprep.subr.mxu0 0.0
    %5186 = vmatpush1.msra.mxu0 0.0
    %5187 = vmatprep.subr.mxu0 0.0
    %5188 = vmatpush1.msra.mxu0 0.0
    %5189 = vmatprep.subr.mxu0 0.0
    %5190 = vmatpush1.msra.mxu0 0.0
    %5191 = vmatprep.subr.mxu0 0.0
    %5192 = vmatpush1.msra.mxu0 0.0
    %5193 = vmatprep.subr.mxu0 0.0
    %5194 = vmatpush1.msra.mxu0 0.0
    %5195 = vmatprep.subr.mxu0 0.0
    %5196 = vmatpush1.msra.mxu0 0.0
    %5197 = vmatprep.subr.mxu0 0.0
    %5198 = vmatpush1.msra.mxu0 0.0
    %5199 = vmatprep.subr.mxu0 0.0
    %5200 = vmatpush1.msra.mxu0 0.0
    %5201 = vmatprep.subr.mxu0 0.0
    %5202 = vmatpush1.msra.mxu0 0.0
    %5203 = vmatprep.subr.mxu0 0.0
    %5204 = vmatpush1.msra.mxu0 0.0
    %5205 = vmatprep.subr.mxu0 0.0
    %5206 = vmatpush1.msra.mxu0 0.0
    %5207 = vmatprep.subr.mxu0 0.0
    %5208 = vmatpush1.msra.mxu0 0.0
    %5209 = vmatprep.subr.mxu0 0.0
    %5210 = vmatpush1.msra.mxu0 0.0
    %5211 = vmatprep.subr.mxu0 0.0
    %5212 = vmatpush1.msra.mxu0 0.0
    %5213 = vmatprep.subr.mxu0 0.0
    %5214 = vmatpush1.msra.mxu0 0.0
    %5215 = vmatprep.subr.mxu0 0.0
    %5216 = vmatpush1.msra.mxu0 0.0
    %5217 = vmatprep.subr.mxu0 0.0
    %5218 = vmatpush1.msra.mxu0 0.0
    %5219 = vmatprep.subr.mxu0 0.0
    %5220 = vmatpush1.msra.mxu0 0.0
    %5221 = vmatprep.subr.mxu0 0.0
    %5222 = vmatpush1.msra.mxu0 0.0
    %5223 = vmatprep.subr.mxu0 0.0
    %5224 = vmatpush1.msra.mxu0 0.0
    %5225 = vmatprep.subr.mxu0 0.0
    %5226 = vmatpush1.msra.mxu0 0.0
    %5227 = vmatprep.subr.mxu0 0.0
    %5228 = vmatpush1.msra.mxu0 0.0
    %5229 = vmatprep.subr.mxu0 0.0
    %5230 = vmatpush1.msra.mxu0 0.0
    %5231 = vmatprep.subr.mxu0 0.0
    %5232 = vmatpush1.msra.mxu0 0.0
    %5233 = vmatprep.mubr.f32.mxu0 0.0
    %5234 = vmatmul.mubr.f32.gmra.mrb[0].mxu0 %v5167
    %v5235 = vpop.f32.mrb[0].mxu0
    %v5236 = vadd.f32 %v75, %v5235
    %v5237 = vpop.f32.mrb[0].mxu0
    %5238 = vdwg.mxu0
    %v5239 = vxor.u32 %v5236, 2147483648
    %v5240 = vmul.f32 %v5239, 1.442695
    %v5241 = vpow.pop %v5240
    %v5242 = vadd.f32 %v5241, 1.0
    %v5243 = vrcp.pop %v5242
    %v5244 = vmul.f32 1.0, %v5243
    %v5245 = vmul.f32 %v5236, %v5244
    %v5247 = vsel %vm173, %v5245, 0
    %5249 = vmatprep.subr.mxu0 0.0
    %5250 = vmatpush1.msra.mxu0 %v58
    %5251 = vmatprep.subr.mxu0 0.0
    %5252 = vmatpush1.msra.mxu0 %v59
    %5253 = vmatprep.subr.mxu0 0.0
    %5254 = vmatpush1.msra.mxu0 %v60
    %5255 = vmatprep.subr.mxu0 0.0
    %5256 = vmatpush1.msra.mxu0 %v61
    %5257 = vmatprep.subr.mxu0 0.0
    %5258 = vmatpush1.msra.mxu0 0.0
    %5259 = vmatprep.subr.mxu0 0.0
    %5260 = vmatpush1.msra.mxu0 0.0
    %5261 = vmatprep.subr.mxu0 0.0
    %5262 = vmatpush1.msra.mxu0 0.0
    %5263 = vmatprep.subr.mxu0 0.0
    %5264 = vmatpush1.msra.mxu0 0.0
    %5265 = vmatprep.subr.mxu0 0.0
    %5266 = vmatpush1.msra.mxu0 0.0
    %5267 = vmatprep.subr.mxu0 0.0
    %5268 = vmatpush1.msra.mxu0 0.0
    %5269 = vmatprep.subr.mxu0 0.0
    %5270 = vmatpush1.msra.mxu0 0.0
    %5271 = vmatprep.subr.mxu0 0.0
    %5272 = vmatpush1.msra.mxu0 0.0
    %5273 = vmatprep.subr.mxu0 0.0
    %5274 = vmatpush1.msra.mxu0 0.0
    %5275 = vmatprep.subr.mxu0 0.0
    %5276 = vmatpush1.msra.mxu0 0.0
    %5277 = vmatprep.subr.mxu0 0.0
    %5278 = vmatpush1.msra.mxu0 0.0
    %5279 = vmatprep.subr.mxu0 0.0
    %5280 = vmatpush1.msra.mxu0 0.0
    %5281 = vmatprep.subr.mxu0 0.0
    %5282 = vmatpush1.msra.mxu0 0.0
    %5283 = vmatprep.subr.mxu0 0.0
    %5284 = vmatpush1.msra.mxu0 0.0
    %5285 = vmatprep.subr.mxu0 0.0
    %5286 = vmatpush1.msra.mxu0 0.0
    %5287 = vmatprep.subr.mxu0 0.0
    %5288 = vmatpush1.msra.mxu0 0.0
    %5289 = vmatprep.subr.mxu0 0.0
    %5290 = vmatpush1.msra.mxu0 0.0
    %5291 = vmatprep.subr.mxu0 0.0
    %5292 = vmatpush1.msra.mxu0 0.0
    %5293 = vmatprep.subr.mxu0 0.0
    %5294 = vmatpush1.msra.mxu0 0.0
    %5295 = vmatprep.subr.mxu0 0.0
    %5296 = vmatpush1.msra.mxu0 0.0
    %5297 = vmatprep.subr.mxu0 0.0
    %5298 = vmatpush1.msra.mxu0 0.0
    %5299 = vmatprep.subr.mxu0 0.0
    %5300 = vmatpush1.msra.mxu0 0.0
    %5301 = vmatprep.subr.mxu0 0.0
    %5302 = vmatpush1.msra.mxu0 0.0
    %5303 = vmatprep.subr.mxu0 0.0
    %5304 = vmatpush1.msra.mxu0 0.0
    %5305 = vmatprep.subr.mxu0 0.0
    %5306 = vmatpush1.msra.mxu0 0.0
    %5307 = vmatprep.subr.mxu0 0.0
    %5308 = vmatpush1.msra.mxu0 0.0
    %5309 = vmatprep.subr.mxu0 0.0
    %5310 = vmatpush1.msra.mxu0 0.0
    %5311 = vmatprep.subr.mxu0 0.0
    %5312 = vmatpush1.msra.mxu0 0.0
    %5313 = vmatprep.mubr.f32.mxu0 0.0
    %5314 = vmatmul.mubr.f32.gmra.mrb[0].mxu0 %v5247
    %v5315 = vpop.f32.mrb[0].mxu0
    %v5316 = vadd.f32 %v82, %v5315
    %v5317 = vpop.f32.mrb[0].mxu0
    %5318 = vdwg.mxu0
    %v5319 = vxor.u32 %v5316, 2147483648
    %v5320 = vmul.f32 %v5319, 1.442695
    %v5321 = vpow.pop %v5320
    %v5322 = vadd.f32 %v5321, 1.0
    %v5323 = vrcp.pop %v5322
    %v5324 = vmul.f32 1.0, %v5323
    %v5325 = vmul.f32 %v5316, %v5324
    %v5326 = vsub.f32 1.0, %v5324
    %v5327 = vmul.f32 %v5325, %v5326
    %v5328 = vadd.f32 %v5324, %v5327
    %v5329 = vmul.f32 %v89, %v5328
    %v5331 = vsel %vm173, %v5329, 0
    %5333 = vmatprep.subr.mxu0 0.0
    %5334 = vmatpush1.msra.mxu0 %v66
    %5335 = vmatprep.subr.mxu0 0.0
    %5336 = vmatpush1.msra.mxu0 %v67
    %5337 = vmatprep.subr.mxu0 0.0
    %5338 = vmatpush1.msra.mxu0 %v68
    %5339 = vmatprep.subr.mxu0 0.0
    %5340 = vmatpush1.msra.mxu0 %v69
    %5341 = vmatprep.subr.mxu0 0.0
    %5342 = vmatpush1.msra.mxu0 0.0
    %5343 = vmatprep.subr.mxu0 0.0
    %5344 = vmatpush1.msra.mxu0 0.0
    %5345 = vmatprep.subr.mxu0 0.0
    %5346 = vmatpush1.msra.mxu0 0.0
    %5347 = vmatprep.subr.mxu0 0.0
    %5348 = vmatpush1.msra.mxu0 0.0
    %5349 = vmatprep.subr.mxu0 0.0
    %5350 = vmatpush1.msra.mxu0 0.0
    %5351 = vmatprep.subr.mxu0 0.0
    %5352 = vmatpush1.msra.mxu0 0.0
    %5353 = vmatprep.subr.mxu0 0.0
    %5354 = vmatpush1.msra.mxu0 0.0
    %5355 = vmatprep.subr.mxu0 0.0
    %5356 = vmatpush1.msra.mxu0 0.0
    %5357 = vmatprep.subr.mxu0 0.0
    %5358 = vmatpush1.msra.mxu0 0.0
    %5359 = vmatprep.subr.mxu0 0.0
    %5360 = vmatpush1.msra.mxu0 0.0
    %5361 = vmatprep.subr.mxu0 0.0
    %5362 = vmatpush1.msra.mxu0 0.0
    %5363 = vmatprep.subr.mxu0 0.0
    %5364 = vmatpush1.msra.mxu0 0.0
    %5365 = vmatprep.subr.mxu0 0.0
    %5366 = vmatpush1.msra.mxu0 0.0
    %5367 = vmatprep.subr.mxu0 0.0
    %5368 = vmatpush1.msra.mxu0 0.0
    %5369 = vmatprep.subr.mxu0 0.0
    %5370 = vmatpush1.msra.mxu0 0.0
    %5371 = vmatprep.subr.mxu0 0.0
    %5372 = vmatpush1.msra.mxu0 0.0
    %5373 = vmatprep.subr.mxu0 0.0
    %5374 = vmatpush1.msra.mxu0 0.0
    %5375 = vmatprep.subr.mxu0 0.0
    %5376 = vmatpush1.msra.mxu0 0.0
    %5377 = vmatprep.subr.mxu0 0.0
    %5378 = vmatpush1.msra.mxu0 0.0
    %5379 = vmatprep.subr.mxu0 0.0
    %5380 = vmatpush1.msra.mxu0 0.0
    %5381 = vmatprep.subr.mxu0 0.0
    %5382 = vmatpush1.msra.mxu0 0.0
    %5383 = vmatprep.subr.mxu0 0.0
    %5384 = vmatpush1.msra.mxu0 0.0
    %5385 = vmatprep.subr.mxu0 0.0
    %5386 = vmatpush1.msra.mxu0 0.0
    %5387 = vmatprep.subr.mxu0 0.0
    %5388 = vmatpush1.msra.mxu0 0.0
    %5389 = vmatprep.subr.mxu0 0.0
    %5390 = vmatpush1.msra.mxu0 0.0
    %5391 = vmatprep.subr.mxu0 0.0
    %5392 = vmatpush1.msra.mxu0 0.0
    %5393 = vmatprep.subr.mxu0 0.0
    %5394 = vmatpush1.msra.mxu0 0.0
    %5395 = vmatprep.subr.mxu0 0.0
    %5396 = vmatpush1.msra.mxu0 0.0
    %5397 = vmatprep.mubr.f32.mxu0 0.0
    %5398 = vmatmul.mubr.f32.gmra.mrb[0].mxu0 %v5331
    %v5399 = vpop.f32.mrb[0].mxu0
    %v5400 = vadd.f32 0.0, %v5399
    %v5401 = vpop.f32.mrb[0].mxu0
    %5402 = vdwg.mxu0
    %v5403 = vsub.f32 1.0, %v5244
    %v5404 = vmul.f32 %v5245, %v5403
    %v5405 = vadd.f32 %v5244, %v5404
    %v5406 = vmul.f32 %v5400, %v5405
    %v5408 = vsel %vm173, %v5406, 0
    %5410 = vmatprep.subr.mxu0 0.0
    %5411 = vmatpush1.msra.mxu0 %v62
    %5412 = vmatprep.subr.mxu0 0.0
    %5413 = vmatpush1.msra.mxu0 %v63
    %5414 = vmatprep.subr.mxu0 0.0
    %5415 = vmatpush1.msra.mxu0 %v64
    %5416 = vmatprep.subr.mxu0 0.0
    %5417 = vmatpush1.msra.mxu0 %v65
    %5418 = vmatprep.subr.mxu0 0.0
    %5419 = vmatpush1.msra.mxu0 0.0
    %5420 = vmatprep.subr.mxu0 0.0
    %5421 = vmatpush1.msra.mxu0 0.0
    %5422 = vmatprep.subr.mxu0 0.0
    %5423 = vmatpush1.msra.mxu0 0.0
    %5424 = vmatprep.subr.mxu0 0.0
    %5425 = vmatpush1.msra.mxu0 0.0
    %5426 = vmatprep.subr.mxu0 0.0
    %5427 = vmatpush1.msra.mxu0 0.0
    %5428 = vmatprep.subr.mxu0 0.0
    %5429 = vmatpush1.msra.mxu0 0.0
    %5430 = vmatprep.subr.mxu0 0.0
    %5431 = vmatpush1.msra.mxu0 0.0
    %5432 = vmatprep.subr.mxu0 0.0
    %5433 = vmatpush1.msra.mxu0 0.0
    %5434 = vmatprep.subr.mxu0 0.0
    %5435 = vmatpush1.msra.mxu0 0.0
    %5436 = vmatprep.subr.mxu0 0.0
    %5437 = vmatpush1.msra.mxu0 0.0
    %5438 = vmatprep.subr.mxu0 0.0
    %5439 = vmatpush1.msra.mxu0 0.0
    %5440 = vmatprep.subr.mxu0 0.0
    %5441 = vmatpush1.msra.mxu0 0.0
    %5442 = vmatprep.subr.mxu0 0.0
    %5443 = vmatpush1.msra.mxu0 0.0
    %5444 = vmatprep.subr.mxu0 0.0
    %5445 = vmatpush1.msra.mxu0 0.0
    %5446 = vmatprep.subr.mxu0 0.0
    %5447 = vmatpush1.msra.mxu0 0.0
    %5448 = vmatprep.subr.mxu0 0.0
    %5449 = vmatpush1.msra.mxu0 0.0
    %5450 = vmatprep.subr.mxu0 0.0
    %5451 = vmatpush1.msra.mxu0 0.0
    %5452 = vmatprep.subr.mxu0 0.0
    %5453 = vmatpush1.msra.mxu0 0.0
    %5454 = vmatprep.subr.mxu0 0.0
    %5455 = vmatpush1.msra.mxu0 0.0
    %5456 = vmatprep.subr.mxu0 0.0
    %5457 = vmatpush1.msra.mxu0 0.0
    %5458 = vmatprep.subr.mxu0 0.0
    %5459 = vmatpush1.msra.mxu0 0.0
    %5460 = vmatprep.subr.mxu0 0.0
    %5461 = vmatpush1.msra.mxu0 0.0
    %5462 = vmatprep.subr.mxu0 0.0
    %5463 = vmatpush1.msra.mxu0 0.0
    %5464 = vmatprep.subr.mxu0 0.0
    %5465 = vmatpush1.msra.mxu0 0.0
    %5466 = vmatprep.subr.mxu0 0.0
    %5467 = vmatpush1.msra.mxu0 0.0
    %5468 = vmatprep.subr.mxu0 0.0
    %5469 = vmatpush1.msra.mxu0 0.0
    %5470 = vmatprep.subr.mxu0 0.0
    %5471 = vmatpush1.msra.mxu0 0.0
    %5472 = vmatprep.subr.mxu0 0.0
    %5473 = vmatpush1.msra.mxu0 0.0
    %5474 = vmatprep.mubr.f32.mxu0 0.0
    %5475 = vmatmul.mubr.f32.gmra.mrb[0].mxu0 %v5408
    %v5476 = vpop.f32.mrb[0].mxu0
    %v5477 = vadd.f32 0.0, %v5476
    %v5478 = vpop.f32.mrb[0].mxu0
    %5479 = vdwg.mxu0
    %v5480 = vmul.f32 %v5165, 0.92
    %v5481 = vmul.f32 %v5477, 0.08
    %v5482 = vsub.f32 %v5480, %v5481
    %v5484 = vsel %vm92, %v5482, 0
    %5486 = vmatprep.subr.mxu0 0.0
    %5487 = vmatpush1.msra.mxu0 %v56
    %5488 = vmatprep.subr.mxu0 0.0
    %5489 = vmatpush1.msra.mxu0 %v57
    %5490 = vmatprep.subr.mxu0 0.0
    %5491 = vmatpush1.msra.mxu0 0.0
    %5492 = vmatprep.subr.mxu0 0.0
    %5493 = vmatpush1.msra.mxu0 0.0
    %5494 = vmatprep.subr.mxu0 0.0
    %5495 = vmatpush1.msra.mxu0 0.0
    %5496 = vmatprep.subr.mxu0 0.0
    %5497 = vmatpush1.msra.mxu0 0.0
    %5498 = vmatprep.subr.mxu0 0.0
    %5499 = vmatpush1.msra.mxu0 0.0
    %5500 = vmatprep.subr.mxu0 0.0
    %5501 = vmatpush1.msra.mxu0 0.0
    %5502 = vmatprep.subr.mxu0 0.0
    %5503 = vmatpush1.msra.mxu0 0.0
    %5504 = vmatprep.subr.mxu0 0.0
    %5505 = vmatpush1.msra.mxu0 0.0
    %5506 = vmatprep.subr.mxu0 0.0
    %5507 = vmatpush1.msra.mxu0 0.0
    %5508 = vmatprep.subr.mxu0 0.0
    %5509 = vmatpush1.msra.mxu0 0.0
    %5510 = vmatprep.subr.mxu0 0.0
    %5511 = vmatpush1.msra.mxu0 0.0
    %5512 = vmatprep.subr.mxu0 0.0
    %5513 = vmatpush1.msra.mxu0 0.0
    %5514 = vmatprep.subr.mxu0 0.0
    %5515 = vmatpush1.msra.mxu0 0.0
    %5516 = vmatprep.subr.mxu0 0.0
    %5517 = vmatpush1.msra.mxu0 0.0
    %5518 = vmatprep.subr.mxu0 0.0
    %5519 = vmatpush1.msra.mxu0 0.0
    %5520 = vmatprep.subr.mxu0 0.0
    %5521 = vmatpush1.msra.mxu0 0.0
    %5522 = vmatprep.subr.mxu0 0.0
    %5523 = vmatpush1.msra.mxu0 0.0
    %5524 = vmatprep.subr.mxu0 0.0
    %5525 = vmatpush1.msra.mxu0 0.0
    %5526 = vmatprep.subr.mxu0 0.0
    %5527 = vmatpush1.msra.mxu0 0.0
    %5528 = vmatprep.subr.mxu0 0.0
    %5529 = vmatpush1.msra.mxu0 0.0
    %5530 = vmatprep.subr.mxu0 0.0
    %5531 = vmatpush1.msra.mxu0 0.0
    %5532 = vmatprep.subr.mxu0 0.0
    %5533 = vmatpush1.msra.mxu0 0.0
    %5534 = vmatprep.subr.mxu0 0.0
    %5535 = vmatpush1.msra.mxu0 0.0
    %5536 = vmatprep.subr.mxu0 0.0
    %5537 = vmatpush1.msra.mxu0 0.0
    %5538 = vmatprep.subr.mxu0 0.0
    %5539 = vmatpush1.msra.mxu0 0.0
    %5540 = vmatprep.subr.mxu0 0.0
    %5541 = vmatpush1.msra.mxu0 0.0
    %5542 = vmatprep.subr.mxu0 0.0
    %5543 = vmatpush1.msra.mxu0 0.0
    %5544 = vmatprep.subr.mxu0 0.0
    %5545 = vmatpush1.msra.mxu0 0.0
    %5546 = vmatprep.subr.mxu0 0.0
    %5547 = vmatpush1.msra.mxu0 0.0
    %5548 = vmatprep.subr.mxu0 0.0
    %5549 = vmatpush1.msra.mxu0 0.0
    %5550 = vmatprep.mubr.f32.mxu0 0.0
    %5551 = vmatmul.mubr.f32.gmra.mrb[0].mxu0 %v5484
    %v5552 = vpop.f32.mrb[0].mxu0
    %v5553 = vadd.f32 %v75, %v5552
    %v5554 = vpop.f32.mrb[0].mxu0
    %5555 = vdwg.mxu0
    %v5556 = vxor.u32 %v5553, 2147483648
    %v5557 = vmul.f32 %v5556, 1.442695
    %v5558 = vpow.pop %v5557
    %v5559 = vadd.f32 %v5558, 1.0
    %v5560 = vrcp.pop %v5559
    %v5561 = vmul.f32 1.0, %v5560
    %v5562 = vmul.f32 %v5553, %v5561
    %v5564 = vsel %vm173, %v5562, 0
    %5566 = vmatprep.subr.mxu0 0.0
    %5567 = vmatpush1.msra.mxu0 %v58
    %5568 = vmatprep.subr.mxu0 0.0
    %5569 = vmatpush1.msra.mxu0 %v59
    %5570 = vmatprep.subr.mxu0 0.0
    %5571 = vmatpush1.msra.mxu0 %v60
    %5572 = vmatprep.subr.mxu0 0.0
    %5573 = vmatpush1.msra.mxu0 %v61
    %5574 = vmatprep.subr.mxu0 0.0
    %5575 = vmatpush1.msra.mxu0 0.0
    %5576 = vmatprep.subr.mxu0 0.0
    %5577 = vmatpush1.msra.mxu0 0.0
    %5578 = vmatprep.subr.mxu0 0.0
    %5579 = vmatpush1.msra.mxu0 0.0
    %5580 = vmatprep.subr.mxu0 0.0
    %5581 = vmatpush1.msra.mxu0 0.0
    %5582 = vmatprep.subr.mxu0 0.0
    %5583 = vmatpush1.msra.mxu0 0.0
    %5584 = vmatprep.subr.mxu0 0.0
    %5585 = vmatpush1.msra.mxu0 0.0
    %5586 = vmatprep.subr.mxu0 0.0
    %5587 = vmatpush1.msra.mxu0 0.0
    %5588 = vmatprep.subr.mxu0 0.0
    %5589 = vmatpush1.msra.mxu0 0.0
    %5590 = vmatprep.subr.mxu0 0.0
    %5591 = vmatpush1.msra.mxu0 0.0
    %5592 = vmatprep.subr.mxu0 0.0
    %5593 = vmatpush1.msra.mxu0 0.0
    %5594 = vmatprep.subr.mxu0 0.0
    %5595 = vmatpush1.msra.mxu0 0.0
    %5596 = vmatprep.subr.mxu0 0.0
    %5597 = vmatpush1.msra.mxu0 0.0
    %5598 = vmatprep.subr.mxu0 0.0
    %5599 = vmatpush1.msra.mxu0 0.0
    %5600 = vmatprep.subr.mxu0 0.0
    %5601 = vmatpush1.msra.mxu0 0.0
    %5602 = vmatprep.subr.mxu0 0.0
    %5603 = vmatpush1.msra.mxu0 0.0
    %5604 = vmatprep.subr.mxu0 0.0
    %5605 = vmatpush1.msra.mxu0 0.0
    %5606 = vmatprep.subr.mxu0 0.0
    %5607 = vmatpush1.msra.mxu0 0.0
    %5608 = vmatprep.subr.mxu0 0.0
    %5609 = vmatpush1.msra.mxu0 0.0
    %5610 = vmatprep.subr.mxu0 0.0
    %5611 = vmatpush1.msra.mxu0 0.0
    %5612 = vmatprep.subr.mxu0 0.0
    %5613 = vmatpush1.msra.mxu0 0.0
    %5614 = vmatprep.subr.mxu0 0.0
    %5615 = vmatpush1.msra.mxu0 0.0
    %5616 = vmatprep.subr.mxu0 0.0
    %5617 = vmatpush1.msra.mxu0 0.0
    %5618 = vmatprep.subr.mxu0 0.0
    %5619 = vmatpush1.msra.mxu0 0.0
    %5620 = vmatprep.subr.mxu0 0.0
    %5621 = vmatpush1.msra.mxu0 0.0
    %5622 = vmatprep.subr.mxu0 0.0
    %5623 = vmatpush1.msra.mxu0 0.0
    %5624 = vmatprep.subr.mxu0 0.0
    %5625 = vmatpush1.msra.mxu0 0.0
    %5626 = vmatprep.subr.mxu0 0.0
    %5627 = vmatpush1.msra.mxu0 0.0
    %5628 = vmatprep.subr.mxu0 0.0
    %5629 = vmatpush1.msra.mxu0 0.0
    %5630 = vmatprep.mubr.f32.mxu0 0.0
    %5631 = vmatmul.mubr.f32.gmra.mrb[0].mxu0 %v5564
    %v5632 = vpop.f32.mrb[0].mxu0
    %v5633 = vadd.f32 %v82, %v5632
    %v5634 = vpop.f32.mrb[0].mxu0
    %5635 = vdwg.mxu0
    %v5636 = vxor.u32 %v5633, 2147483648
    %v5637 = vmul.f32 %v5636, 1.442695
    %v5638 = vpow.pop %v5637
    %v5639 = vadd.f32 %v5638, 1.0
    %v5640 = vrcp.pop %v5639
    %v5641 = vmul.f32 1.0, %v5640
    %v5642 = vmul.f32 %v5633, %v5641
    %v5643 = vsub.f32 1.0, %v5641
    %v5644 = vmul.f32 %v5642, %v5643
    %v5645 = vadd.f32 %v5641, %v5644
    %v5646 = vmul.f32 %v89, %v5645
    %v5648 = vsel %vm173, %v5646, 0
    %5650 = vmatprep.subr.mxu0 0.0
    %5651 = vmatpush1.msra.mxu0 %v66
    %5652 = vmatprep.subr.mxu0 0.0
    %5653 = vmatpush1.msra.mxu0 %v67
    %5654 = vmatprep.subr.mxu0 0.0
    %5655 = vmatpush1.msra.mxu0 %v68
    %5656 = vmatprep.subr.mxu0 0.0
    %5657 = vmatpush1.msra.mxu0 %v69
    %5658 = vmatprep.subr.mxu0 0.0
    %5659 = vmatpush1.msra.mxu0 0.0
    %5660 = vmatprep.subr.mxu0 0.0
    %5661 = vmatpush1.msra.mxu0 0.0
    %5662 = vmatprep.subr.mxu0 0.0
    %5663 = vmatpush1.msra.mxu0 0.0
    %5664 = vmatprep.subr.mxu0 0.0
    %5665 = vmatpush1.msra.mxu0 0.0
    %5666 = vmatprep.subr.mxu0 0.0
    %5667 = vmatpush1.msra.mxu0 0.0
    %5668 = vmatprep.subr.mxu0 0.0
    %5669 = vmatpush1.msra.mxu0 0.0
    %5670 = vmatprep.subr.mxu0 0.0
    %5671 = vmatpush1.msra.mxu0 0.0
    %5672 = vmatprep.subr.mxu0 0.0
    %5673 = vmatpush1.msra.mxu0 0.0
    %5674 = vmatprep.subr.mxu0 0.0
    %5675 = vmatpush1.msra.mxu0 0.0
    %5676 = vmatprep.subr.mxu0 0.0
    %5677 = vmatpush1.msra.mxu0 0.0
    %5678 = vmatprep.subr.mxu0 0.0
    %5679 = vmatpush1.msra.mxu0 0.0
    %5680 = vmatprep.subr.mxu0 0.0
    %5681 = vmatpush1.msra.mxu0 0.0
    %5682 = vmatprep.subr.mxu0 0.0
    %5683 = vmatpush1.msra.mxu0 0.0
    %5684 = vmatprep.subr.mxu0 0.0
    %5685 = vmatpush1.msra.mxu0 0.0
    %5686 = vmatprep.subr.mxu0 0.0
    %5687 = vmatpush1.msra.mxu0 0.0
    %5688 = vmatprep.subr.mxu0 0.0
    %5689 = vmatpush1.msra.mxu0 0.0
    %5690 = vmatprep.subr.mxu0 0.0
    %5691 = vmatpush1.msra.mxu0 0.0
    %5692 = vmatprep.subr.mxu0 0.0
    %5693 = vmatpush1.msra.mxu0 0.0
    %5694 = vmatprep.subr.mxu0 0.0
    %5695 = vmatpush1.msra.mxu0 0.0
    %5696 = vmatprep.subr.mxu0 0.0
    %5697 = vmatpush1.msra.mxu0 0.0
    %5698 = vmatprep.subr.mxu0 0.0
    %5699 = vmatpush1.msra.mxu0 0.0
    %5700 = vmatprep.subr.mxu0 0.0
    %5701 = vmatpush1.msra.mxu0 0.0
    %5702 = vmatprep.subr.mxu0 0.0
    %5703 = vmatpush1.msra.mxu0 0.0
    %5704 = vmatprep.subr.mxu0 0.0
    %5705 = vmatpush1.msra.mxu0 0.0
    %5706 = vmatprep.subr.mxu0 0.0
    %5707 = vmatpush1.msra.mxu0 0.0
    %5708 = vmatprep.subr.mxu0 0.0
    %5709 = vmatpush1.msra.mxu0 0.0
    %5710 = vmatprep.subr.mxu0 0.0
    %5711 = vmatpush1.msra.mxu0 0.0
    %5712 = vmatprep.subr.mxu0 0.0
    %5713 = vmatpush1.msra.mxu0 0.0
    %5714 = vmatprep.mubr.f32.mxu0 0.0
    %5715 = vmatmul.mubr.f32.gmra.mrb[0].mxu0 %v5648
    %v5716 = vpop.f32.mrb[0].mxu0
    %v5717 = vadd.f32 0.0, %v5716
    %v5718 = vpop.f32.mrb[0].mxu0
    %5719 = vdwg.mxu0
    %v5720 = vsub.f32 1.0, %v5561
    %v5721 = vmul.f32 %v5562, %v5720
    %v5722 = vadd.f32 %v5561, %v5721
    %v5723 = vmul.f32 %v5717, %v5722
    %v5725 = vsel %vm173, %v5723, 0
    %5727 = vmatprep.subr.mxu0 0.0
    %5728 = vmatpush1.msra.mxu0 %v62
    %5729 = vmatprep.subr.mxu0 0.0
    %5730 = vmatpush1.msra.mxu0 %v63
    %5731 = vmatprep.subr.mxu0 0.0
    %5732 = vmatpush1.msra.mxu0 %v64
    %5733 = vmatprep.subr.mxu0 0.0
    %5734 = vmatpush1.msra.mxu0 %v65
    %5735 = vmatprep.subr.mxu0 0.0
    %5736 = vmatpush1.msra.mxu0 0.0
    %5737 = vmatprep.subr.mxu0 0.0
    %5738 = vmatpush1.msra.mxu0 0.0
    %5739 = vmatprep.subr.mxu0 0.0
    %5740 = vmatpush1.msra.mxu0 0.0
    %5741 = vmatprep.subr.mxu0 0.0
    %5742 = vmatpush1.msra.mxu0 0.0
    %5743 = vmatprep.subr.mxu0 0.0
    %5744 = vmatpush1.msra.mxu0 0.0
    %5745 = vmatprep.subr.mxu0 0.0
    %5746 = vmatpush1.msra.mxu0 0.0
    %5747 = vmatprep.subr.mxu0 0.0
    %5748 = vmatpush1.msra.mxu0 0.0
    %5749 = vmatprep.subr.mxu0 0.0
    %5750 = vmatpush1.msra.mxu0 0.0
    %5751 = vmatprep.subr.mxu0 0.0
    %5752 = vmatpush1.msra.mxu0 0.0
    %5753 = vmatprep.subr.mxu0 0.0
    %5754 = vmatpush1.msra.mxu0 0.0
    %5755 = vmatprep.subr.mxu0 0.0
    %5756 = vmatpush1.msra.mxu0 0.0
    %5757 = vmatprep.subr.mxu0 0.0
    %5758 = vmatpush1.msra.mxu0 0.0
    %5759 = vmatprep.subr.mxu0 0.0
    %5760 = vmatpush1.msra.mxu0 0.0
    %5761 = vmatprep.subr.mxu0 0.0
    %5762 = vmatpush1.msra.mxu0 0.0
    %5763 = vmatprep.subr.mxu0 0.0
    %5764 = vmatpush1.msra.mxu0 0.0
    %5765 = vmatprep.subr.mxu0 0.0
    %5766 = vmatpush1.msra.mxu0 0.0
    %5767 = vmatprep.subr.mxu0 0.0
    %5768 = vmatpush1.msra.mxu0 0.0
    %5769 = vmatprep.subr.mxu0 0.0
    %5770 = vmatpush1.msra.mxu0 0.0
    %5771 = vmatprep.subr.mxu0 0.0
    %5772 = vmatpush1.msra.mxu0 0.0
    %5773 = vmatprep.subr.mxu0 0.0
    %5774 = vmatpush1.msra.mxu0 0.0
    %5775 = vmatprep.subr.mxu0 0.0
    %5776 = vmatpush1.msra.mxu0 0.0
    %5777 = vmatprep.subr.mxu0 0.0
    %5778 = vmatpush1.msra.mxu0 0.0
    %5779 = vmatprep.subr.mxu0 0.0
    %5780 = vmatpush1.msra.mxu0 0.0
    %5781 = vmatprep.subr.mxu0 0.0
    %5782 = vmatpush1.msra.mxu0 0.0
    %5783 = vmatprep.subr.mxu0 0.0
    %5784 = vmatpush1.msra.mxu0 0.0
    %5785 = vmatprep.subr.mxu0 0.0
    %5786 = vmatpush1.msra.mxu0 0.0
    %5787 = vmatprep.subr.mxu0 0.0
    %5788 = vmatpush1.msra.mxu0 0.0
    %5789 = vmatprep.subr.mxu0 0.0
    %5790 = vmatpush1.msra.mxu0 0.0
    %5791 = vmatprep.mubr.f32.mxu0 0.0
    %5792 = vmatmul.mubr.f32.gmra.mrb[0].mxu0 %v5725
    %v5793 = vpop.f32.mrb[0].mxu0
    %v5794 = vadd.f32 0.0, %v5793
    %v5795 = vpop.f32.mrb[0].mxu0
    %5796 = vdwg.mxu0
    %v5797 = vmul.f32 %v5482, 0.92
    %v5798 = vmul.f32 %v5794, 0.08
    %v5799 = vsub.f32 %v5797, %v5798
    %v5801 = vsel %vm92, %v5799, 0
    %5803 = vmatprep.subr.mxu0 0.0
    %5804 = vmatpush1.msra.mxu0 %v56
    %5805 = vmatprep.subr.mxu0 0.0
    %5806 = vmatpush1.msra.mxu0 %v57
    %5807 = vmatprep.subr.mxu0 0.0
    %5808 = vmatpush1.msra.mxu0 0.0
    %5809 = vmatprep.subr.mxu0 0.0
    %5810 = vmatpush1.msra.mxu0 0.0
    %5811 = vmatprep.subr.mxu0 0.0
    %5812 = vmatpush1.msra.mxu0 0.0
    %5813 = vmatprep.subr.mxu0 0.0
    %5814 = vmatpush1.msra.mxu0 0.0
    %5815 = vmatprep.subr.mxu0 0.0
    %5816 = vmatpush1.msra.mxu0 0.0
    %5817 = vmatprep.subr.mxu0 0.0
    %5818 = vmatpush1.msra.mxu0 0.0
    %5819 = vmatprep.subr.mxu0 0.0
    %5820 = vmatpush1.msra.mxu0 0.0
    %5821 = vmatprep.subr.mxu0 0.0
    %5822 = vmatpush1.msra.mxu0 0.0
    %5823 = vmatprep.subr.mxu0 0.0
    %5824 = vmatpush1.msra.mxu0 0.0
    %5825 = vmatprep.subr.mxu0 0.0
    %5826 = vmatpush1.msra.mxu0 0.0
    %5827 = vmatprep.subr.mxu0 0.0
    %5828 = vmatpush1.msra.mxu0 0.0
    %5829 = vmatprep.subr.mxu0 0.0
    %5830 = vmatpush1.msra.mxu0 0.0
    %5831 = vmatprep.subr.mxu0 0.0
    %5832 = vmatpush1.msra.mxu0 0.0
    %5833 = vmatprep.subr.mxu0 0.0
    %5834 = vmatpush1.msra.mxu0 0.0
    %5835 = vmatprep.subr.mxu0 0.0
    %5836 = vmatpush1.msra.mxu0 0.0
    %5837 = vmatprep.subr.mxu0 0.0
    %5838 = vmatpush1.msra.mxu0 0.0
    %5839 = vmatprep.subr.mxu0 0.0
    %5840 = vmatpush1.msra.mxu0 0.0
    %5841 = vmatprep.subr.mxu0 0.0
    %5842 = vmatpush1.msra.mxu0 0.0
    %5843 = vmatprep.subr.mxu0 0.0
    %5844 = vmatpush1.msra.mxu0 0.0
    %5845 = vmatprep.subr.mxu0 0.0
    %5846 = vmatpush1.msra.mxu0 0.0
    %5847 = vmatprep.subr.mxu0 0.0
    %5848 = vmatpush1.msra.mxu0 0.0
    %5849 = vmatprep.subr.mxu0 0.0
    %5850 = vmatpush1.msra.mxu0 0.0
    %5851 = vmatprep.subr.mxu0 0.0
    %5852 = vmatpush1.msra.mxu0 0.0
    %5853 = vmatprep.subr.mxu0 0.0
    %5854 = vmatpush1.msra.mxu0 0.0
    %5855 = vmatprep.subr.mxu0 0.0
    %5856 = vmatpush1.msra.mxu0 0.0
    %5857 = vmatprep.subr.mxu0 0.0
    %5858 = vmatpush1.msra.mxu0 0.0
    %5859 = vmatprep.subr.mxu0 0.0
    %5860 = vmatpush1.msra.mxu0 0.0
    %5861 = vmatprep.subr.mxu0 0.0
    %5862 = vmatpush1.msra.mxu0 0.0
    %5863 = vmatprep.subr.mxu0 0.0
    %5864 = vmatpush1.msra.mxu0 0.0
    %5865 = vmatprep.subr.mxu0 0.0
    %5866 = vmatpush1.msra.mxu0 0.0
    %5867 = vmatprep.mubr.f32.mxu0 0.0
    %5868 = vmatmul.mubr.f32.gmra.mrb[0].mxu0 %v5801
    %v5869 = vpop.f32.mrb[0].mxu0
    %v5870 = vadd.f32 %v75, %v5869
    %v5871 = vpop.f32.mrb[0].mxu0
    %5872 = vdwg.mxu0
    %v5873 = vxor.u32 %v5870, 2147483648
    %v5874 = vmul.f32 %v5873, 1.442695
    %v5875 = vpow.pop %v5874
    %v5876 = vadd.f32 %v5875, 1.0
    %v5877 = vrcp.pop %v5876
    %v5878 = vmul.f32 1.0, %v5877
    %v5879 = vmul.f32 %v5870, %v5878
    %v5881 = vsel %vm173, %v5879, 0
    %5883 = vmatprep.subr.mxu0 0.0
    %5884 = vmatpush1.msra.mxu0 %v58
    %5885 = vmatprep.subr.mxu0 0.0
    %5886 = vmatpush1.msra.mxu0 %v59
    %5887 = vmatprep.subr.mxu0 0.0
    %5888 = vmatpush1.msra.mxu0 %v60
    %5889 = vmatprep.subr.mxu0 0.0
    %5890 = vmatpush1.msra.mxu0 %v61
    %5891 = vmatprep.subr.mxu0 0.0
    %5892 = vmatpush1.msra.mxu0 0.0
    %5893 = vmatprep.subr.mxu0 0.0
    %5894 = vmatpush1.msra.mxu0 0.0
    %5895 = vmatprep.subr.mxu0 0.0
    %5896 = vmatpush1.msra.mxu0 0.0
    %5897 = vmatprep.subr.mxu0 0.0
    %5898 = vmatpush1.msra.mxu0 0.0
    %5899 = vmatprep.subr.mxu0 0.0
    %5900 = vmatpush1.msra.mxu0 0.0
    %5901 = vmatprep.subr.mxu0 0.0
    %5902 = vmatpush1.msra.mxu0 0.0
    %5903 = vmatprep.subr.mxu0 0.0
    %5904 = vmatpush1.msra.mxu0 0.0
    %5905 = vmatprep.subr.mxu0 0.0
    %5906 = vmatpush1.msra.mxu0 0.0
    %5907 = vmatprep.subr.mxu0 0.0
    %5908 = vmatpush1.msra.mxu0 0.0
    %5909 = vmatprep.subr.mxu0 0.0
    %5910 = vmatpush1.msra.mxu0 0.0
    %5911 = vmatprep.subr.mxu0 0.0
    %5912 = vmatpush1.msra.mxu0 0.0
    %5913 = vmatprep.subr.mxu0 0.0
    %5914 = vmatpush1.msra.mxu0 0.0
    %5915 = vmatprep.subr.mxu0 0.0
    %5916 = vmatpush1.msra.mxu0 0.0
    %5917 = vmatprep.subr.mxu0 0.0
    %5918 = vmatpush1.msra.mxu0 0.0
    %5919 = vmatprep.subr.mxu0 0.0
    %5920 = vmatpush1.msra.mxu0 0.0
    %5921 = vmatprep.subr.mxu0 0.0
    %5922 = vmatpush1.msra.mxu0 0.0
    %5923 = vmatprep.subr.mxu0 0.0
    %5924 = vmatpush1.msra.mxu0 0.0
    %5925 = vmatprep.subr.mxu0 0.0
    %5926 = vmatpush1.msra.mxu0 0.0
    %5927 = vmatprep.subr.mxu0 0.0
    %5928 = vmatpush1.msra.mxu0 0.0
    %5929 = vmatprep.subr.mxu0 0.0
    %5930 = vmatpush1.msra.mxu0 0.0
    %5931 = vmatprep.subr.mxu0 0.0
    %5932 = vmatpush1.msra.mxu0 0.0
    %5933 = vmatprep.subr.mxu0 0.0
    %5934 = vmatpush1.msra.mxu0 0.0
    %5935 = vmatprep.subr.mxu0 0.0
    %5936 = vmatpush1.msra.mxu0 0.0
    %5937 = vmatprep.subr.mxu0 0.0
    %5938 = vmatpush1.msra.mxu0 0.0
    %5939 = vmatprep.subr.mxu0 0.0
    %5940 = vmatpush1.msra.mxu0 0.0
    %5941 = vmatprep.subr.mxu0 0.0
    %5942 = vmatpush1.msra.mxu0 0.0
    %5943 = vmatprep.subr.mxu0 0.0
    %5944 = vmatpush1.msra.mxu0 0.0
    %5945 = vmatprep.subr.mxu0 0.0
    %5946 = vmatpush1.msra.mxu0 0.0
    %5947 = vmatprep.mubr.f32.mxu0 0.0
    %5948 = vmatmul.mubr.f32.gmra.mrb[0].mxu0 %v5881
    %v5949 = vpop.f32.mrb[0].mxu0
    %v5950 = vadd.f32 %v82, %v5949
    %v5951 = vpop.f32.mrb[0].mxu0
    %5952 = vdwg.mxu0
    %v5953 = vxor.u32 %v5950, 2147483648
    %v5954 = vmul.f32 %v5953, 1.442695
    %v5955 = vpow.pop %v5954
    %v5956 = vadd.f32 %v5955, 1.0
    %v5957 = vrcp.pop %v5956
    %v5958 = vmul.f32 1.0, %v5957
    %v5959 = vmul.f32 %v5950, %v5958
    %v5960 = vsub.f32 1.0, %v5958
    %v5961 = vmul.f32 %v5959, %v5960
    %v5962 = vadd.f32 %v5958, %v5961
    %v5963 = vmul.f32 %v89, %v5962
    %v5965 = vsel %vm173, %v5963, 0
    %5967 = vmatprep.subr.mxu0 0.0
    %5968 = vmatpush1.msra.mxu0 %v66
    %5969 = vmatprep.subr.mxu0 0.0
    %5970 = vmatpush1.msra.mxu0 %v67
    %5971 = vmatprep.subr.mxu0 0.0
    %5972 = vmatpush1.msra.mxu0 %v68
    %5973 = vmatprep.subr.mxu0 0.0
    %5974 = vmatpush1.msra.mxu0 %v69
    %5975 = vmatprep.subr.mxu0 0.0
    %5976 = vmatpush1.msra.mxu0 0.0
    %5977 = vmatprep.subr.mxu0 0.0
    %5978 = vmatpush1.msra.mxu0 0.0
    %5979 = vmatprep.subr.mxu0 0.0
    %5980 = vmatpush1.msra.mxu0 0.0
    %5981 = vmatprep.subr.mxu0 0.0
    %5982 = vmatpush1.msra.mxu0 0.0
    %5983 = vmatprep.subr.mxu0 0.0
    %5984 = vmatpush1.msra.mxu0 0.0
    %5985 = vmatprep.subr.mxu0 0.0
    %5986 = vmatpush1.msra.mxu0 0.0
    %5987 = vmatprep.subr.mxu0 0.0
    %5988 = vmatpush1.msra.mxu0 0.0
    %5989 = vmatprep.subr.mxu0 0.0
    %5990 = vmatpush1.msra.mxu0 0.0
    %5991 = vmatprep.subr.mxu0 0.0
    %5992 = vmatpush1.msra.mxu0 0.0
    %5993 = vmatprep.subr.mxu0 0.0
    %5994 = vmatpush1.msra.mxu0 0.0
    %5995 = vmatprep.subr.mxu0 0.0
    %5996 = vmatpush1.msra.mxu0 0.0
    %5997 = vmatprep.subr.mxu0 0.0
    %5998 = vmatpush1.msra.mxu0 0.0
    %5999 = vmatprep.subr.mxu0 0.0
    %6000 = vmatpush1.msra.mxu0 0.0
    %6001 = vmatprep.subr.mxu0 0.0
    %6002 = vmatpush1.msra.mxu0 0.0
    %6003 = vmatprep.subr.mxu0 0.0
    %6004 = vmatpush1.msra.mxu0 0.0
    %6005 = vmatprep.subr.mxu0 0.0
    %6006 = vmatpush1.msra.mxu0 0.0
    %6007 = vmatprep.subr.mxu0 0.0
    %6008 = vmatpush1.msra.mxu0 0.0
    %6009 = vmatprep.subr.mxu0 0.0
    %6010 = vmatpush1.msra.mxu0 0.0
    %6011 = vmatprep.subr.mxu0 0.0
    %6012 = vmatpush1.msra.mxu0 0.0
    %6013 = vmatprep.subr.mxu0 0.0
    %6014 = vmatpush1.msra.mxu0 0.0
    %6015 = vmatprep.subr.mxu0 0.0
    %6016 = vmatpush1.msra.mxu0 0.0
    %6017 = vmatprep.subr.mxu0 0.0
    %6018 = vmatpush1.msra.mxu0 0.0
    %6019 = vmatprep.subr.mxu0 0.0
    %6020 = vmatpush1.msra.mxu0 0.0
    %6021 = vmatprep.subr.mxu0 0.0
    %6022 = vmatpush1.msra.mxu0 0.0
    %6023 = vmatprep.subr.mxu0 0.0
    %6024 = vmatpush1.msra.mxu0 0.0
    %6025 = vmatprep.subr.mxu0 0.0
    %6026 = vmatpush1.msra.mxu0 0.0
    %6027 = vmatprep.subr.mxu0 0.0
    %6028 = vmatpush1.msra.mxu0 0.0
    %6029 = vmatprep.subr.mxu0 0.0
    %6030 = vmatpush1.msra.mxu0 0.0
    %6031 = vmatprep.mubr.f32.mxu0 0.0
    %6032 = vmatmul.mubr.f32.gmra.mrb[0].mxu0 %v5965
    %v6033 = vpop.f32.mrb[0].mxu0
    %v6034 = vadd.f32 0.0, %v6033
    %v6035 = vpop.f32.mrb[0].mxu0
    %6036 = vdwg.mxu0
    %v6037 = vsub.f32 1.0, %v5878
    %v6038 = vmul.f32 %v5879, %v6037
    %v6039 = vadd.f32 %v5878, %v6038
    %v6040 = vmul.f32 %v6034, %v6039
    %v6042 = vsel %vm173, %v6040, 0
    %6044 = vmatprep.subr.mxu0 0.0
    %6045 = vmatpush1.msra.mxu0 %v62
    %6046 = vmatprep.subr.mxu0 0.0
    %6047 = vmatpush1.msra.mxu0 %v63
    %6048 = vmatprep.subr.mxu0 0.0
    %6049 = vmatpush1.msra.mxu0 %v64
    %6050 = vmatprep.subr.mxu0 0.0
    %6051 = vmatpush1.msra.mxu0 %v65
    %6052 = vmatprep.subr.mxu0 0.0
    %6053 = vmatpush1.msra.mxu0 0.0
    %6054 = vmatprep.subr.mxu0 0.0
    %6055 = vmatpush1.msra.mxu0 0.0
    %6056 = vmatprep.subr.mxu0 0.0
    %6057 = vmatpush1.msra.mxu0 0.0
    %6058 = vmatprep.subr.mxu0 0.0
    %6059 = vmatpush1.msra.mxu0 0.0
    %6060 = vmatprep.subr.mxu0 0.0
    %6061 = vmatpush1.msra.mxu0 0.0
    %6062 = vmatprep.subr.mxu0 0.0
    %6063 = vmatpush1.msra.mxu0 0.0
    %6064 = vmatprep.subr.mxu0 0.0
    %6065 = vmatpush1.msra.mxu0 0.0
    %6066 = vmatprep.subr.mxu0 0.0
    %6067 = vmatpush1.msra.mxu0 0.0
    %6068 = vmatprep.subr.mxu0 0.0
    %6069 = vmatpush1.msra.mxu0 0.0
    %6070 = vmatprep.subr.mxu0 0.0
    %6071 = vmatpush1.msra.mxu0 0.0
    %6072 = vmatprep.subr.mxu0 0.0
    %6073 = vmatpush1.msra.mxu0 0.0
    %6074 = vmatprep.subr.mxu0 0.0
    %6075 = vmatpush1.msra.mxu0 0.0
    %6076 = vmatprep.subr.mxu0 0.0
    %6077 = vmatpush1.msra.mxu0 0.0
    %6078 = vmatprep.subr.mxu0 0.0
    %6079 = vmatpush1.msra.mxu0 0.0
    %6080 = vmatprep.subr.mxu0 0.0
    %6081 = vmatpush1.msra.mxu0 0.0
    %6082 = vmatprep.subr.mxu0 0.0
    %6083 = vmatpush1.msra.mxu0 0.0
    %6084 = vmatprep.subr.mxu0 0.0
    %6085 = vmatpush1.msra.mxu0 0.0
    %6086 = vmatprep.subr.mxu0 0.0
    %6087 = vmatpush1.msra.mxu0 0.0
    %6088 = vmatprep.subr.mxu0 0.0
    %6089 = vmatpush1.msra.mxu0 0.0
    %6090 = vmatprep.subr.mxu0 0.0
    %6091 = vmatpush1.msra.mxu0 0.0
    %6092 = vmatprep.subr.mxu0 0.0
    %6093 = vmatpush1.msra.mxu0 0.0
    %6094 = vmatprep.subr.mxu0 0.0
    %6095 = vmatpush1.msra.mxu0 0.0
    %6096 = vmatprep.subr.mxu0 0.0
    %6097 = vmatpush1.msra.mxu0 0.0
    %6098 = vmatprep.subr.mxu0 0.0
    %6099 = vmatpush1.msra.mxu0 0.0
    %6100 = vmatprep.subr.mxu0 0.0
    %6101 = vmatpush1.msra.mxu0 0.0
    %6102 = vmatprep.subr.mxu0 0.0
    %6103 = vmatpush1.msra.mxu0 0.0
    %6104 = vmatprep.subr.mxu0 0.0
    %6105 = vmatpush1.msra.mxu0 0.0
    %6106 = vmatprep.subr.mxu0 0.0
    %6107 = vmatpush1.msra.mxu0 0.0
    %6108 = vmatprep.mubr.f32.mxu0 0.0
    %6109 = vmatmul.mubr.f32.gmra.mrb[0].mxu0 %v6042
    %v6110 = vpop.f32.mrb[0].mxu0
    %v6111 = vadd.f32 0.0, %v6110
    %v6112 = vpop.f32.mrb[0].mxu0
    %6113 = vdwg.mxu0
    %v6114 = vmul.f32 %v5799, 0.92
    %v6115 = vmul.f32 %v6111, 0.08
    %v6116 = vsub.f32 %v6114, %v6115
    %v6118 = vsel %vm92, %v6116, 0
    %6120 = vmatprep.subr.mxu0 0.0
    %6121 = vmatpush1.msra.mxu0 %v56
    %6122 = vmatprep.subr.mxu0 0.0
    %6123 = vmatpush1.msra.mxu0 %v57
    %6124 = vmatprep.subr.mxu0 0.0
    %6125 = vmatpush1.msra.mxu0 0.0
    %6126 = vmatprep.subr.mxu0 0.0
    %6127 = vmatpush1.msra.mxu0 0.0
    %6128 = vmatprep.subr.mxu0 0.0
    %6129 = vmatpush1.msra.mxu0 0.0
    %6130 = vmatprep.subr.mxu0 0.0
    %6131 = vmatpush1.msra.mxu0 0.0
    %6132 = vmatprep.subr.mxu0 0.0
    %6133 = vmatpush1.msra.mxu0 0.0
    %6134 = vmatprep.subr.mxu0 0.0
    %6135 = vmatpush1.msra.mxu0 0.0
    %6136 = vmatprep.subr.mxu0 0.0
    %6137 = vmatpush1.msra.mxu0 0.0
    %6138 = vmatprep.subr.mxu0 0.0
    %6139 = vmatpush1.msra.mxu0 0.0
    %6140 = vmatprep.subr.mxu0 0.0
    %6141 = vmatpush1.msra.mxu0 0.0
    %6142 = vmatprep.subr.mxu0 0.0
    %6143 = vmatpush1.msra.mxu0 0.0
    %6144 = vmatprep.subr.mxu0 0.0
    %6145 = vmatpush1.msra.mxu0 0.0
    %6146 = vmatprep.subr.mxu0 0.0
    %6147 = vmatpush1.msra.mxu0 0.0
    %6148 = vmatprep.subr.mxu0 0.0
    %6149 = vmatpush1.msra.mxu0 0.0
    %6150 = vmatprep.subr.mxu0 0.0
    %6151 = vmatpush1.msra.mxu0 0.0
    %6152 = vmatprep.subr.mxu0 0.0
    %6153 = vmatpush1.msra.mxu0 0.0
    %6154 = vmatprep.subr.mxu0 0.0
    %6155 = vmatpush1.msra.mxu0 0.0
    %6156 = vmatprep.subr.mxu0 0.0
    %6157 = vmatpush1.msra.mxu0 0.0
    %6158 = vmatprep.subr.mxu0 0.0
    %6159 = vmatpush1.msra.mxu0 0.0
    %6160 = vmatprep.subr.mxu0 0.0
    %6161 = vmatpush1.msra.mxu0 0.0
    %6162 = vmatprep.subr.mxu0 0.0
    %6163 = vmatpush1.msra.mxu0 0.0
    %6164 = vmatprep.subr.mxu0 0.0
    %6165 = vmatpush1.msra.mxu0 0.0
    %6166 = vmatprep.subr.mxu0 0.0
    %6167 = vmatpush1.msra.mxu0 0.0
    %6168 = vmatprep.subr.mxu0 0.0
    %6169 = vmatpush1.msra.mxu0 0.0
    %6170 = vmatprep.subr.mxu0 0.0
    %6171 = vmatpush1.msra.mxu0 0.0
    %6172 = vmatprep.subr.mxu0 0.0
    %6173 = vmatpush1.msra.mxu0 0.0
    %6174 = vmatprep.subr.mxu0 0.0
    %6175 = vmatpush1.msra.mxu0 0.0
    %6176 = vmatprep.subr.mxu0 0.0
    %6177 = vmatpush1.msra.mxu0 0.0
    %6178 = vmatprep.subr.mxu0 0.0
    %6179 = vmatpush1.msra.mxu0 0.0
    %6180 = vmatprep.subr.mxu0 0.0
    %6181 = vmatpush1.msra.mxu0 0.0
    %6182 = vmatprep.subr.mxu0 0.0
    %6183 = vmatpush1.msra.mxu0 0.0
    %6184 = vmatprep.mubr.f32.mxu0 0.0
    %6185 = vmatmul.mubr.f32.gmra.mrb[0].mxu0 %v6118
    %v6186 = vpop.f32.mrb[0].mxu0
    %v6187 = vadd.f32 %v75, %v6186
    %v6188 = vpop.f32.mrb[0].mxu0
    %6189 = vdwg.mxu0
    %v6190 = vxor.u32 %v6187, 2147483648
    %v6191 = vmul.f32 %v6190, 1.442695
    %v6192 = vpow.pop %v6191
    %v6193 = vadd.f32 %v6192, 1.0
    %v6194 = vrcp.pop %v6193
    %v6195 = vmul.f32 1.0, %v6194
    %v6196 = vmul.f32 %v6187, %v6195
    %v6198 = vsel %vm173, %v6196, 0
    %6200 = vmatprep.subr.mxu0 0.0
    %6201 = vmatpush1.msra.mxu0 %v58
    %6202 = vmatprep.subr.mxu0 0.0
    %6203 = vmatpush1.msra.mxu0 %v59
    %6204 = vmatprep.subr.mxu0 0.0
    %6205 = vmatpush1.msra.mxu0 %v60
    %6206 = vmatprep.subr.mxu0 0.0
    %6207 = vmatpush1.msra.mxu0 %v61
    %6208 = vmatprep.subr.mxu0 0.0
    %6209 = vmatpush1.msra.mxu0 0.0
    %6210 = vmatprep.subr.mxu0 0.0
    %6211 = vmatpush1.msra.mxu0 0.0
    %6212 = vmatprep.subr.mxu0 0.0
    %6213 = vmatpush1.msra.mxu0 0.0
    %6214 = vmatprep.subr.mxu0 0.0
    %6215 = vmatpush1.msra.mxu0 0.0
    %6216 = vmatprep.subr.mxu0 0.0
    %6217 = vmatpush1.msra.mxu0 0.0
    %6218 = vmatprep.subr.mxu0 0.0
    %6219 = vmatpush1.msra.mxu0 0.0
    %6220 = vmatprep.subr.mxu0 0.0
    %6221 = vmatpush1.msra.mxu0 0.0
    %6222 = vmatprep.subr.mxu0 0.0
    %6223 = vmatpush1.msra.mxu0 0.0
    %6224 = vmatprep.subr.mxu0 0.0
    %6225 = vmatpush1.msra.mxu0 0.0
    %6226 = vmatprep.subr.mxu0 0.0
    %6227 = vmatpush1.msra.mxu0 0.0
    %6228 = vmatprep.subr.mxu0 0.0
    %6229 = vmatpush1.msra.mxu0 0.0
    %6230 = vmatprep.subr.mxu0 0.0
    %6231 = vmatpush1.msra.mxu0 0.0
    %6232 = vmatprep.subr.mxu0 0.0
    %6233 = vmatpush1.msra.mxu0 0.0
    %6234 = vmatprep.subr.mxu0 0.0
    %6235 = vmatpush1.msra.mxu0 0.0
    %6236 = vmatprep.subr.mxu0 0.0
    %6237 = vmatpush1.msra.mxu0 0.0
    %6238 = vmatprep.subr.mxu0 0.0
    %6239 = vmatpush1.msra.mxu0 0.0
    %6240 = vmatprep.subr.mxu0 0.0
    %6241 = vmatpush1.msra.mxu0 0.0
    %6242 = vmatprep.subr.mxu0 0.0
    %6243 = vmatpush1.msra.mxu0 0.0
    %6244 = vmatprep.subr.mxu0 0.0
    %6245 = vmatpush1.msra.mxu0 0.0
    %6246 = vmatprep.subr.mxu0 0.0
    %6247 = vmatpush1.msra.mxu0 0.0
    %6248 = vmatprep.subr.mxu0 0.0
    %6249 = vmatpush1.msra.mxu0 0.0
    %6250 = vmatprep.subr.mxu0 0.0
    %6251 = vmatpush1.msra.mxu0 0.0
    %6252 = vmatprep.subr.mxu0 0.0
    %6253 = vmatpush1.msra.mxu0 0.0
    %6254 = vmatprep.subr.mxu0 0.0
    %6255 = vmatpush1.msra.mxu0 0.0
    %6256 = vmatprep.subr.mxu0 0.0
    %6257 = vmatpush1.msra.mxu0 0.0
    %6258 = vmatprep.subr.mxu0 0.0
    %6259 = vmatpush1.msra.mxu0 0.0
    %6260 = vmatprep.subr.mxu0 0.0
    %6261 = vmatpush1.msra.mxu0 0.0
    %6262 = vmatprep.subr.mxu0 0.0
    %6263 = vmatpush1.msra.mxu0 0.0
    %6264 = vmatprep.mubr.f32.mxu0 0.0
    %6265 = vmatmul.mubr.f32.gmra.mrb[0].mxu0 %v6198
    %v6266 = vpop.f32.mrb[0].mxu0
    %v6267 = vadd.f32 %v82, %v6266
    %v6268 = vpop.f32.mrb[0].mxu0
    %6269 = vdwg.mxu0
    %v6270 = vxor.u32 %v6267, 2147483648
    %v6271 = vmul.f32 %v6270, 1.442695
    %v6272 = vpow.pop %v6271
    %v6273 = vadd.f32 %v6272, 1.0
    %v6274 = vrcp.pop %v6273
    %v6275 = vmul.f32 1.0, %v6274
    %v6276 = vmul.f32 %v6267, %v6275
    %v6277 = vsub.f32 1.0, %v6275
    %v6278 = vmul.f32 %v6276, %v6277
    %v6279 = vadd.f32 %v6275, %v6278
    %v6280 = vmul.f32 %v89, %v6279
    %v6282 = vsel %vm173, %v6280, 0
    %6284 = vmatprep.subr.mxu0 0.0
    %6285 = vmatpush1.msra.mxu0 %v66
    %6286 = vmatprep.subr.mxu0 0.0
    %6287 = vmatpush1.msra.mxu0 %v67
    %6288 = vmatprep.subr.mxu0 0.0
    %6289 = vmatpush1.msra.mxu0 %v68
    %6290 = vmatprep.subr.mxu0 0.0
    %6291 = vmatpush1.msra.mxu0 %v69
    %6292 = vmatprep.subr.mxu0 0.0
    %6293 = vmatpush1.msra.mxu0 0.0
    %6294 = vmatprep.subr.mxu0 0.0
    %6295 = vmatpush1.msra.mxu0 0.0
    %6296 = vmatprep.subr.mxu0 0.0
    %6297 = vmatpush1.msra.mxu0 0.0
    %6298 = vmatprep.subr.mxu0 0.0
    %6299 = vmatpush1.msra.mxu0 0.0
    %6300 = vmatprep.subr.mxu0 0.0
    %6301 = vmatpush1.msra.mxu0 0.0
    %6302 = vmatprep.subr.mxu0 0.0
    %6303 = vmatpush1.msra.mxu0 0.0
    %6304 = vmatprep.subr.mxu0 0.0
    %6305 = vmatpush1.msra.mxu0 0.0
    %6306 = vmatprep.subr.mxu0 0.0
    %6307 = vmatpush1.msra.mxu0 0.0
    %6308 = vmatprep.subr.mxu0 0.0
    %6309 = vmatpush1.msra.mxu0 0.0
    %6310 = vmatprep.subr.mxu0 0.0
    %6311 = vmatpush1.msra.mxu0 0.0
    %6312 = vmatprep.subr.mxu0 0.0
    %6313 = vmatpush1.msra.mxu0 0.0
    %6314 = vmatprep.subr.mxu0 0.0
    %6315 = vmatpush1.msra.mxu0 0.0
    %6316 = vmatprep.subr.mxu0 0.0
    %6317 = vmatpush1.msra.mxu0 0.0
    %6318 = vmatprep.subr.mxu0 0.0
    %6319 = vmatpush1.msra.mxu0 0.0
    %6320 = vmatprep.subr.mxu0 0.0
    %6321 = vmatpush1.msra.mxu0 0.0
    %6322 = vmatprep.subr.mxu0 0.0
    %6323 = vmatpush1.msra.mxu0 0.0
    %6324 = vmatprep.subr.mxu0 0.0
    %6325 = vmatpush1.msra.mxu0 0.0
    %6326 = vmatprep.subr.mxu0 0.0
    %6327 = vmatpush1.msra.mxu0 0.0
    %6328 = vmatprep.subr.mxu0 0.0
    %6329 = vmatpush1.msra.mxu0 0.0
    %6330 = vmatprep.subr.mxu0 0.0
    %6331 = vmatpush1.msra.mxu0 0.0
    %6332 = vmatprep.subr.mxu0 0.0
    %6333 = vmatpush1.msra.mxu0 0.0
    %6334 = vmatprep.subr.mxu0 0.0
    %6335 = vmatpush1.msra.mxu0 0.0
    %6336 = vmatprep.subr.mxu0 0.0
    %6337 = vmatpush1.msra.mxu0 0.0
    %6338 = vmatprep.subr.mxu0 0.0
    %6339 = vmatpush1.msra.mxu0 0.0
    %6340 = vmatprep.subr.mxu0 0.0
    %6341 = vmatpush1.msra.mxu0 0.0
    %6342 = vmatprep.subr.mxu0 0.0
    %6343 = vmatpush1.msra.mxu0 0.0
    %6344 = vmatprep.subr.mxu0 0.0
    %6345 = vmatpush1.msra.mxu0 0.0
    %6346 = vmatprep.subr.mxu0 0.0
    %6347 = vmatpush1.msra.mxu0 0.0
    %6348 = vmatprep.mubr.f32.mxu0 0.0
    %6349 = vmatmul.mubr.f32.gmra.mrb[0].mxu0 %v6282
    %v6350 = vpop.f32.mrb[0].mxu0
    %v6351 = vadd.f32 0.0, %v6350
    %v6352 = vpop.f32.mrb[0].mxu0
    %6353 = vdwg.mxu0
    %v6354 = vsub.f32 1.0, %v6195
    %v6355 = vmul.f32 %v6196, %v6354
    %v6356 = vadd.f32 %v6195, %v6355
    %v6357 = vmul.f32 %v6351, %v6356
    %v6359 = vsel %vm173, %v6357, 0
    %6361 = vmatprep.subr.mxu0 0.0
    %6362 = vmatpush1.msra.mxu0 %v62
    %6363 = vmatprep.subr.mxu0 0.0
    %6364 = vmatpush1.msra.mxu0 %v63
    %6365 = vmatprep.subr.mxu0 0.0
    %6366 = vmatpush1.msra.mxu0 %v64
    %6367 = vmatprep.subr.mxu0 0.0
    %6368 = vmatpush1.msra.mxu0 %v65
    %6369 = vmatprep.subr.mxu0 0.0
    %6370 = vmatpush1.msra.mxu0 0.0
    %6371 = vmatprep.subr.mxu0 0.0
    %6372 = vmatpush1.msra.mxu0 0.0
    %6373 = vmatprep.subr.mxu0 0.0
    %6374 = vmatpush1.msra.mxu0 0.0
    %6375 = vmatprep.subr.mxu0 0.0
    %6376 = vmatpush1.msra.mxu0 0.0
    %6377 = vmatprep.subr.mxu0 0.0
    %6378 = vmatpush1.msra.mxu0 0.0
    %6379 = vmatprep.subr.mxu0 0.0
    %6380 = vmatpush1.msra.mxu0 0.0
    %6381 = vmatprep.subr.mxu0 0.0
    %6382 = vmatpush1.msra.mxu0 0.0
    %6383 = vmatprep.subr.mxu0 0.0
    %6384 = vmatpush1.msra.mxu0 0.0
    %6385 = vmatprep.subr.mxu0 0.0
    %6386 = vmatpush1.msra.mxu0 0.0
    %6387 = vmatprep.subr.mxu0 0.0
    %6388 = vmatpush1.msra.mxu0 0.0
    %6389 = vmatprep.subr.mxu0 0.0
    %6390 = vmatpush1.msra.mxu0 0.0
    %6391 = vmatprep.subr.mxu0 0.0
    %6392 = vmatpush1.msra.mxu0 0.0
    %6393 = vmatprep.subr.mxu0 0.0
    %6394 = vmatpush1.msra.mxu0 0.0
    %6395 = vmatprep.subr.mxu0 0.0
    %6396 = vmatpush1.msra.mxu0 0.0
    %6397 = vmatprep.subr.mxu0 0.0
    %6398 = vmatpush1.msra.mxu0 0.0
    %6399 = vmatprep.subr.mxu0 0.0
    %6400 = vmatpush1.msra.mxu0 0.0
    %6401 = vmatprep.subr.mxu0 0.0
    %6402 = vmatpush1.msra.mxu0 0.0
    %6403 = vmatprep.subr.mxu0 0.0
    %6404 = vmatpush1.msra.mxu0 0.0
    %6405 = vmatprep.subr.mxu0 0.0
    %6406 = vmatpush1.msra.mxu0 0.0
    %6407 = vmatprep.subr.mxu0 0.0
    %6408 = vmatpush1.msra.mxu0 0.0
    %6409 = vmatprep.subr.mxu0 0.0
    %6410 = vmatpush1.msra.mxu0 0.0
    %6411 = vmatprep.subr.mxu0 0.0
    %6412 = vmatpush1.msra.mxu0 0.0
    %6413 = vmatprep.subr.mxu0 0.0
    %6414 = vmatpush1.msra.mxu0 0.0
    %6415 = vmatprep.subr.mxu0 0.0
    %6416 = vmatpush1.msra.mxu0 0.0
    %6417 = vmatprep.subr.mxu0 0.0
    %6418 = vmatpush1.msra.mxu0 0.0
    %6419 = vmatprep.subr.mxu0 0.0
    %6420 = vmatpush1.msra.mxu0 0.0
    %6421 = vmatprep.subr.mxu0 0.0
    %6422 = vmatpush1.msra.mxu0 0.0
    %6423 = vmatprep.subr.mxu0 0.0
    %6424 = vmatpush1.msra.mxu0 0.0
    %6425 = vmatprep.mubr.f32.mxu0 0.0
    %6426 = vmatmul.mubr.f32.gmra.mrb[0].mxu0 %v6359
    %v6427 = vpop.f32.mrb[0].mxu0
    %v6428 = vadd.f32 0.0, %v6427
    %v6429 = vpop.f32.mrb[0].mxu0
    %6430 = vdwg.mxu0
    %v6431 = vmul.f32 %v6116, 0.92
    %v6432 = vmul.f32 %v6428, 0.08
    %v6433 = vsub.f32 %v6431, %v6432
    %6434 = vst.msk [vmem:[#allocation7] sm:$0xff] %vm92, %v6433
    // Predicated region
    $region42: #{tpu_custom_call.1} parent=1 // pred_check
      _
    $region43: #{tpu_custom_call.1} parent=1 // pred_check_branch
      %6436 = sbr.rel (0) target = $region45
    $region44: #{tpu_custom_call.1} parent=1 // pred_region
      %s6438 = ssub.s32 128, 128
      %6439 = vsyncadd [#allocation4], %s6438
      %s6441 = sshll.u32 [#allocation7], 4
      %s6442 = int_to_ptr.vmem [resolvable:$true] %s6441
      %6444 = dma.vmem_to_hbm [thread:$0]  %s6442, 128, %s8, [#allocation4]
    $region45: #{tpu_custom_call.1} parent=1 // pred_fallthru
      _
    // Predicated region
    $region46: #{tpu_custom_call.1} parent=1 // pred_check
      _
    $region47: #{tpu_custom_call.1} parent=1 // pred_check_branch
      %6446 = sbr.rel (0) target = $region49
    $region48: #{tpu_custom_call.1} parent=1 // pred_region
      %6447 = dma.done [#allocation4], 128
    $region49: #{tpu_custom_call.1} parent=1 // pred_fallthru
      _
    %6448 = vsyncpa [#allocation3], 1
    %6449 = vsyncpa [#allocation6], 1
    %6450 = vsyncpa [#allocation4], 1

</llo_original>
